<compile_context>
chip_gen: v7x
topology: tpu7x:2x2x1
jax: 0.10.0
libtpu: 0.0.40
codegen_flags: <defaults>
</compile_context>

<pallas_src>
import functools

import jax
import jax.numpy as jnp
from jax.experimental import pallas as pl
from jax.experimental.pallas import tpu as pltpu


# ---------------------------------------------------------------------------
# Helpers
# ---------------------------------------------------------------------------
def _full_spec(shape):
    n = len(shape)
    return pl.BlockSpec(shape, lambda i, n=n: (0,) * n)


def _ln(z, g, b):
    mu = jnp.mean(z, axis=-1, keepdims=True)
    var = jnp.mean(jnp.square(z - mu), axis=-1, keepdims=True)
    return (z - mu) * jax.lax.rsqrt(var + 1e-12) * g + b


# ---------------------------------------------------------------------------
# Fused encoder layer kernel (one pallas_call per layer, grid over batch)
# ---------------------------------------------------------------------------
def _encoder_layer_kernel(n_heads, apply_in_ln,
                          x_ref, bias_ref,
                          ln_in_g_ref, ln_in_b_ref,
                          wqkv_ref, bqkv_ref, wo_ref, bo_ref,
                          ln1_g_ref, ln1_b_ref,
                          w1_ref, b1_ref, w2_ref, b2_ref,
                          ln2_g_ref, ln2_b_ref,
                          o_ref):
    x = x_ref[0]                                  # (S, H)
    S, H = x.shape
    dh = H // n_heads
    scale = 1.0 / (dh ** 0.5)

    if apply_in_ln:                               # embedding LayerNorm folded into layer 0
        x = _ln(x, ln_in_g_ref[...], ln_in_b_ref[...])

    # fused Q|K|V projection: one (S,H) x (H,3H) matmul
    qkv = jnp.dot(x, wqkv_ref[...], preferred_element_type=jnp.float32) + bqkv_ref[...]
    bias = bias_ref[0]                            # (1, S) additive key mask

    ctx_heads = []
    for hh in range(n_heads):                     # static, tiny head count
        q_h = qkv[:, hh * dh:(hh + 1) * dh]
        k_h = qkv[:, H + hh * dh:H + (hh + 1) * dh]
        v_h = qkv[:, 2 * H + hh * dh:2 * H + (hh + 1) * dh]
        s = jax.lax.dot_general(q_h, k_h, (((1,), (1,)), ((), ())),
                                preferred_element_type=jnp.float32) * scale + bias
        s = s - jnp.max(s, axis=-1, keepdims=True)
        p = jnp.exp(s)
        p = p * pl.reciprocal(jnp.sum(p, axis=-1, keepdims=True), approx=True)
        ctx_heads.append(jnp.dot(p, v_h, preferred_element_type=jnp.float32))
    ctx = jnp.concatenate(ctx_heads, axis=-1)     # (S, H) head merge in VMEM/vregs

    attn_out = jnp.dot(ctx, wo_ref[...], preferred_element_type=jnp.float32) + bo_ref[...]
    h1 = _ln(x + attn_out, ln1_g_ref[...], ln1_b_ref[...])

    ff = jnp.dot(h1, w1_ref[...], preferred_element_type=jnp.float32) + b1_ref[...]
    # TODO(synk): BERT uses erf-GELU; tanh approximation kept for safe Mosaic lowering.
    ff = jax.nn.gelu(ff, approximate=True)
    ff = jnp.dot(ff, w2_ref[...], preferred_element_type=jnp.float32) + b2_ref[...]

    o_ref[0] = _ln(h1 + ff, ln2_g_ref[...], ln2_b_ref[...])


def encoder_layer(x, bias, layer, emb_ln_g, emb_ln_b, apply_in_ln, n_heads):
    B, S, H = x.shape
    inter = layer["w1"].shape[1]
    full2 = lambda shape: pl.BlockSpec(shape, lambda b: (0, 0))
    return pl.pallas_call(
        functools.partial(_encoder_layer_kernel, n_heads, apply_in_ln),
        grid=(B,),
        in_specs=[pl.BlockSpec((1, S, H), lambda b: (b, 0, 0)),
                  pl.BlockSpec((1, 1, S), lambda b: (b, 0, 0)),
                  full2((1, H)), full2((1, H)),           # input (embedding) LN
                  full2((H, 3 * H)), full2((1, 3 * H)),   # fused QKV
                  full2((H, H)), full2((1, H)),           # output proj
                  full2((1, H)), full2((1, H)),           # LN1
                  full2((H, inter)), full2((1, inter)),   # FFN in
                  full2((inter, H)), full2((1, H)),       # FFN out
                  full2((1, H)), full2((1, H))],          # LN2
        out_specs=pl.BlockSpec((1, S, H), lambda b: (b, 0, 0)),
        out_shape=jax.ShapeDtypeStruct((B, S, H), jnp.float32),
        compiler_params=pltpu.CompilerParams(dimension_semantics=("parallel",)),
    )(x, bias, emb_ln_g, emb_ln_b,
      layer["wqkv"], layer["bqkv"], layer["wo"], layer["bo"],
      layer["ln1_g"], layer["ln1_b"], layer["w1"], layer["b1"],
      layer["w2"], layer["b2"], layer["ln2_g"], layer["ln2_b"])


# ---------------------------------------------------------------------------
# Fused BiLSTM + classifier kernel (grid over batch)
# ---------------------------------------------------------------------------
def _bilstm_classifier_kernel(x_ref, wih_ref, bih_ref, whf_ref, whb_ref,
                              wc_ref, bc_ref, tagw_ref, tagpad_ref, o_ref):
    x = x_ref[0]                                  # (S, Hin)
    S = x.shape[0]
    Hh = whf_ref.shape[0]

    # Hoisted input projection for all timesteps and BOTH directions: (S, 8*Hh)
    xp = jnp.dot(x, wih_ref[...], preferred_element_type=jnp.float32) + bih_ref[...]
    whf = whf_ref[...]
    whb = whb_ref[...]

    def cell(gx, h, c, wh):                       # PyTorch gate order (i, f, g, o)
        g = gx + jnp.dot(h, wh, preferred_element_type=jnp.float32)
        i = jax.nn.sigmoid(g[:, 0 * Hh:1 * Hh])
        f = jax.nn.sigmoid(g[:, 1 * Hh:2 * Hh])
        gg = jnp.tanh(g[:, 2 * Hh:3 * Hh])
        o = jax.nn.sigmoid(g[:, 3 * Hh:4 * Hh])
        c_new = f * c + i * gg
        return o * jnp.tanh(c_new), c_new

    # TODO(synk): matches an unpacked nn.LSTM (runs over padded positions too).
    h = jnp.zeros((1, Hh), jnp.float32)
    c = jnp.zeros((1, Hh), jnp.float32)
    fwd = []
    for t in range(S):                            # forward direction
        h, c = cell(xp[t:t + 1, 0:4 * Hh], h, c, whf)
        fwd.append(h)

    h = jnp.zeros((1, Hh), jnp.float32)
    c = jnp.zeros((1, Hh), jnp.float32)
    bwd = [None] * S
    for t in range(S - 1, -1, -1):                # backward direction
        h, c = cell(xp[t:t + 1, 4 * Hh:8 * Hh], h, c, whb)
        bwd[t] = h

    lstm_out = jnp.concatenate([jnp.concatenate(fwd, axis=0),
                                jnp.concatenate(bwd, axis=0)], axis=1)   # (S, 2*Hh)

    # classifier + fixed per-tag weight + padded-tag kill bias; single lane-dense store
    logits = (jnp.dot(lstm_out, wc_ref[...], preferred_element_type=jnp.float32)
              + bc_ref[...]) * tagw_ref[...] + tagpad_ref[...]
    o_ref[0] = logits


def bilstm_classifier(x, lp, wc, bc, tag_weight, tag_pad_bias):
    B, S, Hin = x.shape
    Hh = lp["whf"].shape[0]
    Tp = wc.shape[1]
    full2 = lambda shape: pl.BlockSpec(shape, lambda b: (0, 0))
    return pl.pallas_call(
        _bilstm_classifier_kernel,
        grid=(B,),
        in_specs=[pl.BlockSpec((1, S, Hin), lambda b: (b, 0, 0)),
                  full2((Hin, 8 * Hh)), full2((1, 8 * Hh)),
                  full2((Hh, 4 * Hh)), full2((Hh, 4 * Hh)),
                  full2((2 * Hh, Tp)), full2((1, Tp)),
                  full2((1, Tp)), full2((1, Tp))],
        out_specs=pl.BlockSpec((1, S, Tp), lambda b: (b, 0, 0)),
        out_shape=jax.ShapeDtypeStruct((B, S, Tp), jnp.float32),
        compiler_params=pltpu.CompilerParams(dimension_semantics=("parallel",)),
    )(x, lp["wih"], lp["bih"], lp["whf"], lp["whb"], wc, bc, tag_weight, tag_pad_bias)


# ---------------------------------------------------------------------------
# CRF Viterbi decode kernel (batched; single store of the [B, S] prediction)
# ---------------------------------------------------------------------------
def _crf_decode_kernel(e_ref, m_ref, tr_ref, st_ref, en_ref, o_ref):
    B, S, T = e_ref.shape
    em = e_ref[...]
    mask = m_ref[...]                     # (B, S) int32
    trans = tr_ref[...]                   # (T, T), padded tags are harmless (zeros)

    def argmax_axis(x, axis, keepdims=False):
        mx = jnp.max(x, axis=axis, keepdims=True)
        idx = jax.lax.broadcasted_iota(jnp.int32, x.shape, axis)
        cand = jnp.where(x == mx, idx, jnp.full_like(idx, x.shape[axis]))
        return jnp.min(cand, axis=axis, keepdims=keepdims)

    # Viterbi forward recursion (matches torchcrf._viterbi_decode; first-index tie-break)
    score = st_ref[...] + em[:, 0, :]                     # (B, T)
    history = []
    for i in range(1, S):                                 # TODO(synk): use lax.fori_loop + VMEM history if S grows
        ns = score[:, :, None] + trans[None, :, :] + em[:, i, :][:, None, :]   # (B, T, T)
        history.append(argmax_axis(ns, 1))                # (B, T) best previous tag
        nmax = jnp.max(ns, axis=1)                        # (B, T)
        valid = mask[:, i:i + 1] > 0
        score = jnp.where(valid, nmax, score)
    score = score + en_ref[...]

    best_last = argmax_axis(score, 1, keepdims=True)      # (B, 1)
    lens = jnp.sum(mask, axis=1, keepdims=True)           # (B, 1); assumes len >= 1
    last_pos = lens - 1
    zeros = jnp.zeros_like(best_last)

    # Backtracking; build all S columns in registers, store once (lane-dense).
    cols = [None] * S
    cols[S - 1] = jnp.where(last_pos == S - 1, best_last, zeros)
    cur = best_last
    for t in range(S - 2, -1, -1):
        hist_t = history[t]                                # recorded at step t+1
        onehot = jax.lax.broadcasted_iota(jnp.int32, hist_t.shape, 1) == cur
        prev = jnp.sum(jnp.where(onehot, hist_t, 0), axis=1, keepdims=True)
        valid = mask[:, t + 1:t + 2] > 0
        is_last = last_pos == t
        cols[t] = jnp.where(valid, prev, jnp.where(is_last, best_last, zeros))
        cur = jnp.where(valid, prev, best_last)
    o_ref[...] = jnp.concatenate(cols, axis=1).astype(jnp.int32)


def crf_decode(logits, mask, trans, start, end):
    B, S, T = logits.shape
    return pl.pallas_call(
        _crf_decode_kernel,
        grid=(1,),
        in_specs=[_full_spec((B, S, T)), _full_spec((B, S)), _full_spec((T, T)),
                  _full_spec((1, T)), _full_spec((1, T))],
        out_specs=_full_spec((B, S)),
        out_shape=jax.ShapeDtypeStruct((B, S), jnp.int32),
        compiler_params=pltpu.CompilerParams(dimension_semantics=("arbitrary",)),
    )(logits, mask, trans, start, end)


# ---------------------------------------------------------------------------
# Parameter initialization (deterministic, synthetic)
# ---------------------------------------------------------------------------
def init_params(key, *, vocab=50, hidden=32, n_layers=2, n_heads=2, inter=64,
                max_pos=16, lstm_hidden=16, num_tags=9, tag_pad=128):
    keys = jax.random.split(key, 64)
    ki = iter(range(64))

    def nrm(shape, s=0.02):
        return s * jax.random.normal(keys[next(ki)], shape, jnp.float32)

    def uni(shape, a):
        return jax.random.uniform(keys[next(ki)], shape, jnp.float32, -a, a)

    p = {
        "cfg": {"hidden": hidden, "heads": n_heads},
        "word_emb": nrm((vocab, hidden)),
        "pos_emb": nrm((max_pos, hidden)),
        "type_emb": nrm((2, hidden)),
        "emb_ln_g": jnp.ones((1, hidden), jnp.float32),
        "emb_ln_b": jnp.zeros((1, hidden), jnp.float32),
        "layers": [],
    }
    for _ in range(n_layers):
        p["layers"].append({
            "wqkv": nrm((hidden, 3 * hidden)),            # fused Q|K|V projection
            "bqkv": jnp.zeros((1, 3 * hidden), jnp.float32),
            "wo": nrm((hidden, hidden)), "bo": jnp.zeros((1, hidden), jnp.float32),
            "ln1_g": jnp.ones((1, hidden), jnp.float32),
            "ln1_b": jnp.zeros((1, hidden), jnp.float32),
            "w1": nrm((hidden, inter)), "b1": jnp.zeros((1, inter), jnp.float32),
            "w2": nrm((inter, hidden)), "b2": jnp.zeros((1, hidden), jnp.float32),
            "ln2_g": jnp.ones((1, hidden), jnp.float32),
            "ln2_b": jnp.zeros((1, hidden), jnp.float32),
        })

    # BiLSTM params (PyTorch gate order i, f, g, o; stored transposed; fwd|bwd concatenated)
    a = 1.0 / (lstm_hidden ** 0.5)
    p["lstm"] = {
        "wih": uni((hidden, 8 * lstm_hidden), a),
        "bih": uni((1, 8 * lstm_hidden), a) + uni((1, 8 * lstm_hidden), a),  # b_ih + b_hh
        "whf": uni((lstm_hidden, 4 * lstm_hidden), a),
        "whb": uni((lstm_hidden, 4 * lstm_hidden), a),
    }

    # classifier Linear(2*lstm_hidden, num_tags), tag dim padded to 128 lanes
    pad = tag_pad - num_tags
    b = 1.0 / ((2 * lstm_hidden) ** 0.5)
    p["wc"] = jnp.pad(uni((2 * lstm_hidden, num_tags), b), ((0, 0), (0, pad)))
    p["bc"] = jnp.pad(uni((1, num_tags), b), ((0, 0), (0, pad)))
    tw = jnp.array([[0.2, 0.5, 0.5, 0.4, 0.4, 0.3, 0.3, 0.5, 0.5]], jnp.float32)
    p["tag_weight"] = jnp.pad(tw, ((0, 0), (0, pad)), constant_values=1.0)
    p["tag_pad_bias"] = jnp.pad(jnp.zeros((1, num_tags), jnp.float32),
                                ((0, 0), (0, pad)), constant_values=-1e9)

    # CRF params (torchcrf init uniform(-0.1, 0.1)), zero-padded to the padded tag width
    p["crf_trans"] = jnp.pad(uni((num_tags, num_tags), 0.1), ((0, pad), (0, pad)))
    p["crf_start"] = jnp.pad(uni((1, num_tags), 0.1), ((0, 0), (0, pad)))
    p["crf_end"] = jnp.pad(uni((1, num_tags), 0.1), ((0, 0), (0, pad)))
    return p


# ---------------------------------------------------------------------------
# Forward pass
# ---------------------------------------------------------------------------
def bert_bilstm_crf_forward(params, input_ids, attention_mask):
    B, S = input_ids.shape
    nH = params["cfg"]["heads"]

    # BERT-style embeddings (gathers done in XLA; everything else in Pallas)
    emb = (params["word_emb"][input_ids]
           + params["pos_emb"][jnp.arange(S)][None, :, :]
           + params["type_emb"][0][None, None, :])

    mask_f = attention_mask.astype(jnp.float32)
    bias = ((1.0 - mask_f) * -10000.0).reshape(B, 1, S)

    h = emb
    for li, layer in enumerate(params["layers"]):
        h = encoder_layer(h, bias, layer, params["emb_ln_g"], params["emb_ln_b"],
                          apply_in_ln=(li == 0), n_heads=nH)

    # nn.Dropout(0.2): eval-mode identity
    logits = bilstm_classifier(h, params["lstm"], params["wc"], params["bc"],
                               params["tag_weight"], params["tag_pad_bias"])

    # CRF Viterbi decode (assumes every sequence has length >= 1, as torchcrf requires)
    preds = crf_decode(logits, attention_mask.astype(jnp.int32),
                       params["crf_trans"], params["crf_start"], params["crf_end"])
    return preds


# ---------------------------------------------------------------------------
if __name__ == "__main__":
    key = jax.random.PRNGKey(0)
    kp, kid = jax.random.split(key)

    B, S, VOCAB = 2, 8, 50
    params = init_params(kp, vocab=VOCAB, hidden=32, n_layers=2, n_heads=2,
                         inter=64, max_pos=16, lstm_hidden=16, num_tags=9)

    input_ids = jax.random.randint(kid, (B, S), 0, VOCAB, dtype=jnp.int32)
    attention_mask = jnp.array([[1, 1, 1, 1, 1, 1, 1, 1],
                                [1, 1, 1, 1, 1, 1, 0, 0]], dtype=jnp.int32)

    fwd = jax.jit(functools.partial(bert_bilstm_crf_forward, params))
    preds = fwd(input_ids, attention_mask)
    jax.block_until_ready(preds)
    print("KERNEL_OK")
</pallas_src>

<mosaic_0001>
module attributes {stable_mosaic.version = 11 : i64} {
  func.func @_encoder_layer_kernel(%arg0: i32, %arg1: memref<1x8x32xf32, #tpu.memory_space<vmem>>, %arg2: memref<1x1x8xf32, #tpu.memory_space<vmem>>, %arg3: memref<1x32xf32, #tpu.memory_space<vmem>>, %arg4: memref<1x32xf32, #tpu.memory_space<vmem>>, %arg5: memref<32x96xf32, #tpu.memory_space<vmem>>, %arg6: memref<1x96xf32, #tpu.memory_space<vmem>>, %arg7: memref<32x32xf32, #tpu.memory_space<vmem>>, %arg8: memref<1x32xf32, #tpu.memory_space<vmem>>, %arg9: memref<1x32xf32, #tpu.memory_space<vmem>>, %arg10: memref<1x32xf32, #tpu.memory_space<vmem>>, %arg11: memref<32x64xf32, #tpu.memory_space<vmem>>, %arg12: memref<1x64xf32, #tpu.memory_space<vmem>>, %arg13: memref<64x32xf32, #tpu.memory_space<vmem>>, %arg14: memref<1x32xf32, #tpu.memory_space<vmem>>, %arg15: memref<1x32xf32, #tpu.memory_space<vmem>>, %arg16: memref<1x32xf32, #tpu.memory_space<vmem>>, %arg17: memref<1x8x32xf32, #tpu.memory_space<vmem>>) attributes {dimension_semantics = [#tpu.dimension_semantics<parallel>], iteration_bounds = array<i64: 2>, scalar_prefetch = 0 : i64, scratch_operands = 0 : i64, tpu.core_type = #tpu.core_type<tc>, window_params = [{transform_indices = @transform_0, window_bounds = array<i64: 1, 8, 32>}, {transform_indices = @transform_1, window_bounds = array<i64: 1, 1, 8>}, {pipeline_mode = #tpu.pipeline_mode<synchronous>, transform_indices = @transform_2, window_bounds = array<i64: 1, 32>}, {pipeline_mode = #tpu.pipeline_mode<synchronous>, transform_indices = @transform_3, window_bounds = array<i64: 1, 32>}, {pipeline_mode = #tpu.pipeline_mode<synchronous>, transform_indices = @transform_4, window_bounds = array<i64: 32, 96>}, {pipeline_mode = #tpu.pipeline_mode<synchronous>, transform_indices = @transform_5, window_bounds = array<i64: 1, 96>}, {pipeline_mode = #tpu.pipeline_mode<synchronous>, transform_indices = @transform_6, window_bounds = array<i64: 32, 32>}, {pipeline_mode = #tpu.pipeline_mode<synchronous>, transform_indices = @transform_7, window_bounds = array<i64: 1, 32>}, {pipeline_mode = #tpu.pipeline_mode<synchronous>, transform_indices = @transform_8, window_bounds = array<i64: 1, 32>}, {pipeline_mode = #tpu.pipeline_mode<synchronous>, transform_indices = @transform_9, window_bounds = array<i64: 1, 32>}, {pipeline_mode = #tpu.pipeline_mode<synchronous>, transform_indices = @transform_10, window_bounds = array<i64: 32, 64>}, {pipeline_mode = #tpu.pipeline_mode<synchronous>, transform_indices = @transform_11, window_bounds = array<i64: 1, 64>}, {pipeline_mode = #tpu.pipeline_mode<synchronous>, transform_indices = @transform_12, window_bounds = array<i64: 64, 32>}, {pipeline_mode = #tpu.pipeline_mode<synchronous>, transform_indices = @transform_13, window_bounds = array<i64: 1, 32>}, {pipeline_mode = #tpu.pipeline_mode<synchronous>, transform_indices = @transform_14, window_bounds = array<i64: 1, 32>}, {pipeline_mode = #tpu.pipeline_mode<synchronous>, transform_indices = @transform_15, window_bounds = array<i64: 1, 32>}, {transform_indices = @transform_16, window_bounds = array<i64: 1, 8, 32>}]} {
    %c0 = arith.constant 0 : index
    %c0_0 = arith.constant 0 : index
    %c0_1 = arith.constant 0 : index
    %0 = vector.load %arg1[%c0, %c0_0, %c0_1] : memref<1x8x32xf32, #tpu.memory_space<vmem>>, vector<1x8x32xf32>
    %1 = vector.shape_cast %0 : vector<1x8x32xf32> to vector<8x32xf32>
    %c0_2 = arith.constant 0 : index
    %c0_3 = arith.constant 0 : index
    %2 = vector.load %arg3[%c0_2, %c0_3] : memref<1x32xf32, #tpu.memory_space<vmem>>, vector<1x32xf32>
    %c0_4 = arith.constant 0 : index
    %c0_5 = arith.constant 0 : index
    %3 = vector.load %arg4[%c0_4, %c0_5] : memref<1x32xf32, #tpu.memory_space<vmem>>, vector<1x32xf32>
    %cst = arith.constant dense<0.000000e+00> : vector<8xf32>
    %4 = vector.multi_reduction <add>, %1, %cst [1] : vector<8x32xf32> to vector<8xf32>
    %5 = vector.shape_cast %4 : vector<8xf32> to vector<8x1xf32>
    %cst_6 = arith.constant 3.200000e+01 : f32
    %6 = vector.broadcast %cst_6 : f32 to vector<8x1xf32>
    %7 = arith.divf %5, %6 : vector<8x1xf32>
    %8 = vector.broadcast %7 : vector<8x1xf32> to vector<8x32xf32>
    %9 = arith.subf %1, %8 : vector<8x32xf32>
    %10 = arith.mulf %9, %9 : vector<8x32xf32>
    %cst_7 = arith.constant dense<0.000000e+00> : vector<8xf32>
    %11 = vector.multi_reduction <add>, %10, %cst_7 [1] : vector<8x32xf32> to vector<8xf32>
    %12 = vector.shape_cast %11 : vector<8xf32> to vector<8x1xf32>
    %cst_8 = arith.constant 3.200000e+01 : f32
    %13 = vector.broadcast %cst_8 : f32 to vector<8x1xf32>
    %14 = arith.divf %12, %13 : vector<8x1xf32>
    %15 = vector.broadcast %7 : vector<8x1xf32> to vector<8x32xf32>
    %16 = arith.subf %1, %15 : vector<8x32xf32>
    %cst_9 = arith.constant 9.99999996E-13 : f32
    %17 = vector.broadcast %cst_9 : f32 to vector<8x1xf32>
    %18 = arith.addf %14, %17 : vector<8x1xf32>
    %19 = math.rsqrt %18 : vector<8x1xf32>
    %20 = vector.broadcast %19 : vector<8x1xf32> to vector<8x32xf32>
    %21 = arith.mulf %16, %20 : vector<8x32xf32>
    %22 = vector.broadcast %2 : vector<1x32xf32> to vector<8x32xf32>
    %23 = arith.mulf %21, %22 : vector<8x32xf32>
    %24 = vector.broadcast %3 : vector<1x32xf32> to vector<8x32xf32>
    %25 = arith.addf %23, %24 : vector<8x32xf32>
    %c0_10 = arith.constant 0 : index
    %c0_11 = arith.constant 0 : index
    %26 = vector.load %arg5[%c0_10, %c0_11] : memref<32x96xf32, #tpu.memory_space<vmem>>, vector<32x96xf32>
    %cst_12 = arith.constant dense<0.000000e+00> : vector<8x96xf32>
    %27 = tpu.matmul %25, %26, %cst_12 {dimension_numbers = #tpu.dot_dimension_numbers<[1], [0], [0], [1], [0, 0, 1, 1], [], []>} : vector<8x32xf32>, vector<32x96xf32>, vector<8x96xf32> -> vector<8x96xf32>
    %c0_13 = arith.constant 0 : index
    %c0_14 = arith.constant 0 : index
    %28 = vector.load %arg6[%c0_13, %c0_14] : memref<1x96xf32, #tpu.memory_space<vmem>>, vector<1x96xf32>
    %29 = vector.broadcast %28 : vector<1x96xf32> to vector<8x96xf32>
    %30 = arith.addf %27, %29 : vector<8x96xf32>
    %c0_15 = arith.constant 0 : index
    %c0_16 = arith.constant 0 : index
    %c0_17 = arith.constant 0 : index
    %31 = vector.load %arg2[%c0_15, %c0_16, %c0_17] : memref<1x1x8xf32, #tpu.memory_space<vmem>>, vector<1x1x8xf32>
    %32 = vector.shape_cast %31 : vector<1x1x8xf32> to vector<1x8xf32>
    %33 = vector.extract_strided_slice %30 {offsets = [0, 0], sizes = [8, 16], strides = [1, 1]} : vector<8x96xf32> to vector<8x16xf32>
    %34 = vector.extract_strided_slice %30 {offsets = [0, 32], sizes = [8, 16], strides = [1, 1]} : vector<8x96xf32> to vector<8x16xf32>
    %35 = vector.extract_strided_slice %30 {offsets = [0, 64], sizes = [8, 16], strides = [1, 1]} : vector<8x96xf32> to vector<8x16xf32>
    %cst_18 = arith.constant dense<0.000000e+00> : vector<8x8xf32>
    %36 = tpu.matmul %33, %34, %cst_18 {dimension_numbers = #tpu.dot_dimension_numbers<[1], [1], [0], [0], [0, 0, 1, 0], [], []>} : vector<8x16xf32>, vector<8x16xf32>, vector<8x8xf32> -> vector<8x8xf32>
    %cst_19 = arith.constant 2.500000e-01 : f32
    %37 = vector.broadcast %cst_19 : f32 to vector<8x8xf32>
    %38 = arith.mulf %36, %37 : vector<8x8xf32>
    %39 = vector.broadcast %32 : vector<1x8xf32> to vector<8x8xf32>
    %40 = arith.addf %38, %39 : vector<8x8xf32>
    %cst_20 = arith.constant dense<0xFF800000> : vector<8xf32>
    %41 = vector.multi_reduction <maximumf>, %40, %cst_20 [1] : vector<8x8xf32> to vector<8xf32>
    %42 = vector.shape_cast %41 : vector<8xf32> to vector<8x1xf32>
    %43 = vector.broadcast %42 : vector<8x1xf32> to vector<8x8xf32>
    %44 = arith.subf %40, %43 : vector<8x8xf32>
    %45 = math.exp %44 : vector<8x8xf32>
    %cst_21 = arith.constant dense<0.000000e+00> : vector<8xf32>
    %46 = vector.multi_reduction <add>, %45, %cst_21 [1] : vector<8x8xf32> to vector<8xf32>
    %47 = vector.shape_cast %46 : vector<8xf32> to vector<8x1xf32>
    %48 = tpu.reciprocal %47 {approx = true} : vector<8x1xf32> -> vector<8x1xf32>
    %49 = vector.broadcast %48 : vector<8x1xf32> to vector<8x8xf32>
    %50 = arith.mulf %45, %49 : vector<8x8xf32>
    %cst_22 = arith.constant dense<0.000000e+00> : vector<8x16xf32>
    %51 = tpu.matmul %50, %35, %cst_22 {dimension_numbers = #tpu.dot_dimension_numbers<[1], [0], [0], [1], [0, 0, 1, 1], [], []>} : vector<8x8xf32>, vector<8x16xf32>, vector<8x16xf32> -> vector<8x16xf32>
    %52 = vector.extract_strided_slice %30 {offsets = [0, 16], sizes = [8, 16], strides = [1, 1]} : vector<8x96xf32> to vector<8x16xf32>
    %53 = vector.extract_strided_slice %30 {offsets = [0, 48], sizes = [8, 16], strides = [1, 1]} : vector<8x96xf32> to vector<8x16xf32>
    %54 = vector.extract_strided_slice %30 {offsets = [0, 80], sizes = [8, 16], strides = [1, 1]} : vector<8x96xf32> to vector<8x16xf32>
    %cst_23 = arith.constant dense<0.000000e+00> : vector<8x8xf32>
    %55 = tpu.matmul %52, %53, %cst_23 {dimension_numbers = #tpu.dot_dimension_numbers<[1], [1], [0], [0], [0, 0, 1, 0], [], []>} : vector<8x16xf32>, vector<8x16xf32>, vector<8x8xf32> -> vector<8x8xf32>
    %cst_24 = arith.constant 2.500000e-01 : f32
    %56 = vector.broadcast %cst_24 : f32 to vector<8x8xf32>
    %57 = arith.mulf %55, %56 : vector<8x8xf32>
    %58 = vector.broadcast %32 : vector<1x8xf32> to vector<8x8xf32>
    %59 = arith.addf %57, %58 : vector<8x8xf32>
    %cst_25 = arith.constant dense<0xFF800000> : vector<8xf32>
    %60 = vector.multi_reduction <maximumf>, %59, %cst_25 [1] : vector<8x8xf32> to vector<8xf32>
    %61 = vector.shape_cast %60 : vector<8xf32> to vector<8x1xf32>
    %62 = vector.broadcast %61 : vector<8x1xf32> to vector<8x8xf32>
    %63 = arith.subf %59, %62 : vector<8x8xf32>
    %64 = math.exp %63 : vector<8x8xf32>
    %cst_26 = arith.constant dense<0.000000e+00> : vector<8xf32>
    %65 = vector.multi_reduction <add>, %64, %cst_26 [1] : vector<8x8xf32> to vector<8xf32>
    %66 = vector.shape_cast %65 : vector<8xf32> to vector<8x1xf32>
    %67 = tpu.reciprocal %66 {approx = true} : vector<8x1xf32> -> vector<8x1xf32>
    %68 = vector.broadcast %67 : vector<8x1xf32> to vector<8x8xf32>
    %69 = arith.mulf %64, %68 : vector<8x8xf32>
    %cst_27 = arith.constant dense<0.000000e+00> : vector<8x16xf32>
    %70 = tpu.matmul %69, %54, %cst_27 {dimension_numbers = #tpu.dot_dimension_numbers<[1], [0], [0], [1], [0, 0, 1, 1], [], []>} : vector<8x8xf32>, vector<8x16xf32>, vector<8x16xf32> -> vector<8x16xf32>
    %71 = tpu.concatenate %51, %70 in 1 : vector<8x16xf32>, vector<8x16xf32> -> vector<8x32xf32>
    %c0_28 = arith.constant 0 : index
    %c0_29 = arith.constant 0 : index
    %72 = vector.load %arg7[%c0_28, %c0_29] : memref<32x32xf32, #tpu.memory_space<vmem>>, vector<32x32xf32>
    %cst_30 = arith.constant dense<0.000000e+00> : vector<8x32xf32>
    %73 = tpu.matmul %71, %72, %cst_30 {dimension_numbers = #tpu.dot_dimension_numbers<[1], [0], [0], [1], [0, 0, 1, 1], [], []>} : vector<8x32xf32>, vector<32x32xf32>, vector<8x32xf32> -> vector<8x32xf32>
    %c0_31 = arith.constant 0 : index
    %c0_32 = arith.constant 0 : index
    %74 = vector.load %arg8[%c0_31, %c0_32] : memref<1x32xf32, #tpu.memory_space<vmem>>, vector<1x32xf32>
    %75 = vector.broadcast %74 : vector<1x32xf32> to vector<8x32xf32>
    %76 = arith.addf %73, %75 : vector<8x32xf32>
    %77 = arith.addf %25, %76 : vector<8x32xf32>
    %c0_33 = arith.constant 0 : index
    %c0_34 = arith.constant 0 : index
    %78 = vector.load %arg9[%c0_33, %c0_34] : memref<1x32xf32, #tpu.memory_space<vmem>>, vector<1x32xf32>
    %c0_35 = arith.constant 0 : index
    %c0_36 = arith.constant 0 : index
    %79 = vector.load %arg10[%c0_35, %c0_36] : memref<1x32xf32, #tpu.memory_space<vmem>>, vector<1x32xf32>
    %cst_37 = arith.constant dense<0.000000e+00> : vector<8xf32>
    %80 = vector.multi_reduction <add>, %77, %cst_37 [1] : vector<8x32xf32> to vector<8xf32>
    %81 = vector.shape_cast %80 : vector<8xf32> to vector<8x1xf32>
    %cst_38 = arith.constant 3.200000e+01 : f32
    %82 = vector.broadcast %cst_38 : f32 to vector<8x1xf32>
    %83 = arith.divf %81, %82 : vector<8x1xf32>
    %84 = vector.broadcast %83 : vector<8x1xf32> to vector<8x32xf32>
    %85 = arith.subf %77, %84 : vector<8x32xf32>
    %86 = arith.mulf %85, %85 : vector<8x32xf32>
    %cst_39 = arith.constant dense<0.000000e+00> : vector<8xf32>
    %87 = vector.multi_reduction <add>, %86, %cst_39 [1] : vector<8x32xf32> to vector<8xf32>
    %88 = vector.shape_cast %87 : vector<8xf32> to vector<8x1xf32>
    %cst_40 = arith.constant 3.200000e+01 : f32
    %89 = vector.broadcast %cst_40 : f32 to vector<8x1xf32>
    %90 = arith.divf %88, %89 : vector<8x1xf32>
    %91 = vector.broadcast %83 : vector<8x1xf32> to vector<8x32xf32>
    %92 = arith.subf %77, %91 : vector<8x32xf32>
    %cst_41 = arith.constant 9.99999996E-13 : f32
    %93 = vector.broadcast %cst_41 : f32 to vector<8x1xf32>
    %94 = arith.addf %90, %93 : vector<8x1xf32>
    %95 = math.rsqrt %94 : vector<8x1xf32>
    %96 = vector.broadcast %95 : vector<8x1xf32> to vector<8x32xf32>
    %97 = arith.mulf %92, %96 : vector<8x32xf32>
    %98 = vector.broadcast %78 : vector<1x32xf32> to vector<8x32xf32>
    %99 = arith.mulf %97, %98 : vector<8x32xf32>
    %100 = vector.broadcast %79 : vector<1x32xf32> to vector<8x32xf32>
    %101 = arith.addf %99, %100 : vector<8x32xf32>
    %c0_42 = arith.constant 0 : index
    %c0_43 = arith.constant 0 : index
    %102 = vector.load %arg11[%c0_42, %c0_43] : memref<32x64xf32, #tpu.memory_space<vmem>>, vector<32x64xf32>
    %cst_44 = arith.constant dense<0.000000e+00> : vector<8x64xf32>
    %103 = tpu.matmul %101, %102, %cst_44 {dimension_numbers = #tpu.dot_dimension_numbers<[1], [0], [0], [1], [0, 0, 1, 1], [], []>} : vector<8x32xf32>, vector<32x64xf32>, vector<8x64xf32> -> vector<8x64xf32>
    %c0_45 = arith.constant 0 : index
    %c0_46 = arith.constant 0 : index
    %104 = vector.load %arg12[%c0_45, %c0_46] : memref<1x64xf32, #tpu.memory_space<vmem>>, vector<1x64xf32>
    %105 = vector.broadcast %104 : vector<1x64xf32> to vector<8x64xf32>
    %106 = arith.addf %103, %105 : vector<8x64xf32>
    %107 = arith.mulf %106, %106 : vector<8x64xf32>
    %108 = arith.mulf %106, %107 : vector<8x64xf32>
    %cst_47 = arith.constant 4.471500e-02 : f32
    %109 = vector.broadcast %cst_47 : f32 to vector<8x64xf32>
    %110 = arith.mulf %109, %108 : vector<8x64xf32>
    %111 = arith.addf %106, %110 : vector<8x64xf32>
    %cst_48 = arith.constant 0.797884583 : f32
    %112 = vector.broadcast %cst_48 : f32 to vector<8x64xf32>
    %113 = arith.mulf %112, %111 : vector<8x64xf32>
    %114 = math.tanh %113 : vector<8x64xf32>
    %cst_49 = arith.constant 1.000000e+00 : f32
    %115 = vector.broadcast %cst_49 : f32 to vector<8x64xf32>
    %116 = arith.addf %115, %114 : vector<8x64xf32>
    %cst_50 = arith.constant 5.000000e-01 : f32
    %117 = vector.broadcast %cst_50 : f32 to vector<8x64xf32>
    %118 = arith.mulf %117, %116 : vector<8x64xf32>
    %119 = arith.mulf %106, %118 : vector<8x64xf32>
    %c0_51 = arith.constant 0 : index
    %c0_52 = arith.constant 0 : index
    %120 = vector.load %arg13[%c0_51, %c0_52] : memref<64x32xf32, #tpu.memory_space<vmem>>, vector<64x32xf32>
    %cst_53 = arith.constant dense<0.000000e+00> : vector<8x32xf32>
    %121 = tpu.matmul %119, %120, %cst_53 {dimension_numbers = #tpu.dot_dimension_numbers<[1], [0], [0], [1], [0, 0, 1, 1], [], []>} : vector<8x64xf32>, vector<64x32xf32>, vector<8x32xf32> -> vector<8x32xf32>
    %c0_54 = arith.constant 0 : index
    %c0_55 = arith.constant 0 : index
    %122 = vector.load %arg14[%c0_54, %c0_55] : memref<1x32xf32, #tpu.memory_space<vmem>>, vector<1x32xf32>
    %123 = vector.broadcast %122 : vector<1x32xf32> to vector<8x32xf32>
    %124 = arith.addf %121, %123 : vector<8x32xf32>
    %125 = arith.addf %101, %124 : vector<8x32xf32>
    %c0_56 = arith.constant 0 : index
    %c0_57 = arith.constant 0 : index
    %126 = vector.load %arg15[%c0_56, %c0_57] : memref<1x32xf32, #tpu.memory_space<vmem>>, vector<1x32xf32>
    %c0_58 = arith.constant 0 : index
    %c0_59 = arith.constant 0 : index
    %127 = vector.load %arg16[%c0_58, %c0_59] : memref<1x32xf32, #tpu.memory_space<vmem>>, vector<1x32xf32>
    %cst_60 = arith.constant dense<0.000000e+00> : vector<8xf32>
    %128 = vector.multi_reduction <add>, %125, %cst_60 [1] : vector<8x32xf32> to vector<8xf32>
    %129 = vector.shape_cast %128 : vector<8xf32> to vector<8x1xf32>
    %cst_61 = arith.constant 3.200000e+01 : f32
    %130 = vector.broadcast %cst_61 : f32 to vector<8x1xf32>
    %131 = arith.divf %129, %130 : vector<8x1xf32>
    %132 = vector.broadcast %131 : vector<8x1xf32> to vector<8x32xf32>
    %133 = arith.subf %125, %132 : vector<8x32xf32>
    %134 = arith.mulf %133, %133 : vector<8x32xf32>
    %cst_62 = arith.constant dense<0.000000e+00> : vector<8xf32>
    %135 = vector.multi_reduction <add>, %134, %cst_62 [1] : vector<8x32xf32> to vector<8xf32>
    %136 = vector.shape_cast %135 : vector<8xf32> to vector<8x1xf32>
    %cst_63 = arith.constant 3.200000e+01 : f32
    %137 = vector.broadcast %cst_63 : f32 to vector<8x1xf32>
    %138 = arith.divf %136, %137 : vector<8x1xf32>
    %139 = vector.broadcast %131 : vector<8x1xf32> to vector<8x32xf32>
    %140 = arith.subf %125, %139 : vector<8x32xf32>
    %cst_64 = arith.constant 9.99999996E-13 : f32
    %141 = vector.broadcast %cst_64 : f32 to vector<8x1xf32>
    %142 = arith.addf %138, %141 : vector<8x1xf32>
    %143 = math.rsqrt %142 : vector<8x1xf32>
    %144 = vector.broadcast %143 : vector<8x1xf32> to vector<8x32xf32>
    %145 = arith.mulf %140, %144 : vector<8x32xf32>
    %146 = vector.broadcast %126 : vector<1x32xf32> to vector<8x32xf32>
    %147 = arith.mulf %145, %146 : vector<8x32xf32>
    %148 = vector.broadcast %127 : vector<1x32xf32> to vector<8x32xf32>
    %149 = arith.addf %147, %148 : vector<8x32xf32>
    %c0_65 = arith.constant 0 : index
    %c0_66 = arith.constant 0 : index
    %c0_67 = arith.constant 0 : index
    %150 = vector.load %arg17[%c0_65, %c0_66, %c0_67] : memref<1x8x32xf32, #tpu.memory_space<vmem>>, vector<1x8x32xf32>
    %151 = vector.shape_cast %150 : vector<1x8x32xf32> to vector<8x32xf32>
    %152 = vector.shape_cast %149 : vector<8x32xf32> to vector<1x8x32xf32>
    tpu.vector_store %arg17[%c0_65, %c0_66, %c0_67], %152 {strides = array<i32>} : memref<1x8x32xf32, #tpu.memory_space<vmem>>, vector<1x8x32xf32>,
    return
  }
  func.func @transform_0(%arg0: i32) -> (i32, i32, i32) {
    %c0_i32 = arith.constant 0 : i32
    %c0_i32_0 = arith.constant 0 : i32
    %c0_i32_1 = arith.constant 0 : i32
    return %arg0, %c0_i32, %c0_i32_0 : i32, i32, i32
  }
  func.func @transform_1(%arg0: i32) -> (i32, i32, i32) {
    %c0_i32 = arith.constant 0 : i32
    %c0_i32_0 = arith.constant 0 : i32
    %c0_i32_1 = arith.constant 0 : i32
    return %arg0, %c0_i32, %c0_i32_0 : i32, i32, i32
  }
  func.func @transform_2(%arg0: i32) -> (i32, i32) {
    %c0_i32 = arith.constant 0 : i32
    %c0_i32_0 = arith.constant 0 : i32
    %c0_i32_1 = arith.constant 0 : i32
    return %c0_i32, %c0_i32_0 : i32, i32
  }
  func.func @transform_3(%arg0: i32) -> (i32, i32) {
    %c0_i32 = arith.constant 0 : i32
    %c0_i32_0 = arith.constant 0 : i32
    %c0_i32_1 = arith.constant 0 : i32
    return %c0_i32, %c0_i32_0 : i32, i32
  }
  func.func @transform_4(%arg0: i32) -> (i32, i32) {
    %c0_i32 = arith.constant 0 : i32
    %c0_i32_0 = arith.constant 0 : i32
    %c0_i32_1 = arith.constant 0 : i32
    return %c0_i32, %c0_i32_0 : i32, i32
  }
  func.func @transform_5(%arg0: i32) -> (i32, i32) {
    %c0_i32 = arith.constant 0 : i32
    %c0_i32_0 = arith.constant 0 : i32
    %c0_i32_1 = arith.constant 0 : i32
    return %c0_i32, %c0_i32_0 : i32, i32
  }
  func.func @transform_6(%arg0: i32) -> (i32, i32) {
    %c0_i32 = arith.constant 0 : i32
    %c0_i32_0 = arith.constant 0 : i32
    %c0_i32_1 = arith.constant 0 : i32
    return %c0_i32, %c0_i32_0 : i32, i32
  }
  func.func @transform_7(%arg0: i32) -> (i32, i32) {
    %c0_i32 = arith.constant 0 : i32
    %c0_i32_0 = arith.constant 0 : i32
    %c0_i32_1 = arith.constant 0 : i32
    return %c0_i32, %c0_i32_0 : i32, i32
  }
  func.func @transform_8(%arg0: i32) -> (i32, i32) {
    %c0_i32 = arith.constant 0 : i32
    %c0_i32_0 = arith.constant 0 : i32
    %c0_i32_1 = arith.constant 0 : i32
    return %c0_i32, %c0_i32_0 : i32, i32
  }
  func.func @transform_9(%arg0: i32) -> (i32, i32) {
    %c0_i32 = arith.constant 0 : i32
    %c0_i32_0 = arith.constant 0 : i32
    %c0_i32_1 = arith.constant 0 : i32
    return %c0_i32, %c0_i32_0 : i32, i32
  }
  func.func @transform_10(%arg0: i32) -> (i32, i32) {
    %c0_i32 = arith.constant 0 : i32
    %c0_i32_0 = arith.constant 0 : i32
    %c0_i32_1 = arith.constant 0 : i32
    return %c0_i32, %c0_i32_0 : i32, i32
  }
  func.func @transform_11(%arg0: i32) -> (i32, i32) {
    %c0_i32 = arith.constant 0 : i32
    %c0_i32_0 = arith.constant 0 : i32
    %c0_i32_1 = arith.constant 0 : i32
    return %c0_i32, %c0_i32_0 : i32, i32
  }
  func.func @transform_12(%arg0: i32) -> (i32, i32) {
    %c0_i32 = arith.constant 0 : i32
    %c0_i32_0 = arith.constant 0 : i32
    %c0_i32_1 = arith.constant 0 : i32
    return %c0_i32, %c0_i32_0 : i32, i32
  }
  func.func @transform_13(%arg0: i32) -> (i32, i32) {
    %c0_i32 = arith.constant 0 : i32
    %c0_i32_0 = arith.constant 0 : i32
    %c0_i32_1 = arith.constant 0 : i32
    return %c0_i32, %c0_i32_0 : i32, i32
  }
  func.func @transform_14(%arg0: i32) -> (i32, i32) {
    %c0_i32 = arith.constant 0 : i32
    %c0_i32_0 = arith.constant 0 : i32
    %c0_i32_1 = arith.constant 0 : i32
    return %c0_i32, %c0_i32_0 : i32, i32
  }
  func.func @transform_15(%arg0: i32) -> (i32, i32) {
    %c0_i32 = arith.constant 0 : i32
    %c0_i32_0 = arith.constant 0 : i32
    %c0_i32_1 = arith.constant 0 : i32
    return %c0_i32, %c0_i32_0 : i32, i32
  }
  func.func @transform_16(%arg0: i32) -> (i32, i32, i32) {
    %c0_i32 = arith.constant 0 : i32
    %c0_i32_0 = arith.constant 0 : i32
    %c0_i32_1 = arith.constant 0 : i32
    return %arg0, %c0_i32, %c0_i32_0 : i32, i32, i32
  }
}

module attributes {stable_mosaic.version = 11 : i64} {
  func.func @_encoder_layer_kernel(%arg0: i32, %arg1: memref<1x8x32xf32, #tpu.memory_space<vmem>>, %arg2: memref<1x1x8xf32, #tpu.memory_space<vmem>>, %arg3: memref<1x32xf32, #tpu.memory_space<vmem>>, %arg4: memref<1x32xf32, #tpu.memory_space<vmem>>, %arg5: memref<32x96xf32, #tpu.memory_space<vmem>>, %arg6: memref<1x96xf32, #tpu.memory_space<vmem>>, %arg7: memref<32x32xf32, #tpu.memory_space<vmem>>, %arg8: memref<1x32xf32, #tpu.memory_space<vmem>>, %arg9: memref<1x32xf32, #tpu.memory_space<vmem>>, %arg10: memref<1x32xf32, #tpu.memory_space<vmem>>, %arg11: memref<32x64xf32, #tpu.memory_space<vmem>>, %arg12: memref<1x64xf32, #tpu.memory_space<vmem>>, %arg13: memref<64x32xf32, #tpu.memory_space<vmem>>, %arg14: memref<1x32xf32, #tpu.memory_space<vmem>>, %arg15: memref<1x32xf32, #tpu.memory_space<vmem>>, %arg16: memref<1x32xf32, #tpu.memory_space<vmem>>, %arg17: memref<1x8x32xf32, #tpu.memory_space<vmem>>) attributes {dimension_semantics = [#tpu.dimension_semantics<parallel>], iteration_bounds = array<i64: 2>, scalar_prefetch = 0 : i64, scratch_operands = 0 : i64, tpu.core_type = #tpu.core_type<tc>, window_params = [{transform_indices = @transform_0, window_bounds = array<i64: 1, 8, 32>}, {transform_indices = @transform_1, window_bounds = array<i64: 1, 1, 8>}, {pipeline_mode = #tpu.pipeline_mode<synchronous>, transform_indices = @transform_2, window_bounds = array<i64: 1, 32>}, {pipeline_mode = #tpu.pipeline_mode<synchronous>, transform_indices = @transform_3, window_bounds = array<i64: 1, 32>}, {pipeline_mode = #tpu.pipeline_mode<synchronous>, transform_indices = @transform_4, window_bounds = array<i64: 32, 96>}, {pipeline_mode = #tpu.pipeline_mode<synchronous>, transform_indices = @transform_5, window_bounds = array<i64: 1, 96>}, {pipeline_mode = #tpu.pipeline_mode<synchronous>, transform_indices = @transform_6, window_bounds = array<i64: 32, 32>}, {pipeline_mode = #tpu.pipeline_mode<synchronous>, transform_indices = @transform_7, window_bounds = array<i64: 1, 32>}, {pipeline_mode = #tpu.pipeline_mode<synchronous>, transform_indices = @transform_8, window_bounds = array<i64: 1, 32>}, {pipeline_mode = #tpu.pipeline_mode<synchronous>, transform_indices = @transform_9, window_bounds = array<i64: 1, 32>}, {pipeline_mode = #tpu.pipeline_mode<synchronous>, transform_indices = @transform_10, window_bounds = array<i64: 32, 64>}, {pipeline_mode = #tpu.pipeline_mode<synchronous>, transform_indices = @transform_11, window_bounds = array<i64: 1, 64>}, {pipeline_mode = #tpu.pipeline_mode<synchronous>, transform_indices = @transform_12, window_bounds = array<i64: 64, 32>}, {pipeline_mode = #tpu.pipeline_mode<synchronous>, transform_indices = @transform_13, window_bounds = array<i64: 1, 32>}, {pipeline_mode = #tpu.pipeline_mode<synchronous>, transform_indices = @transform_14, window_bounds = array<i64: 1, 32>}, {pipeline_mode = #tpu.pipeline_mode<synchronous>, transform_indices = @transform_15, window_bounds = array<i64: 1, 32>}, {transform_indices = @transform_16, window_bounds = array<i64: 1, 8, 32>}]} {
    %c0 = arith.constant 0 : index
    %c0_0 = arith.constant 0 : index
    %c0_1 = arith.constant 0 : index
    %0 = vector.load %arg1[%c0, %c0_0, %c0_1] : memref<1x8x32xf32, #tpu.memory_space<vmem>>, vector<1x8x32xf32>
    %1 = vector.shape_cast %0 : vector<1x8x32xf32> to vector<8x32xf32>
    %c0_2 = arith.constant 0 : index
    %c0_3 = arith.constant 0 : index
    %2 = vector.load %arg5[%c0_2, %c0_3] : memref<32x96xf32, #tpu.memory_space<vmem>>, vector<32x96xf32>
    %cst = arith.constant dense<0.000000e+00> : vector<8x96xf32>
    %3 = tpu.matmul %1, %2, %cst {dimension_numbers = #tpu.dot_dimension_numbers<[1], [0], [0], [1], [0, 0, 1, 1], [], []>} : vector<8x32xf32>, vector<32x96xf32>, vector<8x96xf32> -> vector<8x96xf32>
    %c0_4 = arith.constant 0 : index
    %c0_5 = arith.constant 0 : index
    %4 = vector.load %arg6[%c0_4, %c0_5] : memref<1x96xf32, #tpu.memory_space<vmem>>, vector<1x96xf32>
    %5 = vector.broadcast %4 : vector<1x96xf32> to vector<8x96xf32>
    %6 = arith.addf %3, %5 : vector<8x96xf32>
    %c0_6 = arith.constant 0 : index
    %c0_7 = arith.constant 0 : index
    %c0_8 = arith.constant 0 : index
    %7 = vector.load %arg2[%c0_6, %c0_7, %c0_8] : memref<1x1x8xf32, #tpu.memory_space<vmem>>, vector<1x1x8xf32>
    %8 = vector.shape_cast %7 : vector<1x1x8xf32> to vector<1x8xf32>
    %9 = vector.extract_strided_slice %6 {offsets = [0, 0], sizes = [8, 16], strides = [1, 1]} : vector<8x96xf32> to vector<8x16xf32>
    %10 = vector.extract_strided_slice %6 {offsets = [0, 32], sizes = [8, 16], strides = [1, 1]} : vector<8x96xf32> to vector<8x16xf32>
    %11 = vector.extract_strided_slice %6 {offsets = [0, 64], sizes = [8, 16], strides = [1, 1]} : vector<8x96xf32> to vector<8x16xf32>
    %cst_9 = arith.constant dense<0.000000e+00> : vector<8x8xf32>
    %12 = tpu.matmul %9, %10, %cst_9 {dimension_numbers = #tpu.dot_dimension_numbers<[1], [1], [0], [0], [0, 0, 1, 0], [], []>} : vector<8x16xf32>, vector<8x16xf32>, vector<8x8xf32> -> vector<8x8xf32>
    %cst_10 = arith.constant 2.500000e-01 : f32
    %13 = vector.broadcast %cst_10 : f32 to vector<8x8xf32>
    %14 = arith.mulf %12, %13 : vector<8x8xf32>
    %15 = vector.broadcast %8 : vector<1x8xf32> to vector<8x8xf32>
    %16 = arith.addf %14, %15 : vector<8x8xf32>
    %cst_11 = arith.constant dense<0xFF800000> : vector<8xf32>
    %17 = vector.multi_reduction <maximumf>, %16, %cst_11 [1] : vector<8x8xf32> to vector<8xf32>
    %18 = vector.shape_cast %17 : vector<8xf32> to vector<8x1xf32>
    %19 = vector.broadcast %18 : vector<8x1xf32> to vector<8x8xf32>
    %20 = arith.subf %16, %19 : vector<8x8xf32>
    %21 = math.exp %20 : vector<8x8xf32>
    %cst_12 = arith.constant dense<0.000000e+00> : vector<8xf32>
    %22 = vector.multi_reduction <add>, %21, %cst_12 [1] : vector<8x8xf32> to vector<8xf32>
    %23 = vector.shape_cast %22 : vector<8xf32> to vector<8x1xf32>
    %24 = tpu.reciprocal %23 {approx = true} : vector<8x1xf32> -> vector<8x1xf32>
    %25 = vector.broadcast %24 : vector<8x1xf32> to vector<8x8xf32>
    %26 = arith.mulf %21, %25 : vector<8x8xf32>
    %cst_13 = arith.constant dense<0.000000e+00> : vector<8x16xf32>
    %27 = tpu.matmul %26, %11, %cst_13 {dimension_numbers = #tpu.dot_dimension_numbers<[1], [0], [0], [1], [0, 0, 1, 1], [], []>} : vector<8x8xf32>, vector<8x16xf32>, vector<8x16xf32> -> vector<8x16xf32>
    %28 = vector.extract_strided_slice %6 {offsets = [0, 16], sizes = [8, 16], strides = [1, 1]} : vector<8x96xf32> to vector<8x16xf32>
    %29 = vector.extract_strided_slice %6 {offsets = [0, 48], sizes = [8, 16], strides = [1, 1]} : vector<8x96xf32> to vector<8x16xf32>
    %30 = vector.extract_strided_slice %6 {offsets = [0, 80], sizes = [8, 16], strides = [1, 1]} : vector<8x96xf32> to vector<8x16xf32>
    %cst_14 = arith.constant dense<0.000000e+00> : vector<8x8xf32>
    %31 = tpu.matmul %28, %29, %cst_14 {dimension_numbers = #tpu.dot_dimension_numbers<[1], [1], [0], [0], [0, 0, 1, 0], [], []>} : vector<8x16xf32>, vector<8x16xf32>, vector<8x8xf32> -> vector<8x8xf32>
    %cst_15 = arith.constant 2.500000e-01 : f32
    %32 = vector.broadcast %cst_15 : f32 to vector<8x8xf32>
    %33 = arith.mulf %31, %32 : vector<8x8xf32>
    %34 = vector.broadcast %8 : vector<1x8xf32> to vector<8x8xf32>
    %35 = arith.addf %33, %34 : vector<8x8xf32>
    %cst_16 = arith.constant dense<0xFF800000> : vector<8xf32>
    %36 = vector.multi_reduction <maximumf>, %35, %cst_16 [1] : vector<8x8xf32> to vector<8xf32>
    %37 = vector.shape_cast %36 : vector<8xf32> to vector<8x1xf32>
    %38 = vector.broadcast %37 : vector<8x1xf32> to vector<8x8xf32>
    %39 = arith.subf %35, %38 : vector<8x8xf32>
    %40 = math.exp %39 : vector<8x8xf32>
    %cst_17 = arith.constant dense<0.000000e+00> : vector<8xf32>
    %41 = vector.multi_reduction <add>, %40, %cst_17 [1] : vector<8x8xf32> to vector<8xf32>
    %42 = vector.shape_cast %41 : vector<8xf32> to vector<8x1xf32>
    %43 = tpu.reciprocal %42 {approx = true} : vector<8x1xf32> -> vector<8x1xf32>
    %44 = vector.broadcast %43 : vector<8x1xf32> to vector<8x8xf32>
    %45 = arith.mulf %40, %44 : vector<8x8xf32>
    %cst_18 = arith.constant dense<0.000000e+00> : vector<8x16xf32>
    %46 = tpu.matmul %45, %30, %cst_18 {dimension_numbers = #tpu.dot_dimension_numbers<[1], [0], [0], [1], [0, 0, 1, 1], [], []>} : vector<8x8xf32>, vector<8x16xf32>, vector<8x16xf32> -> vector<8x16xf32>
    %47 = tpu.concatenate %27, %46 in 1 : vector<8x16xf32>, vector<8x16xf32> -> vector<8x32xf32>
    %c0_19 = arith.constant 0 : index
    %c0_20 = arith.constant 0 : index
    %48 = vector.load %arg7[%c0_19, %c0_20] : memref<32x32xf32, #tpu.memory_space<vmem>>, vector<32x32xf32>
    %cst_21 = arith.constant dense<0.000000e+00> : vector<8x32xf32>
    %49 = tpu.matmul %47, %48, %cst_21 {dimension_numbers = #tpu.dot_dimension_numbers<[1], [0], [0], [1], [0, 0, 1, 1], [], []>} : vector<8x32xf32>, vector<32x32xf32>, vector<8x32xf32> -> vector<8x32xf32>
    %c0_22 = arith.constant 0 : index
    %c0_23 = arith.constant 0 : index
    %50 = vector.load %arg8[%c0_22, %c0_23] : memref<1x32xf32, #tpu.memory_space<vmem>>, vector<1x32xf32>
    %51 = vector.broadcast %50 : vector<1x32xf32> to vector<8x32xf32>
    %52 = arith.addf %49, %51 : vector<8x32xf32>
    %53 = arith.addf %1, %52 : vector<8x32xf32>
    %c0_24 = arith.constant 0 : index
    %c0_25 = arith.constant 0 : index
    %54 = vector.load %arg9[%c0_24, %c0_25] : memref<1x32xf32, #tpu.memory_space<vmem>>, vector<1x32xf32>
    %c0_26 = arith.constant 0 : index
    %c0_27 = arith.constant 0 : index
    %55 = vector.load %arg10[%c0_26, %c0_27] : memref<1x32xf32, #tpu.memory_space<vmem>>, vector<1x32xf32>
    %cst_28 = arith.constant dense<0.000000e+00> : vector<8xf32>
    %56 = vector.multi_reduction <add>, %53, %cst_28 [1] : vector<8x32xf32> to vector<8xf32>
    %57 = vector.shape_cast %56 : vector<8xf32> to vector<8x1xf32>
    %cst_29 = arith.constant 3.200000e+01 : f32
    %58 = vector.broadcast %cst_29 : f32 to vector<8x1xf32>
    %59 = arith.divf %57, %58 : vector<8x1xf32>
    %60 = vector.broadcast %59 : vector<8x1xf32> to vector<8x32xf32>
    %61 = arith.subf %53, %60 : vector<8x32xf32>
    %62 = arith.mulf %61, %61 : vector<8x32xf32>
    %cst_30 = arith.constant dense<0.000000e+00> : vector<8xf32>
    %63 = vector.multi_reduction <add>, %62, %cst_30 [1] : vector<8x32xf32> to vector<8xf32>
    %64 = vector.shape_cast %63 : vector<8xf32> to vector<8x1xf32>
    %cst_31 = arith.constant 3.200000e+01 : f32
    %65 = vector.broadcast %cst_31 : f32 to vector<8x1xf32>
    %66 = arith.divf %64, %65 : vector<8x1xf32>
    %67 = vector.broadcast %59 : vector<8x1xf32> to vector<8x32xf32>
    %68 = arith.subf %53, %67 : vector<8x32xf32>
    %cst_32 = arith.constant 9.99999996E-13 : f32
    %69 = vector.broadcast %cst_32 : f32 to vector<8x1xf32>
    %70 = arith.addf %66, %69 : vector<8x1xf32>
    %71 = math.rsqrt %70 : vector<8x1xf32>
    %72 = vector.broadcast %71 : vector<8x1xf32> to vector<8x32xf32>
    %73 = arith.mulf %68, %72 : vector<8x32xf32>
    %74 = vector.broadcast %54 : vector<1x32xf32> to vector<8x32xf32>
    %75 = arith.mulf %73, %74 : vector<8x32xf32>
    %76 = vector.broadcast %55 : vector<1x32xf32> to vector<8x32xf32>
    %77 = arith.addf %75, %76 : vector<8x32xf32>
    %c0_33 = arith.constant 0 : index
    %c0_34 = arith.constant 0 : index
    %78 = vector.load %arg11[%c0_33, %c0_34] : memref<32x64xf32, #tpu.memory_space<vmem>>, vector<32x64xf32>
    %cst_35 = arith.constant dense<0.000000e+00> : vector<8x64xf32>
    %79 = tpu.matmul %77, %78, %cst_35 {dimension_numbers = #tpu.dot_dimension_numbers<[1], [0], [0], [1], [0, 0, 1, 1], [], []>} : vector<8x32xf32>, vector<32x64xf32>, vector<8x64xf32> -> vector<8x64xf32>
    %c0_36 = arith.constant 0 : index
    %c0_37 = arith.constant 0 : index
    %80 = vector.load %arg12[%c0_36, %c0_37] : memref<1x64xf32, #tpu.memory_space<vmem>>, vector<1x64xf32>
    %81 = vector.broadcast %80 : vector<1x64xf32> to vector<8x64xf32>
    %82 = arith.addf %79, %81 : vector<8x64xf32>
    %83 = arith.mulf %82, %82 : vector<8x64xf32>
    %84 = arith.mulf %82, %83 : vector<8x64xf32>
    %cst_38 = arith.constant 4.471500e-02 : f32
    %85 = vector.broadcast %cst_38 : f32 to vector<8x64xf32>
    %86 = arith.mulf %85, %84 : vector<8x64xf32>
    %87 = arith.addf %82, %86 : vector<8x64xf32>
    %cst_39 = arith.constant 0.797884583 : f32
    %88 = vector.broadcast %cst_39 : f32 to vector<8x64xf32>
    %89 = arith.mulf %88, %87 : vector<8x64xf32>
    %90 = math.tanh %89 : vector<8x64xf32>
    %cst_40 = arith.constant 1.000000e+00 : f32
    %91 = vector.broadcast %cst_40 : f32 to vector<8x64xf32>
    %92 = arith.addf %91, %90 : vector<8x64xf32>
    %cst_41 = arith.constant 5.000000e-01 : f32
    %93 = vector.broadcast %cst_41 : f32 to vector<8x64xf32>
    %94 = arith.mulf %93, %92 : vector<8x64xf32>
    %95 = arith.mulf %82, %94 : vector<8x64xf32>
    %c0_42 = arith.constant 0 : index
    %c0_43 = arith.constant 0 : index
    %96 = vector.load %arg13[%c0_42, %c0_43] : memref<64x32xf32, #tpu.memory_space<vmem>>, vector<64x32xf32>
    %cst_44 = arith.constant dense<0.000000e+00> : vector<8x32xf32>
    %97 = tpu.matmul %95, %96, %cst_44 {dimension_numbers = #tpu.dot_dimension_numbers<[1], [0], [0], [1], [0, 0, 1, 1], [], []>} : vector<8x64xf32>, vector<64x32xf32>, vector<8x32xf32> -> vector<8x32xf32>
    %c0_45 = arith.constant 0 : index
    %c0_46 = arith.constant 0 : index
    %98 = vector.load %arg14[%c0_45, %c0_46] : memref<1x32xf32, #tpu.memory_space<vmem>>, vector<1x32xf32>
    %99 = vector.broadcast %98 : vector<1x32xf32> to vector<8x32xf32>
    %100 = arith.addf %97, %99 : vector<8x32xf32>
    %101 = arith.addf %77, %100 : vector<8x32xf32>
    %c0_47 = arith.constant 0 : index
    %c0_48 = arith.constant 0 : index
    %102 = vector.load %arg15[%c0_47, %c0_48] : memref<1x32xf32, #tpu.memory_space<vmem>>, vector<1x32xf32>
    %c0_49 = arith.constant 0 : index
    %c0_50 = arith.constant 0 : index
    %103 = vector.load %arg16[%c0_49, %c0_50] : memref<1x32xf32, #tpu.memory_space<vmem>>, vector<1x32xf32>
    %cst_51 = arith.constant dense<0.000000e+00> : vector<8xf32>
    %104 = vector.multi_reduction <add>, %101, %cst_51 [1] : vector<8x32xf32> to vector<8xf32>
    %105 = vector.shape_cast %104 : vector<8xf32> to vector<8x1xf32>
    %cst_52 = arith.constant 3.200000e+01 : f32
    %106 = vector.broadcast %cst_52 : f32 to vector<8x1xf32>
    %107 = arith.divf %105, %106 : vector<8x1xf32>
    %108 = vector.broadcast %107 : vector<8x1xf32> to vector<8x32xf32>
    %109 = arith.subf %101, %108 : vector<8x32xf32>
    %110 = arith.mulf %109, %109 : vector<8x32xf32>
    %cst_53 = arith.constant dense<0.000000e+00> : vector<8xf32>
    %111 = vector.multi_reduction <add>, %110, %cst_53 [1] : vector<8x32xf32> to vector<8xf32>
    %112 = vector.shape_cast %111 : vector<8xf32> to vector<8x1xf32>
    %cst_54 = arith.constant 3.200000e+01 : f32
    %113 = vector.broadcast %cst_54 : f32 to vector<8x1xf32>
    %114 = arith.divf %112, %113 : vector<8x1xf32>
    %115 = vector.broadcast %107 : vector<8x1xf32> to vector<8x32xf32>
    %116 = arith.subf %101, %115 : vector<8x32xf32>
    %cst_55 = arith.constant 9.99999996E-13 : f32
    %117 = vector.broadcast %cst_55 : f32 to vector<8x1xf32>
    %118 = arith.addf %114, %117 : vector<8x1xf32>
    %119 = math.rsqrt %118 : vector<8x1xf32>
    %120 = vector.broadcast %119 : vector<8x1xf32> to vector<8x32xf32>
    %121 = arith.mulf %116, %120 : vector<8x32xf32>
    %122 = vector.broadcast %102 : vector<1x32xf32> to vector<8x32xf32>
    %123 = arith.mulf %121, %122 : vector<8x32xf32>
    %124 = vector.broadcast %103 : vector<1x32xf32> to vector<8x32xf32>
    %125 = arith.addf %123, %124 : vector<8x32xf32>
    %c0_56 = arith.constant 0 : index
    %c0_57 = arith.constant 0 : index
    %c0_58 = arith.constant 0 : index
    %126 = vector.load %arg17[%c0_56, %c0_57, %c0_58] : memref<1x8x32xf32, #tpu.memory_space<vmem>>, vector<1x8x32xf32>
    %127 = vector.shape_cast %126 : vector<1x8x32xf32> to vector<8x32xf32>
    %128 = vector.shape_cast %125 : vector<8x32xf32> to vector<1x8x32xf32>
    tpu.vector_store %arg17[%c0_56, %c0_57, %c0_58], %128 {strides = array<i32>} : memref<1x8x32xf32, #tpu.memory_space<vmem>>, vector<1x8x32xf32>,
    return
  }
  func.func @transform_0(%arg0: i32) -> (i32, i32, i32) {
    %c0_i32 = arith.constant 0 : i32
    %c0_i32_0 = arith.constant 0 : i32
    %c0_i32_1 = arith.constant 0 : i32
    return %arg0, %c0_i32, %c0_i32_0 : i32, i32, i32
  }
  func.func @transform_1(%arg0: i32) -> (i32, i32, i32) {
    %c0_i32 = arith.constant 0 : i32
    %c0_i32_0 = arith.constant 0 : i32
    %c0_i32_1 = arith.constant 0 : i32
    return %arg0, %c0_i32, %c0_i32_0 : i32, i32, i32
  }
  func.func @transform_2(%arg0: i32) -> (i32, i32) {
    %c0_i32 = arith.constant 0 : i32
    %c0_i32_0 = arith.constant 0 : i32
    %c0_i32_1 = arith.constant 0 : i32
    return %c0_i32, %c0_i32_0 : i32, i32
  }
  func.func @transform_3(%arg0: i32) -> (i32, i32) {
    %c0_i32 = arith.constant 0 : i32
    %c0_i32_0 = arith.constant 0 : i32
    %c0_i32_1 = arith.constant 0 : i32
    return %c0_i32, %c0_i32_0 : i32, i32
  }
  func.func @transform_4(%arg0: i32) -> (i32, i32) {
    %c0_i32 = arith.constant 0 : i32
    %c0_i32_0 = arith.constant 0 : i32
    %c0_i32_1 = arith.constant 0 : i32
    return %c0_i32, %c0_i32_0 : i32, i32
  }
  func.func @transform_5(%arg0: i32) -> (i32, i32) {
    %c0_i32 = arith.constant 0 : i32
    %c0_i32_0 = arith.constant 0 : i32
    %c0_i32_1 = arith.constant 0 : i32
    return %c0_i32, %c0_i32_0 : i32, i32
  }
  func.func @transform_6(%arg0: i32) -> (i32, i32) {
    %c0_i32 = arith.constant 0 : i32
    %c0_i32_0 = arith.constant 0 : i32
    %c0_i32_1 = arith.constant 0 : i32
    return %c0_i32, %c0_i32_0 : i32, i32
  }
  func.func @transform_7(%arg0: i32) -> (i32, i32) {
    %c0_i32 = arith.constant 0 : i32
    %c0_i32_0 = arith.constant 0 : i32
    %c0_i32_1 = arith.constant 0 : i32
    return %c0_i32, %c0_i32_0 : i32, i32
  }
  func.func @transform_8(%arg0: i32) -> (i32, i32) {
    %c0_i32 = arith.constant 0 : i32
    %c0_i32_0 = arith.constant 0 : i32
    %c0_i32_1 = arith.constant 0 : i32
    return %c0_i32, %c0_i32_0 : i32, i32
  }
  func.func @transform_9(%arg0: i32) -> (i32, i32) {
    %c0_i32 = arith.constant 0 : i32
    %c0_i32_0 = arith.constant 0 : i32
    %c0_i32_1 = arith.constant 0 : i32
    return %c0_i32, %c0_i32_0 : i32, i32
  }
  func.func @transform_10(%arg0: i32) -> (i32, i32) {
    %c0_i32 = arith.constant 0 : i32
    %c0_i32_0 = arith.constant 0 : i32
    %c0_i32_1 = arith.constant 0 : i32
    return %c0_i32, %c0_i32_0 : i32, i32
  }
  func.func @transform_11(%arg0: i32) -> (i32, i32) {
    %c0_i32 = arith.constant 0 : i32
    %c0_i32_0 = arith.constant 0 : i32
    %c0_i32_1 = arith.constant 0 : i32
    return %c0_i32, %c0_i32_0 : i32, i32
  }
  func.func @transform_12(%arg0: i32) -> (i32, i32) {
    %c0_i32 = arith.constant 0 : i32
    %c0_i32_0 = arith.constant 0 : i32
    %c0_i32_1 = arith.constant 0 : i32
    return %c0_i32, %c0_i32_0 : i32, i32
  }
  func.func @transform_13(%arg0: i32) -> (i32, i32) {
    %c0_i32 = arith.constant 0 : i32
    %c0_i32_0 = arith.constant 0 : i32
    %c0_i32_1 = arith.constant 0 : i32
    return %c0_i32, %c0_i32_0 : i32, i32
  }
  func.func @transform_14(%arg0: i32) -> (i32, i32) {
    %c0_i32 = arith.constant 0 : i32
    %c0_i32_0 = arith.constant 0 : i32
    %c0_i32_1 = arith.constant 0 : i32
    return %c0_i32, %c0_i32_0 : i32, i32
  }
  func.func @transform_15(%arg0: i32) -> (i32, i32) {
    %c0_i32 = arith.constant 0 : i32
    %c0_i32_0 = arith.constant 0 : i32
    %c0_i32_1 = arith.constant 0 : i32
    return %c0_i32, %c0_i32_0 : i32, i32
  }
  func.func @transform_16(%arg0: i32) -> (i32, i32, i32) {
    %c0_i32 = arith.constant 0 : i32
    %c0_i32_0 = arith.constant 0 : i32
    %c0_i32_1 = arith.constant 0 : i32
    return %arg0, %c0_i32, %c0_i32_0 : i32, i32, i32
  }
}

module attributes {stable_mosaic.version = 11 : i64} {
  func.func @_crf_decode_kernel(%arg0: i32, %arg1: memref<2x8x128xf32, #tpu.memory_space<vmem>>, %arg2: memref<2x8xi32, #tpu.memory_space<vmem>>, %arg3: memref<128x128xf32, #tpu.memory_space<vmem>>, %arg4: memref<1x128xf32, #tpu.memory_space<vmem>>, %arg5: memref<1x128xf32, #tpu.memory_space<vmem>>, %arg6: memref<2x8xi32, #tpu.memory_space<vmem>>) attributes {dimension_semantics = [#tpu.dimension_semantics<arbitrary>], iteration_bounds = array<i64: 1>, scalar_prefetch = 0 : i64, scratch_operands = 0 : i64, tpu.core_type = #tpu.core_type<tc>, window_params = [{pipeline_mode = #tpu.pipeline_mode<synchronous>, transform_indices = @transform_0, window_bounds = array<i64: 2, 8, 128>}, {pipeline_mode = #tpu.pipeline_mode<synchronous>, transform_indices = @transform_1, window_bounds = array<i64: 2, 8>}, {pipeline_mode = #tpu.pipeline_mode<synchronous>, transform_indices = @transform_2, window_bounds = array<i64: 128, 128>}, {pipeline_mode = #tpu.pipeline_mode<synchronous>, transform_indices = @transform_3, window_bounds = array<i64: 1, 128>}, {pipeline_mode = #tpu.pipeline_mode<synchronous>, transform_indices = @transform_4, window_bounds = array<i64: 1, 128>}, {pipeline_mode = #tpu.pipeline_mode<synchronous>, transform_indices = @transform_5, window_bounds = array<i64: 2, 8>}]} {
    %c0 = arith.constant 0 : index
    %c0_0 = arith.constant 0 : index
    %c0_1 = arith.constant 0 : index
    %0 = vector.load %arg1[%c0, %c0_0, %c0_1] : memref<2x8x128xf32, #tpu.memory_space<vmem>>, vector<2x8x128xf32>
    %c0_2 = arith.constant 0 : index
    %c0_3 = arith.constant 0 : index
    %1 = vector.load %arg2[%c0_2, %c0_3] : memref<2x8xi32, #tpu.memory_space<vmem>>, vector<2x8xi32>
    %c0_4 = arith.constant 0 : index
    %c0_5 = arith.constant 0 : index
    %2 = vector.load %arg3[%c0_4, %c0_5] : memref<128x128xf32, #tpu.memory_space<vmem>>, vector<128x128xf32>
    %c0_6 = arith.constant 0 : index
    %c0_7 = arith.constant 0 : index
    %3 = vector.load %arg4[%c0_6, %c0_7] : memref<1x128xf32, #tpu.memory_space<vmem>>, vector<1x128xf32>
    %4 = vector.extract_strided_slice %0 {offsets = [0, 0, 0], sizes = [2, 1, 128], strides = [1, 1, 1]} : vector<2x8x128xf32> to vector<2x1x128xf32>
    %5 = vector.shape_cast %4 : vector<2x1x128xf32> to vector<2x128xf32>
    %6 = vector.broadcast %3 : vector<1x128xf32> to vector<2x128xf32>
    %7 = arith.addf %6, %5 : vector<2x128xf32>
    %8 = vector.shape_cast %7 : vector<2x128xf32> to vector<2x128x1xf32>
    %9 = vector.shape_cast %2 : vector<128x128xf32> to vector<1x128x128xf32>
    %10 = vector.broadcast %8 : vector<2x128x1xf32> to vector<2x128x128xf32>
    %11 = vector.broadcast %9 : vector<1x128x128xf32> to vector<2x128x128xf32>
    %12 = arith.addf %10, %11 : vector<2x128x128xf32>
    %13 = vector.extract_strided_slice %0 {offsets = [0, 1, 0], sizes = [2, 1, 128], strides = [1, 1, 1]} : vector<2x8x128xf32> to vector<2x1x128xf32>
    %14 = vector.shape_cast %13 : vector<2x1x128xf32> to vector<2x128xf32>
    %15 = vector.shape_cast %14 : vector<2x128xf32> to vector<2x1x128xf32>
    %16 = vector.broadcast %15 : vector<2x1x128xf32> to vector<2x128x128xf32>
    %17 = arith.addf %12, %16 : vector<2x128x128xf32>
    %cst = arith.constant dense<0xFF800000> : vector<2x128xf32>
    %18 = vector.multi_reduction <maximumf>, %17, %cst [1] : vector<2x128x128xf32> to vector<2x128xf32>
    %19 = vector.shape_cast %18 : vector<2x128xf32> to vector<2x1x128xf32>
    %20 = tpu.iota {dimensions = array<i32: 1>} : vector<2x128x128xi32>
    %21 = vector.broadcast %19 : vector<2x1x128xf32> to vector<2x128x128xf32>
    %22 = arith.cmpf oeq, %17, %21 : vector<2x128x128xf32>
    %c128_i32 = arith.constant 128 : i32
    %23 = vector.broadcast %c128_i32 : i32 to vector<2x128x128xi32>
    %24 = arith.select %22, %20, %23 : vector<2x128x128xi1>, vector<2x128x128xi32>
    %cst_8 = arith.constant dense<2147483647> : vector<2x128xi32>
    %25 = vector.multi_reduction <minsi>, %24, %cst_8 [1] : vector<2x128x128xi32> to vector<2x128xi32>
    %cst_9 = arith.constant dense<0xFF800000> : vector<2x128xf32>
    %26 = vector.multi_reduction <maximumf>, %17, %cst_9 [1] : vector<2x128x128xf32> to vector<2x128xf32>
    %27 = vector.extract_strided_slice %1 {offsets = [0, 1], sizes = [2, 1], strides = [1, 1]} : vector<2x8xi32> to vector<2x1xi32>
    %c0_i32 = arith.constant 0 : i32
    %28 = vector.broadcast %c0_i32 : i32 to vector<2x1xi32>
    %29 = arith.cmpi sgt, %27, %28 : vector<2x1xi32>
    %30 = vector.shape_cast %29 : vector<2x1xi1> to vector<2x1xi1>
    %31 = vector.broadcast %30 : vector<2x1xi1> to vector<2x128xi1>
    %32 = arith.select %31, %26, %7 : vector<2x128xi1>, vector<2x128xf32>
    %33 = vector.shape_cast %32 : vector<2x128xf32> to vector<2x128x1xf32>
    %34 = vector.shape_cast %2 : vector<128x128xf32> to vector<1x128x128xf32>
    %35 = vector.broadcast %33 : vector<2x128x1xf32> to vector<2x128x128xf32>
    %36 = vector.broadcast %34 : vector<1x128x128xf32> to vector<2x128x128xf32>
    %37 = arith.addf %35, %36 : vector<2x128x128xf32>
    %38 = vector.extract_strided_slice %0 {offsets = [0, 2, 0], sizes = [2, 1, 128], strides = [1, 1, 1]} : vector<2x8x128xf32> to vector<2x1x128xf32>
    %39 = vector.shape_cast %38 : vector<2x1x128xf32> to vector<2x128xf32>
    %40 = vector.shape_cast %39 : vector<2x128xf32> to vector<2x1x128xf32>
    %41 = vector.broadcast %40 : vector<2x1x128xf32> to vector<2x128x128xf32>
    %42 = arith.addf %37, %41 : vector<2x128x128xf32>
    %cst_10 = arith.constant dense<0xFF800000> : vector<2x128xf32>
    %43 = vector.multi_reduction <maximumf>, %42, %cst_10 [1] : vector<2x128x128xf32> to vector<2x128xf32>
    %44 = vector.shape_cast %43 : vector<2x128xf32> to vector<2x1x128xf32>
    %45 = tpu.iota {dimensions = array<i32: 1>} : vector<2x128x128xi32>
    %46 = vector.broadcast %44 : vector<2x1x128xf32> to vector<2x128x128xf32>
    %47 = arith.cmpf oeq, %42, %46 : vector<2x128x128xf32>
    %c128_i32_11 = arith.constant 128 : i32
    %48 = vector.broadcast %c128_i32_11 : i32 to vector<2x128x128xi32>
    %49 = arith.select %47, %45, %48 : vector<2x128x128xi1>, vector<2x128x128xi32>
    %cst_12 = arith.constant dense<2147483647> : vector<2x128xi32>
    %50 = vector.multi_reduction <minsi>, %49, %cst_12 [1] : vector<2x128x128xi32> to vector<2x128xi32>
    %cst_13 = arith.constant dense<0xFF800000> : vector<2x128xf32>
    %51 = vector.multi_reduction <maximumf>, %42, %cst_13 [1] : vector<2x128x128xf32> to vector<2x128xf32>
    %52 = vector.extract_strided_slice %1 {offsets = [0, 2], sizes = [2, 1], strides = [1, 1]} : vector<2x8xi32> to vector<2x1xi32>
    %c0_i32_14 = arith.constant 0 : i32
    %53 = vector.broadcast %c0_i32_14 : i32 to vector<2x1xi32>
    %54 = arith.cmpi sgt, %52, %53 : vector<2x1xi32>
    %55 = vector.shape_cast %54 : vector<2x1xi1> to vector<2x1xi1>
    %56 = vector.broadcast %55 : vector<2x1xi1> to vector<2x128xi1>
    %57 = arith.select %56, %51, %32 : vector<2x128xi1>, vector<2x128xf32>
    %58 = vector.shape_cast %57 : vector<2x128xf32> to vector<2x128x1xf32>
    %59 = vector.shape_cast %2 : vector<128x128xf32> to vector<1x128x128xf32>
    %60 = vector.broadcast %58 : vector<2x128x1xf32> to vector<2x128x128xf32>
    %61 = vector.broadcast %59 : vector<1x128x128xf32> to vector<2x128x128xf32>
    %62 = arith.addf %60, %61 : vector<2x128x128xf32>
    %63 = vector.extract_strided_slice %0 {offsets = [0, 3, 0], sizes = [2, 1, 128], strides = [1, 1, 1]} : vector<2x8x128xf32> to vector<2x1x128xf32>
    %64 = vector.shape_cast %63 : vector<2x1x128xf32> to vector<2x128xf32>
    %65 = vector.shape_cast %64 : vector<2x128xf32> to vector<2x1x128xf32>
    %66 = vector.broadcast %65 : vector<2x1x128xf32> to vector<2x128x128xf32>
    %67 = arith.addf %62, %66 : vector<2x128x128xf32>
    %cst_15 = arith.constant dense<0xFF800000> : vector<2x128xf32>
    %68 = vector.multi_reduction <maximumf>, %67, %cst_15 [1] : vector<2x128x128xf32> to vector<2x128xf32>
    %69 = vector.shape_cast %68 : vector<2x128xf32> to vector<2x1x128xf32>
    %70 = tpu.iota {dimensions = array<i32: 1>} : vector<2x128x128xi32>
    %71 = vector.broadcast %69 : vector<2x1x128xf32> to vector<2x128x128xf32>
    %72 = arith.cmpf oeq, %67, %71 : vector<2x128x128xf32>
    %c128_i32_16 = arith.constant 128 : i32
    %73 = vector.broadcast %c128_i32_16 : i32 to vector<2x128x128xi32>
    %74 = arith.select %72, %70, %73 : vector<2x128x128xi1>, vector<2x128x128xi32>
    %cst_17 = arith.constant dense<2147483647> : vector<2x128xi32>
    %75 = vector.multi_reduction <minsi>, %74, %cst_17 [1] : vector<2x128x128xi32> to vector<2x128xi32>
    %cst_18 = arith.constant dense<0xFF800000> : vector<2x128xf32>
    %76 = vector.multi_reduction <maximumf>, %67, %cst_18 [1] : vector<2x128x128xf32> to vector<2x128xf32>
    %77 = vector.extract_strided_slice %1 {offsets = [0, 3], sizes = [2, 1], strides = [1, 1]} : vector<2x8xi32> to vector<2x1xi32>
    %c0_i32_19 = arith.constant 0 : i32
    %78 = vector.broadcast %c0_i32_19 : i32 to vector<2x1xi32>
    %79 = arith.cmpi sgt, %77, %78 : vector<2x1xi32>
    %80 = vector.shape_cast %79 : vector<2x1xi1> to vector<2x1xi1>
    %81 = vector.broadcast %80 : vector<2x1xi1> to vector<2x128xi1>
    %82 = arith.select %81, %76, %57 : vector<2x128xi1>, vector<2x128xf32>
    %83 = vector.shape_cast %82 : vector<2x128xf32> to vector<2x128x1xf32>
    %84 = vector.shape_cast %2 : vector<128x128xf32> to vector<1x128x128xf32>
    %85 = vector.broadcast %83 : vector<2x128x1xf32> to vector<2x128x128xf32>
    %86 = vector.broadcast %84 : vector<1x128x128xf32> to vector<2x128x128xf32>
    %87 = arith.addf %85, %86 : vector<2x128x128xf32>
    %88 = vector.extract_strided_slice %0 {offsets = [0, 4, 0], sizes = [2, 1, 128], strides = [1, 1, 1]} : vector<2x8x128xf32> to vector<2x1x128xf32>
    %89 = vector.shape_cast %88 : vector<2x1x128xf32> to vector<2x128xf32>
    %90 = vector.shape_cast %89 : vector<2x128xf32> to vector<2x1x128xf32>
    %91 = vector.broadcast %90 : vector<2x1x128xf32> to vector<2x128x128xf32>
    %92 = arith.addf %87, %91 : vector<2x128x128xf32>
    %cst_20 = arith.constant dense<0xFF800000> : vector<2x128xf32>
    %93 = vector.multi_reduction <maximumf>, %92, %cst_20 [1] : vector<2x128x128xf32> to vector<2x128xf32>
    %94 = vector.shape_cast %93 : vector<2x128xf32> to vector<2x1x128xf32>
    %95 = tpu.iota {dimensions = array<i32: 1>} : vector<2x128x128xi32>
    %96 = vector.broadcast %94 : vector<2x1x128xf32> to vector<2x128x128xf32>
    %97 = arith.cmpf oeq, %92, %96 : vector<2x128x128xf32>
    %c128_i32_21 = arith.constant 128 : i32
    %98 = vector.broadcast %c128_i32_21 : i32 to vector<2x128x128xi32>
    %99 = arith.select %97, %95, %98 : vector<2x128x128xi1>, vector<2x128x128xi32>
    %cst_22 = arith.constant dense<2147483647> : vector<2x128xi32>
    %100 = vector.multi_reduction <minsi>, %99, %cst_22 [1] : vector<2x128x128xi32> to vector<2x128xi32>
    %cst_23 = arith.constant dense<0xFF800000> : vector<2x128xf32>
    %101 = vector.multi_reduction <maximumf>, %92, %cst_23 [1] : vector<2x128x128xf32> to vector<2x128xf32>
    %102 = vector.extract_strided_slice %1 {offsets = [0, 4], sizes = [2, 1], strides = [1, 1]} : vector<2x8xi32> to vector<2x1xi32>
    %c0_i32_24 = arith.constant 0 : i32
    %103 = vector.broadcast %c0_i32_24 : i32 to vector<2x1xi32>
    %104 = arith.cmpi sgt, %102, %103 : vector<2x1xi32>
    %105 = vector.shape_cast %104 : vector<2x1xi1> to vector<2x1xi1>
    %106 = vector.broadcast %105 : vector<2x1xi1> to vector<2x128xi1>
    %107 = arith.select %106, %101, %82 : vector<2x128xi1>, vector<2x128xf32>
    %108 = vector.shape_cast %107 : vector<2x128xf32> to vector<2x128x1xf32>
    %109 = vector.shape_cast %2 : vector<128x128xf32> to vector<1x128x128xf32>
    %110 = vector.broadcast %108 : vector<2x128x1xf32> to vector<2x128x128xf32>
    %111 = vector.broadcast %109 : vector<1x128x128xf32> to vector<2x128x128xf32>
    %112 = arith.addf %110, %111 : vector<2x128x128xf32>
    %113 = vector.extract_strided_slice %0 {offsets = [0, 5, 0], sizes = [2, 1, 128], strides = [1, 1, 1]} : vector<2x8x128xf32> to vector<2x1x128xf32>
    %114 = vector.shape_cast %113 : vector<2x1x128xf32> to vector<2x128xf32>
    %115 = vector.shape_cast %114 : vector<2x128xf32> to vector<2x1x128xf32>
    %116 = vector.broadcast %115 : vector<2x1x128xf32> to vector<2x128x128xf32>
    %117 = arith.addf %112, %116 : vector<2x128x128xf32>
    %cst_25 = arith.constant dense<0xFF800000> : vector<2x128xf32>
    %118 = vector.multi_reduction <maximumf>, %117, %cst_25 [1] : vector<2x128x128xf32> to vector<2x128xf32>
    %119 = vector.shape_cast %118 : vector<2x128xf32> to vector<2x1x128xf32>
    %120 = tpu.iota {dimensions = array<i32: 1>} : vector<2x128x128xi32>
    %121 = vector.broadcast %119 : vector<2x1x128xf32> to vector<2x128x128xf32>
    %122 = arith.cmpf oeq, %117, %121 : vector<2x128x128xf32>
    %c128_i32_26 = arith.constant 128 : i32
    %123 = vector.broadcast %c128_i32_26 : i32 to vector<2x128x128xi32>
    %124 = arith.select %122, %120, %123 : vector<2x128x128xi1>, vector<2x128x128xi32>
    %cst_27 = arith.constant dense<2147483647> : vector<2x128xi32>
    %125 = vector.multi_reduction <minsi>, %124, %cst_27 [1] : vector<2x128x128xi32> to vector<2x128xi32>
    %cst_28 = arith.constant dense<0xFF800000> : vector<2x128xf32>
    %126 = vector.multi_reduction <maximumf>, %117, %cst_28 [1] : vector<2x128x128xf32> to vector<2x128xf32>
    %127 = vector.extract_strided_slice %1 {offsets = [0, 5], sizes = [2, 1], strides = [1, 1]} : vector<2x8xi32> to vector<2x1xi32>
    %c0_i32_29 = arith.constant 0 : i32
    %128 = vector.broadcast %c0_i32_29 : i32 to vector<2x1xi32>
    %129 = arith.cmpi sgt, %127, %128 : vector<2x1xi32>
    %130 = vector.shape_cast %129 : vector<2x1xi1> to vector<2x1xi1>
    %131 = vector.broadcast %130 : vector<2x1xi1> to vector<2x128xi1>
    %132 = arith.select %131, %126, %107 : vector<2x128xi1>, vector<2x128xf32>
    %133 = vector.shape_cast %132 : vector<2x128xf32> to vector<2x128x1xf32>
    %134 = vector.shape_cast %2 : vector<128x128xf32> to vector<1x128x128xf32>
    %135 = vector.broadcast %133 : vector<2x128x1xf32> to vector<2x128x128xf32>
    %136 = vector.broadcast %134 : vector<1x128x128xf32> to vector<2x128x128xf32>
    %137 = arith.addf %135, %136 : vector<2x128x128xf32>
    %138 = vector.extract_strided_slice %0 {offsets = [0, 6, 0], sizes = [2, 1, 128], strides = [1, 1, 1]} : vector<2x8x128xf32> to vector<2x1x128xf32>
    %139 = vector.shape_cast %138 : vector<2x1x128xf32> to vector<2x128xf32>
    %140 = vector.shape_cast %139 : vector<2x128xf32> to vector<2x1x128xf32>
    %141 = vector.broadcast %140 : vector<2x1x128xf32> to vector<2x128x128xf32>
    %142 = arith.addf %137, %141 : vector<2x128x128xf32>
    %cst_30 = arith.constant dense<0xFF800000> : vector<2x128xf32>
    %143 = vector.multi_reduction <maximumf>, %142, %cst_30 [1] : vector<2x128x128xf32> to vector<2x128xf32>
    %144 = vector.shape_cast %143 : vector<2x128xf32> to vector<2x1x128xf32>
    %145 = tpu.iota {dimensions = array<i32: 1>} : vector<2x128x128xi32>
    %146 = vector.broadcast %144 : vector<2x1x128xf32> to vector<2x128x128xf32>
    %147 = arith.cmpf oeq, %142, %146 : vector<2x128x128xf32>
    %c128_i32_31 = arith.constant 128 : i32
    %148 = vector.broadcast %c128_i32_31 : i32 to vector<2x128x128xi32>
    %149 = arith.select %147, %145, %148 : vector<2x128x128xi1>, vector<2x128x128xi32>
    %cst_32 = arith.constant dense<2147483647> : vector<2x128xi32>
    %150 = vector.multi_reduction <minsi>, %149, %cst_32 [1] : vector<2x128x128xi32> to vector<2x128xi32>
    %cst_33 = arith.constant dense<0xFF800000> : vector<2x128xf32>
    %151 = vector.multi_reduction <maximumf>, %142, %cst_33 [1] : vector<2x128x128xf32> to vector<2x128xf32>
    %152 = vector.extract_strided_slice %1 {offsets = [0, 6], sizes = [2, 1], strides = [1, 1]} : vector<2x8xi32> to vector<2x1xi32>
    %c0_i32_34 = arith.constant 0 : i32
    %153 = vector.broadcast %c0_i32_34 : i32 to vector<2x1xi32>
    %154 = arith.cmpi sgt, %152, %153 : vector<2x1xi32>
    %155 = vector.shape_cast %154 : vector<2x1xi1> to vector<2x1xi1>
    %156 = vector.broadcast %155 : vector<2x1xi1> to vector<2x128xi1>
    %157 = arith.select %156, %151, %132 : vector<2x128xi1>, vector<2x128xf32>
    %158 = vector.shape_cast %157 : vector<2x128xf32> to vector<2x128x1xf32>
    %159 = vector.shape_cast %2 : vector<128x128xf32> to vector<1x128x128xf32>
    %160 = vector.broadcast %158 : vector<2x128x1xf32> to vector<2x128x128xf32>
    %161 = vector.broadcast %159 : vector<1x128x128xf32> to vector<2x128x128xf32>
    %162 = arith.addf %160, %161 : vector<2x128x128xf32>
    %163 = vector.extract_strided_slice %0 {offsets = [0, 7, 0], sizes = [2, 1, 128], strides = [1, 1, 1]} : vector<2x8x128xf32> to vector<2x1x128xf32>
    %164 = vector.shape_cast %163 : vector<2x1x128xf32> to vector<2x128xf32>
    %165 = vector.shape_cast %164 : vector<2x128xf32> to vector<2x1x128xf32>
    %166 = vector.broadcast %165 : vector<2x1x128xf32> to vector<2x128x128xf32>
    %167 = arith.addf %162, %166 : vector<2x128x128xf32>
    %cst_35 = arith.constant dense<0xFF800000> : vector<2x128xf32>
    %168 = vector.multi_reduction <maximumf>, %167, %cst_35 [1] : vector<2x128x128xf32> to vector<2x128xf32>
    %169 = vector.shape_cast %168 : vector<2x128xf32> to vector<2x1x128xf32>
    %170 = tpu.iota {dimensions = array<i32: 1>} : vector<2x128x128xi32>
    %171 = vector.broadcast %169 : vector<2x1x128xf32> to vector<2x128x128xf32>
    %172 = arith.cmpf oeq, %167, %171 : vector<2x128x128xf32>
    %c128_i32_36 = arith.constant 128 : i32
    %173 = vector.broadcast %c128_i32_36 : i32 to vector<2x128x128xi32>
    %174 = arith.select %172, %170, %173 : vector<2x128x128xi1>, vector<2x128x128xi32>
    %cst_37 = arith.constant dense<2147483647> : vector<2x128xi32>
    %175 = vector.multi_reduction <minsi>, %174, %cst_37 [1] : vector<2x128x128xi32> to vector<2x128xi32>
    %cst_38 = arith.constant dense<0xFF800000> : vector<2x128xf32>
    %176 = vector.multi_reduction <maximumf>, %167, %cst_38 [1] : vector<2x128x128xf32> to vector<2x128xf32>
    %177 = vector.extract_strided_slice %1 {offsets = [0, 7], sizes = [2, 1], strides = [1, 1]} : vector<2x8xi32> to vector<2x1xi32>
    %c0_i32_39 = arith.constant 0 : i32
    %178 = vector.broadcast %c0_i32_39 : i32 to vector<2x1xi32>
    %179 = arith.cmpi sgt, %177, %178 : vector<2x1xi32>
    %180 = vector.shape_cast %179 : vector<2x1xi1> to vector<2x1xi1>
    %181 = vector.broadcast %180 : vector<2x1xi1> to vector<2x128xi1>
    %182 = arith.select %181, %176, %157 : vector<2x128xi1>, vector<2x128xf32>
    %c0_40 = arith.constant 0 : index
    %c0_41 = arith.constant 0 : index
    %183 = vector.load %arg5[%c0_40, %c0_41] : memref<1x128xf32, #tpu.memory_space<vmem>>, vector<1x128xf32>
    %184 = vector.broadcast %183 : vector<1x128xf32> to vector<2x128xf32>
    %185 = arith.addf %182, %184 : vector<2x128xf32>
    %cst_42 = arith.constant dense<0xFF800000> : vector<2xf32>
    %186 = vector.multi_reduction <maximumf>, %185, %cst_42 [1] : vector<2x128xf32> to vector<2xf32>
    %187 = vector.shape_cast %186 : vector<2xf32> to vector<2x1xf32>
    %188 = tpu.iota {dimensions = array<i32: 1>} : vector<2x128xi32>
    %189 = vector.broadcast %187 : vector<2x1xf32> to vector<2x128xf32>
    %190 = arith.cmpf oeq, %185, %189 : vector<2x128xf32>
    %c128_i32_43 = arith.constant 128 : i32
    %191 = vector.broadcast %c128_i32_43 : i32 to vector<2x128xi32>
    %192 = arith.select %190, %188, %191 : vector<2x128xi1>, vector<2x128xi32>
    %cst_44 = arith.constant dense<2147483647> : vector<2xi32>
    %193 = vector.multi_reduction <minsi>, %192, %cst_44 [1] : vector<2x128xi32> to vector<2xi32>
    %194 = vector.shape_cast %193 : vector<2xi32> to vector<2x1xi32>
    %cst_45 = arith.constant dense<0> : vector<2xi32>
    %195 = vector.multi_reduction <add>, %1, %cst_45 [1] : vector<2x8xi32> to vector<2xi32>
    %196 = vector.shape_cast %195 : vector<2xi32> to vector<2x1xi32>
    %c1_i32 = arith.constant 1 : i32
    %197 = vector.broadcast %c1_i32 : i32 to vector<2x1xi32>
    %198 = arith.subi %196, %197 : vector<2x1xi32>
    %c0_i32_46 = arith.constant 0 : i32
    %199 = vector.broadcast %c0_i32_46 : i32 to vector<2x1xi32>
    %c7_i32 = arith.constant 7 : i32
    %200 = vector.broadcast %c7_i32 : i32 to vector<2x1xi32>
    %201 = arith.cmpi eq, %198, %200 : vector<2x1xi32>
    %202 = arith.select %201, %194, %199 : vector<2x1xi1>, vector<2x1xi32>
    %203 = tpu.iota {dimensions = array<i32: 1>} : vector<2x128xi32>
    %204 = vector.broadcast %194 : vector<2x1xi32> to vector<2x128xi32>
    %205 = arith.cmpi eq, %203, %204 : vector<2x128xi32>
    %c0_i32_47 = arith.constant 0 : i32
    %206 = vector.broadcast %c0_i32_47 : i32 to vector<2x128xi32>
    %207 = arith.select %205, %175, %206 : vector<2x128xi1>, vector<2x128xi32>
    %cst_48 = arith.constant dense<0> : vector<2xi32>
    %208 = vector.multi_reduction <add>, %207, %cst_48 [1] : vector<2x128xi32> to vector<2xi32>
    %209 = vector.shape_cast %208 : vector<2xi32> to vector<2x1xi32>
    %210 = vector.extract_strided_slice %1 {offsets = [0, 7], sizes = [2, 1], strides = [1, 1]} : vector<2x8xi32> to vector<2x1xi32>
    %c0_i32_49 = arith.constant 0 : i32
    %211 = vector.broadcast %c0_i32_49 : i32 to vector<2x1xi32>
    %212 = arith.cmpi sgt, %210, %211 : vector<2x1xi32>
    %c6_i32 = arith.constant 6 : i32
    %213 = vector.broadcast %c6_i32 : i32 to vector<2x1xi32>
    %214 = arith.cmpi eq, %198, %213 : vector<2x1xi32>
    %215 = arith.select %214, %194, %199 : vector<2x1xi1>, vector<2x1xi32>
    %216 = arith.select %212, %209, %215 : vector<2x1xi1>, vector<2x1xi32>
    %217 = arith.select %212, %209, %194 : vector<2x1xi1>, vector<2x1xi32>
    %218 = tpu.iota {dimensions = array<i32: 1>} : vector<2x128xi32>
    %219 = vector.broadcast %217 : vector<2x1xi32> to vector<2x128xi32>
    %220 = arith.cmpi eq, %218, %219 : vector<2x128xi32>
    %c0_i32_50 = arith.constant 0 : i32
    %221 = vector.broadcast %c0_i32_50 : i32 to vector<2x128xi32>
    %222 = arith.select %220, %150, %221 : vector<2x128xi1>, vector<2x128xi32>
    %cst_51 = arith.constant dense<0> : vector<2xi32>
    %223 = vector.multi_reduction <add>, %222, %cst_51 [1] : vector<2x128xi32> to vector<2xi32>
    %224 = vector.shape_cast %223 : vector<2xi32> to vector<2x1xi32>
    %225 = vector.extract_strided_slice %1 {offsets = [0, 6], sizes = [2, 1], strides = [1, 1]} : vector<2x8xi32> to vector<2x1xi32>
    %c0_i32_52 = arith.constant 0 : i32
    %226 = vector.broadcast %c0_i32_52 : i32 to vector<2x1xi32>
    %227 = arith.cmpi sgt, %225, %226 : vector<2x1xi32>
    %c5_i32 = arith.constant 5 : i32
    %228 = vector.broadcast %c5_i32 : i32 to vector<2x1xi32>
    %229 = arith.cmpi eq, %198, %228 : vector<2x1xi32>
    %230 = arith.select %229, %194, %199 : vector<2x1xi1>, vector<2x1xi32>
    %231 = arith.select %227, %224, %230 : vector<2x1xi1>, vector<2x1xi32>
    %232 = arith.select %227, %224, %194 : vector<2x1xi1>, vector<2x1xi32>
    %233 = tpu.iota {dimensions = array<i32: 1>} : vector<2x128xi32>
    %234 = vector.broadcast %232 : vector<2x1xi32> to vector<2x128xi32>
    %235 = arith.cmpi eq, %233, %234 : vector<2x128xi32>
    %c0_i32_53 = arith.constant 0 : i32
    %236 = vector.broadcast %c0_i32_53 : i32 to vector<2x128xi32>
    %237 = arith.select %235, %125, %236 : vector<2x128xi1>, vector<2x128xi32>
    %cst_54 = arith.constant dense<0> : vector<2xi32>
    %238 = vector.multi_reduction <add>, %237, %cst_54 [1] : vector<2x128xi32> to vector<2xi32>
    %239 = vector.shape_cast %238 : vector<2xi32> to vector<2x1xi32>
    %240 = vector.extract_strided_slice %1 {offsets = [0, 5], sizes = [2, 1], strides = [1, 1]} : vector<2x8xi32> to vector<2x1xi32>
    %c0_i32_55 = arith.constant 0 : i32
    %241 = vector.broadcast %c0_i32_55 : i32 to vector<2x1xi32>
    %242 = arith.cmpi sgt, %240, %241 : vector<2x1xi32>
    %c4_i32 = arith.constant 4 : i32
    %243 = vector.broadcast %c4_i32 : i32 to vector<2x1xi32>
    %244 = arith.cmpi eq, %198, %243 : vector<2x1xi32>
    %245 = arith.select %244, %194, %199 : vector<2x1xi1>, vector<2x1xi32>
    %246 = arith.select %242, %239, %245 : vector<2x1xi1>, vector<2x1xi32>
    %247 = arith.select %242, %239, %194 : vector<2x1xi1>, vector<2x1xi32>
    %248 = tpu.iota {dimensions = array<i32: 1>} : vector<2x128xi32>
    %249 = vector.broadcast %247 : vector<2x1xi32> to vector<2x128xi32>
    %250 = arith.cmpi eq, %248, %249 : vector<2x128xi32>
    %c0_i32_56 = arith.constant 0 : i32
    %251 = vector.broadcast %c0_i32_56 : i32 to vector<2x128xi32>
    %252 = arith.select %250, %100, %251 : vector<2x128xi1>, vector<2x128xi32>
    %cst_57 = arith.constant dense<0> : vector<2xi32>
    %253 = vector.multi_reduction <add>, %252, %cst_57 [1] : vector<2x128xi32> to vector<2xi32>
    %254 = vector.shape_cast %253 : vector<2xi32> to vector<2x1xi32>
    %255 = vector.extract_strided_slice %1 {offsets = [0, 4], sizes = [2, 1], strides = [1, 1]} : vector<2x8xi32> to vector<2x1xi32>
    %c0_i32_58 = arith.constant 0 : i32
    %256 = vector.broadcast %c0_i32_58 : i32 to vector<2x1xi32>
    %257 = arith.cmpi sgt, %255, %256 : vector<2x1xi32>
    %c3_i32 = arith.constant 3 : i32
    %258 = vector.broadcast %c3_i32 : i32 to vector<2x1xi32>
    %259 = arith.cmpi eq, %198, %258 : vector<2x1xi32>
    %260 = arith.select %259, %194, %199 : vector<2x1xi1>, vector<2x1xi32>
    %261 = arith.select %257, %254, %260 : vector<2x1xi1>, vector<2x1xi32>
    %262 = arith.select %257, %254, %194 : vector<2x1xi1>, vector<2x1xi32>
    %263 = tpu.iota {dimensions = array<i32: 1>} : vector<2x128xi32>
    %264 = vector.broadcast %262 : vector<2x1xi32> to vector<2x128xi32>
    %265 = arith.cmpi eq, %263, %264 : vector<2x128xi32>
    %c0_i32_59 = arith.constant 0 : i32
    %266 = vector.broadcast %c0_i32_59 : i32 to vector<2x128xi32>
    %267 = arith.select %265, %75, %266 : vector<2x128xi1>, vector<2x128xi32>
    %cst_60 = arith.constant dense<0> : vector<2xi32>
    %268 = vector.multi_reduction <add>, %267, %cst_60 [1] : vector<2x128xi32> to vector<2xi32>
    %269 = vector.shape_cast %268 : vector<2xi32> to vector<2x1xi32>
    %270 = vector.extract_strided_slice %1 {offsets = [0, 3], sizes = [2, 1], strides = [1, 1]} : vector<2x8xi32> to vector<2x1xi32>
    %c0_i32_61 = arith.constant 0 : i32
    %271 = vector.broadcast %c0_i32_61 : i32 to vector<2x1xi32>
    %272 = arith.cmpi sgt, %270, %271 : vector<2x1xi32>
    %c2_i32 = arith.constant 2 : i32
    %273 = vector.broadcast %c2_i32 : i32 to vector<2x1xi32>
    %274 = arith.cmpi eq, %198, %273 : vector<2x1xi32>
    %275 = arith.select %274, %194, %199 : vector<2x1xi1>, vector<2x1xi32>
    %276 = arith.select %272, %269, %275 : vector<2x1xi1>, vector<2x1xi32>
    %277 = arith.select %272, %269, %194 : vector<2x1xi1>, vector<2x1xi32>
    %278 = tpu.iota {dimensions = array<i32: 1>} : vector<2x128xi32>
    %279 = vector.broadcast %277 : vector<2x1xi32> to vector<2x128xi32>
    %280 = arith.cmpi eq, %278, %279 : vector<2x128xi32>
    %c0_i32_62 = arith.constant 0 : i32
    %281 = vector.broadcast %c0_i32_62 : i32 to vector<2x128xi32>
    %282 = arith.select %280, %50, %281 : vector<2x128xi1>, vector<2x128xi32>
    %cst_63 = arith.constant dense<0> : vector<2xi32>
    %283 = vector.multi_reduction <add>, %282, %cst_63 [1] : vector<2x128xi32> to vector<2xi32>
    %284 = vector.shape_cast %283 : vector<2xi32> to vector<2x1xi32>
    %285 = vector.extract_strided_slice %1 {offsets = [0, 2], sizes = [2, 1], strides = [1, 1]} : vector<2x8xi32> to vector<2x1xi32>
    %c0_i32_64 = arith.constant 0 : i32
    %286 = vector.broadcast %c0_i32_64 : i32 to vector<2x1xi32>
    %287 = arith.cmpi sgt, %285, %286 : vector<2x1xi32>
    %c1_i32_65 = arith.constant 1 : i32
    %288 = vector.broadcast %c1_i32_65 : i32 to vector<2x1xi32>
    %289 = arith.cmpi eq, %198, %288 : vector<2x1xi32>
    %290 = arith.select %289, %194, %199 : vector<2x1xi1>, vector<2x1xi32>
    %291 = arith.select %287, %284, %290 : vector<2x1xi1>, vector<2x1xi32>
    %292 = arith.select %287, %284, %194 : vector<2x1xi1>, vector<2x1xi32>
    %293 = tpu.iota {dimensions = array<i32: 1>} : vector<2x128xi32>
    %294 = vector.broadcast %292 : vector<2x1xi32> to vector<2x128xi32>
    %295 = arith.cmpi eq, %293, %294 : vector<2x128xi32>
    %c0_i32_66 = arith.constant 0 : i32
    %296 = vector.broadcast %c0_i32_66 : i32 to vector<2x128xi32>
    %297 = arith.select %295, %25, %296 : vector<2x128xi1>, vector<2x128xi32>
    %cst_67 = arith.constant dense<0> : vector<2xi32>
    %298 = vector.multi_reduction <add>, %297, %cst_67 [1] : vector<2x128xi32> to vector<2xi32>
    %299 = vector.shape_cast %298 : vector<2xi32> to vector<2x1xi32>
    %300 = vector.extract_strided_slice %1 {offsets = [0, 1], sizes = [2, 1], strides = [1, 1]} : vector<2x8xi32> to vector<2x1xi32>
    %c0_i32_68 = arith.constant 0 : i32
    %301 = vector.broadcast %c0_i32_68 : i32 to vector<2x1xi32>
    %302 = arith.cmpi sgt, %300, %301 : vector<2x1xi32>
    %c0_i32_69 = arith.constant 0 : i32
    %303 = vector.broadcast %c0_i32_69 : i32 to vector<2x1xi32>
    %304 = arith.cmpi eq, %198, %303 : vector<2x1xi32>
    %305 = arith.select %304, %194, %199 : vector<2x1xi1>, vector<2x1xi32>
    %306 = arith.select %302, %299, %305 : vector<2x1xi1>, vector<2x1xi32>
    %307 = tpu.concatenate %306, %291, %276, %261, %246, %231, %216, %202 in 1 : vector<2x1xi32>, vector<2x1xi32>, vector<2x1xi32>, vector<2x1xi32>, vector<2x1xi32>, vector<2x1xi32>, vector<2x1xi32>, vector<2x1xi32> -> vector<2x8xi32>
    %c0_70 = arith.constant 0 : index
    %c0_71 = arith.constant 0 : index
    %308 = vector.load %arg6[%c0_70, %c0_71] : memref<2x8xi32, #tpu.memory_space<vmem>>, vector<2x8xi32>
    tpu.vector_store %arg6[%c0_70, %c0_71], %307 {strides = array<i32>} : memref<2x8xi32, #tpu.memory_space<vmem>>, vector<2x8xi32>,
    return
  }
  func.func @transform_0(%arg0: i32) -> (i32, i32, i32) {
    %c0_i32 = arith.constant 0 : i32
    %c0_i32_0 = arith.constant 0 : i32
    %c0_i32_1 = arith.constant 0 : i32
    %c0_i32_2 = arith.constant 0 : i32
    return %c0_i32, %c0_i32_0, %c0_i32_1 : i32, i32, i32
  }
  func.func @transform_1(%arg0: i32) -> (i32, i32) {
    %c0_i32 = arith.constant 0 : i32
    %c0_i32_0 = arith.constant 0 : i32
    %c0_i32_1 = arith.constant 0 : i32
    return %c0_i32, %c0_i32_0 : i32, i32
  }
  func.func @transform_2(%arg0: i32) -> (i32, i32) {
    %c0_i32 = arith.constant 0 : i32
    %c0_i32_0 = arith.constant 0 : i32
    %c0_i32_1 = arith.constant 0 : i32
    return %c0_i32, %c0_i32_0 : i32, i32
  }
  func.func @transform_3(%arg0: i32) -> (i32, i32) {
    %c0_i32 = arith.constant 0 : i32
    %c0_i32_0 = arith.constant 0 : i32
    %c0_i32_1 = arith.constant 0 : i32
    return %c0_i32, %c0_i32_0 : i32, i32
  }
  func.func @transform_4(%arg0: i32) -> (i32, i32) {
    %c0_i32 = arith.constant 0 : i32
    %c0_i32_0 = arith.constant 0 : i32
    %c0_i32_1 = arith.constant 0 : i32
    return %c0_i32, %c0_i32_0 : i32, i32
  }
  func.func @transform_5(%arg0: i32) -> (i32, i32) {
    %c0_i32 = arith.constant 0 : i32
    %c0_i32_0 = arith.constant 0 : i32
    %c0_i32_1 = arith.constant 0 : i32
    return %c0_i32, %c0_i32_0 : i32, i32
  }
}

module attributes {stable_mosaic.version = 11 : i64} {
  func.func @_bilstm_classifier_kernel(%arg0: i32, %arg1: memref<1x8x32xf32, #tpu.memory_space<vmem>>, %arg2: memref<32x128xf32, #tpu.memory_space<vmem>>, %arg3: memref<1x128xf32, #tpu.memory_space<vmem>>, %arg4: memref<16x64xf32, #tpu.memory_space<vmem>>, %arg5: memref<16x64xf32, #tpu.memory_space<vmem>>, %arg6: memref<32x128xf32, #tpu.memory_space<vmem>>, %arg7: memref<1x128xf32, #tpu.memory_space<vmem>>, %arg8: memref<1x128xf32, #tpu.memory_space<vmem>>, %arg9: memref<1x128xf32, #tpu.memory_space<vmem>>, %arg10: memref<1x8x128xf32, #tpu.memory_space<vmem>>) attributes {dimension_semantics = [#tpu.dimension_semantics<parallel>], iteration_bounds = array<i64: 2>, scalar_prefetch = 0 : i64, scratch_operands = 0 : i64, tpu.core_type = #tpu.core_type<tc>, window_params = [{transform_indices = @transform_0, window_bounds = array<i64: 1, 8, 32>}, {pipeline_mode = #tpu.pipeline_mode<synchronous>, transform_indices = @transform_1, window_bounds = array<i64: 32, 128>}, {pipeline_mode = #tpu.pipeline_mode<synchronous>, transform_indices = @transform_2, window_bounds = array<i64: 1, 128>}, {pipeline_mode = #tpu.pipeline_mode<synchronous>, transform_indices = @transform_3, window_bounds = array<i64: 16, 64>}, {pipeline_mode = #tpu.pipeline_mode<synchronous>, transform_indices = @transform_4, window_bounds = array<i64: 16, 64>}, {pipeline_mode = #tpu.pipeline_mode<synchronous>, transform_indices = @transform_5, window_bounds = array<i64: 32, 128>}, {pipeline_mode = #tpu.pipeline_mode<synchronous>, transform_indices = @transform_6, window_bounds = array<i64: 1, 128>}, {pipeline_mode = #tpu.pipeline_mode<synchronous>, transform_indices = @transform_7, window_bounds = array<i64: 1, 128>}, {pipeline_mode = #tpu.pipeline_mode<synchronous>, transform_indices = @transform_8, window_bounds = array<i64: 1, 128>}, {transform_indices = @transform_9, window_bounds = array<i64: 1, 8, 128>}]} {
    %c0 = arith.constant 0 : index
    %c0_0 = arith.constant 0 : index
    %c0_1 = arith.constant 0 : index
    %0 = vector.load %arg1[%c0, %c0_0, %c0_1] : memref<1x8x32xf32, #tpu.memory_space<vmem>>, vector<1x8x32xf32>
    %1 = vector.shape_cast %0 : vector<1x8x32xf32> to vector<8x32xf32>
    %c0_2 = arith.constant 0 : index
    %c0_3 = arith.constant 0 : index
    %2 = vector.load %arg2[%c0_2, %c0_3] : memref<32x128xf32, #tpu.memory_space<vmem>>, vector<32x128xf32>
    %cst = arith.constant dense<0.000000e+00> : vector<8x128xf32>
    %3 = tpu.matmul %1, %2, %cst {dimension_numbers = #tpu.dot_dimension_numbers<[1], [0], [0], [1], [0, 0, 1, 1], [], []>} : vector<8x32xf32>, vector<32x128xf32>, vector<8x128xf32> -> vector<8x128xf32>
    %c0_4 = arith.constant 0 : index
    %c0_5 = arith.constant 0 : index
    %4 = vector.load %arg3[%c0_4, %c0_5] : memref<1x128xf32, #tpu.memory_space<vmem>>, vector<1x128xf32>
    %5 = vector.broadcast %4 : vector<1x128xf32> to vector<8x128xf32>
    %6 = arith.addf %3, %5 : vector<8x128xf32>
    %c0_6 = arith.constant 0 : index
    %c0_7 = arith.constant 0 : index
    %7 = vector.load %arg4[%c0_6, %c0_7] : memref<16x64xf32, #tpu.memory_space<vmem>>, vector<16x64xf32>
    %c0_8 = arith.constant 0 : index
    %c0_9 = arith.constant 0 : index
    %8 = vector.load %arg5[%c0_8, %c0_9] : memref<16x64xf32, #tpu.memory_space<vmem>>, vector<16x64xf32>
    %cst_10 = arith.constant 0.000000e+00 : f32
    %9 = vector.broadcast %cst_10 : f32 to vector<1x16xf32>
    %cst_11 = arith.constant 0.000000e+00 : f32
    %10 = vector.broadcast %cst_11 : f32 to vector<1x16xf32>
    %11 = vector.extract_strided_slice %6 {offsets = [0, 0], sizes = [1, 64], strides = [1, 1]} : vector<8x128xf32> to vector<1x64xf32>
    %cst_12 = arith.constant dense<0.000000e+00> : vector<1x64xf32>
    %12 = tpu.matmul %9, %7, %cst_12 {dimension_numbers = #tpu.dot_dimension_numbers<[1], [0], [0], [1], [0, 0, 1, 1], [], []>} : vector<1x16xf32>, vector<16x64xf32>, vector<1x64xf32> -> vector<1x64xf32>
    %13 = arith.addf %11, %12 : vector<1x64xf32>
    %14 = vector.extract_strided_slice %13 {offsets = [0, 0], sizes = [1, 16], strides = [1, 1]} : vector<1x64xf32> to vector<1x16xf32>
    %15 = arith.negf %14 : vector<1x16xf32>
    %16 = math.exp %15 : vector<1x16xf32>
    %cst_13 = arith.constant 1.000000e+00 : f32
    %17 = vector.broadcast %cst_13 : f32 to vector<1x16xf32>
    %18 = arith.addf %17, %16 : vector<1x16xf32>
    %19 = arith.divf %17, %18 : vector<1x16xf32>
    %20 = vector.extract_strided_slice %13 {offsets = [0, 16], sizes = [1, 16], strides = [1, 1]} : vector<1x64xf32> to vector<1x16xf32>
    %21 = arith.negf %20 : vector<1x16xf32>
    %22 = math.exp %21 : vector<1x16xf32>
    %cst_14 = arith.constant 1.000000e+00 : f32
    %23 = vector.broadcast %cst_14 : f32 to vector<1x16xf32>
    %24 = arith.addf %23, %22 : vector<1x16xf32>
    %25 = arith.divf %23, %24 : vector<1x16xf32>
    %26 = vector.extract_strided_slice %13 {offsets = [0, 32], sizes = [1, 16], strides = [1, 1]} : vector<1x64xf32> to vector<1x16xf32>
    %27 = math.tanh %26 : vector<1x16xf32>
    %28 = vector.extract_strided_slice %13 {offsets = [0, 48], sizes = [1, 16], strides = [1, 1]} : vector<1x64xf32> to vector<1x16xf32>
    %29 = arith.negf %28 : vector<1x16xf32>
    %30 = math.exp %29 : vector<1x16xf32>
    %cst_15 = arith.constant 1.000000e+00 : f32
    %31 = vector.broadcast %cst_15 : f32 to vector<1x16xf32>
    %32 = arith.addf %31, %30 : vector<1x16xf32>
    %33 = arith.divf %31, %32 : vector<1x16xf32>
    %34 = arith.mulf %25, %10 : vector<1x16xf32>
    %35 = arith.mulf %19, %27 : vector<1x16xf32>
    %36 = arith.addf %34, %35 : vector<1x16xf32>
    %37 = math.tanh %36 : vector<1x16xf32>
    %38 = arith.mulf %33, %37 : vector<1x16xf32>
    %39 = vector.extract_strided_slice %6 {offsets = [1, 0], sizes = [1, 64], strides = [1, 1]} : vector<8x128xf32> to vector<1x64xf32>
    %cst_16 = arith.constant dense<0.000000e+00> : vector<1x64xf32>
    %40 = tpu.matmul %38, %7, %cst_16 {dimension_numbers = #tpu.dot_dimension_numbers<[1], [0], [0], [1], [0, 0, 1, 1], [], []>} : vector<1x16xf32>, vector<16x64xf32>, vector<1x64xf32> -> vector<1x64xf32>
    %41 = arith.addf %39, %40 : vector<1x64xf32>
    %42 = vector.extract_strided_slice %41 {offsets = [0, 0], sizes = [1, 16], strides = [1, 1]} : vector<1x64xf32> to vector<1x16xf32>
    %43 = arith.negf %42 : vector<1x16xf32>
    %44 = math.exp %43 : vector<1x16xf32>
    %cst_17 = arith.constant 1.000000e+00 : f32
    %45 = vector.broadcast %cst_17 : f32 to vector<1x16xf32>
    %46 = arith.addf %45, %44 : vector<1x16xf32>
    %47 = arith.divf %45, %46 : vector<1x16xf32>
    %48 = vector.extract_strided_slice %41 {offsets = [0, 16], sizes = [1, 16], strides = [1, 1]} : vector<1x64xf32> to vector<1x16xf32>
    %49 = arith.negf %48 : vector<1x16xf32>
    %50 = math.exp %49 : vector<1x16xf32>
    %cst_18 = arith.constant 1.000000e+00 : f32
    %51 = vector.broadcast %cst_18 : f32 to vector<1x16xf32>
    %52 = arith.addf %51, %50 : vector<1x16xf32>
    %53 = arith.divf %51, %52 : vector<1x16xf32>
    %54 = vector.extract_strided_slice %41 {offsets = [0, 32], sizes = [1, 16], strides = [1, 1]} : vector<1x64xf32> to vector<1x16xf32>
    %55 = math.tanh %54 : vector<1x16xf32>
    %56 = vector.extract_strided_slice %41 {offsets = [0, 48], sizes = [1, 16], strides = [1, 1]} : vector<1x64xf32> to vector<1x16xf32>
    %57 = arith.negf %56 : vector<1x16xf32>
    %58 = math.exp %57 : vector<1x16xf32>
    %cst_19 = arith.constant 1.000000e+00 : f32
    %59 = vector.broadcast %cst_19 : f32 to vector<1x16xf32>
    %60 = arith.addf %59, %58 : vector<1x16xf32>
    %61 = arith.divf %59, %60 : vector<1x16xf32>
    %62 = arith.mulf %53, %36 : vector<1x16xf32>
    %63 = arith.mulf %47, %55 : vector<1x16xf32>
    %64 = arith.addf %62, %63 : vector<1x16xf32>
    %65 = math.tanh %64 : vector<1x16xf32>
    %66 = arith.mulf %61, %65 : vector<1x16xf32>
    %67 = vector.extract_strided_slice %6 {offsets = [2, 0], sizes = [1, 64], strides = [1, 1]} : vector<8x128xf32> to vector<1x64xf32>
    %cst_20 = arith.constant dense<0.000000e+00> : vector<1x64xf32>
    %68 = tpu.matmul %66, %7, %cst_20 {dimension_numbers = #tpu.dot_dimension_numbers<[1], [0], [0], [1], [0, 0, 1, 1], [], []>} : vector<1x16xf32>, vector<16x64xf32>, vector<1x64xf32> -> vector<1x64xf32>
    %69 = arith.addf %67, %68 : vector<1x64xf32>
    %70 = vector.extract_strided_slice %69 {offsets = [0, 0], sizes = [1, 16], strides = [1, 1]} : vector<1x64xf32> to vector<1x16xf32>
    %71 = arith.negf %70 : vector<1x16xf32>
    %72 = math.exp %71 : vector<1x16xf32>
    %cst_21 = arith.constant 1.000000e+00 : f32
    %73 = vector.broadcast %cst_21 : f32 to vector<1x16xf32>
    %74 = arith.addf %73, %72 : vector<1x16xf32>
    %75 = arith.divf %73, %74 : vector<1x16xf32>
    %76 = vector.extract_strided_slice %69 {offsets = [0, 16], sizes = [1, 16], strides = [1, 1]} : vector<1x64xf32> to vector<1x16xf32>
    %77 = arith.negf %76 : vector<1x16xf32>
    %78 = math.exp %77 : vector<1x16xf32>
    %cst_22 = arith.constant 1.000000e+00 : f32
    %79 = vector.broadcast %cst_22 : f32 to vector<1x16xf32>
    %80 = arith.addf %79, %78 : vector<1x16xf32>
    %81 = arith.divf %79, %80 : vector<1x16xf32>
    %82 = vector.extract_strided_slice %69 {offsets = [0, 32], sizes = [1, 16], strides = [1, 1]} : vector<1x64xf32> to vector<1x16xf32>
    %83 = math.tanh %82 : vector<1x16xf32>
    %84 = vector.extract_strided_slice %69 {offsets = [0, 48], sizes = [1, 16], strides = [1, 1]} : vector<1x64xf32> to vector<1x16xf32>
    %85 = arith.negf %84 : vector<1x16xf32>
    %86 = math.exp %85 : vector<1x16xf32>
    %cst_23 = arith.constant 1.000000e+00 : f32
    %87 = vector.broadcast %cst_23 : f32 to vector<1x16xf32>
    %88 = arith.addf %87, %86 : vector<1x16xf32>
    %89 = arith.divf %87, %88 : vector<1x16xf32>
    %90 = arith.mulf %81, %64 : vector<1x16xf32>
    %91 = arith.mulf %75, %83 : vector<1x16xf32>
    %92 = arith.addf %90, %91 : vector<1x16xf32>
    %93 = math.tanh %92 : vector<1x16xf32>
    %94 = arith.mulf %89, %93 : vector<1x16xf32>
    %95 = vector.extract_strided_slice %6 {offsets = [3, 0], sizes = [1, 64], strides = [1, 1]} : vector<8x128xf32> to vector<1x64xf32>
    %cst_24 = arith.constant dense<0.000000e+00> : vector<1x64xf32>
    %96 = tpu.matmul %94, %7, %cst_24 {dimension_numbers = #tpu.dot_dimension_numbers<[1], [0], [0], [1], [0, 0, 1, 1], [], []>} : vector<1x16xf32>, vector<16x64xf32>, vector<1x64xf32> -> vector<1x64xf32>
    %97 = arith.addf %95, %96 : vector<1x64xf32>
    %98 = vector.extract_strided_slice %97 {offsets = [0, 0], sizes = [1, 16], strides = [1, 1]} : vector<1x64xf32> to vector<1x16xf32>
    %99 = arith.negf %98 : vector<1x16xf32>
    %100 = math.exp %99 : vector<1x16xf32>
    %cst_25 = arith.constant 1.000000e+00 : f32
    %101 = vector.broadcast %cst_25 : f32 to vector<1x16xf32>
    %102 = arith.addf %101, %100 : vector<1x16xf32>
    %103 = arith.divf %101, %102 : vector<1x16xf32>
    %104 = vector.extract_strided_slice %97 {offsets = [0, 16], sizes = [1, 16], strides = [1, 1]} : vector<1x64xf32> to vector<1x16xf32>
    %105 = arith.negf %104 : vector<1x16xf32>
    %106 = math.exp %105 : vector<1x16xf32>
    %cst_26 = arith.constant 1.000000e+00 : f32
    %107 = vector.broadcast %cst_26 : f32 to vector<1x16xf32>
    %108 = arith.addf %107, %106 : vector<1x16xf32>
    %109 = arith.divf %107, %108 : vector<1x16xf32>
    %110 = vector.extract_strided_slice %97 {offsets = [0, 32], sizes = [1, 16], strides = [1, 1]} : vector<1x64xf32> to vector<1x16xf32>
    %111 = math.tanh %110 : vector<1x16xf32>
    %112 = vector.extract_strided_slice %97 {offsets = [0, 48], sizes = [1, 16], strides = [1, 1]} : vector<1x64xf32> to vector<1x16xf32>
    %113 = arith.negf %112 : vector<1x16xf32>
    %114 = math.exp %113 : vector<1x16xf32>
    %cst_27 = arith.constant 1.000000e+00 : f32
    %115 = vector.broadcast %cst_27 : f32 to vector<1x16xf32>
    %116 = arith.addf %115, %114 : vector<1x16xf32>
    %117 = arith.divf %115, %116 : vector<1x16xf32>
    %118 = arith.mulf %109, %92 : vector<1x16xf32>
    %119 = arith.mulf %103, %111 : vector<1x16xf32>
    %120 = arith.addf %118, %119 : vector<1x16xf32>
    %121 = math.tanh %120 : vector<1x16xf32>
    %122 = arith.mulf %117, %121 : vector<1x16xf32>
    %123 = vector.extract_strided_slice %6 {offsets = [4, 0], sizes = [1, 64], strides = [1, 1]} : vector<8x128xf32> to vector<1x64xf32>
    %cst_28 = arith.constant dense<0.000000e+00> : vector<1x64xf32>
    %124 = tpu.matmul %122, %7, %cst_28 {dimension_numbers = #tpu.dot_dimension_numbers<[1], [0], [0], [1], [0, 0, 1, 1], [], []>} : vector<1x16xf32>, vector<16x64xf32>, vector<1x64xf32> -> vector<1x64xf32>
    %125 = arith.addf %123, %124 : vector<1x64xf32>
    %126 = vector.extract_strided_slice %125 {offsets = [0, 0], sizes = [1, 16], strides = [1, 1]} : vector<1x64xf32> to vector<1x16xf32>
    %127 = arith.negf %126 : vector<1x16xf32>
    %128 = math.exp %127 : vector<1x16xf32>
    %cst_29 = arith.constant 1.000000e+00 : f32
    %129 = vector.broadcast %cst_29 : f32 to vector<1x16xf32>
    %130 = arith.addf %129, %128 : vector<1x16xf32>
    %131 = arith.divf %129, %130 : vector<1x16xf32>
    %132 = vector.extract_strided_slice %125 {offsets = [0, 16], sizes = [1, 16], strides = [1, 1]} : vector<1x64xf32> to vector<1x16xf32>
    %133 = arith.negf %132 : vector<1x16xf32>
    %134 = math.exp %133 : vector<1x16xf32>
    %cst_30 = arith.constant 1.000000e+00 : f32
    %135 = vector.broadcast %cst_30 : f32 to vector<1x16xf32>
    %136 = arith.addf %135, %134 : vector<1x16xf32>
    %137 = arith.divf %135, %136 : vector<1x16xf32>
    %138 = vector.extract_strided_slice %125 {offsets = [0, 32], sizes = [1, 16], strides = [1, 1]} : vector<1x64xf32> to vector<1x16xf32>
    %139 = math.tanh %138 : vector<1x16xf32>
    %140 = vector.extract_strided_slice %125 {offsets = [0, 48], sizes = [1, 16], strides = [1, 1]} : vector<1x64xf32> to vector<1x16xf32>
    %141 = arith.negf %140 : vector<1x16xf32>
    %142 = math.exp %141 : vector<1x16xf32>
    %cst_31 = arith.constant 1.000000e+00 : f32
    %143 = vector.broadcast %cst_31 : f32 to vector<1x16xf32>
    %144 = arith.addf %143, %142 : vector<1x16xf32>
    %145 = arith.divf %143, %144 : vector<1x16xf32>
    %146 = arith.mulf %137, %120 : vector<1x16xf32>
    %147 = arith.mulf %131, %139 : vector<1x16xf32>
    %148 = arith.addf %146, %147 : vector<1x16xf32>
    %149 = math.tanh %148 : vector<1x16xf32>
    %150 = arith.mulf %145, %149 : vector<1x16xf32>
    %151 = vector.extract_strided_slice %6 {offsets = [5, 0], sizes = [1, 64], strides = [1, 1]} : vector<8x128xf32> to vector<1x64xf32>
    %cst_32 = arith.constant dense<0.000000e+00> : vector<1x64xf32>
    %152 = tpu.matmul %150, %7, %cst_32 {dimension_numbers = #tpu.dot_dimension_numbers<[1], [0], [0], [1], [0, 0, 1, 1], [], []>} : vector<1x16xf32>, vector<16x64xf32>, vector<1x64xf32> -> vector<1x64xf32>
    %153 = arith.addf %151, %152 : vector<1x64xf32>
    %154 = vector.extract_strided_slice %153 {offsets = [0, 0], sizes = [1, 16], strides = [1, 1]} : vector<1x64xf32> to vector<1x16xf32>
    %155 = arith.negf %154 : vector<1x16xf32>
    %156 = math.exp %155 : vector<1x16xf32>
    %cst_33 = arith.constant 1.000000e+00 : f32
    %157 = vector.broadcast %cst_33 : f32 to vector<1x16xf32>
    %158 = arith.addf %157, %156 : vector<1x16xf32>
    %159 = arith.divf %157, %158 : vector<1x16xf32>
    %160 = vector.extract_strided_slice %153 {offsets = [0, 16], sizes = [1, 16], strides = [1, 1]} : vector<1x64xf32> to vector<1x16xf32>
    %161 = arith.negf %160 : vector<1x16xf32>
    %162 = math.exp %161 : vector<1x16xf32>
    %cst_34 = arith.constant 1.000000e+00 : f32
    %163 = vector.broadcast %cst_34 : f32 to vector<1x16xf32>
    %164 = arith.addf %163, %162 : vector<1x16xf32>
    %165 = arith.divf %163, %164 : vector<1x16xf32>
    %166 = vector.extract_strided_slice %153 {offsets = [0, 32], sizes = [1, 16], strides = [1, 1]} : vector<1x64xf32> to vector<1x16xf32>
    %167 = math.tanh %166 : vector<1x16xf32>
    %168 = vector.extract_strided_slice %153 {offsets = [0, 48], sizes = [1, 16], strides = [1, 1]} : vector<1x64xf32> to vector<1x16xf32>
    %169 = arith.negf %168 : vector<1x16xf32>
    %170 = math.exp %169 : vector<1x16xf32>
    %cst_35 = arith.constant 1.000000e+00 : f32
    %171 = vector.broadcast %cst_35 : f32 to vector<1x16xf32>
    %172 = arith.addf %171, %170 : vector<1x16xf32>
    %173 = arith.divf %171, %172 : vector<1x16xf32>
    %174 = arith.mulf %165, %148 : vector<1x16xf32>
    %175 = arith.mulf %159, %167 : vector<1x16xf32>
    %176 = arith.addf %174, %175 : vector<1x16xf32>
    %177 = math.tanh %176 : vector<1x16xf32>
    %178 = arith.mulf %173, %177 : vector<1x16xf32>
    %179 = vector.extract_strided_slice %6 {offsets = [6, 0], sizes = [1, 64], strides = [1, 1]} : vector<8x128xf32> to vector<1x64xf32>
    %cst_36 = arith.constant dense<0.000000e+00> : vector<1x64xf32>
    %180 = tpu.matmul %178, %7, %cst_36 {dimension_numbers = #tpu.dot_dimension_numbers<[1], [0], [0], [1], [0, 0, 1, 1], [], []>} : vector<1x16xf32>, vector<16x64xf32>, vector<1x64xf32> -> vector<1x64xf32>
    %181 = arith.addf %179, %180 : vector<1x64xf32>
    %182 = vector.extract_strided_slice %181 {offsets = [0, 0], sizes = [1, 16], strides = [1, 1]} : vector<1x64xf32> to vector<1x16xf32>
    %183 = arith.negf %182 : vector<1x16xf32>
    %184 = math.exp %183 : vector<1x16xf32>
    %cst_37 = arith.constant 1.000000e+00 : f32
    %185 = vector.broadcast %cst_37 : f32 to vector<1x16xf32>
    %186 = arith.addf %185, %184 : vector<1x16xf32>
    %187 = arith.divf %185, %186 : vector<1x16xf32>
    %188 = vector.extract_strided_slice %181 {offsets = [0, 16], sizes = [1, 16], strides = [1, 1]} : vector<1x64xf32> to vector<1x16xf32>
    %189 = arith.negf %188 : vector<1x16xf32>
    %190 = math.exp %189 : vector<1x16xf32>
    %cst_38 = arith.constant 1.000000e+00 : f32
    %191 = vector.broadcast %cst_38 : f32 to vector<1x16xf32>
    %192 = arith.addf %191, %190 : vector<1x16xf32>
    %193 = arith.divf %191, %192 : vector<1x16xf32>
    %194 = vector.extract_strided_slice %181 {offsets = [0, 32], sizes = [1, 16], strides = [1, 1]} : vector<1x64xf32> to vector<1x16xf32>
    %195 = math.tanh %194 : vector<1x16xf32>
    %196 = vector.extract_strided_slice %181 {offsets = [0, 48], sizes = [1, 16], strides = [1, 1]} : vector<1x64xf32> to vector<1x16xf32>
    %197 = arith.negf %196 : vector<1x16xf32>
    %198 = math.exp %197 : vector<1x16xf32>
    %cst_39 = arith.constant 1.000000e+00 : f32
    %199 = vector.broadcast %cst_39 : f32 to vector<1x16xf32>
    %200 = arith.addf %199, %198 : vector<1x16xf32>
    %201 = arith.divf %199, %200 : vector<1x16xf32>
    %202 = arith.mulf %193, %176 : vector<1x16xf32>
    %203 = arith.mulf %187, %195 : vector<1x16xf32>
    %204 = arith.addf %202, %203 : vector<1x16xf32>
    %205 = math.tanh %204 : vector<1x16xf32>
    %206 = arith.mulf %201, %205 : vector<1x16xf32>
    %207 = vector.extract_strided_slice %6 {offsets = [7, 0], sizes = [1, 64], strides = [1, 1]} : vector<8x128xf32> to vector<1x64xf32>
    %cst_40 = arith.constant dense<0.000000e+00> : vector<1x64xf32>
    %208 = tpu.matmul %206, %7, %cst_40 {dimension_numbers = #tpu.dot_dimension_numbers<[1], [0], [0], [1], [0, 0, 1, 1], [], []>} : vector<1x16xf32>, vector<16x64xf32>, vector<1x64xf32> -> vector<1x64xf32>
    %209 = arith.addf %207, %208 : vector<1x64xf32>
    %210 = vector.extract_strided_slice %209 {offsets = [0, 0], sizes = [1, 16], strides = [1, 1]} : vector<1x64xf32> to vector<1x16xf32>
    %211 = arith.negf %210 : vector<1x16xf32>
    %212 = math.exp %211 : vector<1x16xf32>
    %cst_41 = arith.constant 1.000000e+00 : f32
    %213 = vector.broadcast %cst_41 : f32 to vector<1x16xf32>
    %214 = arith.addf %213, %212 : vector<1x16xf32>
    %215 = arith.divf %213, %214 : vector<1x16xf32>
    %216 = vector.extract_strided_slice %209 {offsets = [0, 16], sizes = [1, 16], strides = [1, 1]} : vector<1x64xf32> to vector<1x16xf32>
    %217 = arith.negf %216 : vector<1x16xf32>
    %218 = math.exp %217 : vector<1x16xf32>
    %cst_42 = arith.constant 1.000000e+00 : f32
    %219 = vector.broadcast %cst_42 : f32 to vector<1x16xf32>
    %220 = arith.addf %219, %218 : vector<1x16xf32>
    %221 = arith.divf %219, %220 : vector<1x16xf32>
    %222 = vector.extract_strided_slice %209 {offsets = [0, 32], sizes = [1, 16], strides = [1, 1]} : vector<1x64xf32> to vector<1x16xf32>
    %223 = math.tanh %222 : vector<1x16xf32>
    %224 = vector.extract_strided_slice %209 {offsets = [0, 48], sizes = [1, 16], strides = [1, 1]} : vector<1x64xf32> to vector<1x16xf32>
    %225 = arith.negf %224 : vector<1x16xf32>
    %226 = math.exp %225 : vector<1x16xf32>
    %cst_43 = arith.constant 1.000000e+00 : f32
    %227 = vector.broadcast %cst_43 : f32 to vector<1x16xf32>
    %228 = arith.addf %227, %226 : vector<1x16xf32>
    %229 = arith.divf %227, %228 : vector<1x16xf32>
    %230 = arith.mulf %221, %204 : vector<1x16xf32>
    %231 = arith.mulf %215, %223 : vector<1x16xf32>
    %232 = arith.addf %230, %231 : vector<1x16xf32>
    %233 = math.tanh %232 : vector<1x16xf32>
    %234 = arith.mulf %229, %233 : vector<1x16xf32>
    %cst_44 = arith.constant 0.000000e+00 : f32
    %235 = vector.broadcast %cst_44 : f32 to vector<1x16xf32>
    %cst_45 = arith.constant 0.000000e+00 : f32
    %236 = vector.broadcast %cst_45 : f32 to vector<1x16xf32>
    %237 = vector.extract_strided_slice %6 {offsets = [7, 64], sizes = [1, 64], strides = [1, 1]} : vector<8x128xf32> to vector<1x64xf32>
    %cst_46 = arith.constant dense<0.000000e+00> : vector<1x64xf32>
    %238 = tpu.matmul %235, %8, %cst_46 {dimension_numbers = #tpu.dot_dimension_numbers<[1], [0], [0], [1], [0, 0, 1, 1], [], []>} : vector<1x16xf32>, vector<16x64xf32>, vector<1x64xf32> -> vector<1x64xf32>
    %239 = arith.addf %237, %238 : vector<1x64xf32>
    %240 = vector.extract_strided_slice %239 {offsets = [0, 0], sizes = [1, 16], strides = [1, 1]} : vector<1x64xf32> to vector<1x16xf32>
    %241 = arith.negf %240 : vector<1x16xf32>
    %242 = math.exp %241 : vector<1x16xf32>
    %cst_47 = arith.constant 1.000000e+00 : f32
    %243 = vector.broadcast %cst_47 : f32 to vector<1x16xf32>
    %244 = arith.addf %243, %242 : vector<1x16xf32>
    %245 = arith.divf %243, %244 : vector<1x16xf32>
    %246 = vector.extract_strided_slice %239 {offsets = [0, 16], sizes = [1, 16], strides = [1, 1]} : vector<1x64xf32> to vector<1x16xf32>
    %247 = arith.negf %246 : vector<1x16xf32>
    %248 = math.exp %247 : vector<1x16xf32>
    %cst_48 = arith.constant 1.000000e+00 : f32
    %249 = vector.broadcast %cst_48 : f32 to vector<1x16xf32>
    %250 = arith.addf %249, %248 : vector<1x16xf32>
    %251 = arith.divf %249, %250 : vector<1x16xf32>
    %252 = vector.extract_strided_slice %239 {offsets = [0, 32], sizes = [1, 16], strides = [1, 1]} : vector<1x64xf32> to vector<1x16xf32>
    %253 = math.tanh %252 : vector<1x16xf32>
    %254 = vector.extract_strided_slice %239 {offsets = [0, 48], sizes = [1, 16], strides = [1, 1]} : vector<1x64xf32> to vector<1x16xf32>
    %255 = arith.negf %254 : vector<1x16xf32>
    %256 = math.exp %255 : vector<1x16xf32>
    %cst_49 = arith.constant 1.000000e+00 : f32
    %257 = vector.broadcast %cst_49 : f32 to vector<1x16xf32>
    %258 = arith.addf %257, %256 : vector<1x16xf32>
    %259 = arith.divf %257, %258 : vector<1x16xf32>
    %260 = arith.mulf %251, %236 : vector<1x16xf32>
    %261 = arith.mulf %245, %253 : vector<1x16xf32>
    %262 = arith.addf %260, %261 : vector<1x16xf32>
    %263 = math.tanh %262 : vector<1x16xf32>
    %264 = arith.mulf %259, %263 : vector<1x16xf32>
    %265 = vector.extract_strided_slice %6 {offsets = [6, 64], sizes = [1, 64], strides = [1, 1]} : vector<8x128xf32> to vector<1x64xf32>
    %cst_50 = arith.constant dense<0.000000e+00> : vector<1x64xf32>
    %266 = tpu.matmul %264, %8, %cst_50 {dimension_numbers = #tpu.dot_dimension_numbers<[1], [0], [0], [1], [0, 0, 1, 1], [], []>} : vector<1x16xf32>, vector<16x64xf32>, vector<1x64xf32> -> vector<1x64xf32>
    %267 = arith.addf %265, %266 : vector<1x64xf32>
    %268 = vector.extract_strided_slice %267 {offsets = [0, 0], sizes = [1, 16], strides = [1, 1]} : vector<1x64xf32> to vector<1x16xf32>
    %269 = arith.negf %268 : vector<1x16xf32>
    %270 = math.exp %269 : vector<1x16xf32>
    %cst_51 = arith.constant 1.000000e+00 : f32
    %271 = vector.broadcast %cst_51 : f32 to vector<1x16xf32>
    %272 = arith.addf %271, %270 : vector<1x16xf32>
    %273 = arith.divf %271, %272 : vector<1x16xf32>
    %274 = vector.extract_strided_slice %267 {offsets = [0, 16], sizes = [1, 16], strides = [1, 1]} : vector<1x64xf32> to vector<1x16xf32>
    %275 = arith.negf %274 : vector<1x16xf32>
    %276 = math.exp %275 : vector<1x16xf32>
    %cst_52 = arith.constant 1.000000e+00 : f32
    %277 = vector.broadcast %cst_52 : f32 to vector<1x16xf32>
    %278 = arith.addf %277, %276 : vector<1x16xf32>
    %279 = arith.divf %277, %278 : vector<1x16xf32>
    %280 = vector.extract_strided_slice %267 {offsets = [0, 32], sizes = [1, 16], strides = [1, 1]} : vector<1x64xf32> to vector<1x16xf32>
    %281 = math.tanh %280 : vector<1x16xf32>
    %282 = vector.extract_strided_slice %267 {offsets = [0, 48], sizes = [1, 16], strides = [1, 1]} : vector<1x64xf32> to vector<1x16xf32>
    %283 = arith.negf %282 : vector<1x16xf32>
    %284 = math.exp %283 : vector<1x16xf32>
    %cst_53 = arith.constant 1.000000e+00 : f32
    %285 = vector.broadcast %cst_53 : f32 to vector<1x16xf32>
    %286 = arith.addf %285, %284 : vector<1x16xf32>
    %287 = arith.divf %285, %286 : vector<1x16xf32>
    %288 = arith.mulf %279, %262 : vector<1x16xf32>
    %289 = arith.mulf %273, %281 : vector<1x16xf32>
    %290 = arith.addf %288, %289 : vector<1x16xf32>
    %291 = math.tanh %290 : vector<1x16xf32>
    %292 = arith.mulf %287, %291 : vector<1x16xf32>
    %293 = vector.extract_strided_slice %6 {offsets = [5, 64], sizes = [1, 64], strides = [1, 1]} : vector<8x128xf32> to vector<1x64xf32>
    %cst_54 = arith.constant dense<0.000000e+00> : vector<1x64xf32>
    %294 = tpu.matmul %292, %8, %cst_54 {dimension_numbers = #tpu.dot_dimension_numbers<[1], [0], [0], [1], [0, 0, 1, 1], [], []>} : vector<1x16xf32>, vector<16x64xf32>, vector<1x64xf32> -> vector<1x64xf32>
    %295 = arith.addf %293, %294 : vector<1x64xf32>
    %296 = vector.extract_strided_slice %295 {offsets = [0, 0], sizes = [1, 16], strides = [1, 1]} : vector<1x64xf32> to vector<1x16xf32>
    %297 = arith.negf %296 : vector<1x16xf32>
    %298 = math.exp %297 : vector<1x16xf32>
    %cst_55 = arith.constant 1.000000e+00 : f32
    %299 = vector.broadcast %cst_55 : f32 to vector<1x16xf32>
    %300 = arith.addf %299, %298 : vector<1x16xf32>
    %301 = arith.divf %299, %300 : vector<1x16xf32>
    %302 = vector.extract_strided_slice %295 {offsets = [0, 16], sizes = [1, 16], strides = [1, 1]} : vector<1x64xf32> to vector<1x16xf32>
    %303 = arith.negf %302 : vector<1x16xf32>
    %304 = math.exp %303 : vector<1x16xf32>
    %cst_56 = arith.constant 1.000000e+00 : f32
    %305 = vector.broadcast %cst_56 : f32 to vector<1x16xf32>
    %306 = arith.addf %305, %304 : vector<1x16xf32>
    %307 = arith.divf %305, %306 : vector<1x16xf32>
    %308 = vector.extract_strided_slice %295 {offsets = [0, 32], sizes = [1, 16], strides = [1, 1]} : vector<1x64xf32> to vector<1x16xf32>
    %309 = math.tanh %308 : vector<1x16xf32>
    %310 = vector.extract_strided_slice %295 {offsets = [0, 48], sizes = [1, 16], strides = [1, 1]} : vector<1x64xf32> to vector<1x16xf32>
    %311 = arith.negf %310 : vector<1x16xf32>
    %312 = math.exp %311 : vector<1x16xf32>
    %cst_57 = arith.constant 1.000000e+00 : f32
    %313 = vector.broadcast %cst_57 : f32 to vector<1x16xf32>
    %314 = arith.addf %313, %312 : vector<1x16xf32>
    %315 = arith.divf %313, %314 : vector<1x16xf32>
    %316 = arith.mulf %307, %290 : vector<1x16xf32>
    %317 = arith.mulf %301, %309 : vector<1x16xf32>
    %318 = arith.addf %316, %317 : vector<1x16xf32>
    %319 = math.tanh %318 : vector<1x16xf32>
    %320 = arith.mulf %315, %319 : vector<1x16xf32>
    %321 = vector.extract_strided_slice %6 {offsets = [4, 64], sizes = [1, 64], strides = [1, 1]} : vector<8x128xf32> to vector<1x64xf32>
    %cst_58 = arith.constant dense<0.000000e+00> : vector<1x64xf32>
    %322 = tpu.matmul %320, %8, %cst_58 {dimension_numbers = #tpu.dot_dimension_numbers<[1], [0], [0], [1], [0, 0, 1, 1], [], []>} : vector<1x16xf32>, vector<16x64xf32>, vector<1x64xf32> -> vector<1x64xf32>
    %323 = arith.addf %321, %322 : vector<1x64xf32>
    %324 = vector.extract_strided_slice %323 {offsets = [0, 0], sizes = [1, 16], strides = [1, 1]} : vector<1x64xf32> to vector<1x16xf32>
    %325 = arith.negf %324 : vector<1x16xf32>
    %326 = math.exp %325 : vector<1x16xf32>
    %cst_59 = arith.constant 1.000000e+00 : f32
    %327 = vector.broadcast %cst_59 : f32 to vector<1x16xf32>
    %328 = arith.addf %327, %326 : vector<1x16xf32>
    %329 = arith.divf %327, %328 : vector<1x16xf32>
    %330 = vector.extract_strided_slice %323 {offsets = [0, 16], sizes = [1, 16], strides = [1, 1]} : vector<1x64xf32> to vector<1x16xf32>
    %331 = arith.negf %330 : vector<1x16xf32>
    %332 = math.exp %331 : vector<1x16xf32>
    %cst_60 = arith.constant 1.000000e+00 : f32
    %333 = vector.broadcast %cst_60 : f32 to vector<1x16xf32>
    %334 = arith.addf %333, %332 : vector<1x16xf32>
    %335 = arith.divf %333, %334 : vector<1x16xf32>
    %336 = vector.extract_strided_slice %323 {offsets = [0, 32], sizes = [1, 16], strides = [1, 1]} : vector<1x64xf32> to vector<1x16xf32>
    %337 = math.tanh %336 : vector<1x16xf32>
    %338 = vector.extract_strided_slice %323 {offsets = [0, 48], sizes = [1, 16], strides = [1, 1]} : vector<1x64xf32> to vector<1x16xf32>
    %339 = arith.negf %338 : vector<1x16xf32>
    %340 = math.exp %339 : vector<1x16xf32>
    %cst_61 = arith.constant 1.000000e+00 : f32
    %341 = vector.broadcast %cst_61 : f32 to vector<1x16xf32>
    %342 = arith.addf %341, %340 : vector<1x16xf32>
    %343 = arith.divf %341, %342 : vector<1x16xf32>
    %344 = arith.mulf %335, %318 : vector<1x16xf32>
    %345 = arith.mulf %329, %337 : vector<1x16xf32>
    %346 = arith.addf %344, %345 : vector<1x16xf32>
    %347 = math.tanh %346 : vector<1x16xf32>
    %348 = arith.mulf %343, %347 : vector<1x16xf32>
    %349 = vector.extract_strided_slice %6 {offsets = [3, 64], sizes = [1, 64], strides = [1, 1]} : vector<8x128xf32> to vector<1x64xf32>
    %cst_62 = arith.constant dense<0.000000e+00> : vector<1x64xf32>
    %350 = tpu.matmul %348, %8, %cst_62 {dimension_numbers = #tpu.dot_dimension_numbers<[1], [0], [0], [1], [0, 0, 1, 1], [], []>} : vector<1x16xf32>, vector<16x64xf32>, vector<1x64xf32> -> vector<1x64xf32>
    %351 = arith.addf %349, %350 : vector<1x64xf32>
    %352 = vector.extract_strided_slice %351 {offsets = [0, 0], sizes = [1, 16], strides = [1, 1]} : vector<1x64xf32> to vector<1x16xf32>
    %353 = arith.negf %352 : vector<1x16xf32>
    %354 = math.exp %353 : vector<1x16xf32>
    %cst_63 = arith.constant 1.000000e+00 : f32
    %355 = vector.broadcast %cst_63 : f32 to vector<1x16xf32>
    %356 = arith.addf %355, %354 : vector<1x16xf32>
    %357 = arith.divf %355, %356 : vector<1x16xf32>
    %358 = vector.extract_strided_slice %351 {offsets = [0, 16], sizes = [1, 16], strides = [1, 1]} : vector<1x64xf32> to vector<1x16xf32>
    %359 = arith.negf %358 : vector<1x16xf32>
    %360 = math.exp %359 : vector<1x16xf32>
    %cst_64 = arith.constant 1.000000e+00 : f32
    %361 = vector.broadcast %cst_64 : f32 to vector<1x16xf32>
    %362 = arith.addf %361, %360 : vector<1x16xf32>
    %363 = arith.divf %361, %362 : vector<1x16xf32>
    %364 = vector.extract_strided_slice %351 {offsets = [0, 32], sizes = [1, 16], strides = [1, 1]} : vector<1x64xf32> to vector<1x16xf32>
    %365 = math.tanh %364 : vector<1x16xf32>
    %366 = vector.extract_strided_slice %351 {offsets = [0, 48], sizes = [1, 16], strides = [1, 1]} : vector<1x64xf32> to vector<1x16xf32>
    %367 = arith.negf %366 : vector<1x16xf32>
    %368 = math.exp %367 : vector<1x16xf32>
    %cst_65 = arith.constant 1.000000e+00 : f32
    %369 = vector.broadcast %cst_65 : f32 to vector<1x16xf32>
    %370 = arith.addf %369, %368 : vector<1x16xf32>
    %371 = arith.divf %369, %370 : vector<1x16xf32>
    %372 = arith.mulf %363, %346 : vector<1x16xf32>
    %373 = arith.mulf %357, %365 : vector<1x16xf32>
    %374 = arith.addf %372, %373 : vector<1x16xf32>
    %375 = math.tanh %374 : vector<1x16xf32>
    %376 = arith.mulf %371, %375 : vector<1x16xf32>
    %377 = vector.extract_strided_slice %6 {offsets = [2, 64], sizes = [1, 64], strides = [1, 1]} : vector<8x128xf32> to vector<1x64xf32>
    %cst_66 = arith.constant dense<0.000000e+00> : vector<1x64xf32>
    %378 = tpu.matmul %376, %8, %cst_66 {dimension_numbers = #tpu.dot_dimension_numbers<[1], [0], [0], [1], [0, 0, 1, 1], [], []>} : vector<1x16xf32>, vector<16x64xf32>, vector<1x64xf32> -> vector<1x64xf32>
    %379 = arith.addf %377, %378 : vector<1x64xf32>
    %380 = vector.extract_strided_slice %379 {offsets = [0, 0], sizes = [1, 16], strides = [1, 1]} : vector<1x64xf32> to vector<1x16xf32>
    %381 = arith.negf %380 : vector<1x16xf32>
    %382 = math.exp %381 : vector<1x16xf32>
    %cst_67 = arith.constant 1.000000e+00 : f32
    %383 = vector.broadcast %cst_67 : f32 to vector<1x16xf32>
    %384 = arith.addf %383, %382 : vector<1x16xf32>
    %385 = arith.divf %383, %384 : vector<1x16xf32>
    %386 = vector.extract_strided_slice %379 {offsets = [0, 16], sizes = [1, 16], strides = [1, 1]} : vector<1x64xf32> to vector<1x16xf32>
    %387 = arith.negf %386 : vector<1x16xf32>
    %388 = math.exp %387 : vector<1x16xf32>
    %cst_68 = arith.constant 1.000000e+00 : f32
    %389 = vector.broadcast %cst_68 : f32 to vector<1x16xf32>
    %390 = arith.addf %389, %388 : vector<1x16xf32>
    %391 = arith.divf %389, %390 : vector<1x16xf32>
    %392 = vector.extract_strided_slice %379 {offsets = [0, 32], sizes = [1, 16], strides = [1, 1]} : vector<1x64xf32> to vector<1x16xf32>
    %393 = math.tanh %392 : vector<1x16xf32>
    %394 = vector.extract_strided_slice %379 {offsets = [0, 48], sizes = [1, 16], strides = [1, 1]} : vector<1x64xf32> to vector<1x16xf32>
    %395 = arith.negf %394 : vector<1x16xf32>
    %396 = math.exp %395 : vector<1x16xf32>
    %cst_69 = arith.constant 1.000000e+00 : f32
    %397 = vector.broadcast %cst_69 : f32 to vector<1x16xf32>
    %398 = arith.addf %397, %396 : vector<1x16xf32>
    %399 = arith.divf %397, %398 : vector<1x16xf32>
    %400 = arith.mulf %391, %374 : vector<1x16xf32>
    %401 = arith.mulf %385, %393 : vector<1x16xf32>
    %402 = arith.addf %400, %401 : vector<1x16xf32>
    %403 = math.tanh %402 : vector<1x16xf32>
    %404 = arith.mulf %399, %403 : vector<1x16xf32>
    %405 = vector.extract_strided_slice %6 {offsets = [1, 64], sizes = [1, 64], strides = [1, 1]} : vector<8x128xf32> to vector<1x64xf32>
    %cst_70 = arith.constant dense<0.000000e+00> : vector<1x64xf32>
    %406 = tpu.matmul %404, %8, %cst_70 {dimension_numbers = #tpu.dot_dimension_numbers<[1], [0], [0], [1], [0, 0, 1, 1], [], []>} : vector<1x16xf32>, vector<16x64xf32>, vector<1x64xf32> -> vector<1x64xf32>
    %407 = arith.addf %405, %406 : vector<1x64xf32>
    %408 = vector.extract_strided_slice %407 {offsets = [0, 0], sizes = [1, 16], strides = [1, 1]} : vector<1x64xf32> to vector<1x16xf32>
    %409 = arith.negf %408 : vector<1x16xf32>
    %410 = math.exp %409 : vector<1x16xf32>
    %cst_71 = arith.constant 1.000000e+00 : f32
    %411 = vector.broadcast %cst_71 : f32 to vector<1x16xf32>
    %412 = arith.addf %411, %410 : vector<1x16xf32>
    %413 = arith.divf %411, %412 : vector<1x16xf32>
    %414 = vector.extract_strided_slice %407 {offsets = [0, 16], sizes = [1, 16], strides = [1, 1]} : vector<1x64xf32> to vector<1x16xf32>
    %415 = arith.negf %414 : vector<1x16xf32>
    %416 = math.exp %415 : vector<1x16xf32>
    %cst_72 = arith.constant 1.000000e+00 : f32
    %417 = vector.broadcast %cst_72 : f32 to vector<1x16xf32>
    %418 = arith.addf %417, %416 : vector<1x16xf32>
    %419 = arith.divf %417, %418 : vector<1x16xf32>
    %420 = vector.extract_strided_slice %407 {offsets = [0, 32], sizes = [1, 16], strides = [1, 1]} : vector<1x64xf32> to vector<1x16xf32>
    %421 = math.tanh %420 : vector<1x16xf32>
    %422 = vector.extract_strided_slice %407 {offsets = [0, 48], sizes = [1, 16], strides = [1, 1]} : vector<1x64xf32> to vector<1x16xf32>
    %423 = arith.negf %422 : vector<1x16xf32>
    %424 = math.exp %423 : vector<1x16xf32>
    %cst_73 = arith.constant 1.000000e+00 : f32
    %425 = vector.broadcast %cst_73 : f32 to vector<1x16xf32>
    %426 = arith.addf %425, %424 : vector<1x16xf32>
    %427 = arith.divf %425, %426 : vector<1x16xf32>
    %428 = arith.mulf %419, %402 : vector<1x16xf32>
    %429 = arith.mulf %413, %421 : vector<1x16xf32>
    %430 = arith.addf %428, %429 : vector<1x16xf32>
    %431 = math.tanh %430 : vector<1x16xf32>
    %432 = arith.mulf %427, %431 : vector<1x16xf32>
    %433 = vector.extract_strided_slice %6 {offsets = [0, 64], sizes = [1, 64], strides = [1, 1]} : vector<8x128xf32> to vector<1x64xf32>
    %cst_74 = arith.constant dense<0.000000e+00> : vector<1x64xf32>
    %434 = tpu.matmul %432, %8, %cst_74 {dimension_numbers = #tpu.dot_dimension_numbers<[1], [0], [0], [1], [0, 0, 1, 1], [], []>} : vector<1x16xf32>, vector<16x64xf32>, vector<1x64xf32> -> vector<1x64xf32>
    %435 = arith.addf %433, %434 : vector<1x64xf32>
    %436 = vector.extract_strided_slice %435 {offsets = [0, 0], sizes = [1, 16], strides = [1, 1]} : vector<1x64xf32> to vector<1x16xf32>
    %437 = arith.negf %436 : vector<1x16xf32>
    %438 = math.exp %437 : vector<1x16xf32>
    %cst_75 = arith.constant 1.000000e+00 : f32
    %439 = vector.broadcast %cst_75 : f32 to vector<1x16xf32>
    %440 = arith.addf %439, %438 : vector<1x16xf32>
    %441 = arith.divf %439, %440 : vector<1x16xf32>
    %442 = vector.extract_strided_slice %435 {offsets = [0, 16], sizes = [1, 16], strides = [1, 1]} : vector<1x64xf32> to vector<1x16xf32>
    %443 = arith.negf %442 : vector<1x16xf32>
    %444 = math.exp %443 : vector<1x16xf32>
    %cst_76 = arith.constant 1.000000e+00 : f32
    %445 = vector.broadcast %cst_76 : f32 to vector<1x16xf32>
    %446 = arith.addf %445, %444 : vector<1x16xf32>
    %447 = arith.divf %445, %446 : vector<1x16xf32>
    %448 = vector.extract_strided_slice %435 {offsets = [0, 32], sizes = [1, 16], strides = [1, 1]} : vector<1x64xf32> to vector<1x16xf32>
    %449 = math.tanh %448 : vector<1x16xf32>
    %450 = vector.extract_strided_slice %435 {offsets = [0, 48], sizes = [1, 16], strides = [1, 1]} : vector<1x64xf32> to vector<1x16xf32>
    %451 = arith.negf %450 : vector<1x16xf32>
    %452 = math.exp %451 : vector<1x16xf32>
    %cst_77 = arith.constant 1.000000e+00 : f32
    %453 = vector.broadcast %cst_77 : f32 to vector<1x16xf32>
    %454 = arith.addf %453, %452 : vector<1x16xf32>
    %455 = arith.divf %453, %454 : vector<1x16xf32>
    %456 = arith.mulf %447, %430 : vector<1x16xf32>
    %457 = arith.mulf %441, %449 : vector<1x16xf32>
    %458 = arith.addf %456, %457 : vector<1x16xf32>
    %459 = math.tanh %458 : vector<1x16xf32>
    %460 = arith.mulf %455, %459 : vector<1x16xf32>
    %461 = tpu.concatenate %38, %66, %94, %122, %150, %178, %206, %234 in 0 : vector<1x16xf32>, vector<1x16xf32>, vector<1x16xf32>, vector<1x16xf32>, vector<1x16xf32>, vector<1x16xf32>, vector<1x16xf32>, vector<1x16xf32> -> vector<8x16xf32>
    %462 = tpu.concatenate %460, %432, %404, %376, %348, %320, %292, %264 in 0 : vector<1x16xf32>, vector<1x16xf32>, vector<1x16xf32>, vector<1x16xf32>, vector<1x16xf32>, vector<1x16xf32>, vector<1x16xf32>, vector<1x16xf32> -> vector<8x16xf32>
    %463 = tpu.concatenate %461, %462 in 1 : vector<8x16xf32>, vector<8x16xf32> -> vector<8x32xf32>
    %c0_78 = arith.constant 0 : index
    %c0_79 = arith.constant 0 : index
    %464 = vector.load %arg6[%c0_78, %c0_79] : memref<32x128xf32, #tpu.memory_space<vmem>>, vector<32x128xf32>
    %cst_80 = arith.constant dense<0.000000e+00> : vector<8x128xf32>
    %465 = tpu.matmul %463, %464, %cst_80 {dimension_numbers = #tpu.dot_dimension_numbers<[1], [0], [0], [1], [0, 0, 1, 1], [], []>} : vector<8x32xf32>, vector<32x128xf32>, vector<8x128xf32> -> vector<8x128xf32>
    %c0_81 = arith.constant 0 : index
    %c0_82 = arith.constant 0 : index
    %466 = vector.load %arg7[%c0_81, %c0_82] : memref<1x128xf32, #tpu.memory_space<vmem>>, vector<1x128xf32>
    %467 = vector.broadcast %466 : vector<1x128xf32> to vector<8x128xf32>
    %468 = arith.addf %465, %467 : vector<8x128xf32>
    %c0_83 = arith.constant 0 : index
    %c0_84 = arith.constant 0 : index
    %469 = vector.load %arg8[%c0_83, %c0_84] : memref<1x128xf32, #tpu.memory_space<vmem>>, vector<1x128xf32>
    %470 = vector.broadcast %469 : vector<1x128xf32> to vector<8x128xf32>
    %471 = arith.mulf %468, %470 : vector<8x128xf32>
    %c0_85 = arith.constant 0 : index
    %c0_86 = arith.constant 0 : index
    %472 = vector.load %arg9[%c0_85, %c0_86] : memref<1x128xf32, #tpu.memory_space<vmem>>, vector<1x128xf32>
    %473 = vector.broadcast %472 : vector<1x128xf32> to vector<8x128xf32>
    %474 = arith.addf %471, %473 : vector<8x128xf32>
    %c0_87 = arith.constant 0 : index
    %c0_88 = arith.constant 0 : index
    %c0_89 = arith.constant 0 : index
    %475 = vector.load %arg10[%c0_87, %c0_88, %c0_89] : memref<1x8x128xf32, #tpu.memory_space<vmem>>, vector<1x8x128xf32>
    %476 = vector.shape_cast %475 : vector<1x8x128xf32> to vector<8x128xf32>
    %477 = vector.shape_cast %474 : vector<8x128xf32> to vector<1x8x128xf32>
    tpu.vector_store %arg10[%c0_87, %c0_88, %c0_89], %477 {strides = array<i32>} : memref<1x8x128xf32, #tpu.memory_space<vmem>>, vector<1x8x128xf32>,
    return
  }
  func.func @transform_0(%arg0: i32) -> (i32, i32, i32) {
    %c0_i32 = arith.constant 0 : i32
    %c0_i32_0 = arith.constant 0 : i32
    %c0_i32_1 = arith.constant 0 : i32
    return %arg0, %c0_i32, %c0_i32_0 : i32, i32, i32
  }
  func.func @transform_1(%arg0: i32) -> (i32, i32) {
    %c0_i32 = arith.constant 0 : i32
    %c0_i32_0 = arith.constant 0 : i32
    %c0_i32_1 = arith.constant 0 : i32
    return %c0_i32, %c0_i32_0 : i32, i32
  }
  func.func @transform_2(%arg0: i32) -> (i32, i32) {
    %c0_i32 = arith.constant 0 : i32
    %c0_i32_0 = arith.constant 0 : i32
    %c0_i32_1 = arith.constant 0 : i32
    return %c0_i32, %c0_i32_0 : i32, i32
  }
  func.func @transform_3(%arg0: i32) -> (i32, i32) {
    %c0_i32 = arith.constant 0 : i32
    %c0_i32_0 = arith.constant 0 : i32
    %c0_i32_1 = arith.constant 0 : i32
    return %c0_i32, %c0_i32_0 : i32, i32
  }
  func.func @transform_4(%arg0: i32) -> (i32, i32) {
    %c0_i32 = arith.constant 0 : i32
    %c0_i32_0 = arith.constant 0 : i32
    %c0_i32_1 = arith.constant 0 : i32
    return %c0_i32, %c0_i32_0 : i32, i32
  }
  func.func @transform_5(%arg0: i32) -> (i32, i32) {
    %c0_i32 = arith.constant 0 : i32
    %c0_i32_0 = arith.constant 0 : i32
    %c0_i32_1 = arith.constant 0 : i32
    return %c0_i32, %c0_i32_0 : i32, i32
  }
  func.func @transform_6(%arg0: i32) -> (i32, i32) {
    %c0_i32 = arith.constant 0 : i32
    %c0_i32_0 = arith.constant 0 : i32
    %c0_i32_1 = arith.constant 0 : i32
    return %c0_i32, %c0_i32_0 : i32, i32
  }
  func.func @transform_7(%arg0: i32) -> (i32, i32) {
    %c0_i32 = arith.constant 0 : i32
    %c0_i32_0 = arith.constant 0 : i32
    %c0_i32_1 = arith.constant 0 : i32
    return %c0_i32, %c0_i32_0 : i32, i32
  }
  func.func @transform_8(%arg0: i32) -> (i32, i32) {
    %c0_i32 = arith.constant 0 : i32
    %c0_i32_0 = arith.constant 0 : i32
    %c0_i32_1 = arith.constant 0 : i32
    return %c0_i32, %c0_i32_0 : i32, i32
  }
  func.func @transform_9(%arg0: i32) -> (i32, i32, i32) {
    %c0_i32 = arith.constant 0 : i32
    %c0_i32_0 = arith.constant 0 : i32
    %c0_i32_1 = arith.constant 0 : i32
    return %arg0, %c0_i32, %c0_i32_0 : i32, i32, i32
  }
}

</mosaic_0001>

<llo_original>
// kernel: bert_bilstm_crf_forward.4
$region0: #{bert_bilstm_crf_forward.4}
  #allocation0 [shape = 'u32[]', space=smem, size = 0x4, offset = 0x4, fixed_abs, tag = 'smem constant byte address 0x4 - core index']
  #allocation1 [shape = 'u32[144,128]{1,0:T(1,128)}', space=vmem, size = 0x12000, scoped, tag = 'internal scratch']
  %s0 = inlined_call_operand.vmem [shape: f32[2,8,32], index: 0, kind: input, shape index: {}]
  %s1 = inlined_call_operand.vmem [shape: f32[2,1,8], index: 1, kind: input, shape index: {}]
  %s2 = inlined_call_operand.vmem [shape: f32[1,32], index: 2, kind: input, shape index: {}, may-alias: {2,8,14}]
  %s3 = inlined_call_operand.vmem [shape: f32[1,32], index: 3, kind: input, shape index: {}, may-alias: {3,7,9,13,15}]
  %s4 = inlined_call_operand.vmem [shape: f32[32,96], index: 4, kind: input, shape index: {}]
  %s5 = inlined_call_operand.vmem [shape: f32[1,96], index: 5, kind: input, shape index: {}]
  %s6 = inlined_call_operand.vmem [shape: f32[32,32], index: 6, kind: input, shape index: {}]
  %s7 = inlined_call_operand.vmem [shape: f32[1,32], index: 7, kind: input, shape index: {}, may-alias: {3,7,9,13,15}]
  %s8 = inlined_call_operand.vmem [shape: f32[1,32], index: 8, kind: input, shape index: {}, may-alias: {2,8,14}]
  %s9 = inlined_call_operand.vmem [shape: f32[1,32], index: 9, kind: input, shape index: {}, may-alias: {3,7,9,13,15}]
  %s10 = inlined_call_operand.vmem [shape: f32[32,64], index: 10, kind: input, shape index: {}]
  %s11 = inlined_call_operand.vmem [shape: f32[1,64], index: 11, kind: input, shape index: {}]
  %s12 = inlined_call_operand.vmem [shape: f32[64,32], index: 12, kind: input, shape index: {}]
  %s13 = inlined_call_operand.vmem [shape: f32[1,32], index: 13, kind: input, shape index: {}, may-alias: {3,7,9,13,15}]
  %s14 = inlined_call_operand.vmem [shape: f32[1,32], index: 14, kind: input, shape index: {}, may-alias: {2,8,14}]
  %s15 = inlined_call_operand.vmem [shape: f32[1,32], index: 15, kind: input, shape index: {}, may-alias: {3,7,9,13,15}]
  %s16 = inlined_call_operand.vmem [shape: f32[2,8,32], index: 16, kind: output, shape index: {}]
  %s17 = sld [smem:[#allocation0]]
  $region97: #{bert_bilstm_crf_forward.4} parent=0
    _
  %s19 = ssub.s32 1, %s17
  %s20 = scalar_select 0, %s19, %s17
  loop: start=0, step=1, limit=4
  $region2: #{bert_bilstm_crf_forward.4} parent=0 // loop_pre_header
    _
  $region3: #{bert_bilstm_crf_forward.4} parent=0 // loop_header
    %s22 = sphi 0, %s26
    %p23 = scmp.ge.s32.totalorder %s22, 4
    %s32 = sphi 0, %s34
    %s35 = sphi 0, %s32
    %s36 = sphi 0, %s35
    %s52 = sphi 0, %s36
    %s58 = sphi 0, %s60
    %s61 = sphi 0, %s58
    %s62 = sphi 0, %s61
    %s78 = sphi 0, %s62
    %s82 = sphi 0, %s82
    %s84 = sphi 0, %s82
    %s85 = sphi 0, %s84
    %s99 = sphi 0, %s85
    %s103 = sphi 0, %s103
    %s105 = sphi 0, %s103
    %s106 = sphi 0, %s105
    %s120 = sphi 0, %s106
    %s124 = sphi 0, %s124
    %s126 = sphi 0, %s124
    %s127 = sphi 0, %s126
    %s141 = sphi 0, %s127
    %s145 = sphi 0, %s145
    %s147 = sphi 0, %s145
    %s148 = sphi 0, %s147
    %s162 = sphi 0, %s148
    %s166 = sphi 0, %s166
    %s168 = sphi 0, %s166
    %s169 = sphi 0, %s168
    %s183 = sphi 0, %s169
    %s187 = sphi 0, %s187
    %s189 = sphi 0, %s187
    %s190 = sphi 0, %s189
    %s204 = sphi 0, %s190
    %s208 = sphi 0, %s208
    %s210 = sphi 0, %s208
    %s211 = sphi 0, %s210
    %s225 = sphi 0, %s211
    %s229 = sphi 0, %s229
    %s231 = sphi 0, %s229
    %s232 = sphi 0, %s231
    %s246 = sphi 0, %s232
    %s250 = sphi 0, %s250
    %s252 = sphi 0, %s250
    %s253 = sphi 0, %s252
    %s267 = sphi 0, %s253
    %s271 = sphi 0, %s271
    %s273 = sphi 0, %s271
    %s274 = sphi 0, %s273
    %s288 = sphi 0, %s274
    %s292 = sphi 0, %s292
    %s294 = sphi 0, %s292
    %s295 = sphi 0, %s294
    %s309 = sphi 0, %s295
    %s313 = sphi 0, %s313
    %s315 = sphi 0, %s313
    %s316 = sphi 0, %s315
    %s330 = sphi 0, %s316
    %s334 = sphi 0, %s334
    %s336 = sphi 0, %s334
    %s337 = sphi 0, %s336
    %s351 = sphi 0, %s337
    %s355 = sphi 0, %s355
    %s357 = sphi 0, %s355
    %s358 = sphi 0, %s357
    %s372 = sphi 0, %s358
    %s378 = sphi 0, %s380
    %s381 = sphi 0, %s378
    %s382 = sphi 0, %s381
    %s398 = sphi 0, %s382
  $region4: #{bert_bilstm_crf_forward.4} parent=0 // loop_header_branch
    %25 = sbr.rel (%p23) target = $region8
  $region5: #{bert_bilstm_crf_forward.4} parent=0 // loop_body
    %s27 = ssub.s32 %s22, 1
    %s28 = ssub.s32 %s22, 2
    %s29 = sadd.s32 %s22, 1
    %s30 = ssub.s32 %s22, %s29
    %p31 = scmp.eq.s32.totalorder %s30, 0
    %s33 = sadd.s32 %s32, 1
    %s34 = scalar_select %p31, %s32, %s33
    %p37 = pneg %p31
    %p38 = scmp.eq.s32.totalorder %s22, 1
    %p39 = por %p37, %p38
    %p40 = scmp.ne.s32.totalorder %s32, %s35
    %p41 = scmp.eq.s32.totalorder %s22, 0
    %p42 = por %p40, %p41
    %p43 = scmp.ne.s32.totalorder %s32, %s35
    %p44 = scmp.eq.s32.totalorder %s27, 1
    %p45 = por %p43, %p44
    %p46 = scmp.ne.s32.totalorder %s35, %s36
    %p47 = scmp.eq.s32.totalorder %s27, 0
    %p48 = por %p46, %p47
    %p49 = scmp.ne.s32.totalorder %s35, %s36
    %p50 = scmp.eq.s32.totalorder %s28, 1
    %p51 = por %p49, %p50
    %p53 = scmp.ne.s32.totalorder %s36, %s52
    %p54 = scmp.eq.s32.totalorder %s28, 0
    %p55 = por %p53, %p54
    %s56 = ssub.s32 %s22, %s29
    %p57 = scmp.eq.s32.totalorder %s56, 0
    %s59 = sadd.s32 %s58, 1
    %s60 = scalar_select %p57, %s58, %s59
    %p63 = pneg %p57
    %p64 = scmp.eq.s32.totalorder %s22, 1
    %p65 = por %p63, %p64
    %p66 = scmp.ne.s32.totalorder %s58, %s61
    %p67 = scmp.eq.s32.totalorder %s22, 0
    %p68 = por %p66, %p67
    %p69 = scmp.ne.s32.totalorder %s58, %s61
    %p70 = scmp.eq.s32.totalorder %s27, 1
    %p71 = por %p69, %p70
    %p72 = scmp.ne.s32.totalorder %s61, %s62
    %p73 = scmp.eq.s32.totalorder %s27, 0
    %p74 = por %p72, %p73
    %p75 = scmp.ne.s32.totalorder %s61, %s62
    %p76 = scmp.eq.s32.totalorder %s28, 1
    %p77 = por %p75, %p76
    %p79 = scmp.ne.s32.totalorder %s62, %s78
    %p80 = scmp.eq.s32.totalorder %s28, 0
    %p81 = por %p79, %p80
    %s83 = sadd.s32 %s82, 1
    %p86 = scmp.eq.s32.totalorder %s22, 1
    %p87 = scmp.ne.s32.totalorder %s82, %s84
    %p88 = scmp.eq.s32.totalorder %s22, 0
    %p89 = por %p87, %p88
    %p90 = scmp.ne.s32.totalorder %s82, %s84
    %p91 = scmp.eq.s32.totalorder %s27, 1
    %p92 = por %p90, %p91
    %p93 = scmp.ne.s32.totalorder %s84, %s85
    %p94 = scmp.eq.s32.totalorder %s27, 0
    %p95 = por %p93, %p94
    %p96 = scmp.ne.s32.totalorder %s84, %s85
    %p97 = scmp.eq.s32.totalorder %s28, 1
    %p98 = por %p96, %p97
    %p100 = scmp.ne.s32.totalorder %s85, %s99
    %p101 = scmp.eq.s32.totalorder %s28, 0
    %p102 = por %p100, %p101
    %s104 = sadd.s32 %s103, 1
    %p107 = scmp.eq.s32.totalorder %s22, 1
    %p108 = scmp.ne.s32.totalorder %s103, %s105
    %p109 = scmp.eq.s32.totalorder %s22, 0
    %p110 = por %p108, %p109
    %p111 = scmp.ne.s32.totalorder %s103, %s105
    %p112 = scmp.eq.s32.totalorder %s27, 1
    %p113 = por %p111, %p112
    %p114 = scmp.ne.s32.totalorder %s105, %s106
    %p115 = scmp.eq.s32.totalorder %s27, 0
    %p116 = por %p114, %p115
    %p117 = scmp.ne.s32.totalorder %s105, %s106
    %p118 = scmp.eq.s32.totalorder %s28, 1
    %p119 = por %p117, %p118
    %p121 = scmp.ne.s32.totalorder %s106, %s120
    %p122 = scmp.eq.s32.totalorder %s28, 0
    %p123 = por %p121, %p122
    %s125 = sadd.s32 %s124, 1
    %p128 = scmp.eq.s32.totalorder %s22, 1
    %p129 = scmp.ne.s32.totalorder %s124, %s126
    %p130 = scmp.eq.s32.totalorder %s22, 0
    %p131 = por %p129, %p130
    %p132 = scmp.ne.s32.totalorder %s124, %s126
    %p133 = scmp.eq.s32.totalorder %s27, 1
    %p134 = por %p132, %p133
    %p135 = scmp.ne.s32.totalorder %s126, %s127
    %p136 = scmp.eq.s32.totalorder %s27, 0
    %p137 = por %p135, %p136
    %p138 = scmp.ne.s32.totalorder %s126, %s127
    %p139 = scmp.eq.s32.totalorder %s28, 1
    %p140 = por %p138, %p139
    %p142 = scmp.ne.s32.totalorder %s127, %s141
    %p143 = scmp.eq.s32.totalorder %s28, 0
    %p144 = por %p142, %p143
    %s146 = sadd.s32 %s145, 1
    %p149 = scmp.eq.s32.totalorder %s22, 1
    %p150 = scmp.ne.s32.totalorder %s145, %s147
    %p151 = scmp.eq.s32.totalorder %s22, 0
    %p152 = por %p150, %p151
    %p153 = scmp.ne.s32.totalorder %s145, %s147
    %p154 = scmp.eq.s32.totalorder %s27, 1
    %p155 = por %p153, %p154
    %p156 = scmp.ne.s32.totalorder %s147, %s148
    %p157 = scmp.eq.s32.totalorder %s27, 0
    %p158 = por %p156, %p157
    %p159 = scmp.ne.s32.totalorder %s147, %s148
    %p160 = scmp.eq.s32.totalorder %s28, 1
    %p161 = por %p159, %p160
    %p163 = scmp.ne.s32.totalorder %s148, %s162
    %p164 = scmp.eq.s32.totalorder %s28, 0
    %p165 = por %p163, %p164
    %s167 = sadd.s32 %s166, 1
    %p170 = scmp.eq.s32.totalorder %s22, 1
    %p171 = scmp.ne.s32.totalorder %s166, %s168
    %p172 = scmp.eq.s32.totalorder %s22, 0
    %p173 = por %p171, %p172
    %p174 = scmp.ne.s32.totalorder %s166, %s168
    %p175 = scmp.eq.s32.totalorder %s27, 1
    %p176 = por %p174, %p175
    %p177 = scmp.ne.s32.totalorder %s168, %s169
    %p178 = scmp.eq.s32.totalorder %s27, 0
    %p179 = por %p177, %p178
    %p180 = scmp.ne.s32.totalorder %s168, %s169
    %p181 = scmp.eq.s32.totalorder %s28, 1
    %p182 = por %p180, %p181
    %p184 = scmp.ne.s32.totalorder %s169, %s183
    %p185 = scmp.eq.s32.totalorder %s28, 0
    %p186 = por %p184, %p185
    %s188 = sadd.s32 %s187, 1
    %p191 = scmp.eq.s32.totalorder %s22, 1
    %p192 = scmp.ne.s32.totalorder %s187, %s189
    %p193 = scmp.eq.s32.totalorder %s22, 0
    %p194 = por %p192, %p193
    %p195 = scmp.ne.s32.totalorder %s187, %s189
    %p196 = scmp.eq.s32.totalorder %s27, 1
    %p197 = por %p195, %p196
    %p198 = scmp.ne.s32.totalorder %s189, %s190
    %p199 = scmp.eq.s32.totalorder %s27, 0
    %p200 = por %p198, %p199
    %p201 = scmp.ne.s32.totalorder %s189, %s190
    %p202 = scmp.eq.s32.totalorder %s28, 1
    %p203 = por %p201, %p202
    %p205 = scmp.ne.s32.totalorder %s190, %s204
    %p206 = scmp.eq.s32.totalorder %s28, 0
    %p207 = por %p205, %p206
    %s209 = sadd.s32 %s208, 1
    %p212 = scmp.eq.s32.totalorder %s22, 1
    %p213 = scmp.ne.s32.totalorder %s208, %s210
    %p214 = scmp.eq.s32.totalorder %s22, 0
    %p215 = por %p213, %p214
    %p216 = scmp.ne.s32.totalorder %s208, %s210
    %p217 = scmp.eq.s32.totalorder %s27, 1
    %p218 = por %p216, %p217
    %p219 = scmp.ne.s32.totalorder %s210, %s211
    %p220 = scmp.eq.s32.totalorder %s27, 0
    %p221 = por %p219, %p220
    %p222 = scmp.ne.s32.totalorder %s210, %s211
    %p223 = scmp.eq.s32.totalorder %s28, 1
    %p224 = por %p222, %p223
    %p226 = scmp.ne.s32.totalorder %s211, %s225
    %p227 = scmp.eq.s32.totalorder %s28, 0
    %p228 = por %p226, %p227
    %s230 = sadd.s32 %s229, 1
    %p233 = scmp.eq.s32.totalorder %s22, 1
    %p234 = scmp.ne.s32.totalorder %s229, %s231
    %p235 = scmp.eq.s32.totalorder %s22, 0
    %p236 = por %p234, %p235
    %p237 = scmp.ne.s32.totalorder %s229, %s231
    %p238 = scmp.eq.s32.totalorder %s27, 1
    %p239 = por %p237, %p238
    %p240 = scmp.ne.s32.totalorder %s231, %s232
    %p241 = scmp.eq.s32.totalorder %s27, 0
    %p242 = por %p240, %p241
    %p243 = scmp.ne.s32.totalorder %s231, %s232
    %p244 = scmp.eq.s32.totalorder %s28, 1
    %p245 = por %p243, %p244
    %p247 = scmp.ne.s32.totalorder %s232, %s246
    %p248 = scmp.eq.s32.totalorder %s28, 0
    %p249 = por %p247, %p248
    %s251 = sadd.s32 %s250, 1
    %p254 = scmp.eq.s32.totalorder %s22, 1
    %p255 = scmp.ne.s32.totalorder %s250, %s252
    %p256 = scmp.eq.s32.totalorder %s22, 0
    %p257 = por %p255, %p256
    %p258 = scmp.ne.s32.totalorder %s250, %s252
    %p259 = scmp.eq.s32.totalorder %s27, 1
    %p260 = por %p258, %p259
    %p261 = scmp.ne.s32.totalorder %s252, %s253
    %p262 = scmp.eq.s32.totalorder %s27, 0
    %p263 = por %p261, %p262
    %p264 = scmp.ne.s32.totalorder %s252, %s253
    %p265 = scmp.eq.s32.totalorder %s28, 1
    %p266 = por %p264, %p265
    %p268 = scmp.ne.s32.totalorder %s253, %s267
    %p269 = scmp.eq.s32.totalorder %s28, 0
    %p270 = por %p268, %p269
    %s272 = sadd.s32 %s271, 1
    %p275 = scmp.eq.s32.totalorder %s22, 1
    %p276 = scmp.ne.s32.totalorder %s271, %s273
    %p277 = scmp.eq.s32.totalorder %s22, 0
    %p278 = por %p276, %p277
    %p279 = scmp.ne.s32.totalorder %s271, %s273
    %p280 = scmp.eq.s32.totalorder %s27, 1
    %p281 = por %p279, %p280
    %p282 = scmp.ne.s32.totalorder %s273, %s274
    %p283 = scmp.eq.s32.totalorder %s27, 0
    %p284 = por %p282, %p283
    %p285 = scmp.ne.s32.totalorder %s273, %s274
    %p286 = scmp.eq.s32.totalorder %s28, 1
    %p287 = por %p285, %p286
    %p289 = scmp.ne.s32.totalorder %s274, %s288
    %p290 = scmp.eq.s32.totalorder %s28, 0
    %p291 = por %p289, %p290
    %s293 = sadd.s32 %s292, 1
    %p296 = scmp.eq.s32.totalorder %s22, 1
    %p297 = scmp.ne.s32.totalorder %s292, %s294
    %p298 = scmp.eq.s32.totalorder %s22, 0
    %p299 = por %p297, %p298
    %p300 = scmp.ne.s32.totalorder %s292, %s294
    %p301 = scmp.eq.s32.totalorder %s27, 1
    %p302 = por %p300, %p301
    %p303 = scmp.ne.s32.totalorder %s294, %s295
    %p304 = scmp.eq.s32.totalorder %s27, 0
    %p305 = por %p303, %p304
    %p306 = scmp.ne.s32.totalorder %s294, %s295
    %p307 = scmp.eq.s32.totalorder %s28, 1
    %p308 = por %p306, %p307
    %p310 = scmp.ne.s32.totalorder %s295, %s309
    %p311 = scmp.eq.s32.totalorder %s28, 0
    %p312 = por %p310, %p311
    %s314 = sadd.s32 %s313, 1
    %p317 = scmp.eq.s32.totalorder %s22, 1
    %p318 = scmp.ne.s32.totalorder %s313, %s315
    %p319 = scmp.eq.s32.totalorder %s22, 0
    %p320 = por %p318, %p319
    %p321 = scmp.ne.s32.totalorder %s313, %s315
    %p322 = scmp.eq.s32.totalorder %s27, 1
    %p323 = por %p321, %p322
    %p324 = scmp.ne.s32.totalorder %s315, %s316
    %p325 = scmp.eq.s32.totalorder %s27, 0
    %p326 = por %p324, %p325
    %p327 = scmp.ne.s32.totalorder %s315, %s316
    %p328 = scmp.eq.s32.totalorder %s28, 1
    %p329 = por %p327, %p328
    %p331 = scmp.ne.s32.totalorder %s316, %s330
    %p332 = scmp.eq.s32.totalorder %s28, 0
    %p333 = por %p331, %p332
    %s335 = sadd.s32 %s334, 1
    %p338 = scmp.eq.s32.totalorder %s22, 1
    %p339 = scmp.ne.s32.totalorder %s334, %s336
    %p340 = scmp.eq.s32.totalorder %s22, 0
    %p341 = por %p339, %p340
    %p342 = scmp.ne.s32.totalorder %s334, %s336
    %p343 = scmp.eq.s32.totalorder %s27, 1
    %p344 = por %p342, %p343
    %p345 = scmp.ne.s32.totalorder %s336, %s337
    %p346 = scmp.eq.s32.totalorder %s27, 0
    %p347 = por %p345, %p346
    %p348 = scmp.ne.s32.totalorder %s336, %s337
    %p349 = scmp.eq.s32.totalorder %s28, 1
    %p350 = por %p348, %p349
    %p352 = scmp.ne.s32.totalorder %s337, %s351
    %p353 = scmp.eq.s32.totalorder %s28, 0
    %p354 = por %p352, %p353
    %s356 = sadd.s32 %s355, 1
    %p359 = scmp.eq.s32.totalorder %s22, 1
    %p360 = scmp.ne.s32.totalorder %s355, %s357
    %p361 = scmp.eq.s32.totalorder %s22, 0
    %p362 = por %p360, %p361
    %p363 = scmp.ne.s32.totalorder %s355, %s357
    %p364 = scmp.eq.s32.totalorder %s27, 1
    %p365 = por %p363, %p364
    %p366 = scmp.ne.s32.totalorder %s357, %s358
    %p367 = scmp.eq.s32.totalorder %s27, 0
    %p368 = por %p366, %p367
    %p369 = scmp.ne.s32.totalorder %s357, %s358
    %p370 = scmp.eq.s32.totalorder %s28, 1
    %p371 = por %p369, %p370
    %p373 = scmp.ne.s32.totalorder %s358, %s372
    %p374 = scmp.eq.s32.totalorder %s28, 0
    %p375 = por %p373, %p374
    %s376 = ssub.s32 %s22, %s29
    %p377 = scmp.eq.s32.totalorder %s376, 0
    %s379 = sadd.s32 %s378, 1
    %s380 = scalar_select %p377, %s378, %s379
    %p383 = pneg %p377
    %p384 = scmp.eq.s32.totalorder %s22, 1
    %p385 = por %p383, %p384
    %p386 = scmp.ne.s32.totalorder %s378, %s381
    %p387 = scmp.eq.s32.totalorder %s22, 0
    %p388 = por %p386, %p387
    %p389 = scmp.ne.s32.totalorder %s378, %s381
    %p390 = scmp.eq.s32.totalorder %s27, 1
    %p391 = por %p389, %p390
    %p392 = scmp.ne.s32.totalorder %s381, %s382
    %p393 = scmp.eq.s32.totalorder %s27, 0
    %p394 = por %p392, %p393
    %p395 = scmp.ne.s32.totalorder %s381, %s382
    %p396 = scmp.eq.s32.totalorder %s28, 1
    %p397 = por %p395, %p396
    %p399 = scmp.ne.s32.totalorder %s382, %s398
    %p400 = scmp.eq.s32.totalorder %s28, 0
    %p401 = por %p399, %p400
    %p402 = scmp.le.s32.totalorder 1, %s22
    %p403 = scmp.lt.s32.totalorder %s22, 3
    %p404 = pnand %p402, %p403
    %p405 = pneg %p404
    // Predicated region
    $region9: #{bert_bilstm_crf_forward.4} parent=5 // pred_check
      _
    $region10: #{bert_bilstm_crf_forward.4} parent=5 // pred_check_branch
      %407 = sbr.rel (%p404) target = $region12
    $region11: #{bert_bilstm_crf_forward.4} parent=5 // pred_region
      %s408 = ssub.s32 %s22, 1
      // Predicated region
      $region13: #{bert_bilstm_crf_forward.4} parent=11 // pred_check
        %p409 = pneg %p95
      $region14: #{bert_bilstm_crf_forward.4} parent=11 // pred_check_branch
        %411 = sbr.rel (%p409) target = $region16
      $region15: #{bert_bilstm_crf_forward.4} parent=11 // pred_region
        _
      $region16: #{bert_bilstm_crf_forward.4} parent=11 // pred_fallthru
        _
      // Predicated region
      $region17: #{bert_bilstm_crf_forward.4} parent=11 // pred_check
        %p412 = pneg %p116
      $region18: #{bert_bilstm_crf_forward.4} parent=11 // pred_check_branch
        %414 = sbr.rel (%p412) target = $region20
      $region19: #{bert_bilstm_crf_forward.4} parent=11 // pred_region
        _
      $region20: #{bert_bilstm_crf_forward.4} parent=11 // pred_fallthru
        _
      // Predicated region
      $region21: #{bert_bilstm_crf_forward.4} parent=11 // pred_check
        %p415 = pneg %p137
      $region22: #{bert_bilstm_crf_forward.4} parent=11 // pred_check_branch
        %417 = sbr.rel (%p415) target = $region24
      $region23: #{bert_bilstm_crf_forward.4} parent=11 // pred_region
        _
      $region24: #{bert_bilstm_crf_forward.4} parent=11 // pred_fallthru
        _
      // Predicated region
      $region25: #{bert_bilstm_crf_forward.4} parent=11 // pred_check
        %p418 = pneg %p158
      $region26: #{bert_bilstm_crf_forward.4} parent=11 // pred_check_branch
        %420 = sbr.rel (%p418) target = $region28
      $region27: #{bert_bilstm_crf_forward.4} parent=11 // pred_region
        _
      $region28: #{bert_bilstm_crf_forward.4} parent=11 // pred_fallthru
        _
      // Predicated region
      $region29: #{bert_bilstm_crf_forward.4} parent=11 // pred_check
        %p421 = pneg %p179
      $region30: #{bert_bilstm_crf_forward.4} parent=11 // pred_check_branch
        %423 = sbr.rel (%p421) target = $region32
      $region31: #{bert_bilstm_crf_forward.4} parent=11 // pred_region
        _
      $region32: #{bert_bilstm_crf_forward.4} parent=11 // pred_fallthru
        _
      // Predicated region
      $region33: #{bert_bilstm_crf_forward.4} parent=11 // pred_check
        %p424 = pneg %p200
      $region34: #{bert_bilstm_crf_forward.4} parent=11 // pred_check_branch
        %426 = sbr.rel (%p424) target = $region36
      $region35: #{bert_bilstm_crf_forward.4} parent=11 // pred_region
        _
      $region36: #{bert_bilstm_crf_forward.4} parent=11 // pred_fallthru
        _
      // Predicated region
      $region37: #{bert_bilstm_crf_forward.4} parent=11 // pred_check
        %p427 = pneg %p221
      $region38: #{bert_bilstm_crf_forward.4} parent=11 // pred_check_branch
        %429 = sbr.rel (%p427) target = $region40
      $region39: #{bert_bilstm_crf_forward.4} parent=11 // pred_region
        _
      $region40: #{bert_bilstm_crf_forward.4} parent=11 // pred_fallthru
        _
      // Predicated region
      $region41: #{bert_bilstm_crf_forward.4} parent=11 // pred_check
        %p430 = pneg %p242
      $region42: #{bert_bilstm_crf_forward.4} parent=11 // pred_check_branch
        %432 = sbr.rel (%p430) target = $region44
      $region43: #{bert_bilstm_crf_forward.4} parent=11 // pred_region
        _
      $region44: #{bert_bilstm_crf_forward.4} parent=11 // pred_fallthru
        _
      // Predicated region
      $region45: #{bert_bilstm_crf_forward.4} parent=11 // pred_check
        %p433 = pneg %p263
      $region46: #{bert_bilstm_crf_forward.4} parent=11 // pred_check_branch
        %435 = sbr.rel (%p433) target = $region48
      $region47: #{bert_bilstm_crf_forward.4} parent=11 // pred_region
        _
      $region48: #{bert_bilstm_crf_forward.4} parent=11 // pred_fallthru
        _
      // Predicated region
      $region49: #{bert_bilstm_crf_forward.4} parent=11 // pred_check
        %p436 = pneg %p284
      $region50: #{bert_bilstm_crf_forward.4} parent=11 // pred_check_branch
        %438 = sbr.rel (%p436) target = $region52
      $region51: #{bert_bilstm_crf_forward.4} parent=11 // pred_region
        _
      $region52: #{bert_bilstm_crf_forward.4} parent=11 // pred_fallthru
        _
      // Predicated region
      $region53: #{bert_bilstm_crf_forward.4} parent=11 // pred_check
        %p439 = pneg %p305
      $region54: #{bert_bilstm_crf_forward.4} parent=11 // pred_check_branch
        %441 = sbr.rel (%p439) target = $region56
      $region55: #{bert_bilstm_crf_forward.4} parent=11 // pred_region
        _
      $region56: #{bert_bilstm_crf_forward.4} parent=11 // pred_fallthru
        _
      // Predicated region
      $region57: #{bert_bilstm_crf_forward.4} parent=11 // pred_check
        %p442 = pneg %p326
      $region58: #{bert_bilstm_crf_forward.4} parent=11 // pred_check_branch
        %444 = sbr.rel (%p442) target = $region60
      $region59: #{bert_bilstm_crf_forward.4} parent=11 // pred_region
        _
      $region60: #{bert_bilstm_crf_forward.4} parent=11 // pred_fallthru
        _
      // Predicated region
      $region61: #{bert_bilstm_crf_forward.4} parent=11 // pred_check
        %p445 = pneg %p347
      $region62: #{bert_bilstm_crf_forward.4} parent=11 // pred_check_branch
        %447 = sbr.rel (%p445) target = $region64
      $region63: #{bert_bilstm_crf_forward.4} parent=11 // pred_region
        _
      $region64: #{bert_bilstm_crf_forward.4} parent=11 // pred_fallthru
        _
      // Predicated region
      $region65: #{bert_bilstm_crf_forward.4} parent=11 // pred_check
        %p448 = pneg %p368
      $region66: #{bert_bilstm_crf_forward.4} parent=11 // pred_check_branch
        %450 = sbr.rel (%p448) target = $region68
      $region67: #{bert_bilstm_crf_forward.4} parent=11 // pred_region
        _
      $region68: #{bert_bilstm_crf_forward.4} parent=11 // pred_fallthru
        _
    $region12: #{bert_bilstm_crf_forward.4} parent=5 // pred_fallthru
      _
    %p451 = scmp.lt.s32.totalorder %s22, 2
    // Predicated region
    $region69: #{bert_bilstm_crf_forward.4} parent=5 // pred_check
      %p452 = pneg %p451
    $region70: #{bert_bilstm_crf_forward.4} parent=5 // pred_check_branch
      %454 = sbr.rel (%p452) target = $region72
    $region71: #{bert_bilstm_crf_forward.4} parent=5 // pred_region
      // Predicated region
      $region73: #{bert_bilstm_crf_forward.4} parent=71 // pred_check
        %p455 = pneg %p42
      $region74: #{bert_bilstm_crf_forward.4} parent=71 // pred_check_branch
        %457 = sbr.rel (%p455) target = $region76
      $region75: #{bert_bilstm_crf_forward.4} parent=71 // pred_region
        %p458 = scmp.lt.s32.totalorder %s22, 1
        %s459 = scalar_select %p458, %s22, 1
        %s460 = smul.addr %s459, 8
        %s461 = scalar_lea.vmem %s0, %s460
      $region76: #{bert_bilstm_crf_forward.4} parent=71 // pred_fallthru
        _
      // Predicated region
      $region77: #{bert_bilstm_crf_forward.4} parent=71 // pred_check
        %p462 = pneg %p68
      $region78: #{bert_bilstm_crf_forward.4} parent=71 // pred_check_branch
        %464 = sbr.rel (%p462) target = $region80
      $region79: #{bert_bilstm_crf_forward.4} parent=71 // pred_region
        %p465 = scmp.lt.s32.totalorder %s22, 1
        %s466 = scalar_select %p465, %s22, 1
        %s467 = scalar_lea.vmem %s1, %s466
      $region80: #{bert_bilstm_crf_forward.4} parent=71 // pred_fallthru
        _
    $region72: #{bert_bilstm_crf_forward.4} parent=5 // pred_fallthru
      _
    %p468 = scmp.le.s32.totalorder 1, %s22
    %p469 = scmp.lt.s32.totalorder %s22, 3
    %p470 = pnand %p468, %p469
    %p471 = pneg %p470
    // Predicated region
    $region81: #{bert_bilstm_crf_forward.4} parent=5 // pred_check
      _
    $region82: #{bert_bilstm_crf_forward.4} parent=5 // pred_check_branch
      %473 = sbr.rel (%p470) target = $region84
    $region83: #{bert_bilstm_crf_forward.4} parent=5 // pred_region
      %s474 = ssub.s32 %s22, 1
      %p475 = scmp.lt.s32.totalorder %s27, 1
      %s476 = scalar_select %p475, %s27, 1
      %s477 = smul.addr %s476, 8
      %s478 = scalar_lea.vmem %s0, %s477
      %p479 = pneg %p48
      %p480 = pneg %p45
      %p481 = scmp.lt.s32.totalorder %s27, 1
      %s482 = scalar_select %p481, %s27, 1
      %s483 = scalar_lea.vmem %s1, %s482
      %p484 = pneg %p74
      %p485 = pneg %p71
      %p486 = pneg %p95
      %p487 = pneg %p92
      %p488 = pneg %p116
      %p489 = pneg %p113
      %p490 = pneg %p137
      %p491 = pneg %p134
      %p492 = pneg %p158
      %p493 = pneg %p155
      %p494 = pneg %p179
      %p495 = pneg %p176
      %p496 = pneg %p200
      %p497 = pneg %p197
      %p498 = pneg %p221
      %p499 = pneg %p218
      %p500 = pneg %p242
      %p501 = pneg %p239
      %p502 = pneg %p263
      %p503 = pneg %p260
      %p504 = pneg %p284
      %p505 = pneg %p281
      %p506 = pneg %p305
      %p507 = pneg %p302
      %p508 = pneg %p326
      %p509 = pneg %p323
      %p510 = pneg %p347
      %p511 = pneg %p344
      %p512 = pneg %p368
      %p513 = pneg %p365
      %p514 = pneg %p394
      %p515 = pneg %p391
      %p516 = scmp.lt.s32.totalorder %s27, 1
      %s517 = scalar_select %p516, %s27, 1
      %s518 = smul.addr %s517, 8
      %s519 = scalar_lea.vmem %s16, %s518
      %p520 = scmp.lt.s32.totalorder %s27, 1
      %s521 = scalar_select %p520, %s27, 1
      %s522 = smul.addr %s521, 8
      %s523 = scalar_lea.vmem %s0, %s522
      %p524 = scmp.lt.s32.totalorder %s27, 1
      %s525 = scalar_select %p524, %s27, 1
      %s526 = scalar_lea.vmem %s1, %s525
      %p527 = scmp.lt.s32.totalorder %s27, 1
      %s528 = scalar_select %p527, %s27, 1
      %s529 = smul.addr %s528, 8
      %s530 = scalar_lea.vmem %s16, %s529
      %v531 = vld [vmem:[%s523] sm:$0xff]
      %v532 = vld [vmem:[%s2] sm:$0x1]
      %v533 = vld [vmem:[%s3] sm:$0x1]
      %vm534 = vcmask 261120
      %v535 = vsel %vm534, %v531, 0.0
      %536 = vadd.xlane.f32.xlu0 %v535
      %v537 = vpop.xlane.xlu0 %536
      %v538 = vrcp.pop 32.0
      %v539 = vmul.f32 %v537, %v538
      %v540 = vsub.f32 %v531, %v539
      %v541 = vmul.f32 %v540, %v540
      %v542 = vsel %vm534, %v541, 0.0
      %543 = vadd.xlane.f32.xlu0 %v542
      %v544 = vpop.xlane.xlu0 %543
      %v545 = vmul.f32 %v544, %v538
      %v546 = vadd.f32 %v545, 1e-12
      %v547 = vrsqrt.pop %v546
      %v548 = vmul.f32 %v540, %v547
      %v550 = vlaneseq
      %v551 = vshrl.u32 %v550, 7
      %v552 = vsub.s32 0, %v551
      %v553 = vrot.slane %v532, %v552
      %v555 = vmul.f32 %v548, %v553
      %v557 = vlaneseq
      %v558 = vshrl.u32 %v557, 7
      %v559 = vsub.s32 0, %v558
      %v560 = vrot.slane %v533, %v559
      %v562 = vadd.f32 %v555, %v560
      %v563 = vld [vmem:[%s4] sm:$0xff]
      %v564 = vld [vmem:[%s4 + $0x8] sm:$0xff]
      %v565 = vld [vmem:[%s4 + $0x10] sm:$0xff]
      %v566 = vld [vmem:[%s4 + $0x18] sm:$0xff]
      %v567 = vld [vmem:[%s5] sm:$0x1]
      %v569 = vlaneseq
      %v570 = vshrl.u32 %v569, 7
      %v571 = vsub.s32 0, %v570
      %v572 = vrot.slane %v567, %v571
      %v575 = vsel %vm534, %v562, 0
      %577 = vmatprep.subr.mxu0 0.0
      %578 = vmatpush1.msra.mxu0 %v563
      %579 = vmatprep.subr.mxu0 0.0
      %580 = vmatpush1.msra.mxu0 %v564
      %581 = vmatprep.subr.mxu0 0.0
      %582 = vmatpush1.msra.mxu0 %v565
      %583 = vmatprep.subr.mxu0 0.0
      %584 = vmatpush1.msra.mxu0 %v566
      %585 = vmatprep.subr.mxu0 0.0
      %586 = vmatpush1.msra.mxu0 0.0
      %587 = vmatprep.subr.mxu0 0.0
      %588 = vmatpush1.msra.mxu0 0.0
      %589 = vmatprep.subr.mxu0 0.0
      %590 = vmatpush1.msra.mxu0 0.0
      %591 = vmatprep.subr.mxu0 0.0
      %592 = vmatpush1.msra.mxu0 0.0
      %593 = vmatprep.subr.mxu0 0.0
      %594 = vmatpush1.msra.mxu0 0.0
      %595 = vmatprep.subr.mxu0 0.0
      %596 = vmatpush1.msra.mxu0 0.0
      %597 = vmatprep.subr.mxu0 0.0
      %598 = vmatpush1.msra.mxu0 0.0
      %599 = vmatprep.subr.mxu0 0.0
      %600 = vmatpush1.msra.mxu0 0.0
      %601 = vmatprep.subr.mxu0 0.0
      %602 = vmatpush1.msra.mxu0 0.0
      %603 = vmatprep.subr.mxu0 0.0
      %604 = vmatpush1.msra.mxu0 0.0
      %605 = vmatprep.subr.mxu0 0.0
      %606 = vmatpush1.msra.mxu0 0.0
      %607 = vmatprep.subr.mxu0 0.0
      %608 = vmatpush1.msra.mxu0 0.0
      %609 = vmatprep.subr.mxu0 0.0
      %610 = vmatpush1.msra.mxu0 0.0
      %611 = vmatprep.subr.mxu0 0.0
      %612 = vmatpush1.msra.mxu0 0.0
      %613 = vmatprep.subr.mxu0 0.0
      %614 = vmatpush1.msra.mxu0 0.0
      %615 = vmatprep.subr.mxu0 0.0
      %616 = vmatpush1.msra.mxu0 0.0
      %617 = vmatprep.subr.mxu0 0.0
      %618 = vmatpush1.msra.mxu0 0.0
      %619 = vmatprep.subr.mxu0 0.0
      %620 = vmatpush1.msra.mxu0 0.0
      %621 = vmatprep.subr.mxu0 0.0
      %622 = vmatpush1.msra.mxu0 0.0
      %623 = vmatprep.subr.mxu0 0.0
      %624 = vmatpush1.msra.mxu0 0.0
      %625 = vmatprep.subr.mxu0 0.0
      %626 = vmatpush1.msra.mxu0 0.0
      %627 = vmatprep.subr.mxu0 0.0
      %628 = vmatpush1.msra.mxu0 0.0
      %629 = vmatprep.subr.mxu0 0.0
      %630 = vmatpush1.msra.mxu0 0.0
      %631 = vmatprep.subr.mxu0 0.0
      %632 = vmatpush1.msra.mxu0 0.0
      %633 = vmatprep.subr.mxu0 0.0
      %634 = vmatpush1.msra.mxu0 0.0
      %635 = vmatprep.subr.mxu0 0.0
      %636 = vmatpush1.msra.mxu0 0.0
      %637 = vmatprep.subr.mxu0 0.0
      %638 = vmatpush1.msra.mxu0 0.0
      %639 = vmatprep.subr.mxu0 0.0
      %640 = vmatpush1.msra.mxu0 0.0
      %641 = vmatprep.mubr.f32.mxu0 0.0
      %642 = vmatmul.mubr.f32.gmra.mrb[0].mxu0 %v575
      %v643 = vpop.f32.mrb[0].mxu0
      %v644 = vadd.f32 %v572, %v643
      %v645 = vpop.f32.mrb[0].mxu0
      %646 = vdwg.mxu0
      %v647 = vld [vmem:[%s526] sm:$0x1]
      %649 = vrot.lane.b32.xlu0 %v644, 96
      %v650 = vpop.permute.xlu0 %649
      %vm651 = vcmask 130048
      %v652 = vsel %vm651, %v644, 0
      %v654 = vsel %vm651, %v650, 0
      %656 = vmatprep.subr.mxu0 0.0
      %657 = vmatpush1.xpose.msra.mxu0 %v654
      %658 = vmatprep.subr.mxu0 0.0
      %659 = vmatpush1.xpose.msra.mxu0 0.0
      %660 = vmatprep.subr.mxu0 0.0
      %661 = vmatpush1.xpose.msra.mxu0 0.0
      %662 = vmatprep.subr.mxu0 0.0
      %663 = vmatpush1.xpose.msra.mxu0 0.0
      %664 = vmatprep.subr.mxu0 0.0
      %665 = vmatpush1.xpose.msra.mxu0 0.0
      %666 = vmatprep.subr.mxu0 0.0
      %667 = vmatpush1.xpose.msra.mxu0 0.0
      %668 = vmatprep.subr.mxu0 0.0
      %669 = vmatpush1.xpose.msra.mxu0 0.0
      %670 = vmatprep.subr.mxu0 0.0
      %671 = vmatpush1.xpose.msra.mxu0 0.0
      %672 = vmatprep.subr.mxu0 0.0
      %673 = vmatpush1.xpose.msra.mxu0 0.0
      %674 = vmatprep.subr.mxu0 0.0
      %675 = vmatpush1.xpose.msra.mxu0 0.0
      %676 = vmatprep.subr.mxu0 0.0
      %677 = vmatpush1.xpose.msra.mxu0 0.0
      %678 = vmatprep.subr.mxu0 0.0
      %679 = vmatpush1.xpose.msra.mxu0 0.0
      %680 = vmatprep.subr.mxu0 0.0
      %681 = vmatpush1.xpose.msra.mxu0 0.0
      %682 = vmatprep.subr.mxu0 0.0
      %683 = vmatpush1.xpose.msra.mxu0 0.0
      %684 = vmatprep.subr.mxu0 0.0
      %685 = vmatpush1.xpose.msra.mxu0 0.0
      %686 = vmatprep.subr.mxu0 0.0
      %687 = vmatpush1.xpose.msra.mxu0 0.0
      %688 = vmatprep.subr.mxu0 0.0
      %689 = vmatpush1.xpose.msra.mxu0 0.0
      %690 = vmatprep.subr.mxu0 0.0
      %691 = vmatpush1.xpose.msra.mxu0 0.0
      %692 = vmatprep.subr.mxu0 0.0
      %693 = vmatpush1.xpose.msra.mxu0 0.0
      %694 = vmatprep.subr.mxu0 0.0
      %695 = vmatpush1.xpose.msra.mxu0 0.0
      %696 = vmatprep.subr.mxu0 0.0
      %697 = vmatpush1.xpose.msra.mxu0 0.0
      %698 = vmatprep.subr.mxu0 0.0
      %699 = vmatpush1.xpose.msra.mxu0 0.0
      %700 = vmatprep.subr.mxu0 0.0
      %701 = vmatpush1.xpose.msra.mxu0 0.0
      %702 = vmatprep.subr.mxu0 0.0
      %703 = vmatpush1.xpose.msra.mxu0 0.0
      %704 = vmatprep.subr.mxu0 0.0
      %705 = vmatpush1.xpose.msra.mxu0 0.0
      %706 = vmatprep.subr.mxu0 0.0
      %707 = vmatpush1.xpose.msra.mxu0 0.0
      %708 = vmatprep.subr.mxu0 0.0
      %709 = vmatpush1.xpose.msra.mxu0 0.0
      %710 = vmatprep.subr.mxu0 0.0
      %711 = vmatpush1.xpose.msra.mxu0 0.0
      %712 = vmatprep.subr.mxu0 0.0
      %713 = vmatpush1.xpose.msra.mxu0 0.0
      %714 = vmatprep.subr.mxu0 0.0
      %715 = vmatpush1.xpose.msra.mxu0 0.0
      %716 = vmatprep.subr.mxu0 0.0
      %717 = vmatpush1.xpose.msra.mxu0 0.0
      %718 = vmatprep.subr.mxu0 0.0
      %719 = vmatpush1.xpose.msra.mxu0 0.0
      %720 = vmatprep.mubr.f32.mxu0 0.0
      %721 = vmatmul.mubr.f32.gmra.mrb[0].mxu0 %v652
      %v722 = vpop.f32.mrb[0].mxu0
      %v723 = vadd.f32 0.0, %v722
      %v724 = vpop.f32.mrb[0].mxu0
      %725 = vdwg.mxu0
      %v726 = vmul.f32 %v723, 0.25
      %v728 = vlaneseq
      %v729 = vshrl.u32 %v728, 7
      %v730 = vsub.s32 0, %v729
      %v731 = vrot.slane %v647, %v730
      %v733 = vadd.f32 %v726, %v731
      %vm734 = vcmask 64512
      %v735 = vsel %vm734, %v733, -inf
      %736 = vmax.xlane.f32.xlu0 %v735
      %v737 = vpop.xlane.xlu0 %736
      %v738 = vsub.f32 %v733, %v737
      %v739 = vmul.f32 %v738, 1.442695
      %v740 = vpow.pop %v739
      %v741 = vsel %vm734, %v740, 0.0
      %742 = vadd.xlane.f32.xlu0 %v741
      %v743 = vpop.xlane.xlu0 %742
      %v744 = vrcp.pop %v743
      %v745 = vmul.f32 %v740, %v744
      %746 = vrot.lane.b32.xlu0 %v644, 64
      %v747 = vpop.permute.xlu0 %746
      %v750 = vsel %vm734, %v745, 0
      %752 = vmatprep.subr.mxu0 0.0
      %753 = vmatpush1.msra.mxu0 %v747
      %754 = vmatprep.subr.mxu0 0.0
      %755 = vmatpush1.msra.mxu0 0.0
      %756 = vmatprep.subr.mxu0 0.0
      %757 = vmatpush1.msra.mxu0 0.0
      %758 = vmatprep.subr.mxu0 0.0
      %759 = vmatpush1.msra.mxu0 0.0
      %760 = vmatprep.subr.mxu0 0.0
      %761 = vmatpush1.msra.mxu0 0.0
      %762 = vmatprep.subr.mxu0 0.0
      %763 = vmatpush1.msra.mxu0 0.0
      %764 = vmatprep.subr.mxu0 0.0
      %765 = vmatpush1.msra.mxu0 0.0
      %766 = vmatprep.subr.mxu0 0.0
      %767 = vmatpush1.msra.mxu0 0.0
      %768 = vmatprep.subr.mxu0 0.0
      %769 = vmatpush1.msra.mxu0 0.0
      %770 = vmatprep.subr.mxu0 0.0
      %771 = vmatpush1.msra.mxu0 0.0
      %772 = vmatprep.subr.mxu0 0.0
      %773 = vmatpush1.msra.mxu0 0.0
      %774 = vmatprep.subr.mxu0 0.0
      %775 = vmatpush1.msra.mxu0 0.0
      %776 = vmatprep.subr.mxu0 0.0
      %777 = vmatpush1.msra.mxu0 0.0
      %778 = vmatprep.subr.mxu0 0.0
      %779 = vmatpush1.msra.mxu0 0.0
      %780 = vmatprep.subr.mxu0 0.0
      %781 = vmatpush1.msra.mxu0 0.0
      %782 = vmatprep.subr.mxu0 0.0
      %783 = vmatpush1.msra.mxu0 0.0
      %784 = vmatprep.subr.mxu0 0.0
      %785 = vmatpush1.msra.mxu0 0.0
      %786 = vmatprep.subr.mxu0 0.0
      %787 = vmatpush1.msra.mxu0 0.0
      %788 = vmatprep.subr.mxu0 0.0
      %789 = vmatpush1.msra.mxu0 0.0
      %790 = vmatprep.subr.mxu0 0.0
      %791 = vmatpush1.msra.mxu0 0.0
      %792 = vmatprep.subr.mxu0 0.0
      %793 = vmatpush1.msra.mxu0 0.0
      %794 = vmatprep.subr.mxu0 0.0
      %795 = vmatpush1.msra.mxu0 0.0
      %796 = vmatprep.subr.mxu0 0.0
      %797 = vmatpush1.msra.mxu0 0.0
      %798 = vmatprep.subr.mxu0 0.0
      %799 = vmatpush1.msra.mxu0 0.0
      %800 = vmatprep.subr.mxu0 0.0
      %801 = vmatpush1.msra.mxu0 0.0
      %802 = vmatprep.subr.mxu0 0.0
      %803 = vmatpush1.msra.mxu0 0.0
      %804 = vmatprep.subr.mxu0 0.0
      %805 = vmatpush1.msra.mxu0 0.0
      %806 = vmatprep.subr.mxu0 0.0
      %807 = vmatpush1.msra.mxu0 0.0
      %808 = vmatprep.subr.mxu0 0.0
      %809 = vmatpush1.msra.mxu0 0.0
      %810 = vmatprep.subr.mxu0 0.0
      %811 = vmatpush1.msra.mxu0 0.0
      %812 = vmatprep.subr.mxu0 0.0
      %813 = vmatpush1.msra.mxu0 0.0
      %814 = vmatprep.subr.mxu0 0.0
      %815 = vmatpush1.msra.mxu0 0.0
      %816 = vmatprep.mubr.f32.mxu0 0.0
      %817 = vmatmul.mubr.f32.gmra.mrb[0].mxu0 %v750
      %v818 = vpop.f32.mrb[0].mxu0
      %v819 = vadd.f32 0.0, %v818
      %v820 = vpop.f32.mrb[0].mxu0
      %821 = vdwg.mxu0
      %822 = vrot.lane.b32.xlu0 %v644, 112
      %v823 = vpop.permute.xlu0 %822
      %824 = vrot.lane.b32.xlu0 %v644, 80
      %v825 = vpop.permute.xlu0 %824
      %v826 = vsel %vm651, %v823, 0
      %v828 = vsel %vm651, %v825, 0
      %830 = vmatprep.subr.mxu0 0.0
      %831 = vmatpush1.xpose.msra.mxu0 %v828
      %832 = vmatprep.subr.mxu0 0.0
      %833 = vmatpush1.xpose.msra.mxu0 0.0
      %834 = vmatprep.subr.mxu0 0.0
      %835 = vmatpush1.xpose.msra.mxu0 0.0
      %836 = vmatprep.subr.mxu0 0.0
      %837 = vmatpush1.xpose.msra.mxu0 0.0
      %838 = vmatprep.subr.mxu0 0.0
      %839 = vmatpush1.xpose.msra.mxu0 0.0
      %840 = vmatprep.subr.mxu0 0.0
      %841 = vmatpush1.xpose.msra.mxu0 0.0
      %842 = vmatprep.subr.mxu0 0.0
      %843 = vmatpush1.xpose.msra.mxu0 0.0
      %844 = vmatprep.subr.mxu0 0.0
      %845 = vmatpush1.xpose.msra.mxu0 0.0
      %846 = vmatprep.subr.mxu0 0.0
      %847 = vmatpush1.xpose.msra.mxu0 0.0
      %848 = vmatprep.subr.mxu0 0.0
      %849 = vmatpush1.xpose.msra.mxu0 0.0
      %850 = vmatprep.subr.mxu0 0.0
      %851 = vmatpush1.xpose.msra.mxu0 0.0
      %852 = vmatprep.subr.mxu0 0.0
      %853 = vmatpush1.xpose.msra.mxu0 0.0
      %854 = vmatprep.subr.mxu0 0.0
      %855 = vmatpush1.xpose.msra.mxu0 0.0
      %856 = vmatprep.subr.mxu0 0.0
      %857 = vmatpush1.xpose.msra.mxu0 0.0
      %858 = vmatprep.subr.mxu0 0.0
      %859 = vmatpush1.xpose.msra.mxu0 0.0
      %860 = vmatprep.subr.mxu0 0.0
      %861 = vmatpush1.xpose.msra.mxu0 0.0
      %862 = vmatprep.subr.mxu0 0.0
      %863 = vmatpush1.xpose.msra.mxu0 0.0
      %864 = vmatprep.subr.mxu0 0.0
      %865 = vmatpush1.xpose.msra.mxu0 0.0
      %866 = vmatprep.subr.mxu0 0.0
      %867 = vmatpush1.xpose.msra.mxu0 0.0
      %868 = vmatprep.subr.mxu0 0.0
      %869 = vmatpush1.xpose.msra.mxu0 0.0
      %870 = vmatprep.subr.mxu0 0.0
      %871 = vmatpush1.xpose.msra.mxu0 0.0
      %872 = vmatprep.subr.mxu0 0.0
      %873 = vmatpush1.xpose.msra.mxu0 0.0
      %874 = vmatprep.subr.mxu0 0.0
      %875 = vmatpush1.xpose.msra.mxu0 0.0
      %876 = vmatprep.subr.mxu0 0.0
      %877 = vmatpush1.xpose.msra.mxu0 0.0
      %878 = vmatprep.subr.mxu0 0.0
      %879 = vmatpush1.xpose.msra.mxu0 0.0
      %880 = vmatprep.subr.mxu0 0.0
      %881 = vmatpush1.xpose.msra.mxu0 0.0
      %882 = vmatprep.subr.mxu0 0.0
      %883 = vmatpush1.xpose.msra.mxu0 0.0
      %884 = vmatprep.subr.mxu0 0.0
      %885 = vmatpush1.xpose.msra.mxu0 0.0
      %886 = vmatprep.subr.mxu0 0.0
      %887 = vmatpush1.xpose.msra.mxu0 0.0
      %888 = vmatprep.subr.mxu0 0.0
      %889 = vmatpush1.xpose.msra.mxu0 0.0
      %890 = vmatprep.subr.mxu0 0.0
      %891 = vmatpush1.xpose.msra.mxu0 0.0
      %892 = vmatprep.subr.mxu0 0.0
      %893 = vmatpush1.xpose.msra.mxu0 0.0
      %894 = vmatprep.mubr.f32.mxu0 0.0
      %895 = vmatmul.mubr.f32.gmra.mrb[0].mxu0 %v826
      %v896 = vpop.f32.mrb[0].mxu0
      %v897 = vadd.f32 0.0, %v896
      %v898 = vpop.f32.mrb[0].mxu0
      %899 = vdwg.mxu0
      %v900 = vmul.f32 %v897, 0.25
      %v901 = vadd.f32 %v900, %v731
      %v902 = vsel %vm734, %v901, -inf
      %903 = vmax.xlane.f32.xlu0 %v902
      %v904 = vpop.xlane.xlu0 %903
      %v905 = vsub.f32 %v901, %v904
      %v906 = vmul.f32 %v905, 1.442695
      %v907 = vpow.pop %v906
      %v908 = vsel %vm734, %v907, 0.0
      %909 = vadd.xlane.f32.xlu0 %v908
      %v910 = vpop.xlane.xlu0 %909
      %v911 = vrcp.pop %v910
      %v912 = vmul.f32 %v907, %v911
      %913 = vrot.lane.b32.xlu0 %v644, 48
      %v914 = vpop.permute.xlu0 %913
      %v917 = vsel %vm734, %v912, 0
      %919 = vmatprep.subr.mxu0 0.0
      %920 = vmatpush1.msra.mxu0 %v914
      %921 = vmatprep.subr.mxu0 0.0
      %922 = vmatpush1.msra.mxu0 0.0
      %923 = vmatprep.subr.mxu0 0.0
      %924 = vmatpush1.msra.mxu0 0.0
      %925 = vmatprep.subr.mxu0 0.0
      %926 = vmatpush1.msra.mxu0 0.0
      %927 = vmatprep.subr.mxu0 0.0
      %928 = vmatpush1.msra.mxu0 0.0
      %929 = vmatprep.subr.mxu0 0.0
      %930 = vmatpush1.msra.mxu0 0.0
      %931 = vmatprep.subr.mxu0 0.0
      %932 = vmatpush1.msra.mxu0 0.0
      %933 = vmatprep.subr.mxu0 0.0
      %934 = vmatpush1.msra.mxu0 0.0
      %935 = vmatprep.subr.mxu0 0.0
      %936 = vmatpush1.msra.mxu0 0.0
      %937 = vmatprep.subr.mxu0 0.0
      %938 = vmatpush1.msra.mxu0 0.0
      %939 = vmatprep.subr.mxu0 0.0
      %940 = vmatpush1.msra.mxu0 0.0
      %941 = vmatprep.subr.mxu0 0.0
      %942 = vmatpush1.msra.mxu0 0.0
      %943 = vmatprep.subr.mxu0 0.0
      %944 = vmatpush1.msra.mxu0 0.0
      %945 = vmatprep.subr.mxu0 0.0
      %946 = vmatpush1.msra.mxu0 0.0
      %947 = vmatprep.subr.mxu0 0.0
      %948 = vmatpush1.msra.mxu0 0.0
      %949 = vmatprep.subr.mxu0 0.0
      %950 = vmatpush1.msra.mxu0 0.0
      %951 = vmatprep.subr.mxu0 0.0
      %952 = vmatpush1.msra.mxu0 0.0
      %953 = vmatprep.subr.mxu0 0.0
      %954 = vmatpush1.msra.mxu0 0.0
      %955 = vmatprep.subr.mxu0 0.0
      %956 = vmatpush1.msra.mxu0 0.0
      %957 = vmatprep.subr.mxu0 0.0
      %958 = vmatpush1.msra.mxu0 0.0
      %959 = vmatprep.subr.mxu0 0.0
      %960 = vmatpush1.msra.mxu0 0.0
      %961 = vmatprep.subr.mxu0 0.0
      %962 = vmatpush1.msra.mxu0 0.0
      %963 = vmatprep.subr.mxu0 0.0
      %964 = vmatpush1.msra.mxu0 0.0
      %965 = vmatprep.subr.mxu0 0.0
      %966 = vmatpush1.msra.mxu0 0.0
      %967 = vmatprep.subr.mxu0 0.0
      %968 = vmatpush1.msra.mxu0 0.0
      %969 = vmatprep.subr.mxu0 0.0
      %970 = vmatpush1.msra.mxu0 0.0
      %971 = vmatprep.subr.mxu0 0.0
      %972 = vmatpush1.msra.mxu0 0.0
      %973 = vmatprep.subr.mxu0 0.0
      %974 = vmatpush1.msra.mxu0 0.0
      %975 = vmatprep.subr.mxu0 0.0
      %976 = vmatpush1.msra.mxu0 0.0
      %977 = vmatprep.subr.mxu0 0.0
      %978 = vmatpush1.msra.mxu0 0.0
      %979 = vmatprep.subr.mxu0 0.0
      %980 = vmatpush1.msra.mxu0 0.0
      %981 = vmatprep.subr.mxu0 0.0
      %982 = vmatpush1.msra.mxu0 0.0
      %983 = vmatprep.mubr.f32.mxu0 0.0
      %984 = vmatmul.mubr.f32.gmra.mrb[0].mxu0 %v917
      %v985 = vpop.f32.mrb[0].mxu0
      %v986 = vadd.f32 0.0, %v985
      %v987 = vpop.f32.mrb[0].mxu0
      %988 = vdwg.mxu0
      %990 = vrot.lane.b32.xlu0 %v986, 16
      %v991 = vpop.permute.xlu0 %990
      %v993 = vsel %vm651, %v819, %v991
      %v994 = vld [vmem:[%s6] sm:$0xff]
      %v995 = vld [vmem:[%s6 + $0x8] sm:$0xff]
      %v996 = vld [vmem:[%s6 + $0x10] sm:$0xff]
      %v997 = vld [vmem:[%s6 + $0x18] sm:$0xff]
      %v998 = vld [vmem:[%s7] sm:$0x1]
      %v1000 = vlaneseq
      %v1001 = vshrl.u32 %v1000, 7
      %v1002 = vsub.s32 0, %v1001
      %v1003 = vrot.slane %v998, %v1002
      %v1006 = vsel %vm534, %v993, 0
      %1008 = vmatprep.subr.mxu0 0.0
      %1009 = vmatpush1.msra.mxu0 %v994
      %1010 = vmatprep.subr.mxu0 0.0
      %1011 = vmatpush1.msra.mxu0 %v995
      %1012 = vmatprep.subr.mxu0 0.0
      %1013 = vmatpush1.msra.mxu0 %v996
      %1014 = vmatprep.subr.mxu0 0.0
      %1015 = vmatpush1.msra.mxu0 %v997
      %1016 = vmatprep.subr.mxu0 0.0
      %1017 = vmatpush1.msra.mxu0 0.0
      %1018 = vmatprep.subr.mxu0 0.0
      %1019 = vmatpush1.msra.mxu0 0.0
      %1020 = vmatprep.subr.mxu0 0.0
      %1021 = vmatpush1.msra.mxu0 0.0
      %1022 = vmatprep.subr.mxu0 0.0
      %1023 = vmatpush1.msra.mxu0 0.0
      %1024 = vmatprep.subr.mxu0 0.0
      %1025 = vmatpush1.msra.mxu0 0.0
      %1026 = vmatprep.subr.mxu0 0.0
      %1027 = vmatpush1.msra.mxu0 0.0
      %1028 = vmatprep.subr.mxu0 0.0
      %1029 = vmatpush1.msra.mxu0 0.0
      %1030 = vmatprep.subr.mxu0 0.0
      %1031 = vmatpush1.msra.mxu0 0.0
      %1032 = vmatprep.subr.mxu0 0.0
      %1033 = vmatpush1.msra.mxu0 0.0
      %1034 = vmatprep.subr.mxu0 0.0
      %1035 = vmatpush1.msra.mxu0 0.0
      %1036 = vmatprep.subr.mxu0 0.0
      %1037 = vmatpush1.msra.mxu0 0.0
      %1038 = vmatprep.subr.mxu0 0.0
      %1039 = vmatpush1.msra.mxu0 0.0
      %1040 = vmatprep.subr.mxu0 0.0
      %1041 = vmatpush1.msra.mxu0 0.0
      %1042 = vmatprep.subr.mxu0 0.0
      %1043 = vmatpush1.msra.mxu0 0.0
      %1044 = vmatprep.subr.mxu0 0.0
      %1045 = vmatpush1.msra.mxu0 0.0
      %1046 = vmatprep.subr.mxu0 0.0
      %1047 = vmatpush1.msra.mxu0 0.0
      %1048 = vmatprep.subr.mxu0 0.0
      %1049 = vmatpush1.msra.mxu0 0.0
      %1050 = vmatprep.subr.mxu0 0.0
      %1051 = vmatpush1.msra.mxu0 0.0
      %1052 = vmatprep.subr.mxu0 0.0
      %1053 = vmatpush1.msra.mxu0 0.0
      %1054 = vmatprep.subr.mxu0 0.0
      %1055 = vmatpush1.msra.mxu0 0.0
      %1056 = vmatprep.subr.mxu0 0.0
      %1057 = vmatpush1.msra.mxu0 0.0
      %1058 = vmatprep.subr.mxu0 0.0
      %1059 = vmatpush1.msra.mxu0 0.0
      %1060 = vmatprep.subr.mxu0 0.0
      %1061 = vmatpush1.msra.mxu0 0.0
      %1062 = vmatprep.subr.mxu0 0.0
      %1063 = vmatpush1.msra.mxu0 0.0
      %1064 = vmatprep.subr.mxu0 0.0
      %1065 = vmatpush1.msra.mxu0 0.0
      %1066 = vmatprep.subr.mxu0 0.0
      %1067 = vmatpush1.msra.mxu0 0.0
      %1068 = vmatprep.subr.mxu0 0.0
      %1069 = vmatpush1.msra.mxu0 0.0
      %1070 = vmatprep.subr.mxu0 0.0
      %1071 = vmatpush1.msra.mxu0 0.0
      %1072 = vmatprep.mubr.f32.mxu0 0.0
      %1073 = vmatmul.mubr.f32.gmra.mrb[0].mxu0 %v1006
      %v1074 = vpop.f32.mrb[0].mxu0
      %v1075 = vadd.f32 %v1003, %v1074
      %v1076 = vpop.f32.mrb[0].mxu0
      %1077 = vdwg.mxu0
      %v1078 = vadd.f32 %v562, %v1075
      %v1079 = vld [vmem:[%s8] sm:$0x1]
      %v1080 = vld [vmem:[%s9] sm:$0x1]
      %v1081 = vsel %vm534, %v1078, 0.0
      %1082 = vadd.xlane.f32.xlu0 %v1081
      %v1083 = vpop.xlane.xlu0 %1082
      %v1084 = vmul.f32 %v1083, %v538
      %v1085 = vsub.f32 %v1078, %v1084
      %v1086 = vmul.f32 %v1085, %v1085
      %v1087 = vsel %vm534, %v1086, 0.0
      %1088 = vadd.xlane.f32.xlu0 %v1087
      %v1089 = vpop.xlane.xlu0 %1088
      %v1090 = vmul.f32 %v1089, %v538
      %v1091 = vadd.f32 %v1090, 1e-12
      %v1092 = vrsqrt.pop %v1091
      %v1093 = vmul.f32 %v1085, %v1092
      %v1095 = vlaneseq
      %v1096 = vshrl.u32 %v1095, 7
      %v1097 = vsub.s32 0, %v1096
      %v1098 = vrot.slane %v1079, %v1097
      %v1100 = vmul.f32 %v1093, %v1098
      %v1102 = vlaneseq
      %v1103 = vshrl.u32 %v1102, 7
      %v1104 = vsub.s32 0, %v1103
      %v1105 = vrot.slane %v1080, %v1104
      %v1107 = vadd.f32 %v1100, %v1105
      %v1108 = vld [vmem:[%s10] sm:$0xff]
      %v1109 = vld [vmem:[%s10 + $0x8] sm:$0xff]
      %v1110 = vld [vmem:[%s10 + $0x10] sm:$0xff]
      %v1111 = vld [vmem:[%s10 + $0x18] sm:$0xff]
      %v1112 = vld [vmem:[%s11] sm:$0x1]
      %v1114 = vlaneseq
      %v1115 = vshrl.u32 %v1114, 7
      %v1116 = vsub.s32 0, %v1115
      %v1117 = vrot.slane %v1112, %v1116
      %v1120 = vsel %vm534, %v1107, 0
      %1122 = vmatprep.subr.mxu0 0.0
      %1123 = vmatpush1.msra.mxu0 %v1108
      %1124 = vmatprep.subr.mxu0 0.0
      %1125 = vmatpush1.msra.mxu0 %v1109
      %1126 = vmatprep.subr.mxu0 0.0
      %1127 = vmatpush1.msra.mxu0 %v1110
      %1128 = vmatprep.subr.mxu0 0.0
      %1129 = vmatpush1.msra.mxu0 %v1111
      %1130 = vmatprep.subr.mxu0 0.0
      %1131 = vmatpush1.msra.mxu0 0.0
      %1132 = vmatprep.subr.mxu0 0.0
      %1133 = vmatpush1.msra.mxu0 0.0
      %1134 = vmatprep.subr.mxu0 0.0
      %1135 = vmatpush1.msra.mxu0 0.0
      %1136 = vmatprep.subr.mxu0 0.0
      %1137 = vmatpush1.msra.mxu0 0.0
      %1138 = vmatprep.subr.mxu0 0.0
      %1139 = vmatpush1.msra.mxu0 0.0
      %1140 = vmatprep.subr.mxu0 0.0
      %1141 = vmatpush1.msra.mxu0 0.0
      %1142 = vmatprep.subr.mxu0 0.0
      %1143 = vmatpush1.msra.mxu0 0.0
      %1144 = vmatprep.subr.mxu0 0.0
      %1145 = vmatpush1.msra.mxu0 0.0
      %1146 = vmatprep.subr.mxu0 0.0
      %1147 = vmatpush1.msra.mxu0 0.0
      %1148 = vmatprep.subr.mxu0 0.0
      %1149 = vmatpush1.msra.mxu0 0.0
      %1150 = vmatprep.subr.mxu0 0.0
      %1151 = vmatpush1.msra.mxu0 0.0
      %1152 = vmatprep.subr.mxu0 0.0
      %1153 = vmatpush1.msra.mxu0 0.0
      %1154 = vmatprep.subr.mxu0 0.0
      %1155 = vmatpush1.msra.mxu0 0.0
      %1156 = vmatprep.subr.mxu0 0.0
      %1157 = vmatpush1.msra.mxu0 0.0
      %1158 = vmatprep.subr.mxu0 0.0
      %1159 = vmatpush1.msra.mxu0 0.0
      %1160 = vmatprep.subr.mxu0 0.0
      %1161 = vmatpush1.msra.mxu0 0.0
      %1162 = vmatprep.subr.mxu0 0.0
      %1163 = vmatpush1.msra.mxu0 0.0
      %1164 = vmatprep.subr.mxu0 0.0
      %1165 = vmatpush1.msra.mxu0 0.0
      %1166 = vmatprep.subr.mxu0 0.0
      %1167 = vmatpush1.msra.mxu0 0.0
      %1168 = vmatprep.subr.mxu0 0.0
      %1169 = vmatpush1.msra.mxu0 0.0
      %1170 = vmatprep.subr.mxu0 0.0
      %1171 = vmatpush1.msra.mxu0 0.0
      %1172 = vmatprep.subr.mxu0 0.0
      %1173 = vmatpush1.msra.mxu0 0.0
      %1174 = vmatprep.subr.mxu0 0.0
      %1175 = vmatpush1.msra.mxu0 0.0
      %1176 = vmatprep.subr.mxu0 0.0
      %1177 = vmatpush1.msra.mxu0 0.0
      %1178 = vmatprep.subr.mxu0 0.0
      %1179 = vmatpush1.msra.mxu0 0.0
      %1180 = vmatprep.subr.mxu0 0.0
      %1181 = vmatpush1.msra.mxu0 0.0
      %1182 = vmatprep.subr.mxu0 0.0
      %1183 = vmatpush1.msra.mxu0 0.0
      %1184 = vmatprep.subr.mxu0 0.0
      %1185 = vmatpush1.msra.mxu0 0.0
      %1186 = vmatprep.mubr.f32.mxu0 0.0
      %1187 = vmatmul.mubr.f32.gmra.mrb[0].mxu0 %v1120
      %v1188 = vpop.f32.mrb[0].mxu0
      %v1189 = vadd.f32 %v1117, %v1188
      %v1190 = vpop.f32.mrb[0].mxu0
      %1191 = vdwg.mxu0
      %v1192 = vmul.f32 %v1189, %v1189
      %v1193 = vmul.f32 %v1189, %v1192
      %v1194 = vmul.f32 %v1193, 0.044715
      %v1195 = vadd.f32 %v1189, %v1194
      %v1196 = vmul.f32 %v1195, 0.7978846
      %v1197 = vtanh.pop %v1196
      %v1198 = vadd.f32 %v1197, 1.0
      %v1199 = vmul.f32 %v1198, 0.5
      %v1200 = vmul.f32 %v1189, %v1199
      %v1201 = vld [vmem:[%s12] sm:$0xff]
      %v1202 = vld [vmem:[%s12 + $0x8] sm:$0xff]
      %v1203 = vld [vmem:[%s12 + $0x10] sm:$0xff]
      %v1204 = vld [vmem:[%s12 + $0x18] sm:$0xff]
      %v1205 = vld [vmem:[%s12 + $0x20] sm:$0xff]
      %v1206 = vld [vmem:[%s12 + $0x28] sm:$0xff]
      %v1207 = vld [vmem:[%s12 + $0x30] sm:$0xff]
      %v1208 = vld [vmem:[%s12 + $0x38] sm:$0xff]
      %v1209 = vld [vmem:[%s13] sm:$0x1]
      %v1211 = vlaneseq
      %v1212 = vshrl.u32 %v1211, 7
      %v1213 = vsub.s32 0, %v1212
      %v1214 = vrot.slane %v1209, %v1213
      %vm1216 = vcmask 523264
      %v1218 = vsel %vm1216, %v1200, 0
      %1220 = vmatprep.subr.mxu0 0.0
      %1221 = vmatpush1.msra.mxu0 %v1201
      %1222 = vmatprep.subr.mxu0 0.0
      %1223 = vmatpush1.msra.mxu0 %v1202
      %1224 = vmatprep.subr.mxu0 0.0
      %1225 = vmatpush1.msra.mxu0 %v1203
      %1226 = vmatprep.subr.mxu0 0.0
      %1227 = vmatpush1.msra.mxu0 %v1204
      %1228 = vmatprep.subr.mxu0 0.0
      %1229 = vmatpush1.msra.mxu0 %v1205
      %1230 = vmatprep.subr.mxu0 0.0
      %1231 = vmatpush1.msra.mxu0 %v1206
      %1232 = vmatprep.subr.mxu0 0.0
      %1233 = vmatpush1.msra.mxu0 %v1207
      %1234 = vmatprep.subr.mxu0 0.0
      %1235 = vmatpush1.msra.mxu0 %v1208
      %1236 = vmatprep.subr.mxu0 0.0
      %1237 = vmatpush1.msra.mxu0 0.0
      %1238 = vmatprep.subr.mxu0 0.0
      %1239 = vmatpush1.msra.mxu0 0.0
      %1240 = vmatprep.subr.mxu0 0.0
      %1241 = vmatpush1.msra.mxu0 0.0
      %1242 = vmatprep.subr.mxu0 0.0
      %1243 = vmatpush1.msra.mxu0 0.0
      %1244 = vmatprep.subr.mxu0 0.0
      %1245 = vmatpush1.msra.mxu0 0.0
      %1246 = vmatprep.subr.mxu0 0.0
      %1247 = vmatpush1.msra.mxu0 0.0
      %1248 = vmatprep.subr.mxu0 0.0
      %1249 = vmatpush1.msra.mxu0 0.0
      %1250 = vmatprep.subr.mxu0 0.0
      %1251 = vmatpush1.msra.mxu0 0.0
      %1252 = vmatprep.subr.mxu0 0.0
      %1253 = vmatpush1.msra.mxu0 0.0
      %1254 = vmatprep.subr.mxu0 0.0
      %1255 = vmatpush1.msra.mxu0 0.0
      %1256 = vmatprep.subr.mxu0 0.0
      %1257 = vmatpush1.msra.mxu0 0.0
      %1258 = vmatprep.subr.mxu0 0.0
      %1259 = vmatpush1.msra.mxu0 0.0
      %1260 = vmatprep.subr.mxu0 0.0
      %1261 = vmatpush1.msra.mxu0 0.0
      %1262 = vmatprep.subr.mxu0 0.0
      %1263 = vmatpush1.msra.mxu0 0.0
      %1264 = vmatprep.subr.mxu0 0.0
      %1265 = vmatpush1.msra.mxu0 0.0
      %1266 = vmatprep.subr.mxu0 0.0
      %1267 = vmatpush1.msra.mxu0 0.0
      %1268 = vmatprep.subr.mxu0 0.0
      %1269 = vmatpush1.msra.mxu0 0.0
      %1270 = vmatprep.subr.mxu0 0.0
      %1271 = vmatpush1.msra.mxu0 0.0
      %1272 = vmatprep.subr.mxu0 0.0
      %1273 = vmatpush1.msra.mxu0 0.0
      %1274 = vmatprep.subr.mxu0 0.0
      %1275 = vmatpush1.msra.mxu0 0.0
      %1276 = vmatprep.subr.mxu0 0.0
      %1277 = vmatpush1.msra.mxu0 0.0
      %1278 = vmatprep.subr.mxu0 0.0
      %1279 = vmatpush1.msra.mxu0 0.0
      %1280 = vmatprep.subr.mxu0 0.0
      %1281 = vmatpush1.msra.mxu0 0.0
      %1282 = vmatprep.subr.mxu0 0.0
      %1283 = vmatpush1.msra.mxu0 0.0
      %1284 = vmatprep.mubr.f32.mxu0 0.0
      %1285 = vmatmul.mubr.f32.gmra.mrb[0].mxu0 %v1218
      %v1286 = vpop.f32.mrb[0].mxu0
      %v1287 = vadd.f32 %v1214, %v1286
      %v1288 = vpop.f32.mrb[0].mxu0
      %1289 = vdwg.mxu0
      %v1290 = vadd.f32 %v1107, %v1287
      %v1291 = vld [vmem:[%s14] sm:$0x1]
      %v1292 = vld [vmem:[%s15] sm:$0x1]
      %v1293 = vsel %vm534, %v1290, 0.0
      %1294 = vadd.xlane.f32.xlu0 %v1293
      %v1295 = vpop.xlane.xlu0 %1294
      %v1296 = vmul.f32 %v1295, %v538
      %v1297 = vsub.f32 %v1290, %v1296
      %v1298 = vmul.f32 %v1297, %v1297
      %v1299 = vsel %vm534, %v1298, 0.0
      %1300 = vadd.xlane.f32.xlu0 %v1299
      %v1301 = vpop.xlane.xlu0 %1300
      %v1302 = vmul.f32 %v1301, %v538
      %v1303 = vadd.f32 %v1302, 1e-12
      %v1304 = vrsqrt.pop %v1303
      %v1305 = vmul.f32 %v1297, %v1304
      %v1307 = vlaneseq
      %v1308 = vshrl.u32 %v1307, 7
      %v1309 = vsub.s32 0, %v1308
      %v1310 = vrot.slane %v1291, %v1309
      %v1312 = vmul.f32 %v1305, %v1310
      %v1314 = vlaneseq
      %v1315 = vshrl.u32 %v1314, 7
      %v1316 = vsub.s32 0, %v1315
      %v1317 = vrot.slane %v1292, %v1316
      %v1319 = vadd.f32 %v1312, %v1317
      %1320 = vst.msk [vmem:[%s530] sm:$0xff] %vm534, %v1319
      %p1321 = scmp.lt.s32.totalorder %s27, 1
      %s1322 = scalar_select %p1321, %s27, 1
      %s1323 = smul.addr %s1322, 8
      %s1324 = scalar_lea.vmem %s16, %s1323
      // Predicated region
      $region85: #{bert_bilstm_crf_forward.4} parent=83 // pred_check
        %p1325 = pneg %p391
      $region86: #{bert_bilstm_crf_forward.4} parent=83 // pred_check_branch
        %1327 = sbr.rel (%p1325) target = $region88
      $region87: #{bert_bilstm_crf_forward.4} parent=83 // pred_region
        _
      $region88: #{bert_bilstm_crf_forward.4} parent=83 // pred_fallthru
        _
    $region84: #{bert_bilstm_crf_forward.4} parent=5 // pred_fallthru
      _
    %p1328 = scmp.le.s32.totalorder 2, %s22
    // Predicated region
    $region89: #{bert_bilstm_crf_forward.4} parent=5 // pred_check
      %p1329 = pneg %p1328
    $region90: #{bert_bilstm_crf_forward.4} parent=5 // pred_check_branch
      %1331 = sbr.rel (%p1329) target = $region92
    $region91: #{bert_bilstm_crf_forward.4} parent=5 // pred_region
      %s1332 = ssub.s32 %s22, 2
      // Predicated region
      $region93: #{bert_bilstm_crf_forward.4} parent=91 // pred_check
        %p1333 = pneg %p397
      $region94: #{bert_bilstm_crf_forward.4} parent=91 // pred_check_branch
        %1335 = sbr.rel (%p1333) target = $region96
      $region95: #{bert_bilstm_crf_forward.4} parent=91 // pred_region
        %p1336 = scmp.lt.s32.totalorder %s28, 1
        %s1337 = scalar_select %p1336, %s28, 1
        %s1338 = smul.addr %s1337, 8
        %s1339 = scalar_lea.vmem %s16, %s1338
      $region96: #{bert_bilstm_crf_forward.4} parent=91 // pred_fallthru
        _
    $region92: #{bert_bilstm_crf_forward.4} parent=5 // pred_fallthru
      _
  $region6: #{bert_bilstm_crf_forward.4} parent=0 // loop_footer
    %s26 = sadd.s32 1, %s22
  $region7: #{bert_bilstm_crf_forward.4} parent=0 // loop_footer_branch
    %21 = sbr.rel target = $region3
  $region8: #{bert_bilstm_crf_forward.4} parent=0 // loop_exit
    _

// kernel: bert_bilstm_crf_forward.5
$region0: #{bert_bilstm_crf_forward.5}
  #allocation0 [shape = 'u32[]', space=smem, size = 0x4, offset = 0x4, fixed_abs, tag = 'smem constant byte address 0x4 - core index']
  #allocation1 [shape = 'u32[144,128]{1,0:T(1,128)}', space=vmem, size = 0x12000, scoped, tag = 'internal scratch']
  %s0 = inlined_call_operand.vmem [shape: f32[2,8,32], index: 0, kind: input, shape index: {}]
  %s1 = inlined_call_operand.vmem [shape: f32[2,1,8], index: 1, kind: input, shape index: {}]
  %s2 = inlined_call_operand.vmem [shape: f32[1,32], index: 2, kind: input, shape index: {}, may-alias: {2,8,14}]
  %s3 = inlined_call_operand.vmem [shape: f32[1,32], index: 3, kind: input, shape index: {}, may-alias: {3,7,9,13,15}]
  %s4 = inlined_call_operand.vmem [shape: f32[32,96], index: 4, kind: input, shape index: {}]
  %s5 = inlined_call_operand.vmem [shape: f32[1,96], index: 5, kind: input, shape index: {}]
  %s6 = inlined_call_operand.vmem [shape: f32[32,32], index: 6, kind: input, shape index: {}]
  %s7 = inlined_call_operand.vmem [shape: f32[1,32], index: 7, kind: input, shape index: {}, may-alias: {3,7,9,13,15}]
  %s8 = inlined_call_operand.vmem [shape: f32[1,32], index: 8, kind: input, shape index: {}, may-alias: {2,8,14}]
  %s9 = inlined_call_operand.vmem [shape: f32[1,32], index: 9, kind: input, shape index: {}, may-alias: {3,7,9,13,15}]
  %s10 = inlined_call_operand.vmem [shape: f32[32,64], index: 10, kind: input, shape index: {}]
  %s11 = inlined_call_operand.vmem [shape: f32[1,64], index: 11, kind: input, shape index: {}]
  %s12 = inlined_call_operand.vmem [shape: f32[64,32], index: 12, kind: input, shape index: {}]
  %s13 = inlined_call_operand.vmem [shape: f32[1,32], index: 13, kind: input, shape index: {}, may-alias: {3,7,9,13,15}]
  %s14 = inlined_call_operand.vmem [shape: f32[1,32], index: 14, kind: input, shape index: {}, may-alias: {2,8,14}]
  %s15 = inlined_call_operand.vmem [shape: f32[1,32], index: 15, kind: input, shape index: {}, may-alias: {3,7,9,13,15}]
  %s16 = inlined_call_operand.vmem [shape: f32[2,8,32], index: 16, kind: output, shape index: {}]
  %s17 = sld [smem:[#allocation0]]
  $region97: #{bert_bilstm_crf_forward.5} parent=0
    _
  %s19 = ssub.s32 1, %s17
  %s20 = scalar_select 0, %s19, %s17
  loop: start=0, step=1, limit=4
  $region2: #{bert_bilstm_crf_forward.5} parent=0 // loop_pre_header
    _
  $region3: #{bert_bilstm_crf_forward.5} parent=0 // loop_header
    %s22 = sphi 0, %s26
    %p23 = scmp.ge.s32.totalorder %s22, 4
    %s32 = sphi 0, %s34
    %s35 = sphi 0, %s32
    %s36 = sphi 0, %s35
    %s52 = sphi 0, %s36
    %s58 = sphi 0, %s60
    %s61 = sphi 0, %s58
    %s62 = sphi 0, %s61
    %s78 = sphi 0, %s62
    %s82 = sphi 0, %s82
    %s84 = sphi 0, %s82
    %s85 = sphi 0, %s84
    %s99 = sphi 0, %s85
    %s103 = sphi 0, %s103
    %s105 = sphi 0, %s103
    %s106 = sphi 0, %s105
    %s120 = sphi 0, %s106
    %s124 = sphi 0, %s124
    %s126 = sphi 0, %s124
    %s127 = sphi 0, %s126
    %s141 = sphi 0, %s127
    %s145 = sphi 0, %s145
    %s147 = sphi 0, %s145
    %s148 = sphi 0, %s147
    %s162 = sphi 0, %s148
    %s166 = sphi 0, %s166
    %s168 = sphi 0, %s166
    %s169 = sphi 0, %s168
    %s183 = sphi 0, %s169
    %s187 = sphi 0, %s187
    %s189 = sphi 0, %s187
    %s190 = sphi 0, %s189
    %s204 = sphi 0, %s190
    %s208 = sphi 0, %s208
    %s210 = sphi 0, %s208
    %s211 = sphi 0, %s210
    %s225 = sphi 0, %s211
    %s229 = sphi 0, %s229
    %s231 = sphi 0, %s229
    %s232 = sphi 0, %s231
    %s246 = sphi 0, %s232
    %s250 = sphi 0, %s250
    %s252 = sphi 0, %s250
    %s253 = sphi 0, %s252
    %s267 = sphi 0, %s253
    %s271 = sphi 0, %s271
    %s273 = sphi 0, %s271
    %s274 = sphi 0, %s273
    %s288 = sphi 0, %s274
    %s292 = sphi 0, %s292
    %s294 = sphi 0, %s292
    %s295 = sphi 0, %s294
    %s309 = sphi 0, %s295
    %s313 = sphi 0, %s313
    %s315 = sphi 0, %s313
    %s316 = sphi 0, %s315
    %s330 = sphi 0, %s316
    %s334 = sphi 0, %s334
    %s336 = sphi 0, %s334
    %s337 = sphi 0, %s336
    %s351 = sphi 0, %s337
    %s355 = sphi 0, %s355
    %s357 = sphi 0, %s355
    %s358 = sphi 0, %s357
    %s372 = sphi 0, %s358
    %s378 = sphi 0, %s380
    %s381 = sphi 0, %s378
    %s382 = sphi 0, %s381
    %s398 = sphi 0, %s382
  $region4: #{bert_bilstm_crf_forward.5} parent=0 // loop_header_branch
    %25 = sbr.rel (%p23) target = $region8
  $region5: #{bert_bilstm_crf_forward.5} parent=0 // loop_body
    %s27 = ssub.s32 %s22, 1
    %s28 = ssub.s32 %s22, 2
    %s29 = sadd.s32 %s22, 1
    %s30 = ssub.s32 %s22, %s29
    %p31 = scmp.eq.s32.totalorder %s30, 0
    %s33 = sadd.s32 %s32, 1
    %s34 = scalar_select %p31, %s32, %s33
    %p37 = pneg %p31
    %p38 = scmp.eq.s32.totalorder %s22, 1
    %p39 = por %p37, %p38
    %p40 = scmp.ne.s32.totalorder %s32, %s35
    %p41 = scmp.eq.s32.totalorder %s22, 0
    %p42 = por %p40, %p41
    %p43 = scmp.ne.s32.totalorder %s32, %s35
    %p44 = scmp.eq.s32.totalorder %s27, 1
    %p45 = por %p43, %p44
    %p46 = scmp.ne.s32.totalorder %s35, %s36
    %p47 = scmp.eq.s32.totalorder %s27, 0
    %p48 = por %p46, %p47
    %p49 = scmp.ne.s32.totalorder %s35, %s36
    %p50 = scmp.eq.s32.totalorder %s28, 1
    %p51 = por %p49, %p50
    %p53 = scmp.ne.s32.totalorder %s36, %s52
    %p54 = scmp.eq.s32.totalorder %s28, 0
    %p55 = por %p53, %p54
    %s56 = ssub.s32 %s22, %s29
    %p57 = scmp.eq.s32.totalorder %s56, 0
    %s59 = sadd.s32 %s58, 1
    %s60 = scalar_select %p57, %s58, %s59
    %p63 = pneg %p57
    %p64 = scmp.eq.s32.totalorder %s22, 1
    %p65 = por %p63, %p64
    %p66 = scmp.ne.s32.totalorder %s58, %s61
    %p67 = scmp.eq.s32.totalorder %s22, 0
    %p68 = por %p66, %p67
    %p69 = scmp.ne.s32.totalorder %s58, %s61
    %p70 = scmp.eq.s32.totalorder %s27, 1
    %p71 = por %p69, %p70
    %p72 = scmp.ne.s32.totalorder %s61, %s62
    %p73 = scmp.eq.s32.totalorder %s27, 0
    %p74 = por %p72, %p73
    %p75 = scmp.ne.s32.totalorder %s61, %s62
    %p76 = scmp.eq.s32.totalorder %s28, 1
    %p77 = por %p75, %p76
    %p79 = scmp.ne.s32.totalorder %s62, %s78
    %p80 = scmp.eq.s32.totalorder %s28, 0
    %p81 = por %p79, %p80
    %s83 = sadd.s32 %s82, 1
    %p86 = scmp.eq.s32.totalorder %s22, 1
    %p87 = scmp.ne.s32.totalorder %s82, %s84
    %p88 = scmp.eq.s32.totalorder %s22, 0
    %p89 = por %p87, %p88
    %p90 = scmp.ne.s32.totalorder %s82, %s84
    %p91 = scmp.eq.s32.totalorder %s27, 1
    %p92 = por %p90, %p91
    %p93 = scmp.ne.s32.totalorder %s84, %s85
    %p94 = scmp.eq.s32.totalorder %s27, 0
    %p95 = por %p93, %p94
    %p96 = scmp.ne.s32.totalorder %s84, %s85
    %p97 = scmp.eq.s32.totalorder %s28, 1
    %p98 = por %p96, %p97
    %p100 = scmp.ne.s32.totalorder %s85, %s99
    %p101 = scmp.eq.s32.totalorder %s28, 0
    %p102 = por %p100, %p101
    %s104 = sadd.s32 %s103, 1
    %p107 = scmp.eq.s32.totalorder %s22, 1
    %p108 = scmp.ne.s32.totalorder %s103, %s105
    %p109 = scmp.eq.s32.totalorder %s22, 0
    %p110 = por %p108, %p109
    %p111 = scmp.ne.s32.totalorder %s103, %s105
    %p112 = scmp.eq.s32.totalorder %s27, 1
    %p113 = por %p111, %p112
    %p114 = scmp.ne.s32.totalorder %s105, %s106
    %p115 = scmp.eq.s32.totalorder %s27, 0
    %p116 = por %p114, %p115
    %p117 = scmp.ne.s32.totalorder %s105, %s106
    %p118 = scmp.eq.s32.totalorder %s28, 1
    %p119 = por %p117, %p118
    %p121 = scmp.ne.s32.totalorder %s106, %s120
    %p122 = scmp.eq.s32.totalorder %s28, 0
    %p123 = por %p121, %p122
    %s125 = sadd.s32 %s124, 1
    %p128 = scmp.eq.s32.totalorder %s22, 1
    %p129 = scmp.ne.s32.totalorder %s124, %s126
    %p130 = scmp.eq.s32.totalorder %s22, 0
    %p131 = por %p129, %p130
    %p132 = scmp.ne.s32.totalorder %s124, %s126
    %p133 = scmp.eq.s32.totalorder %s27, 1
    %p134 = por %p132, %p133
    %p135 = scmp.ne.s32.totalorder %s126, %s127
    %p136 = scmp.eq.s32.totalorder %s27, 0
    %p137 = por %p135, %p136
    %p138 = scmp.ne.s32.totalorder %s126, %s127
    %p139 = scmp.eq.s32.totalorder %s28, 1
    %p140 = por %p138, %p139
    %p142 = scmp.ne.s32.totalorder %s127, %s141
    %p143 = scmp.eq.s32.totalorder %s28, 0
    %p144 = por %p142, %p143
    %s146 = sadd.s32 %s145, 1
    %p149 = scmp.eq.s32.totalorder %s22, 1
    %p150 = scmp.ne.s32.totalorder %s145, %s147
    %p151 = scmp.eq.s32.totalorder %s22, 0
    %p152 = por %p150, %p151
    %p153 = scmp.ne.s32.totalorder %s145, %s147
    %p154 = scmp.eq.s32.totalorder %s27, 1
    %p155 = por %p153, %p154
    %p156 = scmp.ne.s32.totalorder %s147, %s148
    %p157 = scmp.eq.s32.totalorder %s27, 0
    %p158 = por %p156, %p157
    %p159 = scmp.ne.s32.totalorder %s147, %s148
    %p160 = scmp.eq.s32.totalorder %s28, 1
    %p161 = por %p159, %p160
    %p163 = scmp.ne.s32.totalorder %s148, %s162
    %p164 = scmp.eq.s32.totalorder %s28, 0
    %p165 = por %p163, %p164
    %s167 = sadd.s32 %s166, 1
    %p170 = scmp.eq.s32.totalorder %s22, 1
    %p171 = scmp.ne.s32.totalorder %s166, %s168
    %p172 = scmp.eq.s32.totalorder %s22, 0
    %p173 = por %p171, %p172
    %p174 = scmp.ne.s32.totalorder %s166, %s168
    %p175 = scmp.eq.s32.totalorder %s27, 1
    %p176 = por %p174, %p175
    %p177 = scmp.ne.s32.totalorder %s168, %s169
    %p178 = scmp.eq.s32.totalorder %s27, 0
    %p179 = por %p177, %p178
    %p180 = scmp.ne.s32.totalorder %s168, %s169
    %p181 = scmp.eq.s32.totalorder %s28, 1
    %p182 = por %p180, %p181
    %p184 = scmp.ne.s32.totalorder %s169, %s183
    %p185 = scmp.eq.s32.totalorder %s28, 0
    %p186 = por %p184, %p185
    %s188 = sadd.s32 %s187, 1
    %p191 = scmp.eq.s32.totalorder %s22, 1
    %p192 = scmp.ne.s32.totalorder %s187, %s189
    %p193 = scmp.eq.s32.totalorder %s22, 0
    %p194 = por %p192, %p193
    %p195 = scmp.ne.s32.totalorder %s187, %s189
    %p196 = scmp.eq.s32.totalorder %s27, 1
    %p197 = por %p195, %p196
    %p198 = scmp.ne.s32.totalorder %s189, %s190
    %p199 = scmp.eq.s32.totalorder %s27, 0
    %p200 = por %p198, %p199
    %p201 = scmp.ne.s32.totalorder %s189, %s190
    %p202 = scmp.eq.s32.totalorder %s28, 1
    %p203 = por %p201, %p202
    %p205 = scmp.ne.s32.totalorder %s190, %s204
    %p206 = scmp.eq.s32.totalorder %s28, 0
    %p207 = por %p205, %p206
    %s209 = sadd.s32 %s208, 1
    %p212 = scmp.eq.s32.totalorder %s22, 1
    %p213 = scmp.ne.s32.totalorder %s208, %s210
    %p214 = scmp.eq.s32.totalorder %s22, 0
    %p215 = por %p213, %p214
    %p216 = scmp.ne.s32.totalorder %s208, %s210
    %p217 = scmp.eq.s32.totalorder %s27, 1
    %p218 = por %p216, %p217
    %p219 = scmp.ne.s32.totalorder %s210, %s211
    %p220 = scmp.eq.s32.totalorder %s27, 0
    %p221 = por %p219, %p220
    %p222 = scmp.ne.s32.totalorder %s210, %s211
    %p223 = scmp.eq.s32.totalorder %s28, 1
    %p224 = por %p222, %p223
    %p226 = scmp.ne.s32.totalorder %s211, %s225
    %p227 = scmp.eq.s32.totalorder %s28, 0
    %p228 = por %p226, %p227
    %s230 = sadd.s32 %s229, 1
    %p233 = scmp.eq.s32.totalorder %s22, 1
    %p234 = scmp.ne.s32.totalorder %s229, %s231
    %p235 = scmp.eq.s32.totalorder %s22, 0
    %p236 = por %p234, %p235
    %p237 = scmp.ne.s32.totalorder %s229, %s231
    %p238 = scmp.eq.s32.totalorder %s27, 1
    %p239 = por %p237, %p238
    %p240 = scmp.ne.s32.totalorder %s231, %s232
    %p241 = scmp.eq.s32.totalorder %s27, 0
    %p242 = por %p240, %p241
    %p243 = scmp.ne.s32.totalorder %s231, %s232
    %p244 = scmp.eq.s32.totalorder %s28, 1
    %p245 = por %p243, %p244
    %p247 = scmp.ne.s32.totalorder %s232, %s246
    %p248 = scmp.eq.s32.totalorder %s28, 0
    %p249 = por %p247, %p248
    %s251 = sadd.s32 %s250, 1
    %p254 = scmp.eq.s32.totalorder %s22, 1
    %p255 = scmp.ne.s32.totalorder %s250, %s252
    %p256 = scmp.eq.s32.totalorder %s22, 0
    %p257 = por %p255, %p256
    %p258 = scmp.ne.s32.totalorder %s250, %s252
    %p259 = scmp.eq.s32.totalorder %s27, 1
    %p260 = por %p258, %p259
    %p261 = scmp.ne.s32.totalorder %s252, %s253
    %p262 = scmp.eq.s32.totalorder %s27, 0
    %p263 = por %p261, %p262
    %p264 = scmp.ne.s32.totalorder %s252, %s253
    %p265 = scmp.eq.s32.totalorder %s28, 1
    %p266 = por %p264, %p265
    %p268 = scmp.ne.s32.totalorder %s253, %s267
    %p269 = scmp.eq.s32.totalorder %s28, 0
    %p270 = por %p268, %p269
    %s272 = sadd.s32 %s271, 1
    %p275 = scmp.eq.s32.totalorder %s22, 1
    %p276 = scmp.ne.s32.totalorder %s271, %s273
    %p277 = scmp.eq.s32.totalorder %s22, 0
    %p278 = por %p276, %p277
    %p279 = scmp.ne.s32.totalorder %s271, %s273
    %p280 = scmp.eq.s32.totalorder %s27, 1
    %p281 = por %p279, %p280
    %p282 = scmp.ne.s32.totalorder %s273, %s274
    %p283 = scmp.eq.s32.totalorder %s27, 0
    %p284 = por %p282, %p283
    %p285 = scmp.ne.s32.totalorder %s273, %s274
    %p286 = scmp.eq.s32.totalorder %s28, 1
    %p287 = por %p285, %p286
    %p289 = scmp.ne.s32.totalorder %s274, %s288
    %p290 = scmp.eq.s32.totalorder %s28, 0
    %p291 = por %p289, %p290
    %s293 = sadd.s32 %s292, 1
    %p296 = scmp.eq.s32.totalorder %s22, 1
    %p297 = scmp.ne.s32.totalorder %s292, %s294
    %p298 = scmp.eq.s32.totalorder %s22, 0
    %p299 = por %p297, %p298
    %p300 = scmp.ne.s32.totalorder %s292, %s294
    %p301 = scmp.eq.s32.totalorder %s27, 1
    %p302 = por %p300, %p301
    %p303 = scmp.ne.s32.totalorder %s294, %s295
    %p304 = scmp.eq.s32.totalorder %s27, 0
    %p305 = por %p303, %p304
    %p306 = scmp.ne.s32.totalorder %s294, %s295
    %p307 = scmp.eq.s32.totalorder %s28, 1
    %p308 = por %p306, %p307
    %p310 = scmp.ne.s32.totalorder %s295, %s309
    %p311 = scmp.eq.s32.totalorder %s28, 0
    %p312 = por %p310, %p311
    %s314 = sadd.s32 %s313, 1
    %p317 = scmp.eq.s32.totalorder %s22, 1
    %p318 = scmp.ne.s32.totalorder %s313, %s315
    %p319 = scmp.eq.s32.totalorder %s22, 0
    %p320 = por %p318, %p319
    %p321 = scmp.ne.s32.totalorder %s313, %s315
    %p322 = scmp.eq.s32.totalorder %s27, 1
    %p323 = por %p321, %p322
    %p324 = scmp.ne.s32.totalorder %s315, %s316
    %p325 = scmp.eq.s32.totalorder %s27, 0
    %p326 = por %p324, %p325
    %p327 = scmp.ne.s32.totalorder %s315, %s316
    %p328 = scmp.eq.s32.totalorder %s28, 1
    %p329 = por %p327, %p328
    %p331 = scmp.ne.s32.totalorder %s316, %s330
    %p332 = scmp.eq.s32.totalorder %s28, 0
    %p333 = por %p331, %p332
    %s335 = sadd.s32 %s334, 1
    %p338 = scmp.eq.s32.totalorder %s22, 1
    %p339 = scmp.ne.s32.totalorder %s334, %s336
    %p340 = scmp.eq.s32.totalorder %s22, 0
    %p341 = por %p339, %p340
    %p342 = scmp.ne.s32.totalorder %s334, %s336
    %p343 = scmp.eq.s32.totalorder %s27, 1
    %p344 = por %p342, %p343
    %p345 = scmp.ne.s32.totalorder %s336, %s337
    %p346 = scmp.eq.s32.totalorder %s27, 0
    %p347 = por %p345, %p346
    %p348 = scmp.ne.s32.totalorder %s336, %s337
    %p349 = scmp.eq.s32.totalorder %s28, 1
    %p350 = por %p348, %p349
    %p352 = scmp.ne.s32.totalorder %s337, %s351
    %p353 = scmp.eq.s32.totalorder %s28, 0
    %p354 = por %p352, %p353
    %s356 = sadd.s32 %s355, 1
    %p359 = scmp.eq.s32.totalorder %s22, 1
    %p360 = scmp.ne.s32.totalorder %s355, %s357
    %p361 = scmp.eq.s32.totalorder %s22, 0
    %p362 = por %p360, %p361
    %p363 = scmp.ne.s32.totalorder %s355, %s357
    %p364 = scmp.eq.s32.totalorder %s27, 1
    %p365 = por %p363, %p364
    %p366 = scmp.ne.s32.totalorder %s357, %s358
    %p367 = scmp.eq.s32.totalorder %s27, 0
    %p368 = por %p366, %p367
    %p369 = scmp.ne.s32.totalorder %s357, %s358
    %p370 = scmp.eq.s32.totalorder %s28, 1
    %p371 = por %p369, %p370
    %p373 = scmp.ne.s32.totalorder %s358, %s372
    %p374 = scmp.eq.s32.totalorder %s28, 0
    %p375 = por %p373, %p374
    %s376 = ssub.s32 %s22, %s29
    %p377 = scmp.eq.s32.totalorder %s376, 0
    %s379 = sadd.s32 %s378, 1
    %s380 = scalar_select %p377, %s378, %s379
    %p383 = pneg %p377
    %p384 = scmp.eq.s32.totalorder %s22, 1
    %p385 = por %p383, %p384
    %p386 = scmp.ne.s32.totalorder %s378, %s381
    %p387 = scmp.eq.s32.totalorder %s22, 0
    %p388 = por %p386, %p387
    %p389 = scmp.ne.s32.totalorder %s378, %s381
    %p390 = scmp.eq.s32.totalorder %s27, 1
    %p391 = por %p389, %p390
    %p392 = scmp.ne.s32.totalorder %s381, %s382
    %p393 = scmp.eq.s32.totalorder %s27, 0
    %p394 = por %p392, %p393
    %p395 = scmp.ne.s32.totalorder %s381, %s382
    %p396 = scmp.eq.s32.totalorder %s28, 1
    %p397 = por %p395, %p396
    %p399 = scmp.ne.s32.totalorder %s382, %s398
    %p400 = scmp.eq.s32.totalorder %s28, 0
    %p401 = por %p399, %p400
    %p402 = scmp.le.s32.totalorder 1, %s22
    %p403 = scmp.lt.s32.totalorder %s22, 3
    %p404 = pnand %p402, %p403
    %p405 = pneg %p404
    // Predicated region
    $region9: #{bert_bilstm_crf_forward.5} parent=5 // pred_check
      _
    $region10: #{bert_bilstm_crf_forward.5} parent=5 // pred_check_branch
      %407 = sbr.rel (%p404) target = $region12
    $region11: #{bert_bilstm_crf_forward.5} parent=5 // pred_region
      %s408 = ssub.s32 %s22, 1
      // Predicated region
      $region13: #{bert_bilstm_crf_forward.5} parent=11 // pred_check
        %p409 = pneg %p95
      $region14: #{bert_bilstm_crf_forward.5} parent=11 // pred_check_branch
        %411 = sbr.rel (%p409) target = $region16
      $region15: #{bert_bilstm_crf_forward.5} parent=11 // pred_region
        _
      $region16: #{bert_bilstm_crf_forward.5} parent=11 // pred_fallthru
        _
      // Predicated region
      $region17: #{bert_bilstm_crf_forward.5} parent=11 // pred_check
        %p412 = pneg %p116
      $region18: #{bert_bilstm_crf_forward.5} parent=11 // pred_check_branch
        %414 = sbr.rel (%p412) target = $region20
      $region19: #{bert_bilstm_crf_forward.5} parent=11 // pred_region
        _
      $region20: #{bert_bilstm_crf_forward.5} parent=11 // pred_fallthru
        _
      // Predicated region
      $region21: #{bert_bilstm_crf_forward.5} parent=11 // pred_check
        %p415 = pneg %p137
      $region22: #{bert_bilstm_crf_forward.5} parent=11 // pred_check_branch
        %417 = sbr.rel (%p415) target = $region24
      $region23: #{bert_bilstm_crf_forward.5} parent=11 // pred_region
        _
      $region24: #{bert_bilstm_crf_forward.5} parent=11 // pred_fallthru
        _
      // Predicated region
      $region25: #{bert_bilstm_crf_forward.5} parent=11 // pred_check
        %p418 = pneg %p158
      $region26: #{bert_bilstm_crf_forward.5} parent=11 // pred_check_branch
        %420 = sbr.rel (%p418) target = $region28
      $region27: #{bert_bilstm_crf_forward.5} parent=11 // pred_region
        _
      $region28: #{bert_bilstm_crf_forward.5} parent=11 // pred_fallthru
        _
      // Predicated region
      $region29: #{bert_bilstm_crf_forward.5} parent=11 // pred_check
        %p421 = pneg %p179
      $region30: #{bert_bilstm_crf_forward.5} parent=11 // pred_check_branch
        %423 = sbr.rel (%p421) target = $region32
      $region31: #{bert_bilstm_crf_forward.5} parent=11 // pred_region
        _
      $region32: #{bert_bilstm_crf_forward.5} parent=11 // pred_fallthru
        _
      // Predicated region
      $region33: #{bert_bilstm_crf_forward.5} parent=11 // pred_check
        %p424 = pneg %p200
      $region34: #{bert_bilstm_crf_forward.5} parent=11 // pred_check_branch
        %426 = sbr.rel (%p424) target = $region36
      $region35: #{bert_bilstm_crf_forward.5} parent=11 // pred_region
        _
      $region36: #{bert_bilstm_crf_forward.5} parent=11 // pred_fallthru
        _
      // Predicated region
      $region37: #{bert_bilstm_crf_forward.5} parent=11 // pred_check
        %p427 = pneg %p221
      $region38: #{bert_bilstm_crf_forward.5} parent=11 // pred_check_branch
        %429 = sbr.rel (%p427) target = $region40
      $region39: #{bert_bilstm_crf_forward.5} parent=11 // pred_region
        _
      $region40: #{bert_bilstm_crf_forward.5} parent=11 // pred_fallthru
        _
      // Predicated region
      $region41: #{bert_bilstm_crf_forward.5} parent=11 // pred_check
        %p430 = pneg %p242
      $region42: #{bert_bilstm_crf_forward.5} parent=11 // pred_check_branch
        %432 = sbr.rel (%p430) target = $region44
      $region43: #{bert_bilstm_crf_forward.5} parent=11 // pred_region
        _
      $region44: #{bert_bilstm_crf_forward.5} parent=11 // pred_fallthru
        _
      // Predicated region
      $region45: #{bert_bilstm_crf_forward.5} parent=11 // pred_check
        %p433 = pneg %p263
      $region46: #{bert_bilstm_crf_forward.5} parent=11 // pred_check_branch
        %435 = sbr.rel (%p433) target = $region48
      $region47: #{bert_bilstm_crf_forward.5} parent=11 // pred_region
        _
      $region48: #{bert_bilstm_crf_forward.5} parent=11 // pred_fallthru
        _
      // Predicated region
      $region49: #{bert_bilstm_crf_forward.5} parent=11 // pred_check
        %p436 = pneg %p284
      $region50: #{bert_bilstm_crf_forward.5} parent=11 // pred_check_branch
        %438 = sbr.rel (%p436) target = $region52
      $region51: #{bert_bilstm_crf_forward.5} parent=11 // pred_region
        _
      $region52: #{bert_bilstm_crf_forward.5} parent=11 // pred_fallthru
        _
      // Predicated region
      $region53: #{bert_bilstm_crf_forward.5} parent=11 // pred_check
        %p439 = pneg %p305
      $region54: #{bert_bilstm_crf_forward.5} parent=11 // pred_check_branch
        %441 = sbr.rel (%p439) target = $region56
      $region55: #{bert_bilstm_crf_forward.5} parent=11 // pred_region
        _
      $region56: #{bert_bilstm_crf_forward.5} parent=11 // pred_fallthru
        _
      // Predicated region
      $region57: #{bert_bilstm_crf_forward.5} parent=11 // pred_check
        %p442 = pneg %p326
      $region58: #{bert_bilstm_crf_forward.5} parent=11 // pred_check_branch
        %444 = sbr.rel (%p442) target = $region60
      $region59: #{bert_bilstm_crf_forward.5} parent=11 // pred_region
        _
      $region60: #{bert_bilstm_crf_forward.5} parent=11 // pred_fallthru
        _
      // Predicated region
      $region61: #{bert_bilstm_crf_forward.5} parent=11 // pred_check
        %p445 = pneg %p347
      $region62: #{bert_bilstm_crf_forward.5} parent=11 // pred_check_branch
        %447 = sbr.rel (%p445) target = $region64
      $region63: #{bert_bilstm_crf_forward.5} parent=11 // pred_region
        _
      $region64: #{bert_bilstm_crf_forward.5} parent=11 // pred_fallthru
        _
      // Predicated region
      $region65: #{bert_bilstm_crf_forward.5} parent=11 // pred_check
        %p448 = pneg %p368
      $region66: #{bert_bilstm_crf_forward.5} parent=11 // pred_check_branch
        %450 = sbr.rel (%p448) target = $region68
      $region67: #{bert_bilstm_crf_forward.5} parent=11 // pred_region
        _
      $region68: #{bert_bilstm_crf_forward.5} parent=11 // pred_fallthru
        _
    $region12: #{bert_bilstm_crf_forward.5} parent=5 // pred_fallthru
      _
    %p451 = scmp.lt.s32.totalorder %s22, 2
    // Predicated region
    $region69: #{bert_bilstm_crf_forward.5} parent=5 // pred_check
      %p452 = pneg %p451
    $region70: #{bert_bilstm_crf_forward.5} parent=5 // pred_check_branch
      %454 = sbr.rel (%p452) target = $region72
    $region71: #{bert_bilstm_crf_forward.5} parent=5 // pred_region
      // Predicated region
      $region73: #{bert_bilstm_crf_forward.5} parent=71 // pred_check
        %p455 = pneg %p42
      $region74: #{bert_bilstm_crf_forward.5} parent=71 // pred_check_branch
        %457 = sbr.rel (%p455) target = $region76
      $region75: #{bert_bilstm_crf_forward.5} parent=71 // pred_region
        %p458 = scmp.lt.s32.totalorder %s22, 1
        %s459 = scalar_select %p458, %s22, 1
        %s460 = smul.addr %s459, 8
        %s461 = scalar_lea.vmem %s0, %s460
      $region76: #{bert_bilstm_crf_forward.5} parent=71 // pred_fallthru
        _
      // Predicated region
      $region77: #{bert_bilstm_crf_forward.5} parent=71 // pred_check
        %p462 = pneg %p68
      $region78: #{bert_bilstm_crf_forward.5} parent=71 // pred_check_branch
        %464 = sbr.rel (%p462) target = $region80
      $region79: #{bert_bilstm_crf_forward.5} parent=71 // pred_region
        %p465 = scmp.lt.s32.totalorder %s22, 1
        %s466 = scalar_select %p465, %s22, 1
        %s467 = scalar_lea.vmem %s1, %s466
      $region80: #{bert_bilstm_crf_forward.5} parent=71 // pred_fallthru
        _
    $region72: #{bert_bilstm_crf_forward.5} parent=5 // pred_fallthru
      _
    %p468 = scmp.le.s32.totalorder 1, %s22
    %p469 = scmp.lt.s32.totalorder %s22, 3
    %p470 = pnand %p468, %p469
    %p471 = pneg %p470
    // Predicated region
    $region81: #{bert_bilstm_crf_forward.5} parent=5 // pred_check
      _
    $region82: #{bert_bilstm_crf_forward.5} parent=5 // pred_check_branch
      %473 = sbr.rel (%p470) target = $region84
    $region83: #{bert_bilstm_crf_forward.5} parent=5 // pred_region
      %s474 = ssub.s32 %s22, 1
      %p475 = scmp.lt.s32.totalorder %s27, 1
      %s476 = scalar_select %p475, %s27, 1
      %s477 = smul.addr %s476, 8
      %s478 = scalar_lea.vmem %s0, %s477
      %p479 = pneg %p48
      %p480 = pneg %p45
      %p481 = scmp.lt.s32.totalorder %s27, 1
      %s482 = scalar_select %p481, %s27, 1
      %s483 = scalar_lea.vmem %s1, %s482
      %p484 = pneg %p74
      %p485 = pneg %p71
      %p486 = pneg %p95
      %p487 = pneg %p92
      %p488 = pneg %p116
      %p489 = pneg %p113
      %p490 = pneg %p137
      %p491 = pneg %p134
      %p492 = pneg %p158
      %p493 = pneg %p155
      %p494 = pneg %p179
      %p495 = pneg %p176
      %p496 = pneg %p200
      %p497 = pneg %p197
      %p498 = pneg %p221
      %p499 = pneg %p218
      %p500 = pneg %p242
      %p501 = pneg %p239
      %p502 = pneg %p263
      %p503 = pneg %p260
      %p504 = pneg %p284
      %p505 = pneg %p281
      %p506 = pneg %p305
      %p507 = pneg %p302
      %p508 = pneg %p326
      %p509 = pneg %p323
      %p510 = pneg %p347
      %p511 = pneg %p344
      %p512 = pneg %p368
      %p513 = pneg %p365
      %p514 = pneg %p394
      %p515 = pneg %p391
      %p516 = scmp.lt.s32.totalorder %s27, 1
      %s517 = scalar_select %p516, %s27, 1
      %s518 = smul.addr %s517, 8
      %s519 = scalar_lea.vmem %s16, %s518
      %p520 = scmp.lt.s32.totalorder %s27, 1
      %s521 = scalar_select %p520, %s27, 1
      %s522 = smul.addr %s521, 8
      %s523 = scalar_lea.vmem %s0, %s522
      %p524 = scmp.lt.s32.totalorder %s27, 1
      %s525 = scalar_select %p524, %s27, 1
      %s526 = scalar_lea.vmem %s1, %s525
      %p527 = scmp.lt.s32.totalorder %s27, 1
      %s528 = scalar_select %p527, %s27, 1
      %s529 = smul.addr %s528, 8
      %s530 = scalar_lea.vmem %s16, %s529
      %v531 = vld [vmem:[%s523] sm:$0xff]
      %v532 = vld [vmem:[%s4] sm:$0xff]
      %v533 = vld [vmem:[%s4 + $0x8] sm:$0xff]
      %v534 = vld [vmem:[%s4 + $0x10] sm:$0xff]
      %v535 = vld [vmem:[%s4 + $0x18] sm:$0xff]
      %v536 = vld [vmem:[%s5] sm:$0x1]
      %v538 = vlaneseq
      %v539 = vshrl.u32 %v538, 7
      %v540 = vsub.s32 0, %v539
      %v541 = vrot.slane %v536, %v540
      %vm543 = vcmask 261120
      %v545 = vsel %vm543, %v531, 0
      %547 = vmatprep.subr.mxu0 0.0
      %548 = vmatpush1.msra.mxu0 %v532
      %549 = vmatprep.subr.mxu0 0.0
      %550 = vmatpush1.msra.mxu0 %v533
      %551 = vmatprep.subr.mxu0 0.0
      %552 = vmatpush1.msra.mxu0 %v534
      %553 = vmatprep.subr.mxu0 0.0
      %554 = vmatpush1.msra.mxu0 %v535
      %555 = vmatprep.subr.mxu0 0.0
      %556 = vmatpush1.msra.mxu0 0.0
      %557 = vmatprep.subr.mxu0 0.0
      %558 = vmatpush1.msra.mxu0 0.0
      %559 = vmatprep.subr.mxu0 0.0
      %560 = vmatpush1.msra.mxu0 0.0
      %561 = vmatprep.subr.mxu0 0.0
      %562 = vmatpush1.msra.mxu0 0.0
      %563 = vmatprep.subr.mxu0 0.0
      %564 = vmatpush1.msra.mxu0 0.0
      %565 = vmatprep.subr.mxu0 0.0
      %566 = vmatpush1.msra.mxu0 0.0
      %567 = vmatprep.subr.mxu0 0.0
      %568 = vmatpush1.msra.mxu0 0.0
      %569 = vmatprep.subr.mxu0 0.0
      %570 = vmatpush1.msra.mxu0 0.0
      %571 = vmatprep.subr.mxu0 0.0
      %572 = vmatpush1.msra.mxu0 0.0
      %573 = vmatprep.subr.mxu0 0.0
      %574 = vmatpush1.msra.mxu0 0.0
      %575 = vmatprep.subr.mxu0 0.0
      %576 = vmatpush1.msra.mxu0 0.0
      %577 = vmatprep.subr.mxu0 0.0
      %578 = vmatpush1.msra.mxu0 0.0
      %579 = vmatprep.subr.mxu0 0.0
      %580 = vmatpush1.msra.mxu0 0.0
      %581 = vmatprep.subr.mxu0 0.0
      %582 = vmatpush1.msra.mxu0 0.0
      %583 = vmatprep.subr.mxu0 0.0
      %584 = vmatpush1.msra.mxu0 0.0
      %585 = vmatprep.subr.mxu0 0.0
      %586 = vmatpush1.msra.mxu0 0.0
      %587 = vmatprep.subr.mxu0 0.0
      %588 = vmatpush1.msra.mxu0 0.0
      %589 = vmatprep.subr.mxu0 0.0
      %590 = vmatpush1.msra.mxu0 0.0
      %591 = vmatprep.subr.mxu0 0.0
      %592 = vmatpush1.msra.mxu0 0.0
      %593 = vmatprep.subr.mxu0 0.0
      %594 = vmatpush1.msra.mxu0 0.0
      %595 = vmatprep.subr.mxu0 0.0
      %596 = vmatpush1.msra.mxu0 0.0
      %597 = vmatprep.subr.mxu0 0.0
      %598 = vmatpush1.msra.mxu0 0.0
      %599 = vmatprep.subr.mxu0 0.0
      %600 = vmatpush1.msra.mxu0 0.0
      %601 = vmatprep.subr.mxu0 0.0
      %602 = vmatpush1.msra.mxu0 0.0
      %603 = vmatprep.subr.mxu0 0.0
      %604 = vmatpush1.msra.mxu0 0.0
      %605 = vmatprep.subr.mxu0 0.0
      %606 = vmatpush1.msra.mxu0 0.0
      %607 = vmatprep.subr.mxu0 0.0
      %608 = vmatpush1.msra.mxu0 0.0
      %609 = vmatprep.subr.mxu0 0.0
      %610 = vmatpush1.msra.mxu0 0.0
      %611 = vmatprep.mubr.f32.mxu0 0.0
      %612 = vmatmul.mubr.f32.gmra.mrb[0].mxu0 %v545
      %v613 = vpop.f32.mrb[0].mxu0
      %v614 = vadd.f32 %v541, %v613
      %v615 = vpop.f32.mrb[0].mxu0
      %616 = vdwg.mxu0
      %v617 = vld [vmem:[%s526] sm:$0x1]
      %619 = vrot.lane.b32.xlu0 %v614, 96
      %v620 = vpop.permute.xlu0 %619
      %vm621 = vcmask 130048
      %v622 = vsel %vm621, %v614, 0
      %v624 = vsel %vm621, %v620, 0
      %626 = vmatprep.subr.mxu0 0.0
      %627 = vmatpush1.xpose.msra.mxu0 %v624
      %628 = vmatprep.subr.mxu0 0.0
      %629 = vmatpush1.xpose.msra.mxu0 0.0
      %630 = vmatprep.subr.mxu0 0.0
      %631 = vmatpush1.xpose.msra.mxu0 0.0
      %632 = vmatprep.subr.mxu0 0.0
      %633 = vmatpush1.xpose.msra.mxu0 0.0
      %634 = vmatprep.subr.mxu0 0.0
      %635 = vmatpush1.xpose.msra.mxu0 0.0
      %636 = vmatprep.subr.mxu0 0.0
      %637 = vmatpush1.xpose.msra.mxu0 0.0
      %638 = vmatprep.subr.mxu0 0.0
      %639 = vmatpush1.xpose.msra.mxu0 0.0
      %640 = vmatprep.subr.mxu0 0.0
      %641 = vmatpush1.xpose.msra.mxu0 0.0
      %642 = vmatprep.subr.mxu0 0.0
      %643 = vmatpush1.xpose.msra.mxu0 0.0
      %644 = vmatprep.subr.mxu0 0.0
      %645 = vmatpush1.xpose.msra.mxu0 0.0
      %646 = vmatprep.subr.mxu0 0.0
      %647 = vmatpush1.xpose.msra.mxu0 0.0
      %648 = vmatprep.subr.mxu0 0.0
      %649 = vmatpush1.xpose.msra.mxu0 0.0
      %650 = vmatprep.subr.mxu0 0.0
      %651 = vmatpush1.xpose.msra.mxu0 0.0
      %652 = vmatprep.subr.mxu0 0.0
      %653 = vmatpush1.xpose.msra.mxu0 0.0
      %654 = vmatprep.subr.mxu0 0.0
      %655 = vmatpush1.xpose.msra.mxu0 0.0
      %656 = vmatprep.subr.mxu0 0.0
      %657 = vmatpush1.xpose.msra.mxu0 0.0
      %658 = vmatprep.subr.mxu0 0.0
      %659 = vmatpush1.xpose.msra.mxu0 0.0
      %660 = vmatprep.subr.mxu0 0.0
      %661 = vmatpush1.xpose.msra.mxu0 0.0
      %662 = vmatprep.subr.mxu0 0.0
      %663 = vmatpush1.xpose.msra.mxu0 0.0
      %664 = vmatprep.subr.mxu0 0.0
      %665 = vmatpush1.xpose.msra.mxu0 0.0
      %666 = vmatprep.subr.mxu0 0.0
      %667 = vmatpush1.xpose.msra.mxu0 0.0
      %668 = vmatprep.subr.mxu0 0.0
      %669 = vmatpush1.xpose.msra.mxu0 0.0
      %670 = vmatprep.subr.mxu0 0.0
      %671 = vmatpush1.xpose.msra.mxu0 0.0
      %672 = vmatprep.subr.mxu0 0.0
      %673 = vmatpush1.xpose.msra.mxu0 0.0
      %674 = vmatprep.subr.mxu0 0.0
      %675 = vmatpush1.xpose.msra.mxu0 0.0
      %676 = vmatprep.subr.mxu0 0.0
      %677 = vmatpush1.xpose.msra.mxu0 0.0
      %678 = vmatprep.subr.mxu0 0.0
      %679 = vmatpush1.xpose.msra.mxu0 0.0
      %680 = vmatprep.subr.mxu0 0.0
      %681 = vmatpush1.xpose.msra.mxu0 0.0
      %682 = vmatprep.subr.mxu0 0.0
      %683 = vmatpush1.xpose.msra.mxu0 0.0
      %684 = vmatprep.subr.mxu0 0.0
      %685 = vmatpush1.xpose.msra.mxu0 0.0
      %686 = vmatprep.subr.mxu0 0.0
      %687 = vmatpush1.xpose.msra.mxu0 0.0
      %688 = vmatprep.subr.mxu0 0.0
      %689 = vmatpush1.xpose.msra.mxu0 0.0
      %690 = vmatprep.mubr.f32.mxu0 0.0
      %691 = vmatmul.mubr.f32.gmra.mrb[0].mxu0 %v622
      %v692 = vpop.f32.mrb[0].mxu0
      %v693 = vadd.f32 0.0, %v692
      %v694 = vpop.f32.mrb[0].mxu0
      %695 = vdwg.mxu0
      %v696 = vmul.f32 %v693, 0.25
      %v698 = vlaneseq
      %v699 = vshrl.u32 %v698, 7
      %v700 = vsub.s32 0, %v699
      %v701 = vrot.slane %v617, %v700
      %v703 = vadd.f32 %v696, %v701
      %vm704 = vcmask 64512
      %v705 = vsel %vm704, %v703, -inf
      %706 = vmax.xlane.f32.xlu0 %v705
      %v707 = vpop.xlane.xlu0 %706
      %v708 = vsub.f32 %v703, %v707
      %v709 = vmul.f32 %v708, 1.442695
      %v710 = vpow.pop %v709
      %v711 = vsel %vm704, %v710, 0.0
      %712 = vadd.xlane.f32.xlu0 %v711
      %v713 = vpop.xlane.xlu0 %712
      %v714 = vrcp.pop %v713
      %v715 = vmul.f32 %v710, %v714
      %716 = vrot.lane.b32.xlu0 %v614, 64
      %v717 = vpop.permute.xlu0 %716
      %v720 = vsel %vm704, %v715, 0
      %722 = vmatprep.subr.mxu0 0.0
      %723 = vmatpush1.msra.mxu0 %v717
      %724 = vmatprep.subr.mxu0 0.0
      %725 = vmatpush1.msra.mxu0 0.0
      %726 = vmatprep.subr.mxu0 0.0
      %727 = vmatpush1.msra.mxu0 0.0
      %728 = vmatprep.subr.mxu0 0.0
      %729 = vmatpush1.msra.mxu0 0.0
      %730 = vmatprep.subr.mxu0 0.0
      %731 = vmatpush1.msra.mxu0 0.0
      %732 = vmatprep.subr.mxu0 0.0
      %733 = vmatpush1.msra.mxu0 0.0
      %734 = vmatprep.subr.mxu0 0.0
      %735 = vmatpush1.msra.mxu0 0.0
      %736 = vmatprep.subr.mxu0 0.0
      %737 = vmatpush1.msra.mxu0 0.0
      %738 = vmatprep.subr.mxu0 0.0
      %739 = vmatpush1.msra.mxu0 0.0
      %740 = vmatprep.subr.mxu0 0.0
      %741 = vmatpush1.msra.mxu0 0.0
      %742 = vmatprep.subr.mxu0 0.0
      %743 = vmatpush1.msra.mxu0 0.0
      %744 = vmatprep.subr.mxu0 0.0
      %745 = vmatpush1.msra.mxu0 0.0
      %746 = vmatprep.subr.mxu0 0.0
      %747 = vmatpush1.msra.mxu0 0.0
      %748 = vmatprep.subr.mxu0 0.0
      %749 = vmatpush1.msra.mxu0 0.0
      %750 = vmatprep.subr.mxu0 0.0
      %751 = vmatpush1.msra.mxu0 0.0
      %752 = vmatprep.subr.mxu0 0.0
      %753 = vmatpush1.msra.mxu0 0.0
      %754 = vmatprep.subr.mxu0 0.0
      %755 = vmatpush1.msra.mxu0 0.0
      %756 = vmatprep.subr.mxu0 0.0
      %757 = vmatpush1.msra.mxu0 0.0
      %758 = vmatprep.subr.mxu0 0.0
      %759 = vmatpush1.msra.mxu0 0.0
      %760 = vmatprep.subr.mxu0 0.0
      %761 = vmatpush1.msra.mxu0 0.0
      %762 = vmatprep.subr.mxu0 0.0
      %763 = vmatpush1.msra.mxu0 0.0
      %764 = vmatprep.subr.mxu0 0.0
      %765 = vmatpush1.msra.mxu0 0.0
      %766 = vmatprep.subr.mxu0 0.0
      %767 = vmatpush1.msra.mxu0 0.0
      %768 = vmatprep.subr.mxu0 0.0
      %769 = vmatpush1.msra.mxu0 0.0
      %770 = vmatprep.subr.mxu0 0.0
      %771 = vmatpush1.msra.mxu0 0.0
      %772 = vmatprep.subr.mxu0 0.0
      %773 = vmatpush1.msra.mxu0 0.0
      %774 = vmatprep.subr.mxu0 0.0
      %775 = vmatpush1.msra.mxu0 0.0
      %776 = vmatprep.subr.mxu0 0.0
      %777 = vmatpush1.msra.mxu0 0.0
      %778 = vmatprep.subr.mxu0 0.0
      %779 = vmatpush1.msra.mxu0 0.0
      %780 = vmatprep.subr.mxu0 0.0
      %781 = vmatpush1.msra.mxu0 0.0
      %782 = vmatprep.subr.mxu0 0.0
      %783 = vmatpush1.msra.mxu0 0.0
      %784 = vmatprep.subr.mxu0 0.0
      %785 = vmatpush1.msra.mxu0 0.0
      %786 = vmatprep.mubr.f32.mxu0 0.0
      %787 = vmatmul.mubr.f32.gmra.mrb[0].mxu0 %v720
      %v788 = vpop.f32.mrb[0].mxu0
      %v789 = vadd.f32 0.0, %v788
      %v790 = vpop.f32.mrb[0].mxu0
      %791 = vdwg.mxu0
      %792 = vrot.lane.b32.xlu0 %v614, 112
      %v793 = vpop.permute.xlu0 %792
      %794 = vrot.lane.b32.xlu0 %v614, 80
      %v795 = vpop.permute.xlu0 %794
      %v796 = vsel %vm621, %v793, 0
      %v798 = vsel %vm621, %v795, 0
      %800 = vmatprep.subr.mxu0 0.0
      %801 = vmatpush1.xpose.msra.mxu0 %v798
      %802 = vmatprep.subr.mxu0 0.0
      %803 = vmatpush1.xpose.msra.mxu0 0.0
      %804 = vmatprep.subr.mxu0 0.0
      %805 = vmatpush1.xpose.msra.mxu0 0.0
      %806 = vmatprep.subr.mxu0 0.0
      %807 = vmatpush1.xpose.msra.mxu0 0.0
      %808 = vmatprep.subr.mxu0 0.0
      %809 = vmatpush1.xpose.msra.mxu0 0.0
      %810 = vmatprep.subr.mxu0 0.0
      %811 = vmatpush1.xpose.msra.mxu0 0.0
      %812 = vmatprep.subr.mxu0 0.0
      %813 = vmatpush1.xpose.msra.mxu0 0.0
      %814 = vmatprep.subr.mxu0 0.0
      %815 = vmatpush1.xpose.msra.mxu0 0.0
      %816 = vmatprep.subr.mxu0 0.0
      %817 = vmatpush1.xpose.msra.mxu0 0.0
      %818 = vmatprep.subr.mxu0 0.0
      %819 = vmatpush1.xpose.msra.mxu0 0.0
      %820 = vmatprep.subr.mxu0 0.0
      %821 = vmatpush1.xpose.msra.mxu0 0.0
      %822 = vmatprep.subr.mxu0 0.0
      %823 = vmatpush1.xpose.msra.mxu0 0.0
      %824 = vmatprep.subr.mxu0 0.0
      %825 = vmatpush1.xpose.msra.mxu0 0.0
      %826 = vmatprep.subr.mxu0 0.0
      %827 = vmatpush1.xpose.msra.mxu0 0.0
      %828 = vmatprep.subr.mxu0 0.0
      %829 = vmatpush1.xpose.msra.mxu0 0.0
      %830 = vmatprep.subr.mxu0 0.0
      %831 = vmatpush1.xpose.msra.mxu0 0.0
      %832 = vmatprep.subr.mxu0 0.0
      %833 = vmatpush1.xpose.msra.mxu0 0.0
      %834 = vmatprep.subr.mxu0 0.0
      %835 = vmatpush1.xpose.msra.mxu0 0.0
      %836 = vmatprep.subr.mxu0 0.0
      %837 = vmatpush1.xpose.msra.mxu0 0.0
      %838 = vmatprep.subr.mxu0 0.0
      %839 = vmatpush1.xpose.msra.mxu0 0.0
      %840 = vmatprep.subr.mxu0 0.0
      %841 = vmatpush1.xpose.msra.mxu0 0.0
      %842 = vmatprep.subr.mxu0 0.0
      %843 = vmatpush1.xpose.msra.mxu0 0.0
      %844 = vmatprep.subr.mxu0 0.0
      %845 = vmatpush1.xpose.msra.mxu0 0.0
      %846 = vmatprep.subr.mxu0 0.0
      %847 = vmatpush1.xpose.msra.mxu0 0.0
      %848 = vmatprep.subr.mxu0 0.0
      %849 = vmatpush1.xpose.msra.mxu0 0.0
      %850 = vmatprep.subr.mxu0 0.0
      %851 = vmatpush1.xpose.msra.mxu0 0.0
      %852 = vmatprep.subr.mxu0 0.0
      %853 = vmatpush1.xpose.msra.mxu0 0.0
      %854 = vmatprep.subr.mxu0 0.0
      %855 = vmatpush1.xpose.msra.mxu0 0.0
      %856 = vmatprep.subr.mxu0 0.0
      %857 = vmatpush1.xpose.msra.mxu0 0.0
      %858 = vmatprep.subr.mxu0 0.0
      %859 = vmatpush1.xpose.msra.mxu0 0.0
      %860 = vmatprep.subr.mxu0 0.0
      %861 = vmatpush1.xpose.msra.mxu0 0.0
      %862 = vmatprep.subr.mxu0 0.0
      %863 = vmatpush1.xpose.msra.mxu0 0.0
      %864 = vmatprep.mubr.f32.mxu0 0.0
      %865 = vmatmul.mubr.f32.gmra.mrb[0].mxu0 %v796
      %v866 = vpop.f32.mrb[0].mxu0
      %v867 = vadd.f32 0.0, %v866
      %v868 = vpop.f32.mrb[0].mxu0
      %869 = vdwg.mxu0
      %v870 = vmul.f32 %v867, 0.25
      %v871 = vadd.f32 %v870, %v701
      %v872 = vsel %vm704, %v871, -inf
      %873 = vmax.xlane.f32.xlu0 %v872
      %v874 = vpop.xlane.xlu0 %873
      %v875 = vsub.f32 %v871, %v874
      %v876 = vmul.f32 %v875, 1.442695
      %v877 = vpow.pop %v876
      %v878 = vsel %vm704, %v877, 0.0
      %879 = vadd.xlane.f32.xlu0 %v878
      %v880 = vpop.xlane.xlu0 %879
      %v881 = vrcp.pop %v880
      %v882 = vmul.f32 %v877, %v881
      %883 = vrot.lane.b32.xlu0 %v614, 48
      %v884 = vpop.permute.xlu0 %883
      %v887 = vsel %vm704, %v882, 0
      %889 = vmatprep.subr.mxu0 0.0
      %890 = vmatpush1.msra.mxu0 %v884
      %891 = vmatprep.subr.mxu0 0.0
      %892 = vmatpush1.msra.mxu0 0.0
      %893 = vmatprep.subr.mxu0 0.0
      %894 = vmatpush1.msra.mxu0 0.0
      %895 = vmatprep.subr.mxu0 0.0
      %896 = vmatpush1.msra.mxu0 0.0
      %897 = vmatprep.subr.mxu0 0.0
      %898 = vmatpush1.msra.mxu0 0.0
      %899 = vmatprep.subr.mxu0 0.0
      %900 = vmatpush1.msra.mxu0 0.0
      %901 = vmatprep.subr.mxu0 0.0
      %902 = vmatpush1.msra.mxu0 0.0
      %903 = vmatprep.subr.mxu0 0.0
      %904 = vmatpush1.msra.mxu0 0.0
      %905 = vmatprep.subr.mxu0 0.0
      %906 = vmatpush1.msra.mxu0 0.0
      %907 = vmatprep.subr.mxu0 0.0
      %908 = vmatpush1.msra.mxu0 0.0
      %909 = vmatprep.subr.mxu0 0.0
      %910 = vmatpush1.msra.mxu0 0.0
      %911 = vmatprep.subr.mxu0 0.0
      %912 = vmatpush1.msra.mxu0 0.0
      %913 = vmatprep.subr.mxu0 0.0
      %914 = vmatpush1.msra.mxu0 0.0
      %915 = vmatprep.subr.mxu0 0.0
      %916 = vmatpush1.msra.mxu0 0.0
      %917 = vmatprep.subr.mxu0 0.0
      %918 = vmatpush1.msra.mxu0 0.0
      %919 = vmatprep.subr.mxu0 0.0
      %920 = vmatpush1.msra.mxu0 0.0
      %921 = vmatprep.subr.mxu0 0.0
      %922 = vmatpush1.msra.mxu0 0.0
      %923 = vmatprep.subr.mxu0 0.0
      %924 = vmatpush1.msra.mxu0 0.0
      %925 = vmatprep.subr.mxu0 0.0
      %926 = vmatpush1.msra.mxu0 0.0
      %927 = vmatprep.subr.mxu0 0.0
      %928 = vmatpush1.msra.mxu0 0.0
      %929 = vmatprep.subr.mxu0 0.0
      %930 = vmatpush1.msra.mxu0 0.0
      %931 = vmatprep.subr.mxu0 0.0
      %932 = vmatpush1.msra.mxu0 0.0
      %933 = vmatprep.subr.mxu0 0.0
      %934 = vmatpush1.msra.mxu0 0.0
      %935 = vmatprep.subr.mxu0 0.0
      %936 = vmatpush1.msra.mxu0 0.0
      %937 = vmatprep.subr.mxu0 0.0
      %938 = vmatpush1.msra.mxu0 0.0
      %939 = vmatprep.subr.mxu0 0.0
      %940 = vmatpush1.msra.mxu0 0.0
      %941 = vmatprep.subr.mxu0 0.0
      %942 = vmatpush1.msra.mxu0 0.0
      %943 = vmatprep.subr.mxu0 0.0
      %944 = vmatpush1.msra.mxu0 0.0
      %945 = vmatprep.subr.mxu0 0.0
      %946 = vmatpush1.msra.mxu0 0.0
      %947 = vmatprep.subr.mxu0 0.0
      %948 = vmatpush1.msra.mxu0 0.0
      %949 = vmatprep.subr.mxu0 0.0
      %950 = vmatpush1.msra.mxu0 0.0
      %951 = vmatprep.subr.mxu0 0.0
      %952 = vmatpush1.msra.mxu0 0.0
      %953 = vmatprep.mubr.f32.mxu0 0.0
      %954 = vmatmul.mubr.f32.gmra.mrb[0].mxu0 %v887
      %v955 = vpop.f32.mrb[0].mxu0
      %v956 = vadd.f32 0.0, %v955
      %v957 = vpop.f32.mrb[0].mxu0
      %958 = vdwg.mxu0
      %960 = vrot.lane.b32.xlu0 %v956, 16
      %v961 = vpop.permute.xlu0 %960
      %v963 = vsel %vm621, %v789, %v961
      %v964 = vld [vmem:[%s6] sm:$0xff]
      %v965 = vld [vmem:[%s6 + $0x8] sm:$0xff]
      %v966 = vld [vmem:[%s6 + $0x10] sm:$0xff]
      %v967 = vld [vmem:[%s6 + $0x18] sm:$0xff]
      %v968 = vld [vmem:[%s7] sm:$0x1]
      %v970 = vlaneseq
      %v971 = vshrl.u32 %v970, 7
      %v972 = vsub.s32 0, %v971
      %v973 = vrot.slane %v968, %v972
      %v976 = vsel %vm543, %v963, 0
      %978 = vmatprep.subr.mxu0 0.0
      %979 = vmatpush1.msra.mxu0 %v964
      %980 = vmatprep.subr.mxu0 0.0
      %981 = vmatpush1.msra.mxu0 %v965
      %982 = vmatprep.subr.mxu0 0.0
      %983 = vmatpush1.msra.mxu0 %v966
      %984 = vmatprep.subr.mxu0 0.0
      %985 = vmatpush1.msra.mxu0 %v967
      %986 = vmatprep.subr.mxu0 0.0
      %987 = vmatpush1.msra.mxu0 0.0
      %988 = vmatprep.subr.mxu0 0.0
      %989 = vmatpush1.msra.mxu0 0.0
      %990 = vmatprep.subr.mxu0 0.0
      %991 = vmatpush1.msra.mxu0 0.0
      %992 = vmatprep.subr.mxu0 0.0
      %993 = vmatpush1.msra.mxu0 0.0
      %994 = vmatprep.subr.mxu0 0.0
      %995 = vmatpush1.msra.mxu0 0.0
      %996 = vmatprep.subr.mxu0 0.0
      %997 = vmatpush1.msra.mxu0 0.0
      %998 = vmatprep.subr.mxu0 0.0
      %999 = vmatpush1.msra.mxu0 0.0
      %1000 = vmatprep.subr.mxu0 0.0
      %1001 = vmatpush1.msra.mxu0 0.0
      %1002 = vmatprep.subr.mxu0 0.0
      %1003 = vmatpush1.msra.mxu0 0.0
      %1004 = vmatprep.subr.mxu0 0.0
      %1005 = vmatpush1.msra.mxu0 0.0
      %1006 = vmatprep.subr.mxu0 0.0
      %1007 = vmatpush1.msra.mxu0 0.0
      %1008 = vmatprep.subr.mxu0 0.0
      %1009 = vmatpush1.msra.mxu0 0.0
      %1010 = vmatprep.subr.mxu0 0.0
      %1011 = vmatpush1.msra.mxu0 0.0
      %1012 = vmatprep.subr.mxu0 0.0
      %1013 = vmatpush1.msra.mxu0 0.0
      %1014 = vmatprep.subr.mxu0 0.0
      %1015 = vmatpush1.msra.mxu0 0.0
      %1016 = vmatprep.subr.mxu0 0.0
      %1017 = vmatpush1.msra.mxu0 0.0
      %1018 = vmatprep.subr.mxu0 0.0
      %1019 = vmatpush1.msra.mxu0 0.0
      %1020 = vmatprep.subr.mxu0 0.0
      %1021 = vmatpush1.msra.mxu0 0.0
      %1022 = vmatprep.subr.mxu0 0.0
      %1023 = vmatpush1.msra.mxu0 0.0
      %1024 = vmatprep.subr.mxu0 0.0
      %1025 = vmatpush1.msra.mxu0 0.0
      %1026 = vmatprep.subr.mxu0 0.0
      %1027 = vmatpush1.msra.mxu0 0.0
      %1028 = vmatprep.subr.mxu0 0.0
      %1029 = vmatpush1.msra.mxu0 0.0
      %1030 = vmatprep.subr.mxu0 0.0
      %1031 = vmatpush1.msra.mxu0 0.0
      %1032 = vmatprep.subr.mxu0 0.0
      %1033 = vmatpush1.msra.mxu0 0.0
      %1034 = vmatprep.subr.mxu0 0.0
      %1035 = vmatpush1.msra.mxu0 0.0
      %1036 = vmatprep.subr.mxu0 0.0
      %1037 = vmatpush1.msra.mxu0 0.0
      %1038 = vmatprep.subr.mxu0 0.0
      %1039 = vmatpush1.msra.mxu0 0.0
      %1040 = vmatprep.subr.mxu0 0.0
      %1041 = vmatpush1.msra.mxu0 0.0
      %1042 = vmatprep.mubr.f32.mxu0 0.0
      %1043 = vmatmul.mubr.f32.gmra.mrb[0].mxu0 %v976
      %v1044 = vpop.f32.mrb[0].mxu0
      %v1045 = vadd.f32 %v973, %v1044
      %v1046 = vpop.f32.mrb[0].mxu0
      %1047 = vdwg.mxu0
      %v1048 = vadd.f32 %v531, %v1045
      %v1049 = vld [vmem:[%s8] sm:$0x1]
      %v1050 = vld [vmem:[%s9] sm:$0x1]
      %v1051 = vsel %vm543, %v1048, 0.0
      %1052 = vadd.xlane.f32.xlu0 %v1051
      %v1053 = vpop.xlane.xlu0 %1052
      %v1054 = vrcp.pop 32.0
      %v1055 = vmul.f32 %v1053, %v1054
      %v1056 = vsub.f32 %v1048, %v1055
      %v1057 = vmul.f32 %v1056, %v1056
      %v1058 = vsel %vm543, %v1057, 0.0
      %1059 = vadd.xlane.f32.xlu0 %v1058
      %v1060 = vpop.xlane.xlu0 %1059
      %v1061 = vmul.f32 %v1060, %v1054
      %v1062 = vadd.f32 %v1061, 1e-12
      %v1063 = vrsqrt.pop %v1062
      %v1064 = vmul.f32 %v1056, %v1063
      %v1066 = vlaneseq
      %v1067 = vshrl.u32 %v1066, 7
      %v1068 = vsub.s32 0, %v1067
      %v1069 = vrot.slane %v1049, %v1068
      %v1071 = vmul.f32 %v1064, %v1069
      %v1073 = vlaneseq
      %v1074 = vshrl.u32 %v1073, 7
      %v1075 = vsub.s32 0, %v1074
      %v1076 = vrot.slane %v1050, %v1075
      %v1078 = vadd.f32 %v1071, %v1076
      %v1079 = vld [vmem:[%s10] sm:$0xff]
      %v1080 = vld [vmem:[%s10 + $0x8] sm:$0xff]
      %v1081 = vld [vmem:[%s10 + $0x10] sm:$0xff]
      %v1082 = vld [vmem:[%s10 + $0x18] sm:$0xff]
      %v1083 = vld [vmem:[%s11] sm:$0x1]
      %v1085 = vlaneseq
      %v1086 = vshrl.u32 %v1085, 7
      %v1087 = vsub.s32 0, %v1086
      %v1088 = vrot.slane %v1083, %v1087
      %v1091 = vsel %vm543, %v1078, 0
      %1093 = vmatprep.subr.mxu0 0.0
      %1094 = vmatpush1.msra.mxu0 %v1079
      %1095 = vmatprep.subr.mxu0 0.0
      %1096 = vmatpush1.msra.mxu0 %v1080
      %1097 = vmatprep.subr.mxu0 0.0
      %1098 = vmatpush1.msra.mxu0 %v1081
      %1099 = vmatprep.subr.mxu0 0.0
      %1100 = vmatpush1.msra.mxu0 %v1082
      %1101 = vmatprep.subr.mxu0 0.0
      %1102 = vmatpush1.msra.mxu0 0.0
      %1103 = vmatprep.subr.mxu0 0.0
      %1104 = vmatpush1.msra.mxu0 0.0
      %1105 = vmatprep.subr.mxu0 0.0
      %1106 = vmatpush1.msra.mxu0 0.0
      %1107 = vmatprep.subr.mxu0 0.0
      %1108 = vmatpush1.msra.mxu0 0.0
      %1109 = vmatprep.subr.mxu0 0.0
      %1110 = vmatpush1.msra.mxu0 0.0
      %1111 = vmatprep.subr.mxu0 0.0
      %1112 = vmatpush1.msra.mxu0 0.0
      %1113 = vmatprep.subr.mxu0 0.0
      %1114 = vmatpush1.msra.mxu0 0.0
      %1115 = vmatprep.subr.mxu0 0.0
      %1116 = vmatpush1.msra.mxu0 0.0
      %1117 = vmatprep.subr.mxu0 0.0
      %1118 = vmatpush1.msra.mxu0 0.0
      %1119 = vmatprep.subr.mxu0 0.0
      %1120 = vmatpush1.msra.mxu0 0.0
      %1121 = vmatprep.subr.mxu0 0.0
      %1122 = vmatpush1.msra.mxu0 0.0
      %1123 = vmatprep.subr.mxu0 0.0
      %1124 = vmatpush1.msra.mxu0 0.0
      %1125 = vmatprep.subr.mxu0 0.0
      %1126 = vmatpush1.msra.mxu0 0.0
      %1127 = vmatprep.subr.mxu0 0.0
      %1128 = vmatpush1.msra.mxu0 0.0
      %1129 = vmatprep.subr.mxu0 0.0
      %1130 = vmatpush1.msra.mxu0 0.0
      %1131 = vmatprep.subr.mxu0 0.0
      %1132 = vmatpush1.msra.mxu0 0.0
      %1133 = vmatprep.subr.mxu0 0.0
      %1134 = vmatpush1.msra.mxu0 0.0
      %1135 = vmatprep.subr.mxu0 0.0
      %1136 = vmatpush1.msra.mxu0 0.0
      %1137 = vmatprep.subr.mxu0 0.0
      %1138 = vmatpush1.msra.mxu0 0.0
      %1139 = vmatprep.subr.mxu0 0.0
      %1140 = vmatpush1.msra.mxu0 0.0
      %1141 = vmatprep.subr.mxu0 0.0
      %1142 = vmatpush1.msra.mxu0 0.0
      %1143 = vmatprep.subr.mxu0 0.0
      %1144 = vmatpush1.msra.mxu0 0.0
      %1145 = vmatprep.subr.mxu0 0.0
      %1146 = vmatpush1.msra.mxu0 0.0
      %1147 = vmatprep.subr.mxu0 0.0
      %1148 = vmatpush1.msra.mxu0 0.0
      %1149 = vmatprep.subr.mxu0 0.0
      %1150 = vmatpush1.msra.mxu0 0.0
      %1151 = vmatprep.subr.mxu0 0.0
      %1152 = vmatpush1.msra.mxu0 0.0
      %1153 = vmatprep.subr.mxu0 0.0
      %1154 = vmatpush1.msra.mxu0 0.0
      %1155 = vmatprep.subr.mxu0 0.0
      %1156 = vmatpush1.msra.mxu0 0.0
      %1157 = vmatprep.mubr.f32.mxu0 0.0
      %1158 = vmatmul.mubr.f32.gmra.mrb[0].mxu0 %v1091
      %v1159 = vpop.f32.mrb[0].mxu0
      %v1160 = vadd.f32 %v1088, %v1159
      %v1161 = vpop.f32.mrb[0].mxu0
      %1162 = vdwg.mxu0
      %v1163 = vmul.f32 %v1160, %v1160
      %v1164 = vmul.f32 %v1160, %v1163
      %v1165 = vmul.f32 %v1164, 0.044715
      %v1166 = vadd.f32 %v1160, %v1165
      %v1167 = vmul.f32 %v1166, 0.7978846
      %v1168 = vtanh.pop %v1167
      %v1169 = vadd.f32 %v1168, 1.0
      %v1170 = vmul.f32 %v1169, 0.5
      %v1171 = vmul.f32 %v1160, %v1170
      %v1172 = vld [vmem:[%s12] sm:$0xff]
      %v1173 = vld [vmem:[%s12 + $0x8] sm:$0xff]
      %v1174 = vld [vmem:[%s12 + $0x10] sm:$0xff]
      %v1175 = vld [vmem:[%s12 + $0x18] sm:$0xff]
      %v1176 = vld [vmem:[%s12 + $0x20] sm:$0xff]
      %v1177 = vld [vmem:[%s12 + $0x28] sm:$0xff]
      %v1178 = vld [vmem:[%s12 + $0x30] sm:$0xff]
      %v1179 = vld [vmem:[%s12 + $0x38] sm:$0xff]
      %v1180 = vld [vmem:[%s13] sm:$0x1]
      %v1182 = vlaneseq
      %v1183 = vshrl.u32 %v1182, 7
      %v1184 = vsub.s32 0, %v1183
      %v1185 = vrot.slane %v1180, %v1184
      %vm1187 = vcmask 523264
      %v1189 = vsel %vm1187, %v1171, 0
      %1191 = vmatprep.subr.mxu0 0.0
      %1192 = vmatpush1.msra.mxu0 %v1172
      %1193 = vmatprep.subr.mxu0 0.0
      %1194 = vmatpush1.msra.mxu0 %v1173
      %1195 = vmatprep.subr.mxu0 0.0
      %1196 = vmatpush1.msra.mxu0 %v1174
      %1197 = vmatprep.subr.mxu0 0.0
      %1198 = vmatpush1.msra.mxu0 %v1175
      %1199 = vmatprep.subr.mxu0 0.0
      %1200 = vmatpush1.msra.mxu0 %v1176
      %1201 = vmatprep.subr.mxu0 0.0
      %1202 = vmatpush1.msra.mxu0 %v1177
      %1203 = vmatprep.subr.mxu0 0.0
      %1204 = vmatpush1.msra.mxu0 %v1178
      %1205 = vmatprep.subr.mxu0 0.0
      %1206 = vmatpush1.msra.mxu0 %v1179
      %1207 = vmatprep.subr.mxu0 0.0
      %1208 = vmatpush1.msra.mxu0 0.0
      %1209 = vmatprep.subr.mxu0 0.0
      %1210 = vmatpush1.msra.mxu0 0.0
      %1211 = vmatprep.subr.mxu0 0.0
      %1212 = vmatpush1.msra.mxu0 0.0
      %1213 = vmatprep.subr.mxu0 0.0
      %1214 = vmatpush1.msra.mxu0 0.0
      %1215 = vmatprep.subr.mxu0 0.0
      %1216 = vmatpush1.msra.mxu0 0.0
      %1217 = vmatprep.subr.mxu0 0.0
      %1218 = vmatpush1.msra.mxu0 0.0
      %1219 = vmatprep.subr.mxu0 0.0
      %1220 = vmatpush1.msra.mxu0 0.0
      %1221 = vmatprep.subr.mxu0 0.0
      %1222 = vmatpush1.msra.mxu0 0.0
      %1223 = vmatprep.subr.mxu0 0.0
      %1224 = vmatpush1.msra.mxu0 0.0
      %1225 = vmatprep.subr.mxu0 0.0
      %1226 = vmatpush1.msra.mxu0 0.0
      %1227 = vmatprep.subr.mxu0 0.0
      %1228 = vmatpush1.msra.mxu0 0.0
      %1229 = vmatprep.subr.mxu0 0.0
      %1230 = vmatpush1.msra.mxu0 0.0
      %1231 = vmatprep.subr.mxu0 0.0
      %1232 = vmatpush1.msra.mxu0 0.0
      %1233 = vmatprep.subr.mxu0 0.0
      %1234 = vmatpush1.msra.mxu0 0.0
      %1235 = vmatprep.subr.mxu0 0.0
      %1236 = vmatpush1.msra.mxu0 0.0
      %1237 = vmatprep.subr.mxu0 0.0
      %1238 = vmatpush1.msra.mxu0 0.0
      %1239 = vmatprep.subr.mxu0 0.0
      %1240 = vmatpush1.msra.mxu0 0.0
      %1241 = vmatprep.subr.mxu0 0.0
      %1242 = vmatpush1.msra.mxu0 0.0
      %1243 = vmatprep.subr.mxu0 0.0
      %1244 = vmatpush1.msra.mxu0 0.0
      %1245 = vmatprep.subr.mxu0 0.0
      %1246 = vmatpush1.msra.mxu0 0.0
      %1247 = vmatprep.subr.mxu0 0.0
      %1248 = vmatpush1.msra.mxu0 0.0
      %1249 = vmatprep.subr.mxu0 0.0
      %1250 = vmatpush1.msra.mxu0 0.0
      %1251 = vmatprep.subr.mxu0 0.0
      %1252 = vmatpush1.msra.mxu0 0.0
      %1253 = vmatprep.subr.mxu0 0.0
      %1254 = vmatpush1.msra.mxu0 0.0
      %1255 = vmatprep.mubr.f32.mxu0 0.0
      %1256 = vmatmul.mubr.f32.gmra.mrb[0].mxu0 %v1189
      %v1257 = vpop.f32.mrb[0].mxu0
      %v1258 = vadd.f32 %v1185, %v1257
      %v1259 = vpop.f32.mrb[0].mxu0
      %1260 = vdwg.mxu0
      %v1261 = vadd.f32 %v1078, %v1258
      %v1262 = vld [vmem:[%s14] sm:$0x1]
      %v1263 = vld [vmem:[%s15] sm:$0x1]
      %v1264 = vsel %vm543, %v1261, 0.0
      %1265 = vadd.xlane.f32.xlu0 %v1264
      %v1266 = vpop.xlane.xlu0 %1265
      %v1267 = vmul.f32 %v1266, %v1054
      %v1268 = vsub.f32 %v1261, %v1267
      %v1269 = vmul.f32 %v1268, %v1268
      %v1270 = vsel %vm543, %v1269, 0.0
      %1271 = vadd.xlane.f32.xlu0 %v1270
      %v1272 = vpop.xlane.xlu0 %1271
      %v1273 = vmul.f32 %v1272, %v1054
      %v1274 = vadd.f32 %v1273, 1e-12
      %v1275 = vrsqrt.pop %v1274
      %v1276 = vmul.f32 %v1268, %v1275
      %v1278 = vlaneseq
      %v1279 = vshrl.u32 %v1278, 7
      %v1280 = vsub.s32 0, %v1279
      %v1281 = vrot.slane %v1262, %v1280
      %v1283 = vmul.f32 %v1276, %v1281
      %v1285 = vlaneseq
      %v1286 = vshrl.u32 %v1285, 7
      %v1287 = vsub.s32 0, %v1286
      %v1288 = vrot.slane %v1263, %v1287
      %v1290 = vadd.f32 %v1283, %v1288
      %1291 = vst.msk [vmem:[%s530] sm:$0xff] %vm543, %v1290
      %p1292 = scmp.lt.s32.totalorder %s27, 1
      %s1293 = scalar_select %p1292, %s27, 1
      %s1294 = smul.addr %s1293, 8
      %s1295 = scalar_lea.vmem %s16, %s1294
      // Predicated region
      $region85: #{bert_bilstm_crf_forward.5} parent=83 // pred_check
        %p1296 = pneg %p391
      $region86: #{bert_bilstm_crf_forward.5} parent=83 // pred_check_branch
        %1298 = sbr.rel (%p1296) target = $region88
      $region87: #{bert_bilstm_crf_forward.5} parent=83 // pred_region
        _
      $region88: #{bert_bilstm_crf_forward.5} parent=83 // pred_fallthru
        _
    $region84: #{bert_bilstm_crf_forward.5} parent=5 // pred_fallthru
      _
    %p1299 = scmp.le.s32.totalorder 2, %s22
    // Predicated region
    $region89: #{bert_bilstm_crf_forward.5} parent=5 // pred_check
      %p1300 = pneg %p1299
    $region90: #{bert_bilstm_crf_forward.5} parent=5 // pred_check_branch
      %1302 = sbr.rel (%p1300) target = $region92
    $region91: #{bert_bilstm_crf_forward.5} parent=5 // pred_region
      %s1303 = ssub.s32 %s22, 2
      // Predicated region
      $region93: #{bert_bilstm_crf_forward.5} parent=91 // pred_check
        %p1304 = pneg %p397
      $region94: #{bert_bilstm_crf_forward.5} parent=91 // pred_check_branch
        %1306 = sbr.rel (%p1304) target = $region96
      $region95: #{bert_bilstm_crf_forward.5} parent=91 // pred_region
        %p1307 = scmp.lt.s32.totalorder %s28, 1
        %s1308 = scalar_select %p1307, %s28, 1
        %s1309 = smul.addr %s1308, 8
        %s1310 = scalar_lea.vmem %s16, %s1309
      $region96: #{bert_bilstm_crf_forward.5} parent=91 // pred_fallthru
        _
    $region92: #{bert_bilstm_crf_forward.5} parent=5 // pred_fallthru
      _
  $region6: #{bert_bilstm_crf_forward.5} parent=0 // loop_footer
    %s26 = sadd.s32 1, %s22
  $region7: #{bert_bilstm_crf_forward.5} parent=0 // loop_footer_branch
    %21 = sbr.rel target = $region3
  $region8: #{bert_bilstm_crf_forward.5} parent=0 // loop_exit
    _

// kernel: bert_bilstm_crf_forward.6
$region0: #{bert_bilstm_crf_forward.6}
  #allocation0 [shape = 'u32[]', space=smem, size = 0x4, offset = 0x4, fixed_abs, tag = 'smem constant byte address 0x4 - core index']
  #allocation1 [shape = 'u32[144,128]{1,0:T(1,128)}', space=vmem, size = 0x12000, scoped, tag = 'internal scratch']
  %s0 = inlined_call_operand.vmem [shape: f32[2,8,32], index: 0, kind: input, shape index: {}]
  %s1 = inlined_call_operand.vmem [shape: f32[32,128], index: 1, kind: input, shape index: {}]
  %s2 = inlined_call_operand.vmem [shape: f32[1,128], index: 2, kind: input, shape index: {}]
  %s3 = inlined_call_operand.vmem [shape: f32[16,64], index: 3, kind: input, shape index: {}]
  %s4 = inlined_call_operand.vmem [shape: f32[16,64], index: 4, kind: input, shape index: {}]
  %s5 = inlined_call_operand.vmem [shape: f32[32,128], index: 5, kind: input, shape index: {}]
  %s6 = inlined_call_operand.vmem [shape: f32[1,128], index: 6, kind: input, shape index: {}]
  %s7 = inlined_call_operand.vmem [shape: f32[1,128], index: 7, kind: input, shape index: {}]
  %s8 = inlined_call_operand.vmem [shape: f32[1,128], index: 8, kind: input, shape index: {}]
  %s9 = inlined_call_operand.vmem [shape: f32[2,8,128], index: 9, kind: output, shape index: {}]
  %s10 = sld [smem:[#allocation0]]
  $region69: #{bert_bilstm_crf_forward.6} parent=0
    _
  %s12 = ssub.s32 1, %s10
  %s13 = scalar_select 0, %s12, %s10
  loop: start=0, step=1, limit=4
  $region2: #{bert_bilstm_crf_forward.6} parent=0 // loop_pre_header
    _
  $region3: #{bert_bilstm_crf_forward.6} parent=0 // loop_header
    %s15 = sphi 0, %s19
    %p16 = scmp.ge.s32.totalorder %s15, 4
    %s25 = sphi 0, %s27
    %s28 = sphi 0, %s25
    %s29 = sphi 0, %s28
    %s45 = sphi 0, %s29
    %s49 = sphi 0, %s49
    %s51 = sphi 0, %s49
    %s52 = sphi 0, %s51
    %s66 = sphi 0, %s52
    %s70 = sphi 0, %s70
    %s72 = sphi 0, %s70
    %s73 = sphi 0, %s72
    %s87 = sphi 0, %s73
    %s91 = sphi 0, %s91
    %s93 = sphi 0, %s91
    %s94 = sphi 0, %s93
    %s108 = sphi 0, %s94
    %s112 = sphi 0, %s112
    %s114 = sphi 0, %s112
    %s115 = sphi 0, %s114
    %s129 = sphi 0, %s115
    %s133 = sphi 0, %s133
    %s135 = sphi 0, %s133
    %s136 = sphi 0, %s135
    %s150 = sphi 0, %s136
    %s154 = sphi 0, %s154
    %s156 = sphi 0, %s154
    %s157 = sphi 0, %s156
    %s171 = sphi 0, %s157
    %s175 = sphi 0, %s175
    %s177 = sphi 0, %s175
    %s178 = sphi 0, %s177
    %s192 = sphi 0, %s178
    %s196 = sphi 0, %s196
    %s198 = sphi 0, %s196
    %s199 = sphi 0, %s198
    %s213 = sphi 0, %s199
    %s219 = sphi 0, %s221
    %s222 = sphi 0, %s219
    %s223 = sphi 0, %s222
    %s239 = sphi 0, %s223
  $region4: #{bert_bilstm_crf_forward.6} parent=0 // loop_header_branch
    %18 = sbr.rel (%p16) target = $region8
  $region5: #{bert_bilstm_crf_forward.6} parent=0 // loop_body
    %s20 = ssub.s32 %s15, 1
    %s21 = ssub.s32 %s15, 2
    %s22 = sadd.s32 %s15, 1
    %s23 = ssub.s32 %s15, %s22
    %p24 = scmp.eq.s32.totalorder %s23, 0
    %s26 = sadd.s32 %s25, 1
    %s27 = scalar_select %p24, %s25, %s26
    %p30 = pneg %p24
    %p31 = scmp.eq.s32.totalorder %s15, 1
    %p32 = por %p30, %p31
    %p33 = scmp.ne.s32.totalorder %s25, %s28
    %p34 = scmp.eq.s32.totalorder %s15, 0
    %p35 = por %p33, %p34
    %p36 = scmp.ne.s32.totalorder %s25, %s28
    %p37 = scmp.eq.s32.totalorder %s20, 1
    %p38 = por %p36, %p37
    %p39 = scmp.ne.s32.totalorder %s28, %s29
    %p40 = scmp.eq.s32.totalorder %s20, 0
    %p41 = por %p39, %p40
    %p42 = scmp.ne.s32.totalorder %s28, %s29
    %p43 = scmp.eq.s32.totalorder %s21, 1
    %p44 = por %p42, %p43
    %p46 = scmp.ne.s32.totalorder %s29, %s45
    %p47 = scmp.eq.s32.totalorder %s21, 0
    %p48 = por %p46, %p47
    %s50 = sadd.s32 %s49, 1
    %p53 = scmp.eq.s32.totalorder %s15, 1
    %p54 = scmp.ne.s32.totalorder %s49, %s51
    %p55 = scmp.eq.s32.totalorder %s15, 0
    %p56 = por %p54, %p55
    %p57 = scmp.ne.s32.totalorder %s49, %s51
    %p58 = scmp.eq.s32.totalorder %s20, 1
    %p59 = por %p57, %p58
    %p60 = scmp.ne.s32.totalorder %s51, %s52
    %p61 = scmp.eq.s32.totalorder %s20, 0
    %p62 = por %p60, %p61
    %p63 = scmp.ne.s32.totalorder %s51, %s52
    %p64 = scmp.eq.s32.totalorder %s21, 1
    %p65 = por %p63, %p64
    %p67 = scmp.ne.s32.totalorder %s52, %s66
    %p68 = scmp.eq.s32.totalorder %s21, 0
    %p69 = por %p67, %p68
    %s71 = sadd.s32 %s70, 1
    %p74 = scmp.eq.s32.totalorder %s15, 1
    %p75 = scmp.ne.s32.totalorder %s70, %s72
    %p76 = scmp.eq.s32.totalorder %s15, 0
    %p77 = por %p75, %p76
    %p78 = scmp.ne.s32.totalorder %s70, %s72
    %p79 = scmp.eq.s32.totalorder %s20, 1
    %p80 = por %p78, %p79
    %p81 = scmp.ne.s32.totalorder %s72, %s73
    %p82 = scmp.eq.s32.totalorder %s20, 0
    %p83 = por %p81, %p82
    %p84 = scmp.ne.s32.totalorder %s72, %s73
    %p85 = scmp.eq.s32.totalorder %s21, 1
    %p86 = por %p84, %p85
    %p88 = scmp.ne.s32.totalorder %s73, %s87
    %p89 = scmp.eq.s32.totalorder %s21, 0
    %p90 = por %p88, %p89
    %s92 = sadd.s32 %s91, 1
    %p95 = scmp.eq.s32.totalorder %s15, 1
    %p96 = scmp.ne.s32.totalorder %s91, %s93
    %p97 = scmp.eq.s32.totalorder %s15, 0
    %p98 = por %p96, %p97
    %p99 = scmp.ne.s32.totalorder %s91, %s93
    %p100 = scmp.eq.s32.totalorder %s20, 1
    %p101 = por %p99, %p100
    %p102 = scmp.ne.s32.totalorder %s93, %s94
    %p103 = scmp.eq.s32.totalorder %s20, 0
    %p104 = por %p102, %p103
    %p105 = scmp.ne.s32.totalorder %s93, %s94
    %p106 = scmp.eq.s32.totalorder %s21, 1
    %p107 = por %p105, %p106
    %p109 = scmp.ne.s32.totalorder %s94, %s108
    %p110 = scmp.eq.s32.totalorder %s21, 0
    %p111 = por %p109, %p110
    %s113 = sadd.s32 %s112, 1
    %p116 = scmp.eq.s32.totalorder %s15, 1
    %p117 = scmp.ne.s32.totalorder %s112, %s114
    %p118 = scmp.eq.s32.totalorder %s15, 0
    %p119 = por %p117, %p118
    %p120 = scmp.ne.s32.totalorder %s112, %s114
    %p121 = scmp.eq.s32.totalorder %s20, 1
    %p122 = por %p120, %p121
    %p123 = scmp.ne.s32.totalorder %s114, %s115
    %p124 = scmp.eq.s32.totalorder %s20, 0
    %p125 = por %p123, %p124
    %p126 = scmp.ne.s32.totalorder %s114, %s115
    %p127 = scmp.eq.s32.totalorder %s21, 1
    %p128 = por %p126, %p127
    %p130 = scmp.ne.s32.totalorder %s115, %s129
    %p131 = scmp.eq.s32.totalorder %s21, 0
    %p132 = por %p130, %p131
    %s134 = sadd.s32 %s133, 1
    %p137 = scmp.eq.s32.totalorder %s15, 1
    %p138 = scmp.ne.s32.totalorder %s133, %s135
    %p139 = scmp.eq.s32.totalorder %s15, 0
    %p140 = por %p138, %p139
    %p141 = scmp.ne.s32.totalorder %s133, %s135
    %p142 = scmp.eq.s32.totalorder %s20, 1
    %p143 = por %p141, %p142
    %p144 = scmp.ne.s32.totalorder %s135, %s136
    %p145 = scmp.eq.s32.totalorder %s20, 0
    %p146 = por %p144, %p145
    %p147 = scmp.ne.s32.totalorder %s135, %s136
    %p148 = scmp.eq.s32.totalorder %s21, 1
    %p149 = por %p147, %p148
    %p151 = scmp.ne.s32.totalorder %s136, %s150
    %p152 = scmp.eq.s32.totalorder %s21, 0
    %p153 = por %p151, %p152
    %s155 = sadd.s32 %s154, 1
    %p158 = scmp.eq.s32.totalorder %s15, 1
    %p159 = scmp.ne.s32.totalorder %s154, %s156
    %p160 = scmp.eq.s32.totalorder %s15, 0
    %p161 = por %p159, %p160
    %p162 = scmp.ne.s32.totalorder %s154, %s156
    %p163 = scmp.eq.s32.totalorder %s20, 1
    %p164 = por %p162, %p163
    %p165 = scmp.ne.s32.totalorder %s156, %s157
    %p166 = scmp.eq.s32.totalorder %s20, 0
    %p167 = por %p165, %p166
    %p168 = scmp.ne.s32.totalorder %s156, %s157
    %p169 = scmp.eq.s32.totalorder %s21, 1
    %p170 = por %p168, %p169
    %p172 = scmp.ne.s32.totalorder %s157, %s171
    %p173 = scmp.eq.s32.totalorder %s21, 0
    %p174 = por %p172, %p173
    %s176 = sadd.s32 %s175, 1
    %p179 = scmp.eq.s32.totalorder %s15, 1
    %p180 = scmp.ne.s32.totalorder %s175, %s177
    %p181 = scmp.eq.s32.totalorder %s15, 0
    %p182 = por %p180, %p181
    %p183 = scmp.ne.s32.totalorder %s175, %s177
    %p184 = scmp.eq.s32.totalorder %s20, 1
    %p185 = por %p183, %p184
    %p186 = scmp.ne.s32.totalorder %s177, %s178
    %p187 = scmp.eq.s32.totalorder %s20, 0
    %p188 = por %p186, %p187
    %p189 = scmp.ne.s32.totalorder %s177, %s178
    %p190 = scmp.eq.s32.totalorder %s21, 1
    %p191 = por %p189, %p190
    %p193 = scmp.ne.s32.totalorder %s178, %s192
    %p194 = scmp.eq.s32.totalorder %s21, 0
    %p195 = por %p193, %p194
    %s197 = sadd.s32 %s196, 1
    %p200 = scmp.eq.s32.totalorder %s15, 1
    %p201 = scmp.ne.s32.totalorder %s196, %s198
    %p202 = scmp.eq.s32.totalorder %s15, 0
    %p203 = por %p201, %p202
    %p204 = scmp.ne.s32.totalorder %s196, %s198
    %p205 = scmp.eq.s32.totalorder %s20, 1
    %p206 = por %p204, %p205
    %p207 = scmp.ne.s32.totalorder %s198, %s199
    %p208 = scmp.eq.s32.totalorder %s20, 0
    %p209 = por %p207, %p208
    %p210 = scmp.ne.s32.totalorder %s198, %s199
    %p211 = scmp.eq.s32.totalorder %s21, 1
    %p212 = por %p210, %p211
    %p214 = scmp.ne.s32.totalorder %s199, %s213
    %p215 = scmp.eq.s32.totalorder %s21, 0
    %p216 = por %p214, %p215
    %s217 = ssub.s32 %s15, %s22
    %p218 = scmp.eq.s32.totalorder %s217, 0
    %s220 = sadd.s32 %s219, 1
    %s221 = scalar_select %p218, %s219, %s220
    %p224 = pneg %p218
    %p225 = scmp.eq.s32.totalorder %s15, 1
    %p226 = por %p224, %p225
    %p227 = scmp.ne.s32.totalorder %s219, %s222
    %p228 = scmp.eq.s32.totalorder %s15, 0
    %p229 = por %p227, %p228
    %p230 = scmp.ne.s32.totalorder %s219, %s222
    %p231 = scmp.eq.s32.totalorder %s20, 1
    %p232 = por %p230, %p231
    %p233 = scmp.ne.s32.totalorder %s222, %s223
    %p234 = scmp.eq.s32.totalorder %s20, 0
    %p235 = por %p233, %p234
    %p236 = scmp.ne.s32.totalorder %s222, %s223
    %p237 = scmp.eq.s32.totalorder %s21, 1
    %p238 = por %p236, %p237
    %p240 = scmp.ne.s32.totalorder %s223, %s239
    %p241 = scmp.eq.s32.totalorder %s21, 0
    %p242 = por %p240, %p241
    %p243 = scmp.le.s32.totalorder 1, %s15
    %p244 = scmp.lt.s32.totalorder %s15, 3
    %p245 = pnand %p243, %p244
    %p246 = pneg %p245
    // Predicated region
    $region9: #{bert_bilstm_crf_forward.6} parent=5 // pred_check
      _
    $region10: #{bert_bilstm_crf_forward.6} parent=5 // pred_check_branch
      %248 = sbr.rel (%p245) target = $region12
    $region11: #{bert_bilstm_crf_forward.6} parent=5 // pred_region
      %s249 = ssub.s32 %s15, 1
      // Predicated region
      $region13: #{bert_bilstm_crf_forward.6} parent=11 // pred_check
        %p250 = pneg %p62
      $region14: #{bert_bilstm_crf_forward.6} parent=11 // pred_check_branch
        %252 = sbr.rel (%p250) target = $region16
      $region15: #{bert_bilstm_crf_forward.6} parent=11 // pred_region
        _
      $region16: #{bert_bilstm_crf_forward.6} parent=11 // pred_fallthru
        _
      // Predicated region
      $region17: #{bert_bilstm_crf_forward.6} parent=11 // pred_check
        %p253 = pneg %p83
      $region18: #{bert_bilstm_crf_forward.6} parent=11 // pred_check_branch
        %255 = sbr.rel (%p253) target = $region20
      $region19: #{bert_bilstm_crf_forward.6} parent=11 // pred_region
        _
      $region20: #{bert_bilstm_crf_forward.6} parent=11 // pred_fallthru
        _
      // Predicated region
      $region21: #{bert_bilstm_crf_forward.6} parent=11 // pred_check
        %p256 = pneg %p104
      $region22: #{bert_bilstm_crf_forward.6} parent=11 // pred_check_branch
        %258 = sbr.rel (%p256) target = $region24
      $region23: #{bert_bilstm_crf_forward.6} parent=11 // pred_region
        _
      $region24: #{bert_bilstm_crf_forward.6} parent=11 // pred_fallthru
        _
      // Predicated region
      $region25: #{bert_bilstm_crf_forward.6} parent=11 // pred_check
        %p259 = pneg %p125
      $region26: #{bert_bilstm_crf_forward.6} parent=11 // pred_check_branch
        %261 = sbr.rel (%p259) target = $region28
      $region27: #{bert_bilstm_crf_forward.6} parent=11 // pred_region
        _
      $region28: #{bert_bilstm_crf_forward.6} parent=11 // pred_fallthru
        _
      // Predicated region
      $region29: #{bert_bilstm_crf_forward.6} parent=11 // pred_check
        %p262 = pneg %p146
      $region30: #{bert_bilstm_crf_forward.6} parent=11 // pred_check_branch
        %264 = sbr.rel (%p262) target = $region32
      $region31: #{bert_bilstm_crf_forward.6} parent=11 // pred_region
        _
      $region32: #{bert_bilstm_crf_forward.6} parent=11 // pred_fallthru
        _
      // Predicated region
      $region33: #{bert_bilstm_crf_forward.6} parent=11 // pred_check
        %p265 = pneg %p167
      $region34: #{bert_bilstm_crf_forward.6} parent=11 // pred_check_branch
        %267 = sbr.rel (%p265) target = $region36
      $region35: #{bert_bilstm_crf_forward.6} parent=11 // pred_region
        _
      $region36: #{bert_bilstm_crf_forward.6} parent=11 // pred_fallthru
        _
      // Predicated region
      $region37: #{bert_bilstm_crf_forward.6} parent=11 // pred_check
        %p268 = pneg %p188
      $region38: #{bert_bilstm_crf_forward.6} parent=11 // pred_check_branch
        %270 = sbr.rel (%p268) target = $region40
      $region39: #{bert_bilstm_crf_forward.6} parent=11 // pred_region
        _
      $region40: #{bert_bilstm_crf_forward.6} parent=11 // pred_fallthru
        _
      // Predicated region
      $region41: #{bert_bilstm_crf_forward.6} parent=11 // pred_check
        %p271 = pneg %p209
      $region42: #{bert_bilstm_crf_forward.6} parent=11 // pred_check_branch
        %273 = sbr.rel (%p271) target = $region44
      $region43: #{bert_bilstm_crf_forward.6} parent=11 // pred_region
        _
      $region44: #{bert_bilstm_crf_forward.6} parent=11 // pred_fallthru
        _
    $region12: #{bert_bilstm_crf_forward.6} parent=5 // pred_fallthru
      _
    %p274 = scmp.lt.s32.totalorder %s15, 2
    // Predicated region
    $region45: #{bert_bilstm_crf_forward.6} parent=5 // pred_check
      %p275 = pneg %p274
    $region46: #{bert_bilstm_crf_forward.6} parent=5 // pred_check_branch
      %277 = sbr.rel (%p275) target = $region48
    $region47: #{bert_bilstm_crf_forward.6} parent=5 // pred_region
      // Predicated region
      $region49: #{bert_bilstm_crf_forward.6} parent=47 // pred_check
        %p278 = pneg %p35
      $region50: #{bert_bilstm_crf_forward.6} parent=47 // pred_check_branch
        %280 = sbr.rel (%p278) target = $region52
      $region51: #{bert_bilstm_crf_forward.6} parent=47 // pred_region
        %p281 = scmp.lt.s32.totalorder %s15, 1
        %s282 = scalar_select %p281, %s15, 1
        %s283 = smul.addr %s282, 8
        %s284 = scalar_lea.vmem %s0, %s283
      $region52: #{bert_bilstm_crf_forward.6} parent=47 // pred_fallthru
        _
    $region48: #{bert_bilstm_crf_forward.6} parent=5 // pred_fallthru
      _
    %p285 = scmp.le.s32.totalorder 1, %s15
    %p286 = scmp.lt.s32.totalorder %s15, 3
    %p287 = pnand %p285, %p286
    %p288 = pneg %p287
    // Predicated region
    $region53: #{bert_bilstm_crf_forward.6} parent=5 // pred_check
      _
    $region54: #{bert_bilstm_crf_forward.6} parent=5 // pred_check_branch
      %290 = sbr.rel (%p287) target = $region56
    $region55: #{bert_bilstm_crf_forward.6} parent=5 // pred_region
      %s291 = ssub.s32 %s15, 1
      %p292 = scmp.lt.s32.totalorder %s20, 1
      %s293 = scalar_select %p292, %s20, 1
      %s294 = smul.addr %s293, 8
      %s295 = scalar_lea.vmem %s0, %s294
      %p296 = pneg %p41
      %p297 = pneg %p38
      %p298 = pneg %p62
      %p299 = pneg %p59
      %p300 = pneg %p83
      %p301 = pneg %p80
      %p302 = pneg %p104
      %p303 = pneg %p101
      %p304 = pneg %p125
      %p305 = pneg %p122
      %p306 = pneg %p146
      %p307 = pneg %p143
      %p308 = pneg %p167
      %p309 = pneg %p164
      %p310 = pneg %p188
      %p311 = pneg %p185
      %p312 = pneg %p209
      %p313 = pneg %p206
      %p314 = pneg %p235
      %p315 = pneg %p232
      %p316 = scmp.lt.s32.totalorder %s20, 1
      %s317 = scalar_select %p316, %s20, 1
      %s318 = smul.addr %s317, 8
      %s319 = scalar_lea.vmem %s9, %s318
      %p320 = scmp.lt.s32.totalorder %s20, 1
      %s321 = scalar_select %p320, %s20, 1
      %s322 = smul.addr %s321, 8
      %s323 = scalar_lea.vmem %s0, %s322
      %p324 = scmp.lt.s32.totalorder %s20, 1
      %s325 = scalar_select %p324, %s20, 1
      %s326 = smul.addr %s325, 8
      %s327 = scalar_lea.vmem %s9, %s326
      %v328 = vld [vmem:[%s323] sm:$0xff]
      %v329 = vld [vmem:[%s1] sm:$0xff]
      %v330 = vld [vmem:[%s1 + $0x8] sm:$0xff]
      %v331 = vld [vmem:[%s1 + $0x10] sm:$0xff]
      %v332 = vld [vmem:[%s1 + $0x18] sm:$0xff]
      %v333 = vld [vmem:[%s2] sm:$0x1]
      %v335 = vlaneseq
      %v336 = vshrl.u32 %v335, 7
      %v337 = vsub.s32 0, %v336
      %v338 = vrot.slane %v333, %v337
      %vm340 = vcmask 261120
      %v342 = vsel %vm340, %v328, 0
      %344 = vmatprep.subr.mxu0 0.0
      %345 = vmatpush1.msra.mxu0 %v329
      %346 = vmatprep.subr.mxu0 0.0
      %347 = vmatpush1.msra.mxu0 %v330
      %348 = vmatprep.subr.mxu0 0.0
      %349 = vmatpush1.msra.mxu0 %v331
      %350 = vmatprep.subr.mxu0 0.0
      %351 = vmatpush1.msra.mxu0 %v332
      %352 = vmatprep.subr.mxu0 0.0
      %353 = vmatpush1.msra.mxu0 0.0
      %354 = vmatprep.subr.mxu0 0.0
      %355 = vmatpush1.msra.mxu0 0.0
      %356 = vmatprep.subr.mxu0 0.0
      %357 = vmatpush1.msra.mxu0 0.0
      %358 = vmatprep.subr.mxu0 0.0
      %359 = vmatpush1.msra.mxu0 0.0
      %360 = vmatprep.subr.mxu0 0.0
      %361 = vmatpush1.msra.mxu0 0.0
      %362 = vmatprep.subr.mxu0 0.0
      %363 = vmatpush1.msra.mxu0 0.0
      %364 = vmatprep.subr.mxu0 0.0
      %365 = vmatpush1.msra.mxu0 0.0
      %366 = vmatprep.subr.mxu0 0.0
      %367 = vmatpush1.msra.mxu0 0.0
      %368 = vmatprep.subr.mxu0 0.0
      %369 = vmatpush1.msra.mxu0 0.0
      %370 = vmatprep.subr.mxu0 0.0
      %371 = vmatpush1.msra.mxu0 0.0
      %372 = vmatprep.subr.mxu0 0.0
      %373 = vmatpush1.msra.mxu0 0.0
      %374 = vmatprep.subr.mxu0 0.0
      %375 = vmatpush1.msra.mxu0 0.0
      %376 = vmatprep.subr.mxu0 0.0
      %377 = vmatpush1.msra.mxu0 0.0
      %378 = vmatprep.subr.mxu0 0.0
      %379 = vmatpush1.msra.mxu0 0.0
      %380 = vmatprep.subr.mxu0 0.0
      %381 = vmatpush1.msra.mxu0 0.0
      %382 = vmatprep.subr.mxu0 0.0
      %383 = vmatpush1.msra.mxu0 0.0
      %384 = vmatprep.subr.mxu0 0.0
      %385 = vmatpush1.msra.mxu0 0.0
      %386 = vmatprep.subr.mxu0 0.0
      %387 = vmatpush1.msra.mxu0 0.0
      %388 = vmatprep.subr.mxu0 0.0
      %389 = vmatpush1.msra.mxu0 0.0
      %390 = vmatprep.subr.mxu0 0.0
      %391 = vmatpush1.msra.mxu0 0.0
      %392 = vmatprep.subr.mxu0 0.0
      %393 = vmatpush1.msra.mxu0 0.0
      %394 = vmatprep.subr.mxu0 0.0
      %395 = vmatpush1.msra.mxu0 0.0
      %396 = vmatprep.subr.mxu0 0.0
      %397 = vmatpush1.msra.mxu0 0.0
      %398 = vmatprep.subr.mxu0 0.0
      %399 = vmatpush1.msra.mxu0 0.0
      %400 = vmatprep.subr.mxu0 0.0
      %401 = vmatpush1.msra.mxu0 0.0
      %402 = vmatprep.subr.mxu0 0.0
      %403 = vmatpush1.msra.mxu0 0.0
      %404 = vmatprep.subr.mxu0 0.0
      %405 = vmatpush1.msra.mxu0 0.0
      %406 = vmatprep.subr.mxu0 0.0
      %407 = vmatpush1.msra.mxu0 0.0
      %408 = vmatprep.mubr.f32.mxu0 0.0
      %409 = vmatmul.mubr.f32.gmra.mrb[0].mxu0 %v342
      %v410 = vpop.f32.mrb[0].mxu0
      %v411 = vadd.f32 %v338, %v410
      %v412 = vpop.f32.mrb[0].mxu0
      %413 = vdwg.mxu0
      %v414 = vld [vmem:[%s3] sm:$0xff]
      %v415 = vld [vmem:[%s3 + $0x8] sm:$0xff]
      %v416 = vld [vmem:[%s4] sm:$0xff]
      %v417 = vld [vmem:[%s4 + $0x8] sm:$0xff]
      %vm418 = vcmask 130048
      %v420 = vsel %vm418, 0.0, 0
      %422 = vmatprep.subr.mxu0 0.0
      %423 = vmatpush1.msra.mxu0 %v414
      %424 = vmatprep.subr.mxu0 0.0
      %425 = vmatpush1.msra.mxu0 %v415
      %426 = vmatprep.subr.mxu0 0.0
      %427 = vmatpush1.msra.mxu0 0.0
      %428 = vmatprep.subr.mxu0 0.0
      %429 = vmatpush1.msra.mxu0 0.0
      %430 = vmatprep.subr.mxu0 0.0
      %431 = vmatpush1.msra.mxu0 0.0
      %432 = vmatprep.subr.mxu0 0.0
      %433 = vmatpush1.msra.mxu0 0.0
      %434 = vmatprep.subr.mxu0 0.0
      %435 = vmatpush1.msra.mxu0 0.0
      %436 = vmatprep.subr.mxu0 0.0
      %437 = vmatpush1.msra.mxu0 0.0
      %438 = vmatprep.subr.mxu0 0.0
      %439 = vmatpush1.msra.mxu0 0.0
      %440 = vmatprep.subr.mxu0 0.0
      %441 = vmatpush1.msra.mxu0 0.0
      %442 = vmatprep.subr.mxu0 0.0
      %443 = vmatpush1.msra.mxu0 0.0
      %444 = vmatprep.subr.mxu0 0.0
      %445 = vmatpush1.msra.mxu0 0.0
      %446 = vmatprep.subr.mxu0 0.0
      %447 = vmatpush1.msra.mxu0 0.0
      %448 = vmatprep.subr.mxu0 0.0
      %449 = vmatpush1.msra.mxu0 0.0
      %450 = vmatprep.subr.mxu0 0.0
      %451 = vmatpush1.msra.mxu0 0.0
      %452 = vmatprep.subr.mxu0 0.0
      %453 = vmatpush1.msra.mxu0 0.0
      %454 = vmatprep.subr.mxu0 0.0
      %455 = vmatpush1.msra.mxu0 0.0
      %456 = vmatprep.subr.mxu0 0.0
      %457 = vmatpush1.msra.mxu0 0.0
      %458 = vmatprep.subr.mxu0 0.0
      %459 = vmatpush1.msra.mxu0 0.0
      %460 = vmatprep.subr.mxu0 0.0
      %461 = vmatpush1.msra.mxu0 0.0
      %462 = vmatprep.subr.mxu0 0.0
      %463 = vmatpush1.msra.mxu0 0.0
      %464 = vmatprep.subr.mxu0 0.0
      %465 = vmatpush1.msra.mxu0 0.0
      %466 = vmatprep.subr.mxu0 0.0
      %467 = vmatpush1.msra.mxu0 0.0
      %468 = vmatprep.subr.mxu0 0.0
      %469 = vmatpush1.msra.mxu0 0.0
      %470 = vmatprep.subr.mxu0 0.0
      %471 = vmatpush1.msra.mxu0 0.0
      %472 = vmatprep.subr.mxu0 0.0
      %473 = vmatpush1.msra.mxu0 0.0
      %474 = vmatprep.subr.mxu0 0.0
      %475 = vmatpush1.msra.mxu0 0.0
      %476 = vmatprep.subr.mxu0 0.0
      %477 = vmatpush1.msra.mxu0 0.0
      %478 = vmatprep.subr.mxu0 0.0
      %479 = vmatpush1.msra.mxu0 0.0
      %480 = vmatprep.subr.mxu0 0.0
      %481 = vmatpush1.msra.mxu0 0.0
      %482 = vmatprep.subr.mxu0 0.0
      %483 = vmatpush1.msra.mxu0 0.0
      %484 = vmatprep.subr.mxu0 0.0
      %485 = vmatpush1.msra.mxu0 0.0
      %486 = vmatprep.mubr.f32.mxu0 0.0
      %487 = vmatmul.mubr.f32.gmra.mrb[0].mxu0 %v420
      %v488 = vpop.f32.mrb[0].mxu0
      %v489 = vadd.f32 0.0, %v488
      %v490 = vpop.f32.mrb[0].mxu0
      %491 = vdwg.mxu0
      %v492 = vadd.f32 %v411, %v489
      %v493 = vxor.u32 %v492, 2147483648
      %v494 = vmul.f32 %v493, 1.442695
      %v495 = vpow.pop %v494
      %v496 = vadd.f32 %v495, 1.0
      %v497 = vrcp.pop %v496
      %v498 = vmul.f32 1.0, %v497
      %v499 = vtanh.pop %v492
      %v500 = vmul.f32 %v498, 0.0
      %502 = vrot.lane.b32.xlu0 %v499, 96
      %v503 = vpop.permute.xlu0 %502
      %v505 = vmul.f32 %v498, %v503
      %507 = vrot.lane.b32.xlu0 %v505, 16
      %v508 = vpop.permute.xlu0 %507
      %v510 = vadd.f32 %v500, %v508
      %v511 = vtanh.pop %v510
      %513 = vrot.lane.b32.xlu0 %v511, 32
      %v514 = vpop.permute.xlu0 %513
      %v516 = vmul.f32 %v498, %v514
      %518 = vrot.lane.b32.xlu0 %v516, 80
      %v519 = vpop.permute.xlu0 %518
      %v520 = vsel %vm418, %v519, 0
      %522 = vmatprep.subr.mxu0 0.0
      %523 = vmatpush1.msra.mxu0 %v414
      %524 = vmatprep.subr.mxu0 0.0
      %525 = vmatpush1.msra.mxu0 %v415
      %526 = vmatprep.subr.mxu0 0.0
      %527 = vmatpush1.msra.mxu0 0.0
      %528 = vmatprep.subr.mxu0 0.0
      %529 = vmatpush1.msra.mxu0 0.0
      %530 = vmatprep.subr.mxu0 0.0
      %531 = vmatpush1.msra.mxu0 0.0
      %532 = vmatprep.subr.mxu0 0.0
      %533 = vmatpush1.msra.mxu0 0.0
      %534 = vmatprep.subr.mxu0 0.0
      %535 = vmatpush1.msra.mxu0 0.0
      %536 = vmatprep.subr.mxu0 0.0
      %537 = vmatpush1.msra.mxu0 0.0
      %538 = vmatprep.subr.mxu0 0.0
      %539 = vmatpush1.msra.mxu0 0.0
      %540 = vmatprep.subr.mxu0 0.0
      %541 = vmatpush1.msra.mxu0 0.0
      %542 = vmatprep.subr.mxu0 0.0
      %543 = vmatpush1.msra.mxu0 0.0
      %544 = vmatprep.subr.mxu0 0.0
      %545 = vmatpush1.msra.mxu0 0.0
      %546 = vmatprep.subr.mxu0 0.0
      %547 = vmatpush1.msra.mxu0 0.0
      %548 = vmatprep.subr.mxu0 0.0
      %549 = vmatpush1.msra.mxu0 0.0
      %550 = vmatprep.subr.mxu0 0.0
      %551 = vmatpush1.msra.mxu0 0.0
      %552 = vmatprep.subr.mxu0 0.0
      %553 = vmatpush1.msra.mxu0 0.0
      %554 = vmatprep.subr.mxu0 0.0
      %555 = vmatpush1.msra.mxu0 0.0
      %556 = vmatprep.subr.mxu0 0.0
      %557 = vmatpush1.msra.mxu0 0.0
      %558 = vmatprep.subr.mxu0 0.0
      %559 = vmatpush1.msra.mxu0 0.0
      %560 = vmatprep.subr.mxu0 0.0
      %561 = vmatpush1.msra.mxu0 0.0
      %562 = vmatprep.subr.mxu0 0.0
      %563 = vmatpush1.msra.mxu0 0.0
      %564 = vmatprep.subr.mxu0 0.0
      %565 = vmatpush1.msra.mxu0 0.0
      %566 = vmatprep.subr.mxu0 0.0
      %567 = vmatpush1.msra.mxu0 0.0
      %568 = vmatprep.subr.mxu0 0.0
      %569 = vmatpush1.msra.mxu0 0.0
      %570 = vmatprep.subr.mxu0 0.0
      %571 = vmatpush1.msra.mxu0 0.0
      %572 = vmatprep.subr.mxu0 0.0
      %573 = vmatpush1.msra.mxu0 0.0
      %574 = vmatprep.subr.mxu0 0.0
      %575 = vmatpush1.msra.mxu0 0.0
      %576 = vmatprep.subr.mxu0 0.0
      %577 = vmatpush1.msra.mxu0 0.0
      %578 = vmatprep.subr.mxu0 0.0
      %579 = vmatpush1.msra.mxu0 0.0
      %580 = vmatprep.subr.mxu0 0.0
      %581 = vmatpush1.msra.mxu0 0.0
      %582 = vmatprep.subr.mxu0 0.0
      %583 = vmatpush1.msra.mxu0 0.0
      %584 = vmatprep.subr.mxu0 0.0
      %585 = vmatpush1.msra.mxu0 0.0
      %586 = vmatprep.mubr.f32.mxu0 0.0
      %587 = vmatmul.mubr.f32.gmra.mrb[0].mxu0 %v520
      %v588 = vpop.f32.mrb[0].mxu0
      %v589 = vadd.f32 0.0, %v588
      %v590 = vpop.f32.mrb[0].mxu0
      %591 = vdwg.mxu0
      %v593 = vrot.slane %v589, 7
      %v595 = vadd.f32 %v411, %v593
      %v596 = vxor.u32 %v595, 2147483648
      %v597 = vmul.f32 %v596, 1.442695
      %v598 = vpow.pop %v597
      %v599 = vadd.f32 %v598, 1.0
      %v600 = vrcp.pop %v599
      %v601 = vmul.f32 1.0, %v600
      %v602 = vtanh.pop %v595
      %v604 = vrot.slane %v510, 7
      %v606 = vmul.f32 %v601, %v604
      %608 = vrot.lane.b32.xlu0 %v602, 96
      %v609 = vpop.permute.xlu0 %608
      %v611 = vmul.f32 %v601, %v609
      %613 = vrot.lane.b32.xlu0 %v611, 16
      %v614 = vpop.permute.xlu0 %613
      %v616 = vadd.f32 %v606, %v614
      %v617 = vtanh.pop %v616
      %619 = vrot.lane.b32.xlu0 %v617, 32
      %v620 = vpop.permute.xlu0 %619
      %v622 = vmul.f32 %v601, %v620
      %v624 = vrot.slane %v622, 1
      %625 = vrot.lane.b32.xlu0 %v624, 80
      %v626 = vpop.permute.xlu0 %625
      %v627 = vsel %vm418, %v626, 0
      %629 = vmatprep.subr.mxu0 0.0
      %630 = vmatpush1.msra.mxu0 %v414
      %631 = vmatprep.subr.mxu0 0.0
      %632 = vmatpush1.msra.mxu0 %v415
      %633 = vmatprep.subr.mxu0 0.0
      %634 = vmatpush1.msra.mxu0 0.0
      %635 = vmatprep.subr.mxu0 0.0
      %636 = vmatpush1.msra.mxu0 0.0
      %637 = vmatprep.subr.mxu0 0.0
      %638 = vmatpush1.msra.mxu0 0.0
      %639 = vmatprep.subr.mxu0 0.0
      %640 = vmatpush1.msra.mxu0 0.0
      %641 = vmatprep.subr.mxu0 0.0
      %642 = vmatpush1.msra.mxu0 0.0
      %643 = vmatprep.subr.mxu0 0.0
      %644 = vmatpush1.msra.mxu0 0.0
      %645 = vmatprep.subr.mxu0 0.0
      %646 = vmatpush1.msra.mxu0 0.0
      %647 = vmatprep.subr.mxu0 0.0
      %648 = vmatpush1.msra.mxu0 0.0
      %649 = vmatprep.subr.mxu0 0.0
      %650 = vmatpush1.msra.mxu0 0.0
      %651 = vmatprep.subr.mxu0 0.0
      %652 = vmatpush1.msra.mxu0 0.0
      %653 = vmatprep.subr.mxu0 0.0
      %654 = vmatpush1.msra.mxu0 0.0
      %655 = vmatprep.subr.mxu0 0.0
      %656 = vmatpush1.msra.mxu0 0.0
      %657 = vmatprep.subr.mxu0 0.0
      %658 = vmatpush1.msra.mxu0 0.0
      %659 = vmatprep.subr.mxu0 0.0
      %660 = vmatpush1.msra.mxu0 0.0
      %661 = vmatprep.subr.mxu0 0.0
      %662 = vmatpush1.msra.mxu0 0.0
      %663 = vmatprep.subr.mxu0 0.0
      %664 = vmatpush1.msra.mxu0 0.0
      %665 = vmatprep.subr.mxu0 0.0
      %666 = vmatpush1.msra.mxu0 0.0
      %667 = vmatprep.subr.mxu0 0.0
      %668 = vmatpush1.msra.mxu0 0.0
      %669 = vmatprep.subr.mxu0 0.0
      %670 = vmatpush1.msra.mxu0 0.0
      %671 = vmatprep.subr.mxu0 0.0
      %672 = vmatpush1.msra.mxu0 0.0
      %673 = vmatprep.subr.mxu0 0.0
      %674 = vmatpush1.msra.mxu0 0.0
      %675 = vmatprep.subr.mxu0 0.0
      %676 = vmatpush1.msra.mxu0 0.0
      %677 = vmatprep.subr.mxu0 0.0
      %678 = vmatpush1.msra.mxu0 0.0
      %679 = vmatprep.subr.mxu0 0.0
      %680 = vmatpush1.msra.mxu0 0.0
      %681 = vmatprep.subr.mxu0 0.0
      %682 = vmatpush1.msra.mxu0 0.0
      %683 = vmatprep.subr.mxu0 0.0
      %684 = vmatpush1.msra.mxu0 0.0
      %685 = vmatprep.subr.mxu0 0.0
      %686 = vmatpush1.msra.mxu0 0.0
      %687 = vmatprep.subr.mxu0 0.0
      %688 = vmatpush1.msra.mxu0 0.0
      %689 = vmatprep.subr.mxu0 0.0
      %690 = vmatpush1.msra.mxu0 0.0
      %691 = vmatprep.subr.mxu0 0.0
      %692 = vmatpush1.msra.mxu0 0.0
      %693 = vmatprep.mubr.f32.mxu0 0.0
      %694 = vmatmul.mubr.f32.gmra.mrb[0].mxu0 %v627
      %v695 = vpop.f32.mrb[0].mxu0
      %v696 = vadd.f32 0.0, %v695
      %v697 = vpop.f32.mrb[0].mxu0
      %698 = vdwg.mxu0
      %v700 = vrot.slane %v696, 6
      %v702 = vadd.f32 %v411, %v700
      %v703 = vxor.u32 %v702, 2147483648
      %v704 = vmul.f32 %v703, 1.442695
      %v705 = vpow.pop %v704
      %v706 = vadd.f32 %v705, 1.0
      %v707 = vrcp.pop %v706
      %v708 = vmul.f32 1.0, %v707
      %v709 = vtanh.pop %v702
      %v711 = vrot.slane %v616, 7
      %v713 = vmul.f32 %v708, %v711
      %715 = vrot.lane.b32.xlu0 %v709, 96
      %v716 = vpop.permute.xlu0 %715
      %v718 = vmul.f32 %v708, %v716
      %720 = vrot.lane.b32.xlu0 %v718, 16
      %v721 = vpop.permute.xlu0 %720
      %v723 = vadd.f32 %v713, %v721
      %v724 = vtanh.pop %v723
      %726 = vrot.lane.b32.xlu0 %v724, 32
      %v727 = vpop.permute.xlu0 %726
      %v729 = vmul.f32 %v708, %v727
      %v731 = vrot.slane %v729, 2
      %732 = vrot.lane.b32.xlu0 %v731, 80
      %v733 = vpop.permute.xlu0 %732
      %v734 = vsel %vm418, %v733, 0
      %736 = vmatprep.subr.mxu0 0.0
      %737 = vmatpush1.msra.mxu0 %v414
      %738 = vmatprep.subr.mxu0 0.0
      %739 = vmatpush1.msra.mxu0 %v415
      %740 = vmatprep.subr.mxu0 0.0
      %741 = vmatpush1.msra.mxu0 0.0
      %742 = vmatprep.subr.mxu0 0.0
      %743 = vmatpush1.msra.mxu0 0.0
      %744 = vmatprep.subr.mxu0 0.0
      %745 = vmatpush1.msra.mxu0 0.0
      %746 = vmatprep.subr.mxu0 0.0
      %747 = vmatpush1.msra.mxu0 0.0
      %748 = vmatprep.subr.mxu0 0.0
      %749 = vmatpush1.msra.mxu0 0.0
      %750 = vmatprep.subr.mxu0 0.0
      %751 = vmatpush1.msra.mxu0 0.0
      %752 = vmatprep.subr.mxu0 0.0
      %753 = vmatpush1.msra.mxu0 0.0
      %754 = vmatprep.subr.mxu0 0.0
      %755 = vmatpush1.msra.mxu0 0.0
      %756 = vmatprep.subr.mxu0 0.0
      %757 = vmatpush1.msra.mxu0 0.0
      %758 = vmatprep.subr.mxu0 0.0
      %759 = vmatpush1.msra.mxu0 0.0
      %760 = vmatprep.subr.mxu0 0.0
      %761 = vmatpush1.msra.mxu0 0.0
      %762 = vmatprep.subr.mxu0 0.0
      %763 = vmatpush1.msra.mxu0 0.0
      %764 = vmatprep.subr.mxu0 0.0
      %765 = vmatpush1.msra.mxu0 0.0
      %766 = vmatprep.subr.mxu0 0.0
      %767 = vmatpush1.msra.mxu0 0.0
      %768 = vmatprep.subr.mxu0 0.0
      %769 = vmatpush1.msra.mxu0 0.0
      %770 = vmatprep.subr.mxu0 0.0
      %771 = vmatpush1.msra.mxu0 0.0
      %772 = vmatprep.subr.mxu0 0.0
      %773 = vmatpush1.msra.mxu0 0.0
      %774 = vmatprep.subr.mxu0 0.0
      %775 = vmatpush1.msra.mxu0 0.0
      %776 = vmatprep.subr.mxu0 0.0
      %777 = vmatpush1.msra.mxu0 0.0
      %778 = vmatprep.subr.mxu0 0.0
      %779 = vmatpush1.msra.mxu0 0.0
      %780 = vmatprep.subr.mxu0 0.0
      %781 = vmatpush1.msra.mxu0 0.0
      %782 = vmatprep.subr.mxu0 0.0
      %783 = vmatpush1.msra.mxu0 0.0
      %784 = vmatprep.subr.mxu0 0.0
      %785 = vmatpush1.msra.mxu0 0.0
      %786 = vmatprep.subr.mxu0 0.0
      %787 = vmatpush1.msra.mxu0 0.0
      %788 = vmatprep.subr.mxu0 0.0
      %789 = vmatpush1.msra.mxu0 0.0
      %790 = vmatprep.subr.mxu0 0.0
      %791 = vmatpush1.msra.mxu0 0.0
      %792 = vmatprep.subr.mxu0 0.0
      %793 = vmatpush1.msra.mxu0 0.0
      %794 = vmatprep.subr.mxu0 0.0
      %795 = vmatpush1.msra.mxu0 0.0
      %796 = vmatprep.subr.mxu0 0.0
      %797 = vmatpush1.msra.mxu0 0.0
      %798 = vmatprep.subr.mxu0 0.0
      %799 = vmatpush1.msra.mxu0 0.0
      %800 = vmatprep.mubr.f32.mxu0 0.0
      %801 = vmatmul.mubr.f32.gmra.mrb[0].mxu0 %v734
      %v802 = vpop.f32.mrb[0].mxu0
      %v803 = vadd.f32 0.0, %v802
      %v804 = vpop.f32.mrb[0].mxu0
      %805 = vdwg.mxu0
      %v807 = vrot.slane %v803, 5
      %v809 = vadd.f32 %v411, %v807
      %v810 = vxor.u32 %v809, 2147483648
      %v811 = vmul.f32 %v810, 1.442695
      %v812 = vpow.pop %v811
      %v813 = vadd.f32 %v812, 1.0
      %v814 = vrcp.pop %v813
      %v815 = vmul.f32 1.0, %v814
      %v816 = vtanh.pop %v809
      %v818 = vrot.slane %v723, 7
      %v820 = vmul.f32 %v815, %v818
      %822 = vrot.lane.b32.xlu0 %v816, 96
      %v823 = vpop.permute.xlu0 %822
      %v825 = vmul.f32 %v815, %v823
      %827 = vrot.lane.b32.xlu0 %v825, 16
      %v828 = vpop.permute.xlu0 %827
      %v830 = vadd.f32 %v820, %v828
      %v831 = vtanh.pop %v830
      %833 = vrot.lane.b32.xlu0 %v831, 32
      %v834 = vpop.permute.xlu0 %833
      %v836 = vmul.f32 %v815, %v834
      %v838 = vrot.slane %v836, 3
      %839 = vrot.lane.b32.xlu0 %v838, 80
      %v840 = vpop.permute.xlu0 %839
      %v841 = vsel %vm418, %v840, 0
      %843 = vmatprep.subr.mxu0 0.0
      %844 = vmatpush1.msra.mxu0 %v414
      %845 = vmatprep.subr.mxu0 0.0
      %846 = vmatpush1.msra.mxu0 %v415
      %847 = vmatprep.subr.mxu0 0.0
      %848 = vmatpush1.msra.mxu0 0.0
      %849 = vmatprep.subr.mxu0 0.0
      %850 = vmatpush1.msra.mxu0 0.0
      %851 = vmatprep.subr.mxu0 0.0
      %852 = vmatpush1.msra.mxu0 0.0
      %853 = vmatprep.subr.mxu0 0.0
      %854 = vmatpush1.msra.mxu0 0.0
      %855 = vmatprep.subr.mxu0 0.0
      %856 = vmatpush1.msra.mxu0 0.0
      %857 = vmatprep.subr.mxu0 0.0
      %858 = vmatpush1.msra.mxu0 0.0
      %859 = vmatprep.subr.mxu0 0.0
      %860 = vmatpush1.msra.mxu0 0.0
      %861 = vmatprep.subr.mxu0 0.0
      %862 = vmatpush1.msra.mxu0 0.0
      %863 = vmatprep.subr.mxu0 0.0
      %864 = vmatpush1.msra.mxu0 0.0
      %865 = vmatprep.subr.mxu0 0.0
      %866 = vmatpush1.msra.mxu0 0.0
      %867 = vmatprep.subr.mxu0 0.0
      %868 = vmatpush1.msra.mxu0 0.0
      %869 = vmatprep.subr.mxu0 0.0
      %870 = vmatpush1.msra.mxu0 0.0
      %871 = vmatprep.subr.mxu0 0.0
      %872 = vmatpush1.msra.mxu0 0.0
      %873 = vmatprep.subr.mxu0 0.0
      %874 = vmatpush1.msra.mxu0 0.0
      %875 = vmatprep.subr.mxu0 0.0
      %876 = vmatpush1.msra.mxu0 0.0
      %877 = vmatprep.subr.mxu0 0.0
      %878 = vmatpush1.msra.mxu0 0.0
      %879 = vmatprep.subr.mxu0 0.0
      %880 = vmatpush1.msra.mxu0 0.0
      %881 = vmatprep.subr.mxu0 0.0
      %882 = vmatpush1.msra.mxu0 0.0
      %883 = vmatprep.subr.mxu0 0.0
      %884 = vmatpush1.msra.mxu0 0.0
      %885 = vmatprep.subr.mxu0 0.0
      %886 = vmatpush1.msra.mxu0 0.0
      %887 = vmatprep.subr.mxu0 0.0
      %888 = vmatpush1.msra.mxu0 0.0
      %889 = vmatprep.subr.mxu0 0.0
      %890 = vmatpush1.msra.mxu0 0.0
      %891 = vmatprep.subr.mxu0 0.0
      %892 = vmatpush1.msra.mxu0 0.0
      %893 = vmatprep.subr.mxu0 0.0
      %894 = vmatpush1.msra.mxu0 0.0
      %895 = vmatprep.subr.mxu0 0.0
      %896 = vmatpush1.msra.mxu0 0.0
      %897 = vmatprep.subr.mxu0 0.0
      %898 = vmatpush1.msra.mxu0 0.0
      %899 = vmatprep.subr.mxu0 0.0
      %900 = vmatpush1.msra.mxu0 0.0
      %901 = vmatprep.subr.mxu0 0.0
      %902 = vmatpush1.msra.mxu0 0.0
      %903 = vmatprep.subr.mxu0 0.0
      %904 = vmatpush1.msra.mxu0 0.0
      %905 = vmatprep.subr.mxu0 0.0
      %906 = vmatpush1.msra.mxu0 0.0
      %907 = vmatprep.mubr.f32.mxu0 0.0
      %908 = vmatmul.mubr.f32.gmra.mrb[0].mxu0 %v841
      %v909 = vpop.f32.mrb[0].mxu0
      %v910 = vadd.f32 0.0, %v909
      %v911 = vpop.f32.mrb[0].mxu0
      %912 = vdwg.mxu0
      %v914 = vrot.slane %v910, 4
      %v916 = vadd.f32 %v411, %v914
      %v917 = vxor.u32 %v916, 2147483648
      %v918 = vmul.f32 %v917, 1.442695
      %v919 = vpow.pop %v918
      %v920 = vadd.f32 %v919, 1.0
      %v921 = vrcp.pop %v920
      %v922 = vmul.f32 1.0, %v921
      %v923 = vtanh.pop %v916
      %v925 = vrot.slane %v830, 7
      %v927 = vmul.f32 %v922, %v925
      %929 = vrot.lane.b32.xlu0 %v923, 96
      %v930 = vpop.permute.xlu0 %929
      %v932 = vmul.f32 %v922, %v930
      %934 = vrot.lane.b32.xlu0 %v932, 16
      %v935 = vpop.permute.xlu0 %934
      %v937 = vadd.f32 %v927, %v935
      %v938 = vtanh.pop %v937
      %940 = vrot.lane.b32.xlu0 %v938, 32
      %v941 = vpop.permute.xlu0 %940
      %v943 = vmul.f32 %v922, %v941
      %v945 = vrot.slane %v943, 4
      %946 = vrot.lane.b32.xlu0 %v945, 80
      %v947 = vpop.permute.xlu0 %946
      %v948 = vsel %vm418, %v947, 0
      %950 = vmatprep.subr.mxu0 0.0
      %951 = vmatpush1.msra.mxu0 %v414
      %952 = vmatprep.subr.mxu0 0.0
      %953 = vmatpush1.msra.mxu0 %v415
      %954 = vmatprep.subr.mxu0 0.0
      %955 = vmatpush1.msra.mxu0 0.0
      %956 = vmatprep.subr.mxu0 0.0
      %957 = vmatpush1.msra.mxu0 0.0
      %958 = vmatprep.subr.mxu0 0.0
      %959 = vmatpush1.msra.mxu0 0.0
      %960 = vmatprep.subr.mxu0 0.0
      %961 = vmatpush1.msra.mxu0 0.0
      %962 = vmatprep.subr.mxu0 0.0
      %963 = vmatpush1.msra.mxu0 0.0
      %964 = vmatprep.subr.mxu0 0.0
      %965 = vmatpush1.msra.mxu0 0.0
      %966 = vmatprep.subr.mxu0 0.0
      %967 = vmatpush1.msra.mxu0 0.0
      %968 = vmatprep.subr.mxu0 0.0
      %969 = vmatpush1.msra.mxu0 0.0
      %970 = vmatprep.subr.mxu0 0.0
      %971 = vmatpush1.msra.mxu0 0.0
      %972 = vmatprep.subr.mxu0 0.0
      %973 = vmatpush1.msra.mxu0 0.0
      %974 = vmatprep.subr.mxu0 0.0
      %975 = vmatpush1.msra.mxu0 0.0
      %976 = vmatprep.subr.mxu0 0.0
      %977 = vmatpush1.msra.mxu0 0.0
      %978 = vmatprep.subr.mxu0 0.0
      %979 = vmatpush1.msra.mxu0 0.0
      %980 = vmatprep.subr.mxu0 0.0
      %981 = vmatpush1.msra.mxu0 0.0
      %982 = vmatprep.subr.mxu0 0.0
      %983 = vmatpush1.msra.mxu0 0.0
      %984 = vmatprep.subr.mxu0 0.0
      %985 = vmatpush1.msra.mxu0 0.0
      %986 = vmatprep.subr.mxu0 0.0
      %987 = vmatpush1.msra.mxu0 0.0
      %988 = vmatprep.subr.mxu0 0.0
      %989 = vmatpush1.msra.mxu0 0.0
      %990 = vmatprep.subr.mxu0 0.0
      %991 = vmatpush1.msra.mxu0 0.0
      %992 = vmatprep.subr.mxu0 0.0
      %993 = vmatpush1.msra.mxu0 0.0
      %994 = vmatprep.subr.mxu0 0.0
      %995 = vmatpush1.msra.mxu0 0.0
      %996 = vmatprep.subr.mxu0 0.0
      %997 = vmatpush1.msra.mxu0 0.0
      %998 = vmatprep.subr.mxu0 0.0
      %999 = vmatpush1.msra.mxu0 0.0
      %1000 = vmatprep.subr.mxu0 0.0
      %1001 = vmatpush1.msra.mxu0 0.0
      %1002 = vmatprep.subr.mxu0 0.0
      %1003 = vmatpush1.msra.mxu0 0.0
      %1004 = vmatprep.subr.mxu0 0.0
      %1005 = vmatpush1.msra.mxu0 0.0
      %1006 = vmatprep.subr.mxu0 0.0
      %1007 = vmatpush1.msra.mxu0 0.0
      %1008 = vmatprep.subr.mxu0 0.0
      %1009 = vmatpush1.msra.mxu0 0.0
      %1010 = vmatprep.subr.mxu0 0.0
      %1011 = vmatpush1.msra.mxu0 0.0
      %1012 = vmatprep.subr.mxu0 0.0
      %1013 = vmatpush1.msra.mxu0 0.0
      %1014 = vmatprep.mubr.f32.mxu0 0.0
      %1015 = vmatmul.mubr.f32.gmra.mrb[0].mxu0 %v948
      %v1016 = vpop.f32.mrb[0].mxu0
      %v1017 = vadd.f32 0.0, %v1016
      %v1018 = vpop.f32.mrb[0].mxu0
      %1019 = vdwg.mxu0
      %v1021 = vrot.slane %v1017, 3
      %v1023 = vadd.f32 %v411, %v1021
      %v1024 = vxor.u32 %v1023, 2147483648
      %v1025 = vmul.f32 %v1024, 1.442695
      %v1026 = vpow.pop %v1025
      %v1027 = vadd.f32 %v1026, 1.0
      %v1028 = vrcp.pop %v1027
      %v1029 = vmul.f32 1.0, %v1028
      %v1030 = vtanh.pop %v1023
      %v1032 = vrot.slane %v937, 7
      %v1034 = vmul.f32 %v1029, %v1032
      %1036 = vrot.lane.b32.xlu0 %v1030, 96
      %v1037 = vpop.permute.xlu0 %1036
      %v1039 = vmul.f32 %v1029, %v1037
      %1041 = vrot.lane.b32.xlu0 %v1039, 16
      %v1042 = vpop.permute.xlu0 %1041
      %v1044 = vadd.f32 %v1034, %v1042
      %v1045 = vtanh.pop %v1044
      %1047 = vrot.lane.b32.xlu0 %v1045, 32
      %v1048 = vpop.permute.xlu0 %1047
      %v1050 = vmul.f32 %v1029, %v1048
      %v1052 = vrot.slane %v1050, 5
      %1053 = vrot.lane.b32.xlu0 %v1052, 80
      %v1054 = vpop.permute.xlu0 %1053
      %v1055 = vsel %vm418, %v1054, 0
      %1057 = vmatprep.subr.mxu0 0.0
      %1058 = vmatpush1.msra.mxu0 %v414
      %1059 = vmatprep.subr.mxu0 0.0
      %1060 = vmatpush1.msra.mxu0 %v415
      %1061 = vmatprep.subr.mxu0 0.0
      %1062 = vmatpush1.msra.mxu0 0.0
      %1063 = vmatprep.subr.mxu0 0.0
      %1064 = vmatpush1.msra.mxu0 0.0
      %1065 = vmatprep.subr.mxu0 0.0
      %1066 = vmatpush1.msra.mxu0 0.0
      %1067 = vmatprep.subr.mxu0 0.0
      %1068 = vmatpush1.msra.mxu0 0.0
      %1069 = vmatprep.subr.mxu0 0.0
      %1070 = vmatpush1.msra.mxu0 0.0
      %1071 = vmatprep.subr.mxu0 0.0
      %1072 = vmatpush1.msra.mxu0 0.0
      %1073 = vmatprep.subr.mxu0 0.0
      %1074 = vmatpush1.msra.mxu0 0.0
      %1075 = vmatprep.subr.mxu0 0.0
      %1076 = vmatpush1.msra.mxu0 0.0
      %1077 = vmatprep.subr.mxu0 0.0
      %1078 = vmatpush1.msra.mxu0 0.0
      %1079 = vmatprep.subr.mxu0 0.0
      %1080 = vmatpush1.msra.mxu0 0.0
      %1081 = vmatprep.subr.mxu0 0.0
      %1082 = vmatpush1.msra.mxu0 0.0
      %1083 = vmatprep.subr.mxu0 0.0
      %1084 = vmatpush1.msra.mxu0 0.0
      %1085 = vmatprep.subr.mxu0 0.0
      %1086 = vmatpush1.msra.mxu0 0.0
      %1087 = vmatprep.subr.mxu0 0.0
      %1088 = vmatpush1.msra.mxu0 0.0
      %1089 = vmatprep.subr.mxu0 0.0
      %1090 = vmatpush1.msra.mxu0 0.0
      %1091 = vmatprep.subr.mxu0 0.0
      %1092 = vmatpush1.msra.mxu0 0.0
      %1093 = vmatprep.subr.mxu0 0.0
      %1094 = vmatpush1.msra.mxu0 0.0
      %1095 = vmatprep.subr.mxu0 0.0
      %1096 = vmatpush1.msra.mxu0 0.0
      %1097 = vmatprep.subr.mxu0 0.0
      %1098 = vmatpush1.msra.mxu0 0.0
      %1099 = vmatprep.subr.mxu0 0.0
      %1100 = vmatpush1.msra.mxu0 0.0
      %1101 = vmatprep.subr.mxu0 0.0
      %1102 = vmatpush1.msra.mxu0 0.0
      %1103 = vmatprep.subr.mxu0 0.0
      %1104 = vmatpush1.msra.mxu0 0.0
      %1105 = vmatprep.subr.mxu0 0.0
      %1106 = vmatpush1.msra.mxu0 0.0
      %1107 = vmatprep.subr.mxu0 0.0
      %1108 = vmatpush1.msra.mxu0 0.0
      %1109 = vmatprep.subr.mxu0 0.0
      %1110 = vmatpush1.msra.mxu0 0.0
      %1111 = vmatprep.subr.mxu0 0.0
      %1112 = vmatpush1.msra.mxu0 0.0
      %1113 = vmatprep.subr.mxu0 0.0
      %1114 = vmatpush1.msra.mxu0 0.0
      %1115 = vmatprep.subr.mxu0 0.0
      %1116 = vmatpush1.msra.mxu0 0.0
      %1117 = vmatprep.subr.mxu0 0.0
      %1118 = vmatpush1.msra.mxu0 0.0
      %1119 = vmatprep.subr.mxu0 0.0
      %1120 = vmatpush1.msra.mxu0 0.0
      %1121 = vmatprep.mubr.f32.mxu0 0.0
      %1122 = vmatmul.mubr.f32.gmra.mrb[0].mxu0 %v1055
      %v1123 = vpop.f32.mrb[0].mxu0
      %v1124 = vadd.f32 0.0, %v1123
      %v1125 = vpop.f32.mrb[0].mxu0
      %1126 = vdwg.mxu0
      %v1128 = vrot.slane %v1124, 2
      %v1130 = vadd.f32 %v411, %v1128
      %v1131 = vxor.u32 %v1130, 2147483648
      %v1132 = vmul.f32 %v1131, 1.442695
      %v1133 = vpow.pop %v1132
      %v1134 = vadd.f32 %v1133, 1.0
      %v1135 = vrcp.pop %v1134
      %v1136 = vmul.f32 1.0, %v1135
      %v1137 = vtanh.pop %v1130
      %v1139 = vrot.slane %v1044, 7
      %v1141 = vmul.f32 %v1136, %v1139
      %1143 = vrot.lane.b32.xlu0 %v1137, 96
      %v1144 = vpop.permute.xlu0 %1143
      %v1146 = vmul.f32 %v1136, %v1144
      %1148 = vrot.lane.b32.xlu0 %v1146, 16
      %v1149 = vpop.permute.xlu0 %1148
      %v1151 = vadd.f32 %v1141, %v1149
      %v1152 = vtanh.pop %v1151
      %1154 = vrot.lane.b32.xlu0 %v1152, 32
      %v1155 = vpop.permute.xlu0 %1154
      %v1157 = vmul.f32 %v1136, %v1155
      %v1159 = vrot.slane %v1157, 6
      %1160 = vrot.lane.b32.xlu0 %v1159, 80
      %v1161 = vpop.permute.xlu0 %1160
      %v1162 = vsel %vm418, %v1161, 0
      %1164 = vmatprep.subr.mxu0 0.0
      %1165 = vmatpush1.msra.mxu0 %v414
      %1166 = vmatprep.subr.mxu0 0.0
      %1167 = vmatpush1.msra.mxu0 %v415
      %1168 = vmatprep.subr.mxu0 0.0
      %1169 = vmatpush1.msra.mxu0 0.0
      %1170 = vmatprep.subr.mxu0 0.0
      %1171 = vmatpush1.msra.mxu0 0.0
      %1172 = vmatprep.subr.mxu0 0.0
      %1173 = vmatpush1.msra.mxu0 0.0
      %1174 = vmatprep.subr.mxu0 0.0
      %1175 = vmatpush1.msra.mxu0 0.0
      %1176 = vmatprep.subr.mxu0 0.0
      %1177 = vmatpush1.msra.mxu0 0.0
      %1178 = vmatprep.subr.mxu0 0.0
      %1179 = vmatpush1.msra.mxu0 0.0
      %1180 = vmatprep.subr.mxu0 0.0
      %1181 = vmatpush1.msra.mxu0 0.0
      %1182 = vmatprep.subr.mxu0 0.0
      %1183 = vmatpush1.msra.mxu0 0.0
      %1184 = vmatprep.subr.mxu0 0.0
      %1185 = vmatpush1.msra.mxu0 0.0
      %1186 = vmatprep.subr.mxu0 0.0
      %1187 = vmatpush1.msra.mxu0 0.0
      %1188 = vmatprep.subr.mxu0 0.0
      %1189 = vmatpush1.msra.mxu0 0.0
      %1190 = vmatprep.subr.mxu0 0.0
      %1191 = vmatpush1.msra.mxu0 0.0
      %1192 = vmatprep.subr.mxu0 0.0
      %1193 = vmatpush1.msra.mxu0 0.0
      %1194 = vmatprep.subr.mxu0 0.0
      %1195 = vmatpush1.msra.mxu0 0.0
      %1196 = vmatprep.subr.mxu0 0.0
      %1197 = vmatpush1.msra.mxu0 0.0
      %1198 = vmatprep.subr.mxu0 0.0
      %1199 = vmatpush1.msra.mxu0 0.0
      %1200 = vmatprep.subr.mxu0 0.0
      %1201 = vmatpush1.msra.mxu0 0.0
      %1202 = vmatprep.subr.mxu0 0.0
      %1203 = vmatpush1.msra.mxu0 0.0
      %1204 = vmatprep.subr.mxu0 0.0
      %1205 = vmatpush1.msra.mxu0 0.0
      %1206 = vmatprep.subr.mxu0 0.0
      %1207 = vmatpush1.msra.mxu0 0.0
      %1208 = vmatprep.subr.mxu0 0.0
      %1209 = vmatpush1.msra.mxu0 0.0
      %1210 = vmatprep.subr.mxu0 0.0
      %1211 = vmatpush1.msra.mxu0 0.0
      %1212 = vmatprep.subr.mxu0 0.0
      %1213 = vmatpush1.msra.mxu0 0.0
      %1214 = vmatprep.subr.mxu0 0.0
      %1215 = vmatpush1.msra.mxu0 0.0
      %1216 = vmatprep.subr.mxu0 0.0
      %1217 = vmatpush1.msra.mxu0 0.0
      %1218 = vmatprep.subr.mxu0 0.0
      %1219 = vmatpush1.msra.mxu0 0.0
      %1220 = vmatprep.subr.mxu0 0.0
      %1221 = vmatpush1.msra.mxu0 0.0
      %1222 = vmatprep.subr.mxu0 0.0
      %1223 = vmatpush1.msra.mxu0 0.0
      %1224 = vmatprep.subr.mxu0 0.0
      %1225 = vmatpush1.msra.mxu0 0.0
      %1226 = vmatprep.subr.mxu0 0.0
      %1227 = vmatpush1.msra.mxu0 0.0
      %1228 = vmatprep.mubr.f32.mxu0 0.0
      %1229 = vmatmul.mubr.f32.gmra.mrb[0].mxu0 %v1162
      %v1230 = vpop.f32.mrb[0].mxu0
      %v1231 = vadd.f32 0.0, %v1230
      %v1232 = vpop.f32.mrb[0].mxu0
      %1233 = vdwg.mxu0
      %v1235 = vrot.slane %v1231, 1
      %v1237 = vadd.f32 %v411, %v1235
      %v1238 = vxor.u32 %v1237, 2147483648
      %v1239 = vmul.f32 %v1238, 1.442695
      %v1240 = vpow.pop %v1239
      %v1241 = vadd.f32 %v1240, 1.0
      %v1242 = vrcp.pop %v1241
      %v1243 = vmul.f32 1.0, %v1242
      %v1244 = vtanh.pop %v1237
      %v1246 = vrot.slane %v1151, 7
      %v1248 = vmul.f32 %v1243, %v1246
      %1250 = vrot.lane.b32.xlu0 %v1244, 96
      %v1251 = vpop.permute.xlu0 %1250
      %v1253 = vmul.f32 %v1243, %v1251
      %1255 = vrot.lane.b32.xlu0 %v1253, 16
      %v1256 = vpop.permute.xlu0 %1255
      %v1258 = vadd.f32 %v1248, %v1256
      %v1259 = vtanh.pop %v1258
      %1261 = vrot.lane.b32.xlu0 %v1259, 32
      %v1262 = vpop.permute.xlu0 %1261
      %v1264 = vmul.f32 %v1243, %v1262
      %1265 = vmatprep.subr.mxu0 0.0
      %1266 = vmatpush1.msra.mxu0 %v416
      %1267 = vmatprep.subr.mxu0 0.0
      %1268 = vmatpush1.msra.mxu0 %v417
      %1269 = vmatprep.subr.mxu0 0.0
      %1270 = vmatpush1.msra.mxu0 0.0
      %1271 = vmatprep.subr.mxu0 0.0
      %1272 = vmatpush1.msra.mxu0 0.0
      %1273 = vmatprep.subr.mxu0 0.0
      %1274 = vmatpush1.msra.mxu0 0.0
      %1275 = vmatprep.subr.mxu0 0.0
      %1276 = vmatpush1.msra.mxu0 0.0
      %1277 = vmatprep.subr.mxu0 0.0
      %1278 = vmatpush1.msra.mxu0 0.0
      %1279 = vmatprep.subr.mxu0 0.0
      %1280 = vmatpush1.msra.mxu0 0.0
      %1281 = vmatprep.subr.mxu0 0.0
      %1282 = vmatpush1.msra.mxu0 0.0
      %1283 = vmatprep.subr.mxu0 0.0
      %1284 = vmatpush1.msra.mxu0 0.0
      %1285 = vmatprep.subr.mxu0 0.0
      %1286 = vmatpush1.msra.mxu0 0.0
      %1287 = vmatprep.subr.mxu0 0.0
      %1288 = vmatpush1.msra.mxu0 0.0
      %1289 = vmatprep.subr.mxu0 0.0
      %1290 = vmatpush1.msra.mxu0 0.0
      %1291 = vmatprep.subr.mxu0 0.0
      %1292 = vmatpush1.msra.mxu0 0.0
      %1293 = vmatprep.subr.mxu0 0.0
      %1294 = vmatpush1.msra.mxu0 0.0
      %1295 = vmatprep.subr.mxu0 0.0
      %1296 = vmatpush1.msra.mxu0 0.0
      %1297 = vmatprep.subr.mxu0 0.0
      %1298 = vmatpush1.msra.mxu0 0.0
      %1299 = vmatprep.subr.mxu0 0.0
      %1300 = vmatpush1.msra.mxu0 0.0
      %1301 = vmatprep.subr.mxu0 0.0
      %1302 = vmatpush1.msra.mxu0 0.0
      %1303 = vmatprep.subr.mxu0 0.0
      %1304 = vmatpush1.msra.mxu0 0.0
      %1305 = vmatprep.subr.mxu0 0.0
      %1306 = vmatpush1.msra.mxu0 0.0
      %1307 = vmatprep.subr.mxu0 0.0
      %1308 = vmatpush1.msra.mxu0 0.0
      %1309 = vmatprep.subr.mxu0 0.0
      %1310 = vmatpush1.msra.mxu0 0.0
      %1311 = vmatprep.subr.mxu0 0.0
      %1312 = vmatpush1.msra.mxu0 0.0
      %1313 = vmatprep.subr.mxu0 0.0
      %1314 = vmatpush1.msra.mxu0 0.0
      %1315 = vmatprep.subr.mxu0 0.0
      %1316 = vmatpush1.msra.mxu0 0.0
      %1317 = vmatprep.subr.mxu0 0.0
      %1318 = vmatpush1.msra.mxu0 0.0
      %1319 = vmatprep.subr.mxu0 0.0
      %1320 = vmatpush1.msra.mxu0 0.0
      %1321 = vmatprep.subr.mxu0 0.0
      %1322 = vmatpush1.msra.mxu0 0.0
      %1323 = vmatprep.subr.mxu0 0.0
      %1324 = vmatpush1.msra.mxu0 0.0
      %1325 = vmatprep.subr.mxu0 0.0
      %1326 = vmatpush1.msra.mxu0 0.0
      %1327 = vmatprep.subr.mxu0 0.0
      %1328 = vmatpush1.msra.mxu0 0.0
      %1329 = vmatprep.mubr.f32.mxu0 0.0
      %1330 = vmatmul.mubr.f32.gmra.mrb[0].mxu0 %v420
      %v1331 = vpop.f32.mrb[0].mxu0
      %v1332 = vadd.f32 0.0, %v1331
      %v1333 = vpop.f32.mrb[0].mxu0
      %1334 = vdwg.mxu0
      %v1336 = vrot.slane %v1332, 1
      %1337 = vrot.lane.b32.xlu0 %v1336, 64
      %v1338 = vpop.permute.xlu0 %1337
      %v1340 = vadd.f32 %v411, %v1338
      %v1341 = vxor.u32 %v1340, 2147483648
      %v1342 = vmul.f32 %v1341, 1.442695
      %v1343 = vpow.pop %v1342
      %v1344 = vadd.f32 %v1343, 1.0
      %v1345 = vrcp.pop %v1344
      %v1346 = vmul.f32 1.0, %v1345
      %v1347 = vtanh.pop %v1340
      %v1348 = vmul.f32 %v1346, 0.0
      %1350 = vrot.lane.b32.xlu0 %v1347, 96
      %v1351 = vpop.permute.xlu0 %1350
      %v1353 = vmul.f32 %v1346, %v1351
      %1355 = vrot.lane.b32.xlu0 %v1353, 16
      %v1356 = vpop.permute.xlu0 %1355
      %v1358 = vadd.f32 %v1348, %v1356
      %v1359 = vtanh.pop %v1358
      %1361 = vrot.lane.b32.xlu0 %v1359, 32
      %v1362 = vpop.permute.xlu0 %1361
      %v1364 = vmul.f32 %v1346, %v1362
      %v1366 = vrot.slane %v1364, 7
      %1367 = vrot.lane.b32.xlu0 %v1366, 16
      %v1368 = vpop.permute.xlu0 %1367
      %v1369 = vsel %vm418, %v1368, 0
      %1371 = vmatprep.subr.mxu0 0.0
      %1372 = vmatpush1.msra.mxu0 %v416
      %1373 = vmatprep.subr.mxu0 0.0
      %1374 = vmatpush1.msra.mxu0 %v417
      %1375 = vmatprep.subr.mxu0 0.0
      %1376 = vmatpush1.msra.mxu0 0.0
      %1377 = vmatprep.subr.mxu0 0.0
      %1378 = vmatpush1.msra.mxu0 0.0
      %1379 = vmatprep.subr.mxu0 0.0
      %1380 = vmatpush1.msra.mxu0 0.0
      %1381 = vmatprep.subr.mxu0 0.0
      %1382 = vmatpush1.msra.mxu0 0.0
      %1383 = vmatprep.subr.mxu0 0.0
      %1384 = vmatpush1.msra.mxu0 0.0
      %1385 = vmatprep.subr.mxu0 0.0
      %1386 = vmatpush1.msra.mxu0 0.0
      %1387 = vmatprep.subr.mxu0 0.0
      %1388 = vmatpush1.msra.mxu0 0.0
      %1389 = vmatprep.subr.mxu0 0.0
      %1390 = vmatpush1.msra.mxu0 0.0
      %1391 = vmatprep.subr.mxu0 0.0
      %1392 = vmatpush1.msra.mxu0 0.0
      %1393 = vmatprep.subr.mxu0 0.0
      %1394 = vmatpush1.msra.mxu0 0.0
      %1395 = vmatprep.subr.mxu0 0.0
      %1396 = vmatpush1.msra.mxu0 0.0
      %1397 = vmatprep.subr.mxu0 0.0
      %1398 = vmatpush1.msra.mxu0 0.0
      %1399 = vmatprep.subr.mxu0 0.0
      %1400 = vmatpush1.msra.mxu0 0.0
      %1401 = vmatprep.subr.mxu0 0.0
      %1402 = vmatpush1.msra.mxu0 0.0
      %1403 = vmatprep.subr.mxu0 0.0
      %1404 = vmatpush1.msra.mxu0 0.0
      %1405 = vmatprep.subr.mxu0 0.0
      %1406 = vmatpush1.msra.mxu0 0.0
      %1407 = vmatprep.subr.mxu0 0.0
      %1408 = vmatpush1.msra.mxu0 0.0
      %1409 = vmatprep.subr.mxu0 0.0
      %1410 = vmatpush1.msra.mxu0 0.0
      %1411 = vmatprep.subr.mxu0 0.0
      %1412 = vmatpush1.msra.mxu0 0.0
      %1413 = vmatprep.subr.mxu0 0.0
      %1414 = vmatpush1.msra.mxu0 0.0
      %1415 = vmatprep.subr.mxu0 0.0
      %1416 = vmatpush1.msra.mxu0 0.0
      %1417 = vmatprep.subr.mxu0 0.0
      %1418 = vmatpush1.msra.mxu0 0.0
      %1419 = vmatprep.subr.mxu0 0.0
      %1420 = vmatpush1.msra.mxu0 0.0
      %1421 = vmatprep.subr.mxu0 0.0
      %1422 = vmatpush1.msra.mxu0 0.0
      %1423 = vmatprep.subr.mxu0 0.0
      %1424 = vmatpush1.msra.mxu0 0.0
      %1425 = vmatprep.subr.mxu0 0.0
      %1426 = vmatpush1.msra.mxu0 0.0
      %1427 = vmatprep.subr.mxu0 0.0
      %1428 = vmatpush1.msra.mxu0 0.0
      %1429 = vmatprep.subr.mxu0 0.0
      %1430 = vmatpush1.msra.mxu0 0.0
      %1431 = vmatprep.subr.mxu0 0.0
      %1432 = vmatpush1.msra.mxu0 0.0
      %1433 = vmatprep.subr.mxu0 0.0
      %1434 = vmatpush1.msra.mxu0 0.0
      %1435 = vmatprep.mubr.f32.mxu0 0.0
      %1436 = vmatmul.mubr.f32.gmra.mrb[0].mxu0 %v1369
      %v1437 = vpop.f32.mrb[0].mxu0
      %v1438 = vadd.f32 0.0, %v1437
      %v1439 = vpop.f32.mrb[0].mxu0
      %1440 = vdwg.mxu0
      %v1442 = vrot.slane %v1438, 2
      %1443 = vrot.lane.b32.xlu0 %v1442, 64
      %v1444 = vpop.permute.xlu0 %1443
      %v1446 = vadd.f32 %v411, %v1444
      %v1447 = vxor.u32 %v1446, 2147483648
      %v1448 = vmul.f32 %v1447, 1.442695
      %v1449 = vpow.pop %v1448
      %v1450 = vadd.f32 %v1449, 1.0
      %v1451 = vrcp.pop %v1450
      %v1452 = vmul.f32 1.0, %v1451
      %v1453 = vtanh.pop %v1446
      %v1455 = vrot.slane %v1358, 1
      %v1457 = vmul.f32 %v1452, %v1455
      %1459 = vrot.lane.b32.xlu0 %v1453, 96
      %v1460 = vpop.permute.xlu0 %1459
      %v1462 = vmul.f32 %v1452, %v1460
      %1464 = vrot.lane.b32.xlu0 %v1462, 16
      %v1465 = vpop.permute.xlu0 %1464
      %v1467 = vadd.f32 %v1457, %v1465
      %v1468 = vtanh.pop %v1467
      %1470 = vrot.lane.b32.xlu0 %v1468, 32
      %v1471 = vpop.permute.xlu0 %1470
      %v1473 = vmul.f32 %v1452, %v1471
      %v1475 = vrot.slane %v1473, 6
      %1476 = vrot.lane.b32.xlu0 %v1475, 16
      %v1477 = vpop.permute.xlu0 %1476
      %v1478 = vsel %vm418, %v1477, 0
      %1480 = vmatprep.subr.mxu0 0.0
      %1481 = vmatpush1.msra.mxu0 %v416
      %1482 = vmatprep.subr.mxu0 0.0
      %1483 = vmatpush1.msra.mxu0 %v417
      %1484 = vmatprep.subr.mxu0 0.0
      %1485 = vmatpush1.msra.mxu0 0.0
      %1486 = vmatprep.subr.mxu0 0.0
      %1487 = vmatpush1.msra.mxu0 0.0
      %1488 = vmatprep.subr.mxu0 0.0
      %1489 = vmatpush1.msra.mxu0 0.0
      %1490 = vmatprep.subr.mxu0 0.0
      %1491 = vmatpush1.msra.mxu0 0.0
      %1492 = vmatprep.subr.mxu0 0.0
      %1493 = vmatpush1.msra.mxu0 0.0
      %1494 = vmatprep.subr.mxu0 0.0
      %1495 = vmatpush1.msra.mxu0 0.0
      %1496 = vmatprep.subr.mxu0 0.0
      %1497 = vmatpush1.msra.mxu0 0.0
      %1498 = vmatprep.subr.mxu0 0.0
      %1499 = vmatpush1.msra.mxu0 0.0
      %1500 = vmatprep.subr.mxu0 0.0
      %1501 = vmatpush1.msra.mxu0 0.0
      %1502 = vmatprep.subr.mxu0 0.0
      %1503 = vmatpush1.msra.mxu0 0.0
      %1504 = vmatprep.subr.mxu0 0.0
      %1505 = vmatpush1.msra.mxu0 0.0
      %1506 = vmatprep.subr.mxu0 0.0
      %1507 = vmatpush1.msra.mxu0 0.0
      %1508 = vmatprep.subr.mxu0 0.0
      %1509 = vmatpush1.msra.mxu0 0.0
      %1510 = vmatprep.subr.mxu0 0.0
      %1511 = vmatpush1.msra.mxu0 0.0
      %1512 = vmatprep.subr.mxu0 0.0
      %1513 = vmatpush1.msra.mxu0 0.0
      %1514 = vmatprep.subr.mxu0 0.0
      %1515 = vmatpush1.msra.mxu0 0.0
      %1516 = vmatprep.subr.mxu0 0.0
      %1517 = vmatpush1.msra.mxu0 0.0
      %1518 = vmatprep.subr.mxu0 0.0
      %1519 = vmatpush1.msra.mxu0 0.0
      %1520 = vmatprep.subr.mxu0 0.0
      %1521 = vmatpush1.msra.mxu0 0.0
      %1522 = vmatprep.subr.mxu0 0.0
      %1523 = vmatpush1.msra.mxu0 0.0
      %1524 = vmatprep.subr.mxu0 0.0
      %1525 = vmatpush1.msra.mxu0 0.0
      %1526 = vmatprep.subr.mxu0 0.0
      %1527 = vmatpush1.msra.mxu0 0.0
      %1528 = vmatprep.subr.mxu0 0.0
      %1529 = vmatpush1.msra.mxu0 0.0
      %1530 = vmatprep.subr.mxu0 0.0
      %1531 = vmatpush1.msra.mxu0 0.0
      %1532 = vmatprep.subr.mxu0 0.0
      %1533 = vmatpush1.msra.mxu0 0.0
      %1534 = vmatprep.subr.mxu0 0.0
      %1535 = vmatpush1.msra.mxu0 0.0
      %1536 = vmatprep.subr.mxu0 0.0
      %1537 = vmatpush1.msra.mxu0 0.0
      %1538 = vmatprep.subr.mxu0 0.0
      %1539 = vmatpush1.msra.mxu0 0.0
      %1540 = vmatprep.subr.mxu0 0.0
      %1541 = vmatpush1.msra.mxu0 0.0
      %1542 = vmatprep.subr.mxu0 0.0
      %1543 = vmatpush1.msra.mxu0 0.0
      %1544 = vmatprep.mubr.f32.mxu0 0.0
      %1545 = vmatmul.mubr.f32.gmra.mrb[0].mxu0 %v1478
      %v1546 = vpop.f32.mrb[0].mxu0
      %v1547 = vadd.f32 0.0, %v1546
      %v1548 = vpop.f32.mrb[0].mxu0
      %1549 = vdwg.mxu0
      %v1551 = vrot.slane %v1547, 3
      %1552 = vrot.lane.b32.xlu0 %v1551, 64
      %v1553 = vpop.permute.xlu0 %1552
      %v1555 = vadd.f32 %v411, %v1553
      %v1556 = vxor.u32 %v1555, 2147483648
      %v1557 = vmul.f32 %v1556, 1.442695
      %v1558 = vpow.pop %v1557
      %v1559 = vadd.f32 %v1558, 1.0
      %v1560 = vrcp.pop %v1559
      %v1561 = vmul.f32 1.0, %v1560
      %v1562 = vtanh.pop %v1555
      %v1564 = vrot.slane %v1467, 1
      %v1566 = vmul.f32 %v1561, %v1564
      %1568 = vrot.lane.b32.xlu0 %v1562, 96
      %v1569 = vpop.permute.xlu0 %1568
      %v1571 = vmul.f32 %v1561, %v1569
      %1573 = vrot.lane.b32.xlu0 %v1571, 16
      %v1574 = vpop.permute.xlu0 %1573
      %v1576 = vadd.f32 %v1566, %v1574
      %v1577 = vtanh.pop %v1576
      %1579 = vrot.lane.b32.xlu0 %v1577, 32
      %v1580 = vpop.permute.xlu0 %1579
      %v1582 = vmul.f32 %v1561, %v1580
      %v1584 = vrot.slane %v1582, 5
      %1585 = vrot.lane.b32.xlu0 %v1584, 16
      %v1586 = vpop.permute.xlu0 %1585
      %v1587 = vsel %vm418, %v1586, 0
      %1589 = vmatprep.subr.mxu0 0.0
      %1590 = vmatpush1.msra.mxu0 %v416
      %1591 = vmatprep.subr.mxu0 0.0
      %1592 = vmatpush1.msra.mxu0 %v417
      %1593 = vmatprep.subr.mxu0 0.0
      %1594 = vmatpush1.msra.mxu0 0.0
      %1595 = vmatprep.subr.mxu0 0.0
      %1596 = vmatpush1.msra.mxu0 0.0
      %1597 = vmatprep.subr.mxu0 0.0
      %1598 = vmatpush1.msra.mxu0 0.0
      %1599 = vmatprep.subr.mxu0 0.0
      %1600 = vmatpush1.msra.mxu0 0.0
      %1601 = vmatprep.subr.mxu0 0.0
      %1602 = vmatpush1.msra.mxu0 0.0
      %1603 = vmatprep.subr.mxu0 0.0
      %1604 = vmatpush1.msra.mxu0 0.0
      %1605 = vmatprep.subr.mxu0 0.0
      %1606 = vmatpush1.msra.mxu0 0.0
      %1607 = vmatprep.subr.mxu0 0.0
      %1608 = vmatpush1.msra.mxu0 0.0
      %1609 = vmatprep.subr.mxu0 0.0
      %1610 = vmatpush1.msra.mxu0 0.0
      %1611 = vmatprep.subr.mxu0 0.0
      %1612 = vmatpush1.msra.mxu0 0.0
      %1613 = vmatprep.subr.mxu0 0.0
      %1614 = vmatpush1.msra.mxu0 0.0
      %1615 = vmatprep.subr.mxu0 0.0
      %1616 = vmatpush1.msra.mxu0 0.0
      %1617 = vmatprep.subr.mxu0 0.0
      %1618 = vmatpush1.msra.mxu0 0.0
      %1619 = vmatprep.subr.mxu0 0.0
      %1620 = vmatpush1.msra.mxu0 0.0
      %1621 = vmatprep.subr.mxu0 0.0
      %1622 = vmatpush1.msra.mxu0 0.0
      %1623 = vmatprep.subr.mxu0 0.0
      %1624 = vmatpush1.msra.mxu0 0.0
      %1625 = vmatprep.subr.mxu0 0.0
      %1626 = vmatpush1.msra.mxu0 0.0
      %1627 = vmatprep.subr.mxu0 0.0
      %1628 = vmatpush1.msra.mxu0 0.0
      %1629 = vmatprep.subr.mxu0 0.0
      %1630 = vmatpush1.msra.mxu0 0.0
      %1631 = vmatprep.subr.mxu0 0.0
      %1632 = vmatpush1.msra.mxu0 0.0
      %1633 = vmatprep.subr.mxu0 0.0
      %1634 = vmatpush1.msra.mxu0 0.0
      %1635 = vmatprep.subr.mxu0 0.0
      %1636 = vmatpush1.msra.mxu0 0.0
      %1637 = vmatprep.subr.mxu0 0.0
      %1638 = vmatpush1.msra.mxu0 0.0
      %1639 = vmatprep.subr.mxu0 0.0
      %1640 = vmatpush1.msra.mxu0 0.0
      %1641 = vmatprep.subr.mxu0 0.0
      %1642 = vmatpush1.msra.mxu0 0.0
      %1643 = vmatprep.subr.mxu0 0.0
      %1644 = vmatpush1.msra.mxu0 0.0
      %1645 = vmatprep.subr.mxu0 0.0
      %1646 = vmatpush1.msra.mxu0 0.0
      %1647 = vmatprep.subr.mxu0 0.0
      %1648 = vmatpush1.msra.mxu0 0.0
      %1649 = vmatprep.subr.mxu0 0.0
      %1650 = vmatpush1.msra.mxu0 0.0
      %1651 = vmatprep.subr.mxu0 0.0
      %1652 = vmatpush1.msra.mxu0 0.0
      %1653 = vmatprep.mubr.f32.mxu0 0.0
      %1654 = vmatmul.mubr.f32.gmra.mrb[0].mxu0 %v1587
      %v1655 = vpop.f32.mrb[0].mxu0
      %v1656 = vadd.f32 0.0, %v1655
      %v1657 = vpop.f32.mrb[0].mxu0
      %1658 = vdwg.mxu0
      %v1660 = vrot.slane %v1656, 4
      %1661 = vrot.lane.b32.xlu0 %v1660, 64
      %v1662 = vpop.permute.xlu0 %1661
      %v1664 = vadd.f32 %v411, %v1662
      %v1665 = vxor.u32 %v1664, 2147483648
      %v1666 = vmul.f32 %v1665, 1.442695
      %v1667 = vpow.pop %v1666
      %v1668 = vadd.f32 %v1667, 1.0
      %v1669 = vrcp.pop %v1668
      %v1670 = vmul.f32 1.0, %v1669
      %v1671 = vtanh.pop %v1664
      %v1673 = vrot.slane %v1576, 1
      %v1675 = vmul.f32 %v1670, %v1673
      %1677 = vrot.lane.b32.xlu0 %v1671, 96
      %v1678 = vpop.permute.xlu0 %1677
      %v1680 = vmul.f32 %v1670, %v1678
      %1682 = vrot.lane.b32.xlu0 %v1680, 16
      %v1683 = vpop.permute.xlu0 %1682
      %v1685 = vadd.f32 %v1675, %v1683
      %v1686 = vtanh.pop %v1685
      %1688 = vrot.lane.b32.xlu0 %v1686, 32
      %v1689 = vpop.permute.xlu0 %1688
      %v1691 = vmul.f32 %v1670, %v1689
      %v1693 = vrot.slane %v1691, 4
      %1694 = vrot.lane.b32.xlu0 %v1693, 16
      %v1695 = vpop.permute.xlu0 %1694
      %v1696 = vsel %vm418, %v1695, 0
      %1698 = vmatprep.subr.mxu0 0.0
      %1699 = vmatpush1.msra.mxu0 %v416
      %1700 = vmatprep.subr.mxu0 0.0
      %1701 = vmatpush1.msra.mxu0 %v417
      %1702 = vmatprep.subr.mxu0 0.0
      %1703 = vmatpush1.msra.mxu0 0.0
      %1704 = vmatprep.subr.mxu0 0.0
      %1705 = vmatpush1.msra.mxu0 0.0
      %1706 = vmatprep.subr.mxu0 0.0
      %1707 = vmatpush1.msra.mxu0 0.0
      %1708 = vmatprep.subr.mxu0 0.0
      %1709 = vmatpush1.msra.mxu0 0.0
      %1710 = vmatprep.subr.mxu0 0.0
      %1711 = vmatpush1.msra.mxu0 0.0
      %1712 = vmatprep.subr.mxu0 0.0
      %1713 = vmatpush1.msra.mxu0 0.0
      %1714 = vmatprep.subr.mxu0 0.0
      %1715 = vmatpush1.msra.mxu0 0.0
      %1716 = vmatprep.subr.mxu0 0.0
      %1717 = vmatpush1.msra.mxu0 0.0
      %1718 = vmatprep.subr.mxu0 0.0
      %1719 = vmatpush1.msra.mxu0 0.0
      %1720 = vmatprep.subr.mxu0 0.0
      %1721 = vmatpush1.msra.mxu0 0.0
      %1722 = vmatprep.subr.mxu0 0.0
      %1723 = vmatpush1.msra.mxu0 0.0
      %1724 = vmatprep.subr.mxu0 0.0
      %1725 = vmatpush1.msra.mxu0 0.0
      %1726 = vmatprep.subr.mxu0 0.0
      %1727 = vmatpush1.msra.mxu0 0.0
      %1728 = vmatprep.subr.mxu0 0.0
      %1729 = vmatpush1.msra.mxu0 0.0
      %1730 = vmatprep.subr.mxu0 0.0
      %1731 = vmatpush1.msra.mxu0 0.0
      %1732 = vmatprep.subr.mxu0 0.0
      %1733 = vmatpush1.msra.mxu0 0.0
      %1734 = vmatprep.subr.mxu0 0.0
      %1735 = vmatpush1.msra.mxu0 0.0
      %1736 = vmatprep.subr.mxu0 0.0
      %1737 = vmatpush1.msra.mxu0 0.0
      %1738 = vmatprep.subr.mxu0 0.0
      %1739 = vmatpush1.msra.mxu0 0.0
      %1740 = vmatprep.subr.mxu0 0.0
      %1741 = vmatpush1.msra.mxu0 0.0
      %1742 = vmatprep.subr.mxu0 0.0
      %1743 = vmatpush1.msra.mxu0 0.0
      %1744 = vmatprep.subr.mxu0 0.0
      %1745 = vmatpush1.msra.mxu0 0.0
      %1746 = vmatprep.subr.mxu0 0.0
      %1747 = vmatpush1.msra.mxu0 0.0
      %1748 = vmatprep.subr.mxu0 0.0
      %1749 = vmatpush1.msra.mxu0 0.0
      %1750 = vmatprep.subr.mxu0 0.0
      %1751 = vmatpush1.msra.mxu0 0.0
      %1752 = vmatprep.subr.mxu0 0.0
      %1753 = vmatpush1.msra.mxu0 0.0
      %1754 = vmatprep.subr.mxu0 0.0
      %1755 = vmatpush1.msra.mxu0 0.0
      %1756 = vmatprep.subr.mxu0 0.0
      %1757 = vmatpush1.msra.mxu0 0.0
      %1758 = vmatprep.subr.mxu0 0.0
      %1759 = vmatpush1.msra.mxu0 0.0
      %1760 = vmatprep.subr.mxu0 0.0
      %1761 = vmatpush1.msra.mxu0 0.0
      %1762 = vmatprep.mubr.f32.mxu0 0.0
      %1763 = vmatmul.mubr.f32.gmra.mrb[0].mxu0 %v1696
      %v1764 = vpop.f32.mrb[0].mxu0
      %v1765 = vadd.f32 0.0, %v1764
      %v1766 = vpop.f32.mrb[0].mxu0
      %1767 = vdwg.mxu0
      %v1769 = vrot.slane %v1765, 5
      %1770 = vrot.lane.b32.xlu0 %v1769, 64
      %v1771 = vpop.permute.xlu0 %1770
      %v1773 = vadd.f32 %v411, %v1771
      %v1774 = vxor.u32 %v1773, 2147483648
      %v1775 = vmul.f32 %v1774, 1.442695
      %v1776 = vpow.pop %v1775
      %v1777 = vadd.f32 %v1776, 1.0
      %v1778 = vrcp.pop %v1777
      %v1779 = vmul.f32 1.0, %v1778
      %v1780 = vtanh.pop %v1773
      %v1782 = vrot.slane %v1685, 1
      %v1784 = vmul.f32 %v1779, %v1782
      %1786 = vrot.lane.b32.xlu0 %v1780, 96
      %v1787 = vpop.permute.xlu0 %1786
      %v1789 = vmul.f32 %v1779, %v1787
      %1791 = vrot.lane.b32.xlu0 %v1789, 16
      %v1792 = vpop.permute.xlu0 %1791
      %v1794 = vadd.f32 %v1784, %v1792
      %v1795 = vtanh.pop %v1794
      %1797 = vrot.lane.b32.xlu0 %v1795, 32
      %v1798 = vpop.permute.xlu0 %1797
      %v1800 = vmul.f32 %v1779, %v1798
      %v1802 = vrot.slane %v1800, 3
      %1803 = vrot.lane.b32.xlu0 %v1802, 16
      %v1804 = vpop.permute.xlu0 %1803
      %v1805 = vsel %vm418, %v1804, 0
      %1807 = vmatprep.subr.mxu0 0.0
      %1808 = vmatpush1.msra.mxu0 %v416
      %1809 = vmatprep.subr.mxu0 0.0
      %1810 = vmatpush1.msra.mxu0 %v417
      %1811 = vmatprep.subr.mxu0 0.0
      %1812 = vmatpush1.msra.mxu0 0.0
      %1813 = vmatprep.subr.mxu0 0.0
      %1814 = vmatpush1.msra.mxu0 0.0
      %1815 = vmatprep.subr.mxu0 0.0
      %1816 = vmatpush1.msra.mxu0 0.0
      %1817 = vmatprep.subr.mxu0 0.0
      %1818 = vmatpush1.msra.mxu0 0.0
      %1819 = vmatprep.subr.mxu0 0.0
      %1820 = vmatpush1.msra.mxu0 0.0
      %1821 = vmatprep.subr.mxu0 0.0
      %1822 = vmatpush1.msra.mxu0 0.0
      %1823 = vmatprep.subr.mxu0 0.0
      %1824 = vmatpush1.msra.mxu0 0.0
      %1825 = vmatprep.subr.mxu0 0.0
      %1826 = vmatpush1.msra.mxu0 0.0
      %1827 = vmatprep.subr.mxu0 0.0
      %1828 = vmatpush1.msra.mxu0 0.0
      %1829 = vmatprep.subr.mxu0 0.0
      %1830 = vmatpush1.msra.mxu0 0.0
      %1831 = vmatprep.subr.mxu0 0.0
      %1832 = vmatpush1.msra.mxu0 0.0
      %1833 = vmatprep.subr.mxu0 0.0
      %1834 = vmatpush1.msra.mxu0 0.0
      %1835 = vmatprep.subr.mxu0 0.0
      %1836 = vmatpush1.msra.mxu0 0.0
      %1837 = vmatprep.subr.mxu0 0.0
      %1838 = vmatpush1.msra.mxu0 0.0
      %1839 = vmatprep.subr.mxu0 0.0
      %1840 = vmatpush1.msra.mxu0 0.0
      %1841 = vmatprep.subr.mxu0 0.0
      %1842 = vmatpush1.msra.mxu0 0.0
      %1843 = vmatprep.subr.mxu0 0.0
      %1844 = vmatpush1.msra.mxu0 0.0
      %1845 = vmatprep.subr.mxu0 0.0
      %1846 = vmatpush1.msra.mxu0 0.0
      %1847 = vmatprep.subr.mxu0 0.0
      %1848 = vmatpush1.msra.mxu0 0.0
      %1849 = vmatprep.subr.mxu0 0.0
      %1850 = vmatpush1.msra.mxu0 0.0
      %1851 = vmatprep.subr.mxu0 0.0
      %1852 = vmatpush1.msra.mxu0 0.0
      %1853 = vmatprep.subr.mxu0 0.0
      %1854 = vmatpush1.msra.mxu0 0.0
      %1855 = vmatprep.subr.mxu0 0.0
      %1856 = vmatpush1.msra.mxu0 0.0
      %1857 = vmatprep.subr.mxu0 0.0
      %1858 = vmatpush1.msra.mxu0 0.0
      %1859 = vmatprep.subr.mxu0 0.0
      %1860 = vmatpush1.msra.mxu0 0.0
      %1861 = vmatprep.subr.mxu0 0.0
      %1862 = vmatpush1.msra.mxu0 0.0
      %1863 = vmatprep.subr.mxu0 0.0
      %1864 = vmatpush1.msra.mxu0 0.0
      %1865 = vmatprep.subr.mxu0 0.0
      %1866 = vmatpush1.msra.mxu0 0.0
      %1867 = vmatprep.subr.mxu0 0.0
      %1868 = vmatpush1.msra.mxu0 0.0
      %1869 = vmatprep.subr.mxu0 0.0
      %1870 = vmatpush1.msra.mxu0 0.0
      %1871 = vmatprep.mubr.f32.mxu0 0.0
      %1872 = vmatmul.mubr.f32.gmra.mrb[0].mxu0 %v1805
      %v1873 = vpop.f32.mrb[0].mxu0
      %v1874 = vadd.f32 0.0, %v1873
      %v1875 = vpop.f32.mrb[0].mxu0
      %1876 = vdwg.mxu0
      %v1878 = vrot.slane %v1874, 6
      %1879 = vrot.lane.b32.xlu0 %v1878, 64
      %v1880 = vpop.permute.xlu0 %1879
      %v1882 = vadd.f32 %v411, %v1880
      %v1883 = vxor.u32 %v1882, 2147483648
      %v1884 = vmul.f32 %v1883, 1.442695
      %v1885 = vpow.pop %v1884
      %v1886 = vadd.f32 %v1885, 1.0
      %v1887 = vrcp.pop %v1886
      %v1888 = vmul.f32 1.0, %v1887
      %v1889 = vtanh.pop %v1882
      %v1891 = vrot.slane %v1794, 1
      %v1893 = vmul.f32 %v1888, %v1891
      %1895 = vrot.lane.b32.xlu0 %v1889, 96
      %v1896 = vpop.permute.xlu0 %1895
      %v1898 = vmul.f32 %v1888, %v1896
      %1900 = vrot.lane.b32.xlu0 %v1898, 16
      %v1901 = vpop.permute.xlu0 %1900
      %v1903 = vadd.f32 %v1893, %v1901
      %v1904 = vtanh.pop %v1903
      %1906 = vrot.lane.b32.xlu0 %v1904, 32
      %v1907 = vpop.permute.xlu0 %1906
      %v1909 = vmul.f32 %v1888, %v1907
      %v1911 = vrot.slane %v1909, 2
      %1912 = vrot.lane.b32.xlu0 %v1911, 16
      %v1913 = vpop.permute.xlu0 %1912
      %v1914 = vsel %vm418, %v1913, 0
      %1916 = vmatprep.subr.mxu0 0.0
      %1917 = vmatpush1.msra.mxu0 %v416
      %1918 = vmatprep.subr.mxu0 0.0
      %1919 = vmatpush1.msra.mxu0 %v417
      %1920 = vmatprep.subr.mxu0 0.0
      %1921 = vmatpush1.msra.mxu0 0.0
      %1922 = vmatprep.subr.mxu0 0.0
      %1923 = vmatpush1.msra.mxu0 0.0
      %1924 = vmatprep.subr.mxu0 0.0
      %1925 = vmatpush1.msra.mxu0 0.0
      %1926 = vmatprep.subr.mxu0 0.0
      %1927 = vmatpush1.msra.mxu0 0.0
      %1928 = vmatprep.subr.mxu0 0.0
      %1929 = vmatpush1.msra.mxu0 0.0
      %1930 = vmatprep.subr.mxu0 0.0
      %1931 = vmatpush1.msra.mxu0 0.0
      %1932 = vmatprep.subr.mxu0 0.0
      %1933 = vmatpush1.msra.mxu0 0.0
      %1934 = vmatprep.subr.mxu0 0.0
      %1935 = vmatpush1.msra.mxu0 0.0
      %1936 = vmatprep.subr.mxu0 0.0
      %1937 = vmatpush1.msra.mxu0 0.0
      %1938 = vmatprep.subr.mxu0 0.0
      %1939 = vmatpush1.msra.mxu0 0.0
      %1940 = vmatprep.subr.mxu0 0.0
      %1941 = vmatpush1.msra.mxu0 0.0
      %1942 = vmatprep.subr.mxu0 0.0
      %1943 = vmatpush1.msra.mxu0 0.0
      %1944 = vmatprep.subr.mxu0 0.0
      %1945 = vmatpush1.msra.mxu0 0.0
      %1946 = vmatprep.subr.mxu0 0.0
      %1947 = vmatpush1.msra.mxu0 0.0
      %1948 = vmatprep.subr.mxu0 0.0
      %1949 = vmatpush1.msra.mxu0 0.0
      %1950 = vmatprep.subr.mxu0 0.0
      %1951 = vmatpush1.msra.mxu0 0.0
      %1952 = vmatprep.subr.mxu0 0.0
      %1953 = vmatpush1.msra.mxu0 0.0
      %1954 = vmatprep.subr.mxu0 0.0
      %1955 = vmatpush1.msra.mxu0 0.0
      %1956 = vmatprep.subr.mxu0 0.0
      %1957 = vmatpush1.msra.mxu0 0.0
      %1958 = vmatprep.subr.mxu0 0.0
      %1959 = vmatpush1.msra.mxu0 0.0
      %1960 = vmatprep.subr.mxu0 0.0
      %1961 = vmatpush1.msra.mxu0 0.0
      %1962 = vmatprep.subr.mxu0 0.0
      %1963 = vmatpush1.msra.mxu0 0.0
      %1964 = vmatprep.subr.mxu0 0.0
      %1965 = vmatpush1.msra.mxu0 0.0
      %1966 = vmatprep.subr.mxu0 0.0
      %1967 = vmatpush1.msra.mxu0 0.0
      %1968 = vmatprep.subr.mxu0 0.0
      %1969 = vmatpush1.msra.mxu0 0.0
      %1970 = vmatprep.subr.mxu0 0.0
      %1971 = vmatpush1.msra.mxu0 0.0
      %1972 = vmatprep.subr.mxu0 0.0
      %1973 = vmatpush1.msra.mxu0 0.0
      %1974 = vmatprep.subr.mxu0 0.0
      %1975 = vmatpush1.msra.mxu0 0.0
      %1976 = vmatprep.subr.mxu0 0.0
      %1977 = vmatpush1.msra.mxu0 0.0
      %1978 = vmatprep.subr.mxu0 0.0
      %1979 = vmatpush1.msra.mxu0 0.0
      %1980 = vmatprep.mubr.f32.mxu0 0.0
      %1981 = vmatmul.mubr.f32.gmra.mrb[0].mxu0 %v1914
      %v1982 = vpop.f32.mrb[0].mxu0
      %v1983 = vadd.f32 0.0, %v1982
      %v1984 = vpop.f32.mrb[0].mxu0
      %1985 = vdwg.mxu0
      %v1987 = vrot.slane %v1983, 7
      %1988 = vrot.lane.b32.xlu0 %v1987, 64
      %v1989 = vpop.permute.xlu0 %1988
      %v1991 = vadd.f32 %v411, %v1989
      %v1992 = vxor.u32 %v1991, 2147483648
      %v1993 = vmul.f32 %v1992, 1.442695
      %v1994 = vpow.pop %v1993
      %v1995 = vadd.f32 %v1994, 1.0
      %v1996 = vrcp.pop %v1995
      %v1997 = vmul.f32 1.0, %v1996
      %v1998 = vtanh.pop %v1991
      %v2000 = vrot.slane %v1903, 1
      %v2002 = vmul.f32 %v1997, %v2000
      %2004 = vrot.lane.b32.xlu0 %v1998, 96
      %v2005 = vpop.permute.xlu0 %2004
      %v2007 = vmul.f32 %v1997, %v2005
      %2009 = vrot.lane.b32.xlu0 %v2007, 16
      %v2010 = vpop.permute.xlu0 %2009
      %v2012 = vadd.f32 %v2002, %v2010
      %v2013 = vtanh.pop %v2012
      %2015 = vrot.lane.b32.xlu0 %v2013, 32
      %v2016 = vpop.permute.xlu0 %2015
      %v2018 = vmul.f32 %v1997, %v2016
      %v2020 = vrot.slane %v2018, 1
      %2021 = vrot.lane.b32.xlu0 %v2020, 16
      %v2022 = vpop.permute.xlu0 %2021
      %v2023 = vsel %vm418, %v2022, 0
      %2025 = vmatprep.subr.mxu0 0.0
      %2026 = vmatpush1.msra.mxu0 %v416
      %2027 = vmatprep.subr.mxu0 0.0
      %2028 = vmatpush1.msra.mxu0 %v417
      %2029 = vmatprep.subr.mxu0 0.0
      %2030 = vmatpush1.msra.mxu0 0.0
      %2031 = vmatprep.subr.mxu0 0.0
      %2032 = vmatpush1.msra.mxu0 0.0
      %2033 = vmatprep.subr.mxu0 0.0
      %2034 = vmatpush1.msra.mxu0 0.0
      %2035 = vmatprep.subr.mxu0 0.0
      %2036 = vmatpush1.msra.mxu0 0.0
      %2037 = vmatprep.subr.mxu0 0.0
      %2038 = vmatpush1.msra.mxu0 0.0
      %2039 = vmatprep.subr.mxu0 0.0
      %2040 = vmatpush1.msra.mxu0 0.0
      %2041 = vmatprep.subr.mxu0 0.0
      %2042 = vmatpush1.msra.mxu0 0.0
      %2043 = vmatprep.subr.mxu0 0.0
      %2044 = vmatpush1.msra.mxu0 0.0
      %2045 = vmatprep.subr.mxu0 0.0
      %2046 = vmatpush1.msra.mxu0 0.0
      %2047 = vmatprep.subr.mxu0 0.0
      %2048 = vmatpush1.msra.mxu0 0.0
      %2049 = vmatprep.subr.mxu0 0.0
      %2050 = vmatpush1.msra.mxu0 0.0
      %2051 = vmatprep.subr.mxu0 0.0
      %2052 = vmatpush1.msra.mxu0 0.0
      %2053 = vmatprep.subr.mxu0 0.0
      %2054 = vmatpush1.msra.mxu0 0.0
      %2055 = vmatprep.subr.mxu0 0.0
      %2056 = vmatpush1.msra.mxu0 0.0
      %2057 = vmatprep.subr.mxu0 0.0
      %2058 = vmatpush1.msra.mxu0 0.0
      %2059 = vmatprep.subr.mxu0 0.0
      %2060 = vmatpush1.msra.mxu0 0.0
      %2061 = vmatprep.subr.mxu0 0.0
      %2062 = vmatpush1.msra.mxu0 0.0
      %2063 = vmatprep.subr.mxu0 0.0
      %2064 = vmatpush1.msra.mxu0 0.0
      %2065 = vmatprep.subr.mxu0 0.0
      %2066 = vmatpush1.msra.mxu0 0.0
      %2067 = vmatprep.subr.mxu0 0.0
      %2068 = vmatpush1.msra.mxu0 0.0
      %2069 = vmatprep.subr.mxu0 0.0
      %2070 = vmatpush1.msra.mxu0 0.0
      %2071 = vmatprep.subr.mxu0 0.0
      %2072 = vmatpush1.msra.mxu0 0.0
      %2073 = vmatprep.subr.mxu0 0.0
      %2074 = vmatpush1.msra.mxu0 0.0
      %2075 = vmatprep.subr.mxu0 0.0
      %2076 = vmatpush1.msra.mxu0 0.0
      %2077 = vmatprep.subr.mxu0 0.0
      %2078 = vmatpush1.msra.mxu0 0.0
      %2079 = vmatprep.subr.mxu0 0.0
      %2080 = vmatpush1.msra.mxu0 0.0
      %2081 = vmatprep.subr.mxu0 0.0
      %2082 = vmatpush1.msra.mxu0 0.0
      %2083 = vmatprep.subr.mxu0 0.0
      %2084 = vmatpush1.msra.mxu0 0.0
      %2085 = vmatprep.subr.mxu0 0.0
      %2086 = vmatpush1.msra.mxu0 0.0
      %2087 = vmatprep.subr.mxu0 0.0
      %2088 = vmatpush1.msra.mxu0 0.0
      %2089 = vmatprep.mubr.f32.mxu0 0.0
      %2090 = vmatmul.mubr.f32.gmra.mrb[0].mxu0 %v2023
      %v2091 = vpop.f32.mrb[0].mxu0
      %v2092 = vadd.f32 0.0, %v2091
      %v2093 = vpop.f32.mrb[0].mxu0
      %2094 = vdwg.mxu0
      %2096 = vrot.lane.b32.xlu0 %v2092, 64
      %v2097 = vpop.permute.xlu0 %2096
      %v2099 = vadd.f32 %v411, %v2097
      %v2100 = vxor.u32 %v2099, 2147483648
      %v2101 = vmul.f32 %v2100, 1.442695
      %v2102 = vpow.pop %v2101
      %v2103 = vadd.f32 %v2102, 1.0
      %v2104 = vrcp.pop %v2103
      %v2105 = vmul.f32 1.0, %v2104
      %v2106 = vtanh.pop %v2099
      %v2108 = vrot.slane %v2012, 1
      %v2110 = vmul.f32 %v2105, %v2108
      %2112 = vrot.lane.b32.xlu0 %v2106, 96
      %v2113 = vpop.permute.xlu0 %2112
      %v2115 = vmul.f32 %v2105, %v2113
      %2117 = vrot.lane.b32.xlu0 %v2115, 16
      %v2118 = vpop.permute.xlu0 %2117
      %v2120 = vadd.f32 %v2110, %v2118
      %v2121 = vtanh.pop %v2120
      %2123 = vrot.lane.b32.xlu0 %v2121, 32
      %v2124 = vpop.permute.xlu0 %2123
      %v2126 = vmul.f32 %v2105, %v2124
      %vm2127 = vcmask 1040384
      %v2128 = vsel %vm2127, %v516, %v622
      %vm2129 = vcmask 1041408
      %v2130 = vsel %vm2129, %v2128, %v729
      %vm2131 = vcmask 1042432
      %v2132 = vsel %vm2131, %v2130, %v836
      %vm2133 = vcmask 1043456
      %v2134 = vsel %vm2133, %v2132, %v943
      %vm2135 = vcmask 1044480
      %v2136 = vsel %vm2135, %v2134, %v1050
      %vm2137 = vcmask 1045504
      %v2138 = vsel %vm2137, %v2136, %v1157
      %vm2139 = vcmask 1046528
      %v2140 = vsel %vm2139, %v2138, %v1264
      %v2141 = vsel %vm2127, %v2126, %v2018
      %v2142 = vsel %vm2129, %v2141, %v1909
      %v2143 = vsel %vm2131, %v2142, %v1800
      %v2144 = vsel %vm2133, %v2143, %v1691
      %v2145 = vsel %vm2135, %v2144, %v1582
      %v2146 = vsel %vm2137, %v2145, %v1473
      %v2147 = vsel %vm2139, %v2146, %v1364
      %2149 = vrot.lane.b32.xlu0 %v2140, 80
      %v2150 = vpop.permute.xlu0 %2149
      %2153 = vrot.lane.b32.xlu0 %v2147, 32
      %v2154 = vpop.permute.xlu0 %2153
      %v2156 = vsel %vm418, %v2150, %v2154
      %v2157 = vld [vmem:[%s5] sm:$0xff]
      %v2158 = vld [vmem:[%s5 + $0x8] sm:$0xff]
      %v2159 = vld [vmem:[%s5 + $0x10] sm:$0xff]
      %v2160 = vld [vmem:[%s5 + $0x18] sm:$0xff]
      %v2161 = vld [vmem:[%s6] sm:$0x1]
      %v2163 = vlaneseq
      %v2164 = vshrl.u32 %v2163, 7
      %v2165 = vsub.s32 0, %v2164
      %v2166 = vrot.slane %v2161, %v2165
      %v2169 = vsel %vm340, %v2156, 0
      %2171 = vmatprep.subr.mxu0 0.0
      %2172 = vmatpush1.msra.mxu0 %v2157
      %2173 = vmatprep.subr.mxu0 0.0
      %2174 = vmatpush1.msra.mxu0 %v2158
      %2175 = vmatprep.subr.mxu0 0.0
      %2176 = vmatpush1.msra.mxu0 %v2159
      %2177 = vmatprep.subr.mxu0 0.0
      %2178 = vmatpush1.msra.mxu0 %v2160
      %2179 = vmatprep.subr.mxu0 0.0
      %2180 = vmatpush1.msra.mxu0 0.0
      %2181 = vmatprep.subr.mxu0 0.0
      %2182 = vmatpush1.msra.mxu0 0.0
      %2183 = vmatprep.subr.mxu0 0.0
      %2184 = vmatpush1.msra.mxu0 0.0
      %2185 = vmatprep.subr.mxu0 0.0
      %2186 = vmatpush1.msra.mxu0 0.0
      %2187 = vmatprep.subr.mxu0 0.0
      %2188 = vmatpush1.msra.mxu0 0.0
      %2189 = vmatprep.subr.mxu0 0.0
      %2190 = vmatpush1.msra.mxu0 0.0
      %2191 = vmatprep.subr.mxu0 0.0
      %2192 = vmatpush1.msra.mxu0 0.0
      %2193 = vmatprep.subr.mxu0 0.0
      %2194 = vmatpush1.msra.mxu0 0.0
      %2195 = vmatprep.subr.mxu0 0.0
      %2196 = vmatpush1.msra.mxu0 0.0
      %2197 = vmatprep.subr.mxu0 0.0
      %2198 = vmatpush1.msra.mxu0 0.0
      %2199 = vmatprep.subr.mxu0 0.0
      %2200 = vmatpush1.msra.mxu0 0.0
      %2201 = vmatprep.subr.mxu0 0.0
      %2202 = vmatpush1.msra.mxu0 0.0
      %2203 = vmatprep.subr.mxu0 0.0
      %2204 = vmatpush1.msra.mxu0 0.0
      %2205 = vmatprep.subr.mxu0 0.0
      %2206 = vmatpush1.msra.mxu0 0.0
      %2207 = vmatprep.subr.mxu0 0.0
      %2208 = vmatpush1.msra.mxu0 0.0
      %2209 = vmatprep.subr.mxu0 0.0
      %2210 = vmatpush1.msra.mxu0 0.0
      %2211 = vmatprep.subr.mxu0 0.0
      %2212 = vmatpush1.msra.mxu0 0.0
      %2213 = vmatprep.subr.mxu0 0.0
      %2214 = vmatpush1.msra.mxu0 0.0
      %2215 = vmatprep.subr.mxu0 0.0
      %2216 = vmatpush1.msra.mxu0 0.0
      %2217 = vmatprep.subr.mxu0 0.0
      %2218 = vmatpush1.msra.mxu0 0.0
      %2219 = vmatprep.subr.mxu0 0.0
      %2220 = vmatpush1.msra.mxu0 0.0
      %2221 = vmatprep.subr.mxu0 0.0
      %2222 = vmatpush1.msra.mxu0 0.0
      %2223 = vmatprep.subr.mxu0 0.0
      %2224 = vmatpush1.msra.mxu0 0.0
      %2225 = vmatprep.subr.mxu0 0.0
      %2226 = vmatpush1.msra.mxu0 0.0
      %2227 = vmatprep.subr.mxu0 0.0
      %2228 = vmatpush1.msra.mxu0 0.0
      %2229 = vmatprep.subr.mxu0 0.0
      %2230 = vmatpush1.msra.mxu0 0.0
      %2231 = vmatprep.subr.mxu0 0.0
      %2232 = vmatpush1.msra.mxu0 0.0
      %2233 = vmatprep.subr.mxu0 0.0
      %2234 = vmatpush1.msra.mxu0 0.0
      %2235 = vmatprep.mubr.f32.mxu0 0.0
      %2236 = vmatmul.mubr.f32.gmra.mrb[0].mxu0 %v2169
      %v2237 = vpop.f32.mrb[0].mxu0
      %v2238 = vadd.f32 %v2166, %v2237
      %v2239 = vpop.f32.mrb[0].mxu0
      %2240 = vdwg.mxu0
      %v2241 = vld [vmem:[%s7] sm:$0x1]
      %v2243 = vlaneseq
      %v2244 = vshrl.u32 %v2243, 7
      %v2245 = vsub.s32 0, %v2244
      %v2246 = vrot.slane %v2241, %v2245
      %v2248 = vmul.f32 %v2238, %v2246
      %v2249 = vld [vmem:[%s8] sm:$0x1]
      %v2251 = vlaneseq
      %v2252 = vshrl.u32 %v2251, 7
      %v2253 = vsub.s32 0, %v2252
      %v2254 = vrot.slane %v2249, %v2253
      %v2256 = vadd.f32 %v2248, %v2254
      %2257 = vst [vmem:[%s327] sm:$0xff] %v2256
      %p2258 = scmp.lt.s32.totalorder %s20, 1
      %s2259 = scalar_select %p2258, %s20, 1
      %s2260 = smul.addr %s2259, 8
      %s2261 = scalar_lea.vmem %s9, %s2260
      // Predicated region
      $region57: #{bert_bilstm_crf_forward.6} parent=55 // pred_check
        %p2262 = pneg %p232
      $region58: #{bert_bilstm_crf_forward.6} parent=55 // pred_check_branch
        %2264 = sbr.rel (%p2262) target = $region60
      $region59: #{bert_bilstm_crf_forward.6} parent=55 // pred_region
        _
      $region60: #{bert_bilstm_crf_forward.6} parent=55 // pred_fallthru
        _
    $region56: #{bert_bilstm_crf_forward.6} parent=5 // pred_fallthru
      _
    %p2265 = scmp.le.s32.totalorder 2, %s15
    // Predicated region
    $region61: #{bert_bilstm_crf_forward.6} parent=5 // pred_check
      %p2266 = pneg %p2265
    $region62: #{bert_bilstm_crf_forward.6} parent=5 // pred_check_branch
      %2268 = sbr.rel (%p2266) target = $region64
    $region63: #{bert_bilstm_crf_forward.6} parent=5 // pred_region
      %s2269 = ssub.s32 %s15, 2
      // Predicated region
      $region65: #{bert_bilstm_crf_forward.6} parent=63 // pred_check
        %p2270 = pneg %p238
      $region66: #{bert_bilstm_crf_forward.6} parent=63 // pred_check_branch
        %2272 = sbr.rel (%p2270) target = $region68
      $region67: #{bert_bilstm_crf_forward.6} parent=63 // pred_region
        %p2273 = scmp.lt.s32.totalorder %s21, 1
        %s2274 = scalar_select %p2273, %s21, 1
        %s2275 = smul.addr %s2274, 8
        %s2276 = scalar_lea.vmem %s9, %s2275
      $region68: #{bert_bilstm_crf_forward.6} parent=63 // pred_fallthru
        _
    $region64: #{bert_bilstm_crf_forward.6} parent=5 // pred_fallthru
      _
  $region6: #{bert_bilstm_crf_forward.6} parent=0 // loop_footer
    %s19 = sadd.s32 1, %s15
  $region7: #{bert_bilstm_crf_forward.6} parent=0 // loop_footer_branch
    %14 = sbr.rel target = $region3
  $region8: #{bert_bilstm_crf_forward.6} parent=0 // loop_exit
    _

// kernel: bert_bilstm_crf_forward.7
$region0: #{bert_bilstm_crf_forward.7}
  #allocation0 [shape = 'u32[]', space=smem, size = 0x4, offset = 0x4, fixed_abs, tag = 'smem constant byte address 0x4 - core index']
  #allocation1 [shape = 'u32[144,128]{1,0:T(1,128)}', space=vmem, size = 0x12000, scoped, tag = 'internal scratch']
  %s0 = inlined_call_operand.vmem [shape: f32[2,8,128], index: 0, kind: input, shape index: {}]
  %s1 = inlined_call_operand.vmem [shape: s32[2,8], index: 1, kind: input, shape index: {}]
  %s2 = inlined_call_operand.vmem [shape: f32[128,128], index: 2, kind: input, shape index: {}]
  %s3 = inlined_call_operand.vmem [shape: f32[1,128], index: 3, kind: input, shape index: {}]
  %s4 = inlined_call_operand.vmem [shape: f32[1,128], index: 4, kind: input, shape index: {}]
  %s5 = inlined_call_operand.hbm [shape: s32[2,8], index: 5, kind: output, shape index: {}]
  %s6 = sld [smem:[#allocation0]]
  $region30: #{bert_bilstm_crf_forward.7} parent=0
    _
  %s8 = ssub.s32 1, %s6
  %s9 = scalar_select 0, %s8, %s6
  $region1: #{bert_bilstm_crf_forward.7} parent=0
    #allocation2 [shape = 'u8[1024]{0}', space=vmem, size = 0x400, scoped, tag = 'output window, operand 0, single buffered']
    #allocation3 [shape = 's32[1]{0}', space=sflag, size = 0x4, scoped, tag = 'scoped memory for bert_bilstm_crf_forward.7']
    %10 = vsyncpa [#allocation3], 0
    // Predicated region
    $region2: #{bert_bilstm_crf_forward.7} parent=1 // pred_check
      _
    $region3: #{bert_bilstm_crf_forward.7} parent=1 // pred_check_branch
      %12 = sbr.rel (0) target = $region5
    $region4: #{bert_bilstm_crf_forward.7} parent=1 // pred_region
      _
    $region5: #{bert_bilstm_crf_forward.7} parent=1 // pred_fallthru
      _
    // Predicated region
    $region6: #{bert_bilstm_crf_forward.7} parent=1 // pred_check
      _
    $region7: #{bert_bilstm_crf_forward.7} parent=1 // pred_check_branch
      %14 = sbr.rel (0) target = $region9
    $region8: #{bert_bilstm_crf_forward.7} parent=1 // pred_region
      _
    $region9: #{bert_bilstm_crf_forward.7} parent=1 // pred_fallthru
      _
    // Predicated region
    $region10: #{bert_bilstm_crf_forward.7} parent=1 // pred_check
      _
    $region11: #{bert_bilstm_crf_forward.7} parent=1 // pred_check_branch
      %16 = sbr.rel (0) target = $region13
    $region12: #{bert_bilstm_crf_forward.7} parent=1 // pred_region
      _
    $region13: #{bert_bilstm_crf_forward.7} parent=1 // pred_fallthru
      _
    // Predicated region
    $region14: #{bert_bilstm_crf_forward.7} parent=1 // pred_check
      _
    $region15: #{bert_bilstm_crf_forward.7} parent=1 // pred_check_branch
      %18 = sbr.rel (0) target = $region17
    $region16: #{bert_bilstm_crf_forward.7} parent=1 // pred_region
      _
    $region17: #{bert_bilstm_crf_forward.7} parent=1 // pred_fallthru
      _
    // Predicated region
    $region18: #{bert_bilstm_crf_forward.7} parent=1 // pred_check
      _
    $region19: #{bert_bilstm_crf_forward.7} parent=1 // pred_check_branch
      %20 = sbr.rel (0) target = $region21
    $region20: #{bert_bilstm_crf_forward.7} parent=1 // pred_region
      _
    $region21: #{bert_bilstm_crf_forward.7} parent=1 // pred_fallthru
      _
    %v21 = vld [vmem:[%s0] sm:$0xff]
    %v22 = vld [vmem:[%s0 + $0x8] sm:$0xff]
    %v23 = vld [vmem:[%s1] sm:$0x3]
    %v24 = vld [vmem:[%s2] sm:$0xff]
    %v25 = vld [vmem:[%s2 + $0x8] sm:$0xff]
    %v26 = vld [vmem:[%s2 + $0x10] sm:$0xff]
    %v27 = vld [vmem:[%s2 + $0x18] sm:$0xff]
    %v28 = vld [vmem:[%s2 + $0x20] sm:$0xff]
    %v29 = vld [vmem:[%s2 + $0x28] sm:$0xff]
    %v30 = vld [vmem:[%s2 + $0x30] sm:$0xff]
    %v31 = vld [vmem:[%s2 + $0x38] sm:$0xff]
    %v32 = vld [vmem:[%s2 + $0x40] sm:$0xff]
    %v33 = vld [vmem:[%s2 + $0x48] sm:$0xff]
    %v34 = vld [vmem:[%s2 + $0x50] sm:$0xff]
    %v35 = vld [vmem:[%s2 + $0x58] sm:$0xff]
    %v36 = vld [vmem:[%s2 + $0x60] sm:$0xff]
    %v37 = vld [vmem:[%s2 + $0x68] sm:$0xff]
    %v38 = vld [vmem:[%s2 + $0x70] sm:$0xff]
    %v39 = vld [vmem:[%s2 + $0x78] sm:$0xff]
    %v40 = vld [vmem:[%s3] sm:$0x1]
    %v42 = vlaneseq
    %v43 = vshrl.u32 %v42, 7
    %v44 = vsub.s32 0, %v43
    %v45 = vrot.slane %v40, %v44
    %v49 = vrot.slane %v22, 7
    %vm50 = vcmask 1041409
    %v51 = vsel %vm50, %v49, %v21
    %v53 = vadd.f32 %v45, %v51
    %v54 = vlaneseq
    %v55 = vshrl.u32 %v54, 7
    %v56 = vsub.s32 0, %v55
    %v57 = vrot.slane %v53, %v56
    %59 = vbcast.lane.b32.xlu0 %v57, 256
    %v60 = vpop.permute.xlu0 %59
    %s62 = sor.u32 256, 8
    %63 = vbcast.lane.b32.xlu0 %v57, %s62
    %v64 = vpop.permute.xlu0 %63
    %s66 = sor.u32 256, 16
    %67 = vbcast.lane.b32.xlu0 %v57, %s66
    %v68 = vpop.permute.xlu0 %67
    %s70 = sor.u32 256, 24
    %71 = vbcast.lane.b32.xlu0 %v57, %s70
    %v72 = vpop.permute.xlu0 %71
    %s74 = sor.u32 256, 32
    %75 = vbcast.lane.b32.xlu0 %v57, %s74
    %v76 = vpop.permute.xlu0 %75
    %s78 = sor.u32 256, 40
    %79 = vbcast.lane.b32.xlu0 %v57, %s78
    %v80 = vpop.permute.xlu0 %79
    %s82 = sor.u32 256, 48
    %83 = vbcast.lane.b32.xlu0 %v57, %s82
    %v84 = vpop.permute.xlu0 %83
    %s86 = sor.u32 256, 56
    %87 = vbcast.lane.b32.xlu0 %v57, %s86
    %v88 = vpop.permute.xlu0 %87
    %s90 = sor.u32 256, 64
    %91 = vbcast.lane.b32.xlu0 %v57, %s90
    %v92 = vpop.permute.xlu0 %91
    %s94 = sor.u32 256, 72
    %95 = vbcast.lane.b32.xlu0 %v57, %s94
    %v96 = vpop.permute.xlu0 %95
    %s98 = sor.u32 256, 80
    %99 = vbcast.lane.b32.xlu0 %v57, %s98
    %v100 = vpop.permute.xlu0 %99
    %s102 = sor.u32 256, 88
    %103 = vbcast.lane.b32.xlu0 %v57, %s102
    %v104 = vpop.permute.xlu0 %103
    %s106 = sor.u32 256, 96
    %107 = vbcast.lane.b32.xlu0 %v57, %s106
    %v108 = vpop.permute.xlu0 %107
    %s110 = sor.u32 256, 104
    %111 = vbcast.lane.b32.xlu0 %v57, %s110
    %v112 = vpop.permute.xlu0 %111
    %s114 = sor.u32 256, 112
    %115 = vbcast.lane.b32.xlu0 %v57, %s114
    %v116 = vpop.permute.xlu0 %115
    %s118 = sor.u32 256, 120
    %119 = vbcast.lane.b32.xlu0 %v57, %s118
    %v120 = vpop.permute.xlu0 %119
    %v121 = vlaneseq
    %v122 = vshrl.u32 %v121, 7
    %v123 = vsub.s32 1, %v122
    %v124 = vrot.slane %v53, %v123
    %126 = vbcast.lane.b32.xlu0 %v124, 256
    %v127 = vpop.permute.xlu0 %126
    %s129 = sor.u32 256, 8
    %130 = vbcast.lane.b32.xlu0 %v124, %s129
    %v131 = vpop.permute.xlu0 %130
    %s133 = sor.u32 256, 16
    %134 = vbcast.lane.b32.xlu0 %v124, %s133
    %v135 = vpop.permute.xlu0 %134
    %s137 = sor.u32 256, 24
    %138 = vbcast.lane.b32.xlu0 %v124, %s137
    %v139 = vpop.permute.xlu0 %138
    %s141 = sor.u32 256, 32
    %142 = vbcast.lane.b32.xlu0 %v124, %s141
    %v143 = vpop.permute.xlu0 %142
    %s145 = sor.u32 256, 40
    %146 = vbcast.lane.b32.xlu0 %v124, %s145
    %v147 = vpop.permute.xlu0 %146
    %s149 = sor.u32 256, 48
    %150 = vbcast.lane.b32.xlu0 %v124, %s149
    %v151 = vpop.permute.xlu0 %150
    %s153 = sor.u32 256, 56
    %154 = vbcast.lane.b32.xlu0 %v124, %s153
    %v155 = vpop.permute.xlu0 %154
    %s157 = sor.u32 256, 64
    %158 = vbcast.lane.b32.xlu0 %v124, %s157
    %v159 = vpop.permute.xlu0 %158
    %s161 = sor.u32 256, 72
    %162 = vbcast.lane.b32.xlu0 %v124, %s161
    %v163 = vpop.permute.xlu0 %162
    %s165 = sor.u32 256, 80
    %166 = vbcast.lane.b32.xlu0 %v124, %s165
    %v167 = vpop.permute.xlu0 %166
    %s169 = sor.u32 256, 88
    %170 = vbcast.lane.b32.xlu0 %v124, %s169
    %v171 = vpop.permute.xlu0 %170
    %s173 = sor.u32 256, 96
    %174 = vbcast.lane.b32.xlu0 %v124, %s173
    %v175 = vpop.permute.xlu0 %174
    %s177 = sor.u32 256, 104
    %178 = vbcast.lane.b32.xlu0 %v124, %s177
    %v179 = vpop.permute.xlu0 %178
    %s181 = sor.u32 256, 112
    %182 = vbcast.lane.b32.xlu0 %v124, %s181
    %v183 = vpop.permute.xlu0 %182
    %s185 = sor.u32 256, 120
    %186 = vbcast.lane.b32.xlu0 %v124, %s185
    %v187 = vpop.permute.xlu0 %186
    %v188 = vadd.f32 %v60, %v24
    %v189 = vadd.f32 %v64, %v25
    %v190 = vadd.f32 %v68, %v26
    %v191 = vadd.f32 %v72, %v27
    %v192 = vadd.f32 %v76, %v28
    %v193 = vadd.f32 %v80, %v29
    %v194 = vadd.f32 %v84, %v30
    %v195 = vadd.f32 %v88, %v31
    %v196 = vadd.f32 %v92, %v32
    %v197 = vadd.f32 %v96, %v33
    %v198 = vadd.f32 %v100, %v34
    %v199 = vadd.f32 %v104, %v35
    %v200 = vadd.f32 %v108, %v36
    %v201 = vadd.f32 %v112, %v37
    %v202 = vadd.f32 %v116, %v38
    %v203 = vadd.f32 %v120, %v39
    %v204 = vadd.f32 %v127, %v24
    %v205 = vadd.f32 %v131, %v25
    %v206 = vadd.f32 %v135, %v26
    %v207 = vadd.f32 %v139, %v27
    %v208 = vadd.f32 %v143, %v28
    %v209 = vadd.f32 %v147, %v29
    %v210 = vadd.f32 %v151, %v30
    %v211 = vadd.f32 %v155, %v31
    %v212 = vadd.f32 %v159, %v32
    %v213 = vadd.f32 %v163, %v33
    %v214 = vadd.f32 %v167, %v34
    %v215 = vadd.f32 %v171, %v35
    %v216 = vadd.f32 %v175, %v36
    %v217 = vadd.f32 %v179, %v37
    %v218 = vadd.f32 %v183, %v38
    %v219 = vadd.f32 %v187, %v39
    %v220 = vlaneseq
    %v221 = vshrl.u32 %v220, 7
    %v222 = vsub.s32 1, %v221
    %v223 = vrot.slane %v21, %v222
    %v224 = vlaneseq
    %v225 = vshrl.u32 %v224, 7
    %v226 = vsub.s32 1, %v225
    %v227 = vrot.slane %v22, %v226
    %v228 = vadd.f32 %v188, %v223
    %v229 = vadd.f32 %v189, %v223
    %v230 = vadd.f32 %v190, %v223
    %v231 = vadd.f32 %v191, %v223
    %v232 = vadd.f32 %v192, %v223
    %v233 = vadd.f32 %v193, %v223
    %v234 = vadd.f32 %v194, %v223
    %v235 = vadd.f32 %v195, %v223
    %v236 = vadd.f32 %v196, %v223
    %v237 = vadd.f32 %v197, %v223
    %v238 = vadd.f32 %v198, %v223
    %v239 = vadd.f32 %v199, %v223
    %v240 = vadd.f32 %v200, %v223
    %v241 = vadd.f32 %v201, %v223
    %v242 = vadd.f32 %v202, %v223
    %v243 = vadd.f32 %v203, %v223
    %v244 = vadd.f32 %v204, %v227
    %v245 = vadd.f32 %v205, %v227
    %v246 = vadd.f32 %v206, %v227
    %v247 = vadd.f32 %v207, %v227
    %v248 = vadd.f32 %v208, %v227
    %v249 = vadd.f32 %v209, %v227
    %v250 = vadd.f32 %v210, %v227
    %v251 = vadd.f32 %v211, %v227
    %v252 = vadd.f32 %v212, %v227
    %v253 = vadd.f32 %v213, %v227
    %v254 = vadd.f32 %v214, %v227
    %v255 = vadd.f32 %v215, %v227
    %v256 = vadd.f32 %v216, %v227
    %v257 = vadd.f32 %v217, %v227
    %v258 = vadd.f32 %v218, %v227
    %v259 = vadd.f32 %v219, %v227
    %v260 = vmax.f32 %v228, %v230
    %v261 = vmax.f32 %v229, %v231
    %v262 = vmax.f32 %v260, %v232
    %v263 = vmax.f32 %v261, %v233
    %v264 = vmax.f32 %v262, %v234
    %v265 = vmax.f32 %v263, %v235
    %v266 = vmax.f32 %v264, %v236
    %v267 = vmax.f32 %v265, %v237
    %v268 = vmax.f32 %v266, %v238
    %v269 = vmax.f32 %v267, %v239
    %v270 = vmax.f32 %v268, %v240
    %v271 = vmax.f32 %v269, %v241
    %v272 = vmax.f32 %v270, %v242
    %v273 = vmax.f32 %v271, %v243
    %v274 = vmax.f32 %v272, %v273
    %v275 = vrot.slane %v274, 4
    %v276 = vmax.f32 %v274, %v275
    %v277 = vrot.slane %v276, 2
    %v278 = vmax.f32 %v276, %v277
    %v279 = vrot.slane %v278, 1
    %v280 = vmax.f32 %v278, %v279
    %v281 = vmax.f32 %v244, %v246
    %v282 = vmax.f32 %v245, %v247
    %v283 = vmax.f32 %v281, %v248
    %v284 = vmax.f32 %v282, %v249
    %v285 = vmax.f32 %v283, %v250
    %v286 = vmax.f32 %v284, %v251
    %v287 = vmax.f32 %v285, %v252
    %v288 = vmax.f32 %v286, %v253
    %v289 = vmax.f32 %v287, %v254
    %v290 = vmax.f32 %v288, %v255
    %v291 = vmax.f32 %v289, %v256
    %v292 = vmax.f32 %v290, %v257
    %v293 = vmax.f32 %v291, %v258
    %v294 = vmax.f32 %v292, %v259
    %v295 = vmax.f32 %v293, %v294
    %v296 = vrot.slane %v295, 4
    %v297 = vmax.f32 %v295, %v296
    %v298 = vrot.slane %v297, 2
    %v299 = vmax.f32 %v297, %v298
    %v300 = vrot.slane %v299, 1
    %v301 = vmax.f32 %v299, %v300
    %v302 = vlaneseq
    %v303 = vshrl.u32 %v302, 7
    %v304 = vadd.s32 %v303, 8
    %v305 = vadd.s32 %v303, 16
    %v306 = vadd.s32 %v303, 24
    %v307 = vadd.s32 %v303, 32
    %v308 = vadd.s32 %v303, 40
    %v309 = vadd.s32 %v303, 48
    %v310 = vadd.s32 %v303, 56
    %v311 = vadd.s32 %v303, 64
    %v312 = vadd.s32 %v303, 72
    %v313 = vadd.s32 %v303, 80
    %v314 = vadd.s32 %v303, 88
    %v315 = vadd.s32 %v303, 96
    %v316 = vadd.s32 %v303, 104
    %v317 = vadd.s32 %v303, 112
    %v318 = vadd.s32 %v303, 120
    %vm319 = vcmp.eq.f32.partialorder %v228, %v280
    %vm320 = vcmp.eq.f32.partialorder %v229, %v280
    %vm321 = vcmp.eq.f32.partialorder %v230, %v280
    %vm322 = vcmp.eq.f32.partialorder %v231, %v280
    %vm323 = vcmp.eq.f32.partialorder %v232, %v280
    %vm324 = vcmp.eq.f32.partialorder %v233, %v280
    %vm325 = vcmp.eq.f32.partialorder %v234, %v280
    %vm326 = vcmp.eq.f32.partialorder %v235, %v280
    %vm327 = vcmp.eq.f32.partialorder %v236, %v280
    %vm328 = vcmp.eq.f32.partialorder %v237, %v280
    %vm329 = vcmp.eq.f32.partialorder %v238, %v280
    %vm330 = vcmp.eq.f32.partialorder %v239, %v280
    %vm331 = vcmp.eq.f32.partialorder %v240, %v280
    %vm332 = vcmp.eq.f32.partialorder %v241, %v280
    %vm333 = vcmp.eq.f32.partialorder %v242, %v280
    %vm334 = vcmp.eq.f32.partialorder %v243, %v280
    %vm335 = vcmp.eq.f32.partialorder %v244, %v301
    %vm336 = vcmp.eq.f32.partialorder %v245, %v301
    %vm337 = vcmp.eq.f32.partialorder %v246, %v301
    %vm338 = vcmp.eq.f32.partialorder %v247, %v301
    %vm339 = vcmp.eq.f32.partialorder %v248, %v301
    %vm340 = vcmp.eq.f32.partialorder %v249, %v301
    %vm341 = vcmp.eq.f32.partialorder %v250, %v301
    %vm342 = vcmp.eq.f32.partialorder %v251, %v301
    %vm343 = vcmp.eq.f32.partialorder %v252, %v301
    %vm344 = vcmp.eq.f32.partialorder %v253, %v301
    %vm345 = vcmp.eq.f32.partialorder %v254, %v301
    %vm346 = vcmp.eq.f32.partialorder %v255, %v301
    %vm347 = vcmp.eq.f32.partialorder %v256, %v301
    %vm348 = vcmp.eq.f32.partialorder %v257, %v301
    %vm349 = vcmp.eq.f32.partialorder %v258, %v301
    %vm350 = vcmp.eq.f32.partialorder %v259, %v301
    %v351 = vsel %vm319, %v303, 128
    %v352 = vsel %vm320, %v304, 128
    %v353 = vsel %vm321, %v305, 128
    %v354 = vsel %vm322, %v306, 128
    %v355 = vsel %vm323, %v307, 128
    %v356 = vsel %vm324, %v308, 128
    %v357 = vsel %vm325, %v309, 128
    %v358 = vsel %vm326, %v310, 128
    %v359 = vsel %vm327, %v311, 128
    %v360 = vsel %vm328, %v312, 128
    %v361 = vsel %vm329, %v313, 128
    %v362 = vsel %vm330, %v314, 128
    %v363 = vsel %vm331, %v315, 128
    %v364 = vsel %vm332, %v316, 128
    %v365 = vsel %vm333, %v317, 128
    %v366 = vsel %vm334, %v318, 128
    %v367 = vsel %vm335, %v303, 128
    %v368 = vsel %vm336, %v304, 128
    %v369 = vsel %vm337, %v305, 128
    %v370 = vsel %vm338, %v306, 128
    %v371 = vsel %vm339, %v307, 128
    %v372 = vsel %vm340, %v308, 128
    %v373 = vsel %vm341, %v309, 128
    %v374 = vsel %vm342, %v310, 128
    %v375 = vsel %vm343, %v311, 128
    %v376 = vsel %vm344, %v312, 128
    %v377 = vsel %vm345, %v313, 128
    %v378 = vsel %vm346, %v314, 128
    %v379 = vsel %vm347, %v315, 128
    %v380 = vsel %vm348, %v316, 128
    %v381 = vsel %vm349, %v317, 128
    %v382 = vsel %vm350, %v318, 128
    %vm383 = vcmp.lt.s32.totalorder %v351, %v353
    %v384 = vsel %vm383, %v351, %v353
    %vm385 = vcmp.lt.s32.totalorder %v352, %v354
    %v386 = vsel %vm385, %v352, %v354
    %vm387 = vcmp.lt.s32.totalorder %v384, %v355
    %v388 = vsel %vm387, %v384, %v355
    %vm389 = vcmp.lt.s32.totalorder %v386, %v356
    %v390 = vsel %vm389, %v386, %v356
    %vm391 = vcmp.lt.s32.totalorder %v388, %v357
    %v392 = vsel %vm391, %v388, %v357
    %vm393 = vcmp.lt.s32.totalorder %v390, %v358
    %v394 = vsel %vm393, %v390, %v358
    %vm395 = vcmp.lt.s32.totalorder %v392, %v359
    %v396 = vsel %vm395, %v392, %v359
    %vm397 = vcmp.lt.s32.totalorder %v394, %v360
    %v398 = vsel %vm397, %v394, %v360
    %vm399 = vcmp.lt.s32.totalorder %v396, %v361
    %v400 = vsel %vm399, %v396, %v361
    %vm401 = vcmp.lt.s32.totalorder %v398, %v362
    %v402 = vsel %vm401, %v398, %v362
    %vm403 = vcmp.lt.s32.totalorder %v400, %v363
    %v404 = vsel %vm403, %v400, %v363
    %vm405 = vcmp.lt.s32.totalorder %v402, %v364
    %v406 = vsel %vm405, %v402, %v364
    %vm407 = vcmp.lt.s32.totalorder %v404, %v365
    %v408 = vsel %vm407, %v404, %v365
    %vm409 = vcmp.lt.s32.totalorder %v406, %v366
    %v410 = vsel %vm409, %v406, %v366
    %vm411 = vcmp.lt.s32.totalorder %v408, %v410
    %v412 = vsel %vm411, %v408, %v410
    %v413 = vrot.slane %v412, 4
    %vm414 = vcmp.lt.s32.totalorder %v412, %v413
    %v415 = vsel %vm414, %v412, %v413
    %v416 = vrot.slane %v415, 2
    %vm417 = vcmp.lt.s32.totalorder %v415, %v416
    %v418 = vsel %vm417, %v415, %v416
    %v419 = vrot.slane %v418, 1
    %vm420 = vcmp.lt.s32.totalorder %v418, %v419
    %v421 = vsel %vm420, %v418, %v419
    %vm422 = vcmp.lt.s32.totalorder %v367, %v369
    %v423 = vsel %vm422, %v367, %v369
    %vm424 = vcmp.lt.s32.totalorder %v368, %v370
    %v425 = vsel %vm424, %v368, %v370
    %vm426 = vcmp.lt.s32.totalorder %v423, %v371
    %v427 = vsel %vm426, %v423, %v371
    %vm428 = vcmp.lt.s32.totalorder %v425, %v372
    %v429 = vsel %vm428, %v425, %v372
    %vm430 = vcmp.lt.s32.totalorder %v427, %v373
    %v431 = vsel %vm430, %v427, %v373
    %vm432 = vcmp.lt.s32.totalorder %v429, %v374
    %v433 = vsel %vm432, %v429, %v374
    %vm434 = vcmp.lt.s32.totalorder %v431, %v375
    %v435 = vsel %vm434, %v431, %v375
    %vm436 = vcmp.lt.s32.totalorder %v433, %v376
    %v437 = vsel %vm436, %v433, %v376
    %vm438 = vcmp.lt.s32.totalorder %v435, %v377
    %v439 = vsel %vm438, %v435, %v377
    %vm440 = vcmp.lt.s32.totalorder %v437, %v378
    %v441 = vsel %vm440, %v437, %v378
    %vm442 = vcmp.lt.s32.totalorder %v439, %v379
    %v443 = vsel %vm442, %v439, %v379
    %vm444 = vcmp.lt.s32.totalorder %v441, %v380
    %v445 = vsel %vm444, %v441, %v380
    %vm446 = vcmp.lt.s32.totalorder %v443, %v381
    %v447 = vsel %vm446, %v443, %v381
    %vm448 = vcmp.lt.s32.totalorder %v445, %v382
    %v449 = vsel %vm448, %v445, %v382
    %vm450 = vcmp.lt.s32.totalorder %v447, %v449
    %v451 = vsel %vm450, %v447, %v449
    %v452 = vrot.slane %v451, 4
    %vm453 = vcmp.lt.s32.totalorder %v451, %v452
    %v454 = vsel %vm453, %v451, %v452
    %v455 = vrot.slane %v454, 2
    %vm456 = vcmp.lt.s32.totalorder %v454, %v455
    %v457 = vsel %vm456, %v454, %v455
    %v458 = vrot.slane %v457, 1
    %vm459 = vcmp.lt.s32.totalorder %v457, %v458
    %v460 = vsel %vm459, %v457, %v458
    %vm461 = vcmp.gt.s32.totalorder %v23, 0
    %v462 = vsel %vm461, 1, 0
    %463 = vset.pattern.permute.xlu0 1
    %464 = vperm.xlu0 %463, %v462
    %v465 = vpop.permute.xlu0 %464
    %vm466 = vcmp.eq.s32.totalorder %v465, 1
    %v469 = vsel %vm50, %v301, %v280
    %v471 = vsel %vm466, %v469, %v53
    %v472 = vlaneseq
    %v473 = vshrl.u32 %v472, 7
    %v474 = vsub.s32 0, %v473
    %v475 = vrot.slane %v471, %v474
    %477 = vbcast.lane.b32.xlu0 %v475, 256
    %v478 = vpop.permute.xlu0 %477
    %s480 = sor.u32 256, 8
    %481 = vbcast.lane.b32.xlu0 %v475, %s480
    %v482 = vpop.permute.xlu0 %481
    %s484 = sor.u32 256, 16
    %485 = vbcast.lane.b32.xlu0 %v475, %s484
    %v486 = vpop.permute.xlu0 %485
    %s488 = sor.u32 256, 24
    %489 = vbcast.lane.b32.xlu0 %v475, %s488
    %v490 = vpop.permute.xlu0 %489
    %s492 = sor.u32 256, 32
    %493 = vbcast.lane.b32.xlu0 %v475, %s492
    %v494 = vpop.permute.xlu0 %493
    %s496 = sor.u32 256, 40
    %497 = vbcast.lane.b32.xlu0 %v475, %s496
    %v498 = vpop.permute.xlu0 %497
    %s500 = sor.u32 256, 48
    %501 = vbcast.lane.b32.xlu0 %v475, %s500
    %v502 = vpop.permute.xlu0 %501
    %s504 = sor.u32 256, 56
    %505 = vbcast.lane.b32.xlu0 %v475, %s504
    %v506 = vpop.permute.xlu0 %505
    %s508 = sor.u32 256, 64
    %509 = vbcast.lane.b32.xlu0 %v475, %s508
    %v510 = vpop.permute.xlu0 %509
    %s512 = sor.u32 256, 72
    %513 = vbcast.lane.b32.xlu0 %v475, %s512
    %v514 = vpop.permute.xlu0 %513
    %s516 = sor.u32 256, 80
    %517 = vbcast.lane.b32.xlu0 %v475, %s516
    %v518 = vpop.permute.xlu0 %517
    %s520 = sor.u32 256, 88
    %521 = vbcast.lane.b32.xlu0 %v475, %s520
    %v522 = vpop.permute.xlu0 %521
    %s524 = sor.u32 256, 96
    %525 = vbcast.lane.b32.xlu0 %v475, %s524
    %v526 = vpop.permute.xlu0 %525
    %s528 = sor.u32 256, 104
    %529 = vbcast.lane.b32.xlu0 %v475, %s528
    %v530 = vpop.permute.xlu0 %529
    %s532 = sor.u32 256, 112
    %533 = vbcast.lane.b32.xlu0 %v475, %s532
    %v534 = vpop.permute.xlu0 %533
    %s536 = sor.u32 256, 120
    %537 = vbcast.lane.b32.xlu0 %v475, %s536
    %v538 = vpop.permute.xlu0 %537
    %v539 = vlaneseq
    %v540 = vshrl.u32 %v539, 7
    %v541 = vsub.s32 1, %v540
    %v542 = vrot.slane %v471, %v541
    %544 = vbcast.lane.b32.xlu0 %v542, 256
    %v545 = vpop.permute.xlu0 %544
    %s547 = sor.u32 256, 8
    %548 = vbcast.lane.b32.xlu0 %v542, %s547
    %v549 = vpop.permute.xlu0 %548
    %s551 = sor.u32 256, 16
    %552 = vbcast.lane.b32.xlu0 %v542, %s551
    %v553 = vpop.permute.xlu0 %552
    %s555 = sor.u32 256, 24
    %556 = vbcast.lane.b32.xlu0 %v542, %s555
    %v557 = vpop.permute.xlu0 %556
    %s559 = sor.u32 256, 32
    %560 = vbcast.lane.b32.xlu0 %v542, %s559
    %v561 = vpop.permute.xlu0 %560
    %s563 = sor.u32 256, 40
    %564 = vbcast.lane.b32.xlu0 %v542, %s563
    %v565 = vpop.permute.xlu0 %564
    %s567 = sor.u32 256, 48
    %568 = vbcast.lane.b32.xlu0 %v542, %s567
    %v569 = vpop.permute.xlu0 %568
    %s571 = sor.u32 256, 56
    %572 = vbcast.lane.b32.xlu0 %v542, %s571
    %v573 = vpop.permute.xlu0 %572
    %s575 = sor.u32 256, 64
    %576 = vbcast.lane.b32.xlu0 %v542, %s575
    %v577 = vpop.permute.xlu0 %576
    %s579 = sor.u32 256, 72
    %580 = vbcast.lane.b32.xlu0 %v542, %s579
    %v581 = vpop.permute.xlu0 %580
    %s583 = sor.u32 256, 80
    %584 = vbcast.lane.b32.xlu0 %v542, %s583
    %v585 = vpop.permute.xlu0 %584
    %s587 = sor.u32 256, 88
    %588 = vbcast.lane.b32.xlu0 %v542, %s587
    %v589 = vpop.permute.xlu0 %588
    %s591 = sor.u32 256, 96
    %592 = vbcast.lane.b32.xlu0 %v542, %s591
    %v593 = vpop.permute.xlu0 %592
    %s595 = sor.u32 256, 104
    %596 = vbcast.lane.b32.xlu0 %v542, %s595
    %v597 = vpop.permute.xlu0 %596
    %s599 = sor.u32 256, 112
    %600 = vbcast.lane.b32.xlu0 %v542, %s599
    %v601 = vpop.permute.xlu0 %600
    %s603 = sor.u32 256, 120
    %604 = vbcast.lane.b32.xlu0 %v542, %s603
    %v605 = vpop.permute.xlu0 %604
    %v606 = vadd.f32 %v478, %v24
    %v607 = vadd.f32 %v482, %v25
    %v608 = vadd.f32 %v486, %v26
    %v609 = vadd.f32 %v490, %v27
    %v610 = vadd.f32 %v494, %v28
    %v611 = vadd.f32 %v498, %v29
    %v612 = vadd.f32 %v502, %v30
    %v613 = vadd.f32 %v506, %v31
    %v614 = vadd.f32 %v510, %v32
    %v615 = vadd.f32 %v514, %v33
    %v616 = vadd.f32 %v518, %v34
    %v617 = vadd.f32 %v522, %v35
    %v618 = vadd.f32 %v526, %v36
    %v619 = vadd.f32 %v530, %v37
    %v620 = vadd.f32 %v534, %v38
    %v621 = vadd.f32 %v538, %v39
    %v622 = vadd.f32 %v545, %v24
    %v623 = vadd.f32 %v549, %v25
    %v624 = vadd.f32 %v553, %v26
    %v625 = vadd.f32 %v557, %v27
    %v626 = vadd.f32 %v561, %v28
    %v627 = vadd.f32 %v565, %v29
    %v628 = vadd.f32 %v569, %v30
    %v629 = vadd.f32 %v573, %v31
    %v630 = vadd.f32 %v577, %v32
    %v631 = vadd.f32 %v581, %v33
    %v632 = vadd.f32 %v585, %v34
    %v633 = vadd.f32 %v589, %v35
    %v634 = vadd.f32 %v593, %v36
    %v635 = vadd.f32 %v597, %v37
    %v636 = vadd.f32 %v601, %v38
    %v637 = vadd.f32 %v605, %v39
    %v638 = vlaneseq
    %v639 = vshrl.u32 %v638, 7
    %v640 = vsub.s32 2, %v639
    %v641 = vrot.slane %v21, %v640
    %v642 = vlaneseq
    %v643 = vshrl.u32 %v642, 7
    %v644 = vsub.s32 2, %v643
    %v645 = vrot.slane %v22, %v644
    %v646 = vadd.f32 %v606, %v641
    %v647 = vadd.f32 %v607, %v641
    %v648 = vadd.f32 %v608, %v641
    %v649 = vadd.f32 %v609, %v641
    %v650 = vadd.f32 %v610, %v641
    %v651 = vadd.f32 %v611, %v641
    %v652 = vadd.f32 %v612, %v641
    %v653 = vadd.f32 %v613, %v641
    %v654 = vadd.f32 %v614, %v641
    %v655 = vadd.f32 %v615, %v641
    %v656 = vadd.f32 %v616, %v641
    %v657 = vadd.f32 %v617, %v641
    %v658 = vadd.f32 %v618, %v641
    %v659 = vadd.f32 %v619, %v641
    %v660 = vadd.f32 %v620, %v641
    %v661 = vadd.f32 %v621, %v641
    %v662 = vadd.f32 %v622, %v645
    %v663 = vadd.f32 %v623, %v645
    %v664 = vadd.f32 %v624, %v645
    %v665 = vadd.f32 %v625, %v645
    %v666 = vadd.f32 %v626, %v645
    %v667 = vadd.f32 %v627, %v645
    %v668 = vadd.f32 %v628, %v645
    %v669 = vadd.f32 %v629, %v645
    %v670 = vadd.f32 %v630, %v645
    %v671 = vadd.f32 %v631, %v645
    %v672 = vadd.f32 %v632, %v645
    %v673 = vadd.f32 %v633, %v645
    %v674 = vadd.f32 %v634, %v645
    %v675 = vadd.f32 %v635, %v645
    %v676 = vadd.f32 %v636, %v645
    %v677 = vadd.f32 %v637, %v645
    %v678 = vmax.f32 %v646, %v648
    %v679 = vmax.f32 %v647, %v649
    %v680 = vmax.f32 %v678, %v650
    %v681 = vmax.f32 %v679, %v651
    %v682 = vmax.f32 %v680, %v652
    %v683 = vmax.f32 %v681, %v653
    %v684 = vmax.f32 %v682, %v654
    %v685 = vmax.f32 %v683, %v655
    %v686 = vmax.f32 %v684, %v656
    %v687 = vmax.f32 %v685, %v657
    %v688 = vmax.f32 %v686, %v658
    %v689 = vmax.f32 %v687, %v659
    %v690 = vmax.f32 %v688, %v660
    %v691 = vmax.f32 %v689, %v661
    %v692 = vmax.f32 %v690, %v691
    %v693 = vrot.slane %v692, 4
    %v694 = vmax.f32 %v692, %v693
    %v695 = vrot.slane %v694, 2
    %v696 = vmax.f32 %v694, %v695
    %v697 = vrot.slane %v696, 1
    %v698 = vmax.f32 %v696, %v697
    %v699 = vmax.f32 %v662, %v664
    %v700 = vmax.f32 %v663, %v665
    %v701 = vmax.f32 %v699, %v666
    %v702 = vmax.f32 %v700, %v667
    %v703 = vmax.f32 %v701, %v668
    %v704 = vmax.f32 %v702, %v669
    %v705 = vmax.f32 %v703, %v670
    %v706 = vmax.f32 %v704, %v671
    %v707 = vmax.f32 %v705, %v672
    %v708 = vmax.f32 %v706, %v673
    %v709 = vmax.f32 %v707, %v674
    %v710 = vmax.f32 %v708, %v675
    %v711 = vmax.f32 %v709, %v676
    %v712 = vmax.f32 %v710, %v677
    %v713 = vmax.f32 %v711, %v712
    %v714 = vrot.slane %v713, 4
    %v715 = vmax.f32 %v713, %v714
    %v716 = vrot.slane %v715, 2
    %v717 = vmax.f32 %v715, %v716
    %v718 = vrot.slane %v717, 1
    %v719 = vmax.f32 %v717, %v718
    %vm720 = vcmp.eq.f32.partialorder %v646, %v698
    %vm721 = vcmp.eq.f32.partialorder %v647, %v698
    %vm722 = vcmp.eq.f32.partialorder %v648, %v698
    %vm723 = vcmp.eq.f32.partialorder %v649, %v698
    %vm724 = vcmp.eq.f32.partialorder %v650, %v698
    %vm725 = vcmp.eq.f32.partialorder %v651, %v698
    %vm726 = vcmp.eq.f32.partialorder %v652, %v698
    %vm727 = vcmp.eq.f32.partialorder %v653, %v698
    %vm728 = vcmp.eq.f32.partialorder %v654, %v698
    %vm729 = vcmp.eq.f32.partialorder %v655, %v698
    %vm730 = vcmp.eq.f32.partialorder %v656, %v698
    %vm731 = vcmp.eq.f32.partialorder %v657, %v698
    %vm732 = vcmp.eq.f32.partialorder %v658, %v698
    %vm733 = vcmp.eq.f32.partialorder %v659, %v698
    %vm734 = vcmp.eq.f32.partialorder %v660, %v698
    %vm735 = vcmp.eq.f32.partialorder %v661, %v698
    %vm736 = vcmp.eq.f32.partialorder %v662, %v719
    %vm737 = vcmp.eq.f32.partialorder %v663, %v719
    %vm738 = vcmp.eq.f32.partialorder %v664, %v719
    %vm739 = vcmp.eq.f32.partialorder %v665, %v719
    %vm740 = vcmp.eq.f32.partialorder %v666, %v719
    %vm741 = vcmp.eq.f32.partialorder %v667, %v719
    %vm742 = vcmp.eq.f32.partialorder %v668, %v719
    %vm743 = vcmp.eq.f32.partialorder %v669, %v719
    %vm744 = vcmp.eq.f32.partialorder %v670, %v719
    %vm745 = vcmp.eq.f32.partialorder %v671, %v719
    %vm746 = vcmp.eq.f32.partialorder %v672, %v719
    %vm747 = vcmp.eq.f32.partialorder %v673, %v719
    %vm748 = vcmp.eq.f32.partialorder %v674, %v719
    %vm749 = vcmp.eq.f32.partialorder %v675, %v719
    %vm750 = vcmp.eq.f32.partialorder %v676, %v719
    %vm751 = vcmp.eq.f32.partialorder %v677, %v719
    %v752 = vsel %vm720, %v303, 128
    %v753 = vsel %vm721, %v304, 128
    %v754 = vsel %vm722, %v305, 128
    %v755 = vsel %vm723, %v306, 128
    %v756 = vsel %vm724, %v307, 128
    %v757 = vsel %vm725, %v308, 128
    %v758 = vsel %vm726, %v309, 128
    %v759 = vsel %vm727, %v310, 128
    %v760 = vsel %vm728, %v311, 128
    %v761 = vsel %vm729, %v312, 128
    %v762 = vsel %vm730, %v313, 128
    %v763 = vsel %vm731, %v314, 128
    %v764 = vsel %vm732, %v315, 128
    %v765 = vsel %vm733, %v316, 128
    %v766 = vsel %vm734, %v317, 128
    %v767 = vsel %vm735, %v318, 128
    %v768 = vsel %vm736, %v303, 128
    %v769 = vsel %vm737, %v304, 128
    %v770 = vsel %vm738, %v305, 128
    %v771 = vsel %vm739, %v306, 128
    %v772 = vsel %vm740, %v307, 128
    %v773 = vsel %vm741, %v308, 128
    %v774 = vsel %vm742, %v309, 128
    %v775 = vsel %vm743, %v310, 128
    %v776 = vsel %vm744, %v311, 128
    %v777 = vsel %vm745, %v312, 128
    %v778 = vsel %vm746, %v313, 128
    %v779 = vsel %vm747, %v314, 128
    %v780 = vsel %vm748, %v315, 128
    %v781 = vsel %vm749, %v316, 128
    %v782 = vsel %vm750, %v317, 128
    %v783 = vsel %vm751, %v318, 128
    %vm784 = vcmp.lt.s32.totalorder %v752, %v754
    %v785 = vsel %vm784, %v752, %v754
    %vm786 = vcmp.lt.s32.totalorder %v753, %v755
    %v787 = vsel %vm786, %v753, %v755
    %vm788 = vcmp.lt.s32.totalorder %v785, %v756
    %v789 = vsel %vm788, %v785, %v756
    %vm790 = vcmp.lt.s32.totalorder %v787, %v757
    %v791 = vsel %vm790, %v787, %v757
    %vm792 = vcmp.lt.s32.totalorder %v789, %v758
    %v793 = vsel %vm792, %v789, %v758
    %vm794 = vcmp.lt.s32.totalorder %v791, %v759
    %v795 = vsel %vm794, %v791, %v759
    %vm796 = vcmp.lt.s32.totalorder %v793, %v760
    %v797 = vsel %vm796, %v793, %v760
    %vm798 = vcmp.lt.s32.totalorder %v795, %v761
    %v799 = vsel %vm798, %v795, %v761
    %vm800 = vcmp.lt.s32.totalorder %v797, %v762
    %v801 = vsel %vm800, %v797, %v762
    %vm802 = vcmp.lt.s32.totalorder %v799, %v763
    %v803 = vsel %vm802, %v799, %v763
    %vm804 = vcmp.lt.s32.totalorder %v801, %v764
    %v805 = vsel %vm804, %v801, %v764
    %vm806 = vcmp.lt.s32.totalorder %v803, %v765
    %v807 = vsel %vm806, %v803, %v765
    %vm808 = vcmp.lt.s32.totalorder %v805, %v766
    %v809 = vsel %vm808, %v805, %v766
    %vm810 = vcmp.lt.s32.totalorder %v807, %v767
    %v811 = vsel %vm810, %v807, %v767
    %vm812 = vcmp.lt.s32.totalorder %v809, %v811
    %v813 = vsel %vm812, %v809, %v811
    %v814 = vrot.slane %v813, 4
    %vm815 = vcmp.lt.s32.totalorder %v813, %v814
    %v816 = vsel %vm815, %v813, %v814
    %v817 = vrot.slane %v816, 2
    %vm818 = vcmp.lt.s32.totalorder %v816, %v817
    %v819 = vsel %vm818, %v816, %v817
    %v820 = vrot.slane %v819, 1
    %vm821 = vcmp.lt.s32.totalorder %v819, %v820
    %v822 = vsel %vm821, %v819, %v820
    %vm823 = vcmp.lt.s32.totalorder %v768, %v770
    %v824 = vsel %vm823, %v768, %v770
    %vm825 = vcmp.lt.s32.totalorder %v769, %v771
    %v826 = vsel %vm825, %v769, %v771
    %vm827 = vcmp.lt.s32.totalorder %v824, %v772
    %v828 = vsel %vm827, %v824, %v772
    %vm829 = vcmp.lt.s32.totalorder %v826, %v773
    %v830 = vsel %vm829, %v826, %v773
    %vm831 = vcmp.lt.s32.totalorder %v828, %v774
    %v832 = vsel %vm831, %v828, %v774
    %vm833 = vcmp.lt.s32.totalorder %v830, %v775
    %v834 = vsel %vm833, %v830, %v775
    %vm835 = vcmp.lt.s32.totalorder %v832, %v776
    %v836 = vsel %vm835, %v832, %v776
    %vm837 = vcmp.lt.s32.totalorder %v834, %v777
    %v838 = vsel %vm837, %v834, %v777
    %vm839 = vcmp.lt.s32.totalorder %v836, %v778
    %v840 = vsel %vm839, %v836, %v778
    %vm841 = vcmp.lt.s32.totalorder %v838, %v779
    %v842 = vsel %vm841, %v838, %v779
    %vm843 = vcmp.lt.s32.totalorder %v840, %v780
    %v844 = vsel %vm843, %v840, %v780
    %vm845 = vcmp.lt.s32.totalorder %v842, %v781
    %v846 = vsel %vm845, %v842, %v781
    %vm847 = vcmp.lt.s32.totalorder %v844, %v782
    %v848 = vsel %vm847, %v844, %v782
    %vm849 = vcmp.lt.s32.totalorder %v846, %v783
    %v850 = vsel %vm849, %v846, %v783
    %vm851 = vcmp.lt.s32.totalorder %v848, %v850
    %v852 = vsel %vm851, %v848, %v850
    %v853 = vrot.slane %v852, 4
    %vm854 = vcmp.lt.s32.totalorder %v852, %v853
    %v855 = vsel %vm854, %v852, %v853
    %v856 = vrot.slane %v855, 2
    %vm857 = vcmp.lt.s32.totalorder %v855, %v856
    %v858 = vsel %vm857, %v855, %v856
    %v859 = vrot.slane %v858, 1
    %vm860 = vcmp.lt.s32.totalorder %v858, %v859
    %v861 = vsel %vm860, %v858, %v859
    %862 = vset.pattern.permute.xlu0 2
    %863 = vperm.xlu0 %862, %v462
    %v864 = vpop.permute.xlu0 %863
    %vm865 = vcmp.eq.s32.totalorder %v864, 1
    %v868 = vsel %vm50, %v719, %v698
    %v870 = vsel %vm865, %v868, %v471
    %v871 = vlaneseq
    %v872 = vshrl.u32 %v871, 7
    %v873 = vsub.s32 0, %v872
    %v874 = vrot.slane %v870, %v873
    %876 = vbcast.lane.b32.xlu0 %v874, 256
    %v877 = vpop.permute.xlu0 %876
    %s879 = sor.u32 256, 8
    %880 = vbcast.lane.b32.xlu0 %v874, %s879
    %v881 = vpop.permute.xlu0 %880
    %s883 = sor.u32 256, 16
    %884 = vbcast.lane.b32.xlu0 %v874, %s883
    %v885 = vpop.permute.xlu0 %884
    %s887 = sor.u32 256, 24
    %888 = vbcast.lane.b32.xlu0 %v874, %s887
    %v889 = vpop.permute.xlu0 %888
    %s891 = sor.u32 256, 32
    %892 = vbcast.lane.b32.xlu0 %v874, %s891
    %v893 = vpop.permute.xlu0 %892
    %s895 = sor.u32 256, 40
    %896 = vbcast.lane.b32.xlu0 %v874, %s895
    %v897 = vpop.permute.xlu0 %896
    %s899 = sor.u32 256, 48
    %900 = vbcast.lane.b32.xlu0 %v874, %s899
    %v901 = vpop.permute.xlu0 %900
    %s903 = sor.u32 256, 56
    %904 = vbcast.lane.b32.xlu0 %v874, %s903
    %v905 = vpop.permute.xlu0 %904
    %s907 = sor.u32 256, 64
    %908 = vbcast.lane.b32.xlu0 %v874, %s907
    %v909 = vpop.permute.xlu0 %908
    %s911 = sor.u32 256, 72
    %912 = vbcast.lane.b32.xlu0 %v874, %s911
    %v913 = vpop.permute.xlu0 %912
    %s915 = sor.u32 256, 80
    %916 = vbcast.lane.b32.xlu0 %v874, %s915
    %v917 = vpop.permute.xlu0 %916
    %s919 = sor.u32 256, 88
    %920 = vbcast.lane.b32.xlu0 %v874, %s919
    %v921 = vpop.permute.xlu0 %920
    %s923 = sor.u32 256, 96
    %924 = vbcast.lane.b32.xlu0 %v874, %s923
    %v925 = vpop.permute.xlu0 %924
    %s927 = sor.u32 256, 104
    %928 = vbcast.lane.b32.xlu0 %v874, %s927
    %v929 = vpop.permute.xlu0 %928
    %s931 = sor.u32 256, 112
    %932 = vbcast.lane.b32.xlu0 %v874, %s931
    %v933 = vpop.permute.xlu0 %932
    %s935 = sor.u32 256, 120
    %936 = vbcast.lane.b32.xlu0 %v874, %s935
    %v937 = vpop.permute.xlu0 %936
    %v938 = vlaneseq
    %v939 = vshrl.u32 %v938, 7
    %v940 = vsub.s32 1, %v939
    %v941 = vrot.slane %v870, %v940
    %943 = vbcast.lane.b32.xlu0 %v941, 256
    %v944 = vpop.permute.xlu0 %943
    %s946 = sor.u32 256, 8
    %947 = vbcast.lane.b32.xlu0 %v941, %s946
    %v948 = vpop.permute.xlu0 %947
    %s950 = sor.u32 256, 16
    %951 = vbcast.lane.b32.xlu0 %v941, %s950
    %v952 = vpop.permute.xlu0 %951
    %s954 = sor.u32 256, 24
    %955 = vbcast.lane.b32.xlu0 %v941, %s954
    %v956 = vpop.permute.xlu0 %955
    %s958 = sor.u32 256, 32
    %959 = vbcast.lane.b32.xlu0 %v941, %s958
    %v960 = vpop.permute.xlu0 %959
    %s962 = sor.u32 256, 40
    %963 = vbcast.lane.b32.xlu0 %v941, %s962
    %v964 = vpop.permute.xlu0 %963
    %s966 = sor.u32 256, 48
    %967 = vbcast.lane.b32.xlu0 %v941, %s966
    %v968 = vpop.permute.xlu0 %967
    %s970 = sor.u32 256, 56
    %971 = vbcast.lane.b32.xlu0 %v941, %s970
    %v972 = vpop.permute.xlu0 %971
    %s974 = sor.u32 256, 64
    %975 = vbcast.lane.b32.xlu0 %v941, %s974
    %v976 = vpop.permute.xlu0 %975
    %s978 = sor.u32 256, 72
    %979 = vbcast.lane.b32.xlu0 %v941, %s978
    %v980 = vpop.permute.xlu0 %979
    %s982 = sor.u32 256, 80
    %983 = vbcast.lane.b32.xlu0 %v941, %s982
    %v984 = vpop.permute.xlu0 %983
    %s986 = sor.u32 256, 88
    %987 = vbcast.lane.b32.xlu0 %v941, %s986
    %v988 = vpop.permute.xlu0 %987
    %s990 = sor.u32 256, 96
    %991 = vbcast.lane.b32.xlu0 %v941, %s990
    %v992 = vpop.permute.xlu0 %991
    %s994 = sor.u32 256, 104
    %995 = vbcast.lane.b32.xlu0 %v941, %s994
    %v996 = vpop.permute.xlu0 %995
    %s998 = sor.u32 256, 112
    %999 = vbcast.lane.b32.xlu0 %v941, %s998
    %v1000 = vpop.permute.xlu0 %999
    %s1002 = sor.u32 256, 120
    %1003 = vbcast.lane.b32.xlu0 %v941, %s1002
    %v1004 = vpop.permute.xlu0 %1003
    %v1005 = vadd.f32 %v877, %v24
    %v1006 = vadd.f32 %v881, %v25
    %v1007 = vadd.f32 %v885, %v26
    %v1008 = vadd.f32 %v889, %v27
    %v1009 = vadd.f32 %v893, %v28
    %v1010 = vadd.f32 %v897, %v29
    %v1011 = vadd.f32 %v901, %v30
    %v1012 = vadd.f32 %v905, %v31
    %v1013 = vadd.f32 %v909, %v32
    %v1014 = vadd.f32 %v913, %v33
    %v1015 = vadd.f32 %v917, %v34
    %v1016 = vadd.f32 %v921, %v35
    %v1017 = vadd.f32 %v925, %v36
    %v1018 = vadd.f32 %v929, %v37
    %v1019 = vadd.f32 %v933, %v38
    %v1020 = vadd.f32 %v937, %v39
    %v1021 = vadd.f32 %v944, %v24
    %v1022 = vadd.f32 %v948, %v25
    %v1023 = vadd.f32 %v952, %v26
    %v1024 = vadd.f32 %v956, %v27
    %v1025 = vadd.f32 %v960, %v28
    %v1026 = vadd.f32 %v964, %v29
    %v1027 = vadd.f32 %v968, %v30
    %v1028 = vadd.f32 %v972, %v31
    %v1029 = vadd.f32 %v976, %v32
    %v1030 = vadd.f32 %v980, %v33
    %v1031 = vadd.f32 %v984, %v34
    %v1032 = vadd.f32 %v988, %v35
    %v1033 = vadd.f32 %v992, %v36
    %v1034 = vadd.f32 %v996, %v37
    %v1035 = vadd.f32 %v1000, %v38
    %v1036 = vadd.f32 %v1004, %v39
    %v1037 = vlaneseq
    %v1038 = vshrl.u32 %v1037, 7
    %v1039 = vsub.s32 3, %v1038
    %v1040 = vrot.slane %v21, %v1039
    %v1041 = vlaneseq
    %v1042 = vshrl.u32 %v1041, 7
    %v1043 = vsub.s32 3, %v1042
    %v1044 = vrot.slane %v22, %v1043
    %v1045 = vadd.f32 %v1005, %v1040
    %v1046 = vadd.f32 %v1006, %v1040
    %v1047 = vadd.f32 %v1007, %v1040
    %v1048 = vadd.f32 %v1008, %v1040
    %v1049 = vadd.f32 %v1009, %v1040
    %v1050 = vadd.f32 %v1010, %v1040
    %v1051 = vadd.f32 %v1011, %v1040
    %v1052 = vadd.f32 %v1012, %v1040
    %v1053 = vadd.f32 %v1013, %v1040
    %v1054 = vadd.f32 %v1014, %v1040
    %v1055 = vadd.f32 %v1015, %v1040
    %v1056 = vadd.f32 %v1016, %v1040
    %v1057 = vadd.f32 %v1017, %v1040
    %v1058 = vadd.f32 %v1018, %v1040
    %v1059 = vadd.f32 %v1019, %v1040
    %v1060 = vadd.f32 %v1020, %v1040
    %v1061 = vadd.f32 %v1021, %v1044
    %v1062 = vadd.f32 %v1022, %v1044
    %v1063 = vadd.f32 %v1023, %v1044
    %v1064 = vadd.f32 %v1024, %v1044
    %v1065 = vadd.f32 %v1025, %v1044
    %v1066 = vadd.f32 %v1026, %v1044
    %v1067 = vadd.f32 %v1027, %v1044
    %v1068 = vadd.f32 %v1028, %v1044
    %v1069 = vadd.f32 %v1029, %v1044
    %v1070 = vadd.f32 %v1030, %v1044
    %v1071 = vadd.f32 %v1031, %v1044
    %v1072 = vadd.f32 %v1032, %v1044
    %v1073 = vadd.f32 %v1033, %v1044
    %v1074 = vadd.f32 %v1034, %v1044
    %v1075 = vadd.f32 %v1035, %v1044
    %v1076 = vadd.f32 %v1036, %v1044
    %v1077 = vmax.f32 %v1045, %v1047
    %v1078 = vmax.f32 %v1046, %v1048
    %v1079 = vmax.f32 %v1077, %v1049
    %v1080 = vmax.f32 %v1078, %v1050
    %v1081 = vmax.f32 %v1079, %v1051
    %v1082 = vmax.f32 %v1080, %v1052
    %v1083 = vmax.f32 %v1081, %v1053
    %v1084 = vmax.f32 %v1082, %v1054
    %v1085 = vmax.f32 %v1083, %v1055
    %v1086 = vmax.f32 %v1084, %v1056
    %v1087 = vmax.f32 %v1085, %v1057
    %v1088 = vmax.f32 %v1086, %v1058
    %v1089 = vmax.f32 %v1087, %v1059
    %v1090 = vmax.f32 %v1088, %v1060
    %v1091 = vmax.f32 %v1089, %v1090
    %v1092 = vrot.slane %v1091, 4
    %v1093 = vmax.f32 %v1091, %v1092
    %v1094 = vrot.slane %v1093, 2
    %v1095 = vmax.f32 %v1093, %v1094
    %v1096 = vrot.slane %v1095, 1
    %v1097 = vmax.f32 %v1095, %v1096
    %v1098 = vmax.f32 %v1061, %v1063
    %v1099 = vmax.f32 %v1062, %v1064
    %v1100 = vmax.f32 %v1098, %v1065
    %v1101 = vmax.f32 %v1099, %v1066
    %v1102 = vmax.f32 %v1100, %v1067
    %v1103 = vmax.f32 %v1101, %v1068
    %v1104 = vmax.f32 %v1102, %v1069
    %v1105 = vmax.f32 %v1103, %v1070
    %v1106 = vmax.f32 %v1104, %v1071
    %v1107 = vmax.f32 %v1105, %v1072
    %v1108 = vmax.f32 %v1106, %v1073
    %v1109 = vmax.f32 %v1107, %v1074
    %v1110 = vmax.f32 %v1108, %v1075
    %v1111 = vmax.f32 %v1109, %v1076
    %v1112 = vmax.f32 %v1110, %v1111
    %v1113 = vrot.slane %v1112, 4
    %v1114 = vmax.f32 %v1112, %v1113
    %v1115 = vrot.slane %v1114, 2
    %v1116 = vmax.f32 %v1114, %v1115
    %v1117 = vrot.slane %v1116, 1
    %v1118 = vmax.f32 %v1116, %v1117
    %vm1119 = vcmp.eq.f32.partialorder %v1045, %v1097
    %vm1120 = vcmp.eq.f32.partialorder %v1046, %v1097
    %vm1121 = vcmp.eq.f32.partialorder %v1047, %v1097
    %vm1122 = vcmp.eq.f32.partialorder %v1048, %v1097
    %vm1123 = vcmp.eq.f32.partialorder %v1049, %v1097
    %vm1124 = vcmp.eq.f32.partialorder %v1050, %v1097
    %vm1125 = vcmp.eq.f32.partialorder %v1051, %v1097
    %vm1126 = vcmp.eq.f32.partialorder %v1052, %v1097
    %vm1127 = vcmp.eq.f32.partialorder %v1053, %v1097
    %vm1128 = vcmp.eq.f32.partialorder %v1054, %v1097
    %vm1129 = vcmp.eq.f32.partialorder %v1055, %v1097
    %vm1130 = vcmp.eq.f32.partialorder %v1056, %v1097
    %vm1131 = vcmp.eq.f32.partialorder %v1057, %v1097
    %vm1132 = vcmp.eq.f32.partialorder %v1058, %v1097
    %vm1133 = vcmp.eq.f32.partialorder %v1059, %v1097
    %vm1134 = vcmp.eq.f32.partialorder %v1060, %v1097
    %vm1135 = vcmp.eq.f32.partialorder %v1061, %v1118
    %vm1136 = vcmp.eq.f32.partialorder %v1062, %v1118
    %vm1137 = vcmp.eq.f32.partialorder %v1063, %v1118
    %vm1138 = vcmp.eq.f32.partialorder %v1064, %v1118
    %vm1139 = vcmp.eq.f32.partialorder %v1065, %v1118
    %vm1140 = vcmp.eq.f32.partialorder %v1066, %v1118
    %vm1141 = vcmp.eq.f32.partialorder %v1067, %v1118
    %vm1142 = vcmp.eq.f32.partialorder %v1068, %v1118
    %vm1143 = vcmp.eq.f32.partialorder %v1069, %v1118
    %vm1144 = vcmp.eq.f32.partialorder %v1070, %v1118
    %vm1145 = vcmp.eq.f32.partialorder %v1071, %v1118
    %vm1146 = vcmp.eq.f32.partialorder %v1072, %v1118
    %vm1147 = vcmp.eq.f32.partialorder %v1073, %v1118
    %vm1148 = vcmp.eq.f32.partialorder %v1074, %v1118
    %vm1149 = vcmp.eq.f32.partialorder %v1075, %v1118
    %vm1150 = vcmp.eq.f32.partialorder %v1076, %v1118
    %v1151 = vsel %vm1119, %v303, 128
    %v1152 = vsel %vm1120, %v304, 128
    %v1153 = vsel %vm1121, %v305, 128
    %v1154 = vsel %vm1122, %v306, 128
    %v1155 = vsel %vm1123, %v307, 128
    %v1156 = vsel %vm1124, %v308, 128
    %v1157 = vsel %vm1125, %v309, 128
    %v1158 = vsel %vm1126, %v310, 128
    %v1159 = vsel %vm1127, %v311, 128
    %v1160 = vsel %vm1128, %v312, 128
    %v1161 = vsel %vm1129, %v313, 128
    %v1162 = vsel %vm1130, %v314, 128
    %v1163 = vsel %vm1131, %v315, 128
    %v1164 = vsel %vm1132, %v316, 128
    %v1165 = vsel %vm1133, %v317, 128
    %v1166 = vsel %vm1134, %v318, 128
    %v1167 = vsel %vm1135, %v303, 128
    %v1168 = vsel %vm1136, %v304, 128
    %v1169 = vsel %vm1137, %v305, 128
    %v1170 = vsel %vm1138, %v306, 128
    %v1171 = vsel %vm1139, %v307, 128
    %v1172 = vsel %vm1140, %v308, 128
    %v1173 = vsel %vm1141, %v309, 128
    %v1174 = vsel %vm1142, %v310, 128
    %v1175 = vsel %vm1143, %v311, 128
    %v1176 = vsel %vm1144, %v312, 128
    %v1177 = vsel %vm1145, %v313, 128
    %v1178 = vsel %vm1146, %v314, 128
    %v1179 = vsel %vm1147, %v315, 128
    %v1180 = vsel %vm1148, %v316, 128
    %v1181 = vsel %vm1149, %v317, 128
    %v1182 = vsel %vm1150, %v318, 128
    %vm1183 = vcmp.lt.s32.totalorder %v1151, %v1153
    %v1184 = vsel %vm1183, %v1151, %v1153
    %vm1185 = vcmp.lt.s32.totalorder %v1152, %v1154
    %v1186 = vsel %vm1185, %v1152, %v1154
    %vm1187 = vcmp.lt.s32.totalorder %v1184, %v1155
    %v1188 = vsel %vm1187, %v1184, %v1155
    %vm1189 = vcmp.lt.s32.totalorder %v1186, %v1156
    %v1190 = vsel %vm1189, %v1186, %v1156
    %vm1191 = vcmp.lt.s32.totalorder %v1188, %v1157
    %v1192 = vsel %vm1191, %v1188, %v1157
    %vm1193 = vcmp.lt.s32.totalorder %v1190, %v1158
    %v1194 = vsel %vm1193, %v1190, %v1158
    %vm1195 = vcmp.lt.s32.totalorder %v1192, %v1159
    %v1196 = vsel %vm1195, %v1192, %v1159
    %vm1197 = vcmp.lt.s32.totalorder %v1194, %v1160
    %v1198 = vsel %vm1197, %v1194, %v1160
    %vm1199 = vcmp.lt.s32.totalorder %v1196, %v1161
    %v1200 = vsel %vm1199, %v1196, %v1161
    %vm1201 = vcmp.lt.s32.totalorder %v1198, %v1162
    %v1202 = vsel %vm1201, %v1198, %v1162
    %vm1203 = vcmp.lt.s32.totalorder %v1200, %v1163
    %v1204 = vsel %vm1203, %v1200, %v1163
    %vm1205 = vcmp.lt.s32.totalorder %v1202, %v1164
    %v1206 = vsel %vm1205, %v1202, %v1164
    %vm1207 = vcmp.lt.s32.totalorder %v1204, %v1165
    %v1208 = vsel %vm1207, %v1204, %v1165
    %vm1209 = vcmp.lt.s32.totalorder %v1206, %v1166
    %v1210 = vsel %vm1209, %v1206, %v1166
    %vm1211 = vcmp.lt.s32.totalorder %v1208, %v1210
    %v1212 = vsel %vm1211, %v1208, %v1210
    %v1213 = vrot.slane %v1212, 4
    %vm1214 = vcmp.lt.s32.totalorder %v1212, %v1213
    %v1215 = vsel %vm1214, %v1212, %v1213
    %v1216 = vrot.slane %v1215, 2
    %vm1217 = vcmp.lt.s32.totalorder %v1215, %v1216
    %v1218 = vsel %vm1217, %v1215, %v1216
    %v1219 = vrot.slane %v1218, 1
    %vm1220 = vcmp.lt.s32.totalorder %v1218, %v1219
    %v1221 = vsel %vm1220, %v1218, %v1219
    %vm1222 = vcmp.lt.s32.totalorder %v1167, %v1169
    %v1223 = vsel %vm1222, %v1167, %v1169
    %vm1224 = vcmp.lt.s32.totalorder %v1168, %v1170
    %v1225 = vsel %vm1224, %v1168, %v1170
    %vm1226 = vcmp.lt.s32.totalorder %v1223, %v1171
    %v1227 = vsel %vm1226, %v1223, %v1171
    %vm1228 = vcmp.lt.s32.totalorder %v1225, %v1172
    %v1229 = vsel %vm1228, %v1225, %v1172
    %vm1230 = vcmp.lt.s32.totalorder %v1227, %v1173
    %v1231 = vsel %vm1230, %v1227, %v1173
    %vm1232 = vcmp.lt.s32.totalorder %v1229, %v1174
    %v1233 = vsel %vm1232, %v1229, %v1174
    %vm1234 = vcmp.lt.s32.totalorder %v1231, %v1175
    %v1235 = vsel %vm1234, %v1231, %v1175
    %vm1236 = vcmp.lt.s32.totalorder %v1233, %v1176
    %v1237 = vsel %vm1236, %v1233, %v1176
    %vm1238 = vcmp.lt.s32.totalorder %v1235, %v1177
    %v1239 = vsel %vm1238, %v1235, %v1177
    %vm1240 = vcmp.lt.s32.totalorder %v1237, %v1178
    %v1241 = vsel %vm1240, %v1237, %v1178
    %vm1242 = vcmp.lt.s32.totalorder %v1239, %v1179
    %v1243 = vsel %vm1242, %v1239, %v1179
    %vm1244 = vcmp.lt.s32.totalorder %v1241, %v1180
    %v1245 = vsel %vm1244, %v1241, %v1180
    %vm1246 = vcmp.lt.s32.totalorder %v1243, %v1181
    %v1247 = vsel %vm1246, %v1243, %v1181
    %vm1248 = vcmp.lt.s32.totalorder %v1245, %v1182
    %v1249 = vsel %vm1248, %v1245, %v1182
    %vm1250 = vcmp.lt.s32.totalorder %v1247, %v1249
    %v1251 = vsel %vm1250, %v1247, %v1249
    %v1252 = vrot.slane %v1251, 4
    %vm1253 = vcmp.lt.s32.totalorder %v1251, %v1252
    %v1254 = vsel %vm1253, %v1251, %v1252
    %v1255 = vrot.slane %v1254, 2
    %vm1256 = vcmp.lt.s32.totalorder %v1254, %v1255
    %v1257 = vsel %vm1256, %v1254, %v1255
    %v1258 = vrot.slane %v1257, 1
    %vm1259 = vcmp.lt.s32.totalorder %v1257, %v1258
    %v1260 = vsel %vm1259, %v1257, %v1258
    %1261 = vset.pattern.permute.xlu0 3
    %1262 = vperm.xlu0 %1261, %v462
    %v1263 = vpop.permute.xlu0 %1262
    %vm1264 = vcmp.eq.s32.totalorder %v1263, 1
    %v1267 = vsel %vm50, %v1118, %v1097
    %v1269 = vsel %vm1264, %v1267, %v870
    %v1270 = vlaneseq
    %v1271 = vshrl.u32 %v1270, 7
    %v1272 = vsub.s32 0, %v1271
    %v1273 = vrot.slane %v1269, %v1272
    %1275 = vbcast.lane.b32.xlu0 %v1273, 256
    %v1276 = vpop.permute.xlu0 %1275
    %s1278 = sor.u32 256, 8
    %1279 = vbcast.lane.b32.xlu0 %v1273, %s1278
    %v1280 = vpop.permute.xlu0 %1279
    %s1282 = sor.u32 256, 16
    %1283 = vbcast.lane.b32.xlu0 %v1273, %s1282
    %v1284 = vpop.permute.xlu0 %1283
    %s1286 = sor.u32 256, 24
    %1287 = vbcast.lane.b32.xlu0 %v1273, %s1286
    %v1288 = vpop.permute.xlu0 %1287
    %s1290 = sor.u32 256, 32
    %1291 = vbcast.lane.b32.xlu0 %v1273, %s1290
    %v1292 = vpop.permute.xlu0 %1291
    %s1294 = sor.u32 256, 40
    %1295 = vbcast.lane.b32.xlu0 %v1273, %s1294
    %v1296 = vpop.permute.xlu0 %1295
    %s1298 = sor.u32 256, 48
    %1299 = vbcast.lane.b32.xlu0 %v1273, %s1298
    %v1300 = vpop.permute.xlu0 %1299
    %s1302 = sor.u32 256, 56
    %1303 = vbcast.lane.b32.xlu0 %v1273, %s1302
    %v1304 = vpop.permute.xlu0 %1303
    %s1306 = sor.u32 256, 64
    %1307 = vbcast.lane.b32.xlu0 %v1273, %s1306
    %v1308 = vpop.permute.xlu0 %1307
    %s1310 = sor.u32 256, 72
    %1311 = vbcast.lane.b32.xlu0 %v1273, %s1310
    %v1312 = vpop.permute.xlu0 %1311
    %s1314 = sor.u32 256, 80
    %1315 = vbcast.lane.b32.xlu0 %v1273, %s1314
    %v1316 = vpop.permute.xlu0 %1315
    %s1318 = sor.u32 256, 88
    %1319 = vbcast.lane.b32.xlu0 %v1273, %s1318
    %v1320 = vpop.permute.xlu0 %1319
    %s1322 = sor.u32 256, 96
    %1323 = vbcast.lane.b32.xlu0 %v1273, %s1322
    %v1324 = vpop.permute.xlu0 %1323
    %s1326 = sor.u32 256, 104
    %1327 = vbcast.lane.b32.xlu0 %v1273, %s1326
    %v1328 = vpop.permute.xlu0 %1327
    %s1330 = sor.u32 256, 112
    %1331 = vbcast.lane.b32.xlu0 %v1273, %s1330
    %v1332 = vpop.permute.xlu0 %1331
    %s1334 = sor.u32 256, 120
    %1335 = vbcast.lane.b32.xlu0 %v1273, %s1334
    %v1336 = vpop.permute.xlu0 %1335
    %v1337 = vlaneseq
    %v1338 = vshrl.u32 %v1337, 7
    %v1339 = vsub.s32 1, %v1338
    %v1340 = vrot.slane %v1269, %v1339
    %1342 = vbcast.lane.b32.xlu0 %v1340, 256
    %v1343 = vpop.permute.xlu0 %1342
    %s1345 = sor.u32 256, 8
    %1346 = vbcast.lane.b32.xlu0 %v1340, %s1345
    %v1347 = vpop.permute.xlu0 %1346
    %s1349 = sor.u32 256, 16
    %1350 = vbcast.lane.b32.xlu0 %v1340, %s1349
    %v1351 = vpop.permute.xlu0 %1350
    %s1353 = sor.u32 256, 24
    %1354 = vbcast.lane.b32.xlu0 %v1340, %s1353
    %v1355 = vpop.permute.xlu0 %1354
    %s1357 = sor.u32 256, 32
    %1358 = vbcast.lane.b32.xlu0 %v1340, %s1357
    %v1359 = vpop.permute.xlu0 %1358
    %s1361 = sor.u32 256, 40
    %1362 = vbcast.lane.b32.xlu0 %v1340, %s1361
    %v1363 = vpop.permute.xlu0 %1362
    %s1365 = sor.u32 256, 48
    %1366 = vbcast.lane.b32.xlu0 %v1340, %s1365
    %v1367 = vpop.permute.xlu0 %1366
    %s1369 = sor.u32 256, 56
    %1370 = vbcast.lane.b32.xlu0 %v1340, %s1369
    %v1371 = vpop.permute.xlu0 %1370
    %s1373 = sor.u32 256, 64
    %1374 = vbcast.lane.b32.xlu0 %v1340, %s1373
    %v1375 = vpop.permute.xlu0 %1374
    %s1377 = sor.u32 256, 72
    %1378 = vbcast.lane.b32.xlu0 %v1340, %s1377
    %v1379 = vpop.permute.xlu0 %1378
    %s1381 = sor.u32 256, 80
    %1382 = vbcast.lane.b32.xlu0 %v1340, %s1381
    %v1383 = vpop.permute.xlu0 %1382
    %s1385 = sor.u32 256, 88
    %1386 = vbcast.lane.b32.xlu0 %v1340, %s1385
    %v1387 = vpop.permute.xlu0 %1386
    %s1389 = sor.u32 256, 96
    %1390 = vbcast.lane.b32.xlu0 %v1340, %s1389
    %v1391 = vpop.permute.xlu0 %1390
    %s1393 = sor.u32 256, 104
    %1394 = vbcast.lane.b32.xlu0 %v1340, %s1393
    %v1395 = vpop.permute.xlu0 %1394
    %s1397 = sor.u32 256, 112
    %1398 = vbcast.lane.b32.xlu0 %v1340, %s1397
    %v1399 = vpop.permute.xlu0 %1398
    %s1401 = sor.u32 256, 120
    %1402 = vbcast.lane.b32.xlu0 %v1340, %s1401
    %v1403 = vpop.permute.xlu0 %1402
    %v1404 = vadd.f32 %v1276, %v24
    %v1405 = vadd.f32 %v1280, %v25
    %v1406 = vadd.f32 %v1284, %v26
    %v1407 = vadd.f32 %v1288, %v27
    %v1408 = vadd.f32 %v1292, %v28
    %v1409 = vadd.f32 %v1296, %v29
    %v1410 = vadd.f32 %v1300, %v30
    %v1411 = vadd.f32 %v1304, %v31
    %v1412 = vadd.f32 %v1308, %v32
    %v1413 = vadd.f32 %v1312, %v33
    %v1414 = vadd.f32 %v1316, %v34
    %v1415 = vadd.f32 %v1320, %v35
    %v1416 = vadd.f32 %v1324, %v36
    %v1417 = vadd.f32 %v1328, %v37
    %v1418 = vadd.f32 %v1332, %v38
    %v1419 = vadd.f32 %v1336, %v39
    %v1420 = vadd.f32 %v1343, %v24
    %v1421 = vadd.f32 %v1347, %v25
    %v1422 = vadd.f32 %v1351, %v26
    %v1423 = vadd.f32 %v1355, %v27
    %v1424 = vadd.f32 %v1359, %v28
    %v1425 = vadd.f32 %v1363, %v29
    %v1426 = vadd.f32 %v1367, %v30
    %v1427 = vadd.f32 %v1371, %v31
    %v1428 = vadd.f32 %v1375, %v32
    %v1429 = vadd.f32 %v1379, %v33
    %v1430 = vadd.f32 %v1383, %v34
    %v1431 = vadd.f32 %v1387, %v35
    %v1432 = vadd.f32 %v1391, %v36
    %v1433 = vadd.f32 %v1395, %v37
    %v1434 = vadd.f32 %v1399, %v38
    %v1435 = vadd.f32 %v1403, %v39
    %v1436 = vlaneseq
    %v1437 = vshrl.u32 %v1436, 7
    %v1438 = vsub.s32 4, %v1437
    %v1439 = vrot.slane %v21, %v1438
    %v1440 = vlaneseq
    %v1441 = vshrl.u32 %v1440, 7
    %v1442 = vsub.s32 4, %v1441
    %v1443 = vrot.slane %v22, %v1442
    %v1444 = vadd.f32 %v1404, %v1439
    %v1445 = vadd.f32 %v1405, %v1439
    %v1446 = vadd.f32 %v1406, %v1439
    %v1447 = vadd.f32 %v1407, %v1439
    %v1448 = vadd.f32 %v1408, %v1439
    %v1449 = vadd.f32 %v1409, %v1439
    %v1450 = vadd.f32 %v1410, %v1439
    %v1451 = vadd.f32 %v1411, %v1439
    %v1452 = vadd.f32 %v1412, %v1439
    %v1453 = vadd.f32 %v1413, %v1439
    %v1454 = vadd.f32 %v1414, %v1439
    %v1455 = vadd.f32 %v1415, %v1439
    %v1456 = vadd.f32 %v1416, %v1439
    %v1457 = vadd.f32 %v1417, %v1439
    %v1458 = vadd.f32 %v1418, %v1439
    %v1459 = vadd.f32 %v1419, %v1439
    %v1460 = vadd.f32 %v1420, %v1443
    %v1461 = vadd.f32 %v1421, %v1443
    %v1462 = vadd.f32 %v1422, %v1443
    %v1463 = vadd.f32 %v1423, %v1443
    %v1464 = vadd.f32 %v1424, %v1443
    %v1465 = vadd.f32 %v1425, %v1443
    %v1466 = vadd.f32 %v1426, %v1443
    %v1467 = vadd.f32 %v1427, %v1443
    %v1468 = vadd.f32 %v1428, %v1443
    %v1469 = vadd.f32 %v1429, %v1443
    %v1470 = vadd.f32 %v1430, %v1443
    %v1471 = vadd.f32 %v1431, %v1443
    %v1472 = vadd.f32 %v1432, %v1443
    %v1473 = vadd.f32 %v1433, %v1443
    %v1474 = vadd.f32 %v1434, %v1443
    %v1475 = vadd.f32 %v1435, %v1443
    %v1476 = vmax.f32 %v1444, %v1446
    %v1477 = vmax.f32 %v1445, %v1447
    %v1478 = vmax.f32 %v1476, %v1448
    %v1479 = vmax.f32 %v1477, %v1449
    %v1480 = vmax.f32 %v1478, %v1450
    %v1481 = vmax.f32 %v1479, %v1451
    %v1482 = vmax.f32 %v1480, %v1452
    %v1483 = vmax.f32 %v1481, %v1453
    %v1484 = vmax.f32 %v1482, %v1454
    %v1485 = vmax.f32 %v1483, %v1455
    %v1486 = vmax.f32 %v1484, %v1456
    %v1487 = vmax.f32 %v1485, %v1457
    %v1488 = vmax.f32 %v1486, %v1458
    %v1489 = vmax.f32 %v1487, %v1459
    %v1490 = vmax.f32 %v1488, %v1489
    %v1491 = vrot.slane %v1490, 4
    %v1492 = vmax.f32 %v1490, %v1491
    %v1493 = vrot.slane %v1492, 2
    %v1494 = vmax.f32 %v1492, %v1493
    %v1495 = vrot.slane %v1494, 1
    %v1496 = vmax.f32 %v1494, %v1495
    %v1497 = vmax.f32 %v1460, %v1462
    %v1498 = vmax.f32 %v1461, %v1463
    %v1499 = vmax.f32 %v1497, %v1464
    %v1500 = vmax.f32 %v1498, %v1465
    %v1501 = vmax.f32 %v1499, %v1466
    %v1502 = vmax.f32 %v1500, %v1467
    %v1503 = vmax.f32 %v1501, %v1468
    %v1504 = vmax.f32 %v1502, %v1469
    %v1505 = vmax.f32 %v1503, %v1470
    %v1506 = vmax.f32 %v1504, %v1471
    %v1507 = vmax.f32 %v1505, %v1472
    %v1508 = vmax.f32 %v1506, %v1473
    %v1509 = vmax.f32 %v1507, %v1474
    %v1510 = vmax.f32 %v1508, %v1475
    %v1511 = vmax.f32 %v1509, %v1510
    %v1512 = vrot.slane %v1511, 4
    %v1513 = vmax.f32 %v1511, %v1512
    %v1514 = vrot.slane %v1513, 2
    %v1515 = vmax.f32 %v1513, %v1514
    %v1516 = vrot.slane %v1515, 1
    %v1517 = vmax.f32 %v1515, %v1516
    %vm1518 = vcmp.eq.f32.partialorder %v1444, %v1496
    %vm1519 = vcmp.eq.f32.partialorder %v1445, %v1496
    %vm1520 = vcmp.eq.f32.partialorder %v1446, %v1496
    %vm1521 = vcmp.eq.f32.partialorder %v1447, %v1496
    %vm1522 = vcmp.eq.f32.partialorder %v1448, %v1496
    %vm1523 = vcmp.eq.f32.partialorder %v1449, %v1496
    %vm1524 = vcmp.eq.f32.partialorder %v1450, %v1496
    %vm1525 = vcmp.eq.f32.partialorder %v1451, %v1496
    %vm1526 = vcmp.eq.f32.partialorder %v1452, %v1496
    %vm1527 = vcmp.eq.f32.partialorder %v1453, %v1496
    %vm1528 = vcmp.eq.f32.partialorder %v1454, %v1496
    %vm1529 = vcmp.eq.f32.partialorder %v1455, %v1496
    %vm1530 = vcmp.eq.f32.partialorder %v1456, %v1496
    %vm1531 = vcmp.eq.f32.partialorder %v1457, %v1496
    %vm1532 = vcmp.eq.f32.partialorder %v1458, %v1496
    %vm1533 = vcmp.eq.f32.partialorder %v1459, %v1496
    %vm1534 = vcmp.eq.f32.partialorder %v1460, %v1517
    %vm1535 = vcmp.eq.f32.partialorder %v1461, %v1517
    %vm1536 = vcmp.eq.f32.partialorder %v1462, %v1517
    %vm1537 = vcmp.eq.f32.partialorder %v1463, %v1517
    %vm1538 = vcmp.eq.f32.partialorder %v1464, %v1517
    %vm1539 = vcmp.eq.f32.partialorder %v1465, %v1517
    %vm1540 = vcmp.eq.f32.partialorder %v1466, %v1517
    %vm1541 = vcmp.eq.f32.partialorder %v1467, %v1517
    %vm1542 = vcmp.eq.f32.partialorder %v1468, %v1517
    %vm1543 = vcmp.eq.f32.partialorder %v1469, %v1517
    %vm1544 = vcmp.eq.f32.partialorder %v1470, %v1517
    %vm1545 = vcmp.eq.f32.partialorder %v1471, %v1517
    %vm1546 = vcmp.eq.f32.partialorder %v1472, %v1517
    %vm1547 = vcmp.eq.f32.partialorder %v1473, %v1517
    %vm1548 = vcmp.eq.f32.partialorder %v1474, %v1517
    %vm1549 = vcmp.eq.f32.partialorder %v1475, %v1517
    %v1550 = vsel %vm1518, %v303, 128
    %v1551 = vsel %vm1519, %v304, 128
    %v1552 = vsel %vm1520, %v305, 128
    %v1553 = vsel %vm1521, %v306, 128
    %v1554 = vsel %vm1522, %v307, 128
    %v1555 = vsel %vm1523, %v308, 128
    %v1556 = vsel %vm1524, %v309, 128
    %v1557 = vsel %vm1525, %v310, 128
    %v1558 = vsel %vm1526, %v311, 128
    %v1559 = vsel %vm1527, %v312, 128
    %v1560 = vsel %vm1528, %v313, 128
    %v1561 = vsel %vm1529, %v314, 128
    %v1562 = vsel %vm1530, %v315, 128
    %v1563 = vsel %vm1531, %v316, 128
    %v1564 = vsel %vm1532, %v317, 128
    %v1565 = vsel %vm1533, %v318, 128
    %v1566 = vsel %vm1534, %v303, 128
    %v1567 = vsel %vm1535, %v304, 128
    %v1568 = vsel %vm1536, %v305, 128
    %v1569 = vsel %vm1537, %v306, 128
    %v1570 = vsel %vm1538, %v307, 128
    %v1571 = vsel %vm1539, %v308, 128
    %v1572 = vsel %vm1540, %v309, 128
    %v1573 = vsel %vm1541, %v310, 128
    %v1574 = vsel %vm1542, %v311, 128
    %v1575 = vsel %vm1543, %v312, 128
    %v1576 = vsel %vm1544, %v313, 128
    %v1577 = vsel %vm1545, %v314, 128
    %v1578 = vsel %vm1546, %v315, 128
    %v1579 = vsel %vm1547, %v316, 128
    %v1580 = vsel %vm1548, %v317, 128
    %v1581 = vsel %vm1549, %v318, 128
    %vm1582 = vcmp.lt.s32.totalorder %v1550, %v1552
    %v1583 = vsel %vm1582, %v1550, %v1552
    %vm1584 = vcmp.lt.s32.totalorder %v1551, %v1553
    %v1585 = vsel %vm1584, %v1551, %v1553
    %vm1586 = vcmp.lt.s32.totalorder %v1583, %v1554
    %v1587 = vsel %vm1586, %v1583, %v1554
    %vm1588 = vcmp.lt.s32.totalorder %v1585, %v1555
    %v1589 = vsel %vm1588, %v1585, %v1555
    %vm1590 = vcmp.lt.s32.totalorder %v1587, %v1556
    %v1591 = vsel %vm1590, %v1587, %v1556
    %vm1592 = vcmp.lt.s32.totalorder %v1589, %v1557
    %v1593 = vsel %vm1592, %v1589, %v1557
    %vm1594 = vcmp.lt.s32.totalorder %v1591, %v1558
    %v1595 = vsel %vm1594, %v1591, %v1558
    %vm1596 = vcmp.lt.s32.totalorder %v1593, %v1559
    %v1597 = vsel %vm1596, %v1593, %v1559
    %vm1598 = vcmp.lt.s32.totalorder %v1595, %v1560
    %v1599 = vsel %vm1598, %v1595, %v1560
    %vm1600 = vcmp.lt.s32.totalorder %v1597, %v1561
    %v1601 = vsel %vm1600, %v1597, %v1561
    %vm1602 = vcmp.lt.s32.totalorder %v1599, %v1562
    %v1603 = vsel %vm1602, %v1599, %v1562
    %vm1604 = vcmp.lt.s32.totalorder %v1601, %v1563
    %v1605 = vsel %vm1604, %v1601, %v1563
    %vm1606 = vcmp.lt.s32.totalorder %v1603, %v1564
    %v1607 = vsel %vm1606, %v1603, %v1564
    %vm1608 = vcmp.lt.s32.totalorder %v1605, %v1565
    %v1609 = vsel %vm1608, %v1605, %v1565
    %vm1610 = vcmp.lt.s32.totalorder %v1607, %v1609
    %v1611 = vsel %vm1610, %v1607, %v1609
    %v1612 = vrot.slane %v1611, 4
    %vm1613 = vcmp.lt.s32.totalorder %v1611, %v1612
    %v1614 = vsel %vm1613, %v1611, %v1612
    %v1615 = vrot.slane %v1614, 2
    %vm1616 = vcmp.lt.s32.totalorder %v1614, %v1615
    %v1617 = vsel %vm1616, %v1614, %v1615
    %v1618 = vrot.slane %v1617, 1
    %vm1619 = vcmp.lt.s32.totalorder %v1617, %v1618
    %v1620 = vsel %vm1619, %v1617, %v1618
    %vm1621 = vcmp.lt.s32.totalorder %v1566, %v1568
    %v1622 = vsel %vm1621, %v1566, %v1568
    %vm1623 = vcmp.lt.s32.totalorder %v1567, %v1569
    %v1624 = vsel %vm1623, %v1567, %v1569
    %vm1625 = vcmp.lt.s32.totalorder %v1622, %v1570
    %v1626 = vsel %vm1625, %v1622, %v1570
    %vm1627 = vcmp.lt.s32.totalorder %v1624, %v1571
    %v1628 = vsel %vm1627, %v1624, %v1571
    %vm1629 = vcmp.lt.s32.totalorder %v1626, %v1572
    %v1630 = vsel %vm1629, %v1626, %v1572
    %vm1631 = vcmp.lt.s32.totalorder %v1628, %v1573
    %v1632 = vsel %vm1631, %v1628, %v1573
    %vm1633 = vcmp.lt.s32.totalorder %v1630, %v1574
    %v1634 = vsel %vm1633, %v1630, %v1574
    %vm1635 = vcmp.lt.s32.totalorder %v1632, %v1575
    %v1636 = vsel %vm1635, %v1632, %v1575
    %vm1637 = vcmp.lt.s32.totalorder %v1634, %v1576
    %v1638 = vsel %vm1637, %v1634, %v1576
    %vm1639 = vcmp.lt.s32.totalorder %v1636, %v1577
    %v1640 = vsel %vm1639, %v1636, %v1577
    %vm1641 = vcmp.lt.s32.totalorder %v1638, %v1578
    %v1642 = vsel %vm1641, %v1638, %v1578
    %vm1643 = vcmp.lt.s32.totalorder %v1640, %v1579
    %v1644 = vsel %vm1643, %v1640, %v1579
    %vm1645 = vcmp.lt.s32.totalorder %v1642, %v1580
    %v1646 = vsel %vm1645, %v1642, %v1580
    %vm1647 = vcmp.lt.s32.totalorder %v1644, %v1581
    %v1648 = vsel %vm1647, %v1644, %v1581
    %vm1649 = vcmp.lt.s32.totalorder %v1646, %v1648
    %v1650 = vsel %vm1649, %v1646, %v1648
    %v1651 = vrot.slane %v1650, 4
    %vm1652 = vcmp.lt.s32.totalorder %v1650, %v1651
    %v1653 = vsel %vm1652, %v1650, %v1651
    %v1654 = vrot.slane %v1653, 2
    %vm1655 = vcmp.lt.s32.totalorder %v1653, %v1654
    %v1656 = vsel %vm1655, %v1653, %v1654
    %v1657 = vrot.slane %v1656, 1
    %vm1658 = vcmp.lt.s32.totalorder %v1656, %v1657
    %v1659 = vsel %vm1658, %v1656, %v1657
    %1660 = vset.pattern.permute.xlu0 4
    %1661 = vperm.xlu0 %1660, %v462
    %v1662 = vpop.permute.xlu0 %1661
    %vm1663 = vcmp.eq.s32.totalorder %v1662, 1
    %v1666 = vsel %vm50, %v1517, %v1496
    %v1668 = vsel %vm1663, %v1666, %v1269
    %v1669 = vlaneseq
    %v1670 = vshrl.u32 %v1669, 7
    %v1671 = vsub.s32 0, %v1670
    %v1672 = vrot.slane %v1668, %v1671
    %1674 = vbcast.lane.b32.xlu0 %v1672, 256
    %v1675 = vpop.permute.xlu0 %1674
    %s1677 = sor.u32 256, 8
    %1678 = vbcast.lane.b32.xlu0 %v1672, %s1677
    %v1679 = vpop.permute.xlu0 %1678
    %s1681 = sor.u32 256, 16
    %1682 = vbcast.lane.b32.xlu0 %v1672, %s1681
    %v1683 = vpop.permute.xlu0 %1682
    %s1685 = sor.u32 256, 24
    %1686 = vbcast.lane.b32.xlu0 %v1672, %s1685
    %v1687 = vpop.permute.xlu0 %1686
    %s1689 = sor.u32 256, 32
    %1690 = vbcast.lane.b32.xlu0 %v1672, %s1689
    %v1691 = vpop.permute.xlu0 %1690
    %s1693 = sor.u32 256, 40
    %1694 = vbcast.lane.b32.xlu0 %v1672, %s1693
    %v1695 = vpop.permute.xlu0 %1694
    %s1697 = sor.u32 256, 48
    %1698 = vbcast.lane.b32.xlu0 %v1672, %s1697
    %v1699 = vpop.permute.xlu0 %1698
    %s1701 = sor.u32 256, 56
    %1702 = vbcast.lane.b32.xlu0 %v1672, %s1701
    %v1703 = vpop.permute.xlu0 %1702
    %s1705 = sor.u32 256, 64
    %1706 = vbcast.lane.b32.xlu0 %v1672, %s1705
    %v1707 = vpop.permute.xlu0 %1706
    %s1709 = sor.u32 256, 72
    %1710 = vbcast.lane.b32.xlu0 %v1672, %s1709
    %v1711 = vpop.permute.xlu0 %1710
    %s1713 = sor.u32 256, 80
    %1714 = vbcast.lane.b32.xlu0 %v1672, %s1713
    %v1715 = vpop.permute.xlu0 %1714
    %s1717 = sor.u32 256, 88
    %1718 = vbcast.lane.b32.xlu0 %v1672, %s1717
    %v1719 = vpop.permute.xlu0 %1718
    %s1721 = sor.u32 256, 96
    %1722 = vbcast.lane.b32.xlu0 %v1672, %s1721
    %v1723 = vpop.permute.xlu0 %1722
    %s1725 = sor.u32 256, 104
    %1726 = vbcast.lane.b32.xlu0 %v1672, %s1725
    %v1727 = vpop.permute.xlu0 %1726
    %s1729 = sor.u32 256, 112
    %1730 = vbcast.lane.b32.xlu0 %v1672, %s1729
    %v1731 = vpop.permute.xlu0 %1730
    %s1733 = sor.u32 256, 120
    %1734 = vbcast.lane.b32.xlu0 %v1672, %s1733
    %v1735 = vpop.permute.xlu0 %1734
    %v1736 = vlaneseq
    %v1737 = vshrl.u32 %v1736, 7
    %v1738 = vsub.s32 1, %v1737
    %v1739 = vrot.slane %v1668, %v1738
    %1741 = vbcast.lane.b32.xlu0 %v1739, 256
    %v1742 = vpop.permute.xlu0 %1741
    %s1744 = sor.u32 256, 8
    %1745 = vbcast.lane.b32.xlu0 %v1739, %s1744
    %v1746 = vpop.permute.xlu0 %1745
    %s1748 = sor.u32 256, 16
    %1749 = vbcast.lane.b32.xlu0 %v1739, %s1748
    %v1750 = vpop.permute.xlu0 %1749
    %s1752 = sor.u32 256, 24
    %1753 = vbcast.lane.b32.xlu0 %v1739, %s1752
    %v1754 = vpop.permute.xlu0 %1753
    %s1756 = sor.u32 256, 32
    %1757 = vbcast.lane.b32.xlu0 %v1739, %s1756
    %v1758 = vpop.permute.xlu0 %1757
    %s1760 = sor.u32 256, 40
    %1761 = vbcast.lane.b32.xlu0 %v1739, %s1760
    %v1762 = vpop.permute.xlu0 %1761
    %s1764 = sor.u32 256, 48
    %1765 = vbcast.lane.b32.xlu0 %v1739, %s1764
    %v1766 = vpop.permute.xlu0 %1765
    %s1768 = sor.u32 256, 56
    %1769 = vbcast.lane.b32.xlu0 %v1739, %s1768
    %v1770 = vpop.permute.xlu0 %1769
    %s1772 = sor.u32 256, 64
    %1773 = vbcast.lane.b32.xlu0 %v1739, %s1772
    %v1774 = vpop.permute.xlu0 %1773
    %s1776 = sor.u32 256, 72
    %1777 = vbcast.lane.b32.xlu0 %v1739, %s1776
    %v1778 = vpop.permute.xlu0 %1777
    %s1780 = sor.u32 256, 80
    %1781 = vbcast.lane.b32.xlu0 %v1739, %s1780
    %v1782 = vpop.permute.xlu0 %1781
    %s1784 = sor.u32 256, 88
    %1785 = vbcast.lane.b32.xlu0 %v1739, %s1784
    %v1786 = vpop.permute.xlu0 %1785
    %s1788 = sor.u32 256, 96
    %1789 = vbcast.lane.b32.xlu0 %v1739, %s1788
    %v1790 = vpop.permute.xlu0 %1789
    %s1792 = sor.u32 256, 104
    %1793 = vbcast.lane.b32.xlu0 %v1739, %s1792
    %v1794 = vpop.permute.xlu0 %1793
    %s1796 = sor.u32 256, 112
    %1797 = vbcast.lane.b32.xlu0 %v1739, %s1796
    %v1798 = vpop.permute.xlu0 %1797
    %s1800 = sor.u32 256, 120
    %1801 = vbcast.lane.b32.xlu0 %v1739, %s1800
    %v1802 = vpop.permute.xlu0 %1801
    %v1803 = vadd.f32 %v1675, %v24
    %v1804 = vadd.f32 %v1679, %v25
    %v1805 = vadd.f32 %v1683, %v26
    %v1806 = vadd.f32 %v1687, %v27
    %v1807 = vadd.f32 %v1691, %v28
    %v1808 = vadd.f32 %v1695, %v29
    %v1809 = vadd.f32 %v1699, %v30
    %v1810 = vadd.f32 %v1703, %v31
    %v1811 = vadd.f32 %v1707, %v32
    %v1812 = vadd.f32 %v1711, %v33
    %v1813 = vadd.f32 %v1715, %v34
    %v1814 = vadd.f32 %v1719, %v35
    %v1815 = vadd.f32 %v1723, %v36
    %v1816 = vadd.f32 %v1727, %v37
    %v1817 = vadd.f32 %v1731, %v38
    %v1818 = vadd.f32 %v1735, %v39
    %v1819 = vadd.f32 %v1742, %v24
    %v1820 = vadd.f32 %v1746, %v25
    %v1821 = vadd.f32 %v1750, %v26
    %v1822 = vadd.f32 %v1754, %v27
    %v1823 = vadd.f32 %v1758, %v28
    %v1824 = vadd.f32 %v1762, %v29
    %v1825 = vadd.f32 %v1766, %v30
    %v1826 = vadd.f32 %v1770, %v31
    %v1827 = vadd.f32 %v1774, %v32
    %v1828 = vadd.f32 %v1778, %v33
    %v1829 = vadd.f32 %v1782, %v34
    %v1830 = vadd.f32 %v1786, %v35
    %v1831 = vadd.f32 %v1790, %v36
    %v1832 = vadd.f32 %v1794, %v37
    %v1833 = vadd.f32 %v1798, %v38
    %v1834 = vadd.f32 %v1802, %v39
    %v1835 = vlaneseq
    %v1836 = vshrl.u32 %v1835, 7
    %v1837 = vsub.s32 5, %v1836
    %v1838 = vrot.slane %v21, %v1837
    %v1839 = vlaneseq
    %v1840 = vshrl.u32 %v1839, 7
    %v1841 = vsub.s32 5, %v1840
    %v1842 = vrot.slane %v22, %v1841
    %v1843 = vadd.f32 %v1803, %v1838
    %v1844 = vadd.f32 %v1804, %v1838
    %v1845 = vadd.f32 %v1805, %v1838
    %v1846 = vadd.f32 %v1806, %v1838
    %v1847 = vadd.f32 %v1807, %v1838
    %v1848 = vadd.f32 %v1808, %v1838
    %v1849 = vadd.f32 %v1809, %v1838
    %v1850 = vadd.f32 %v1810, %v1838
    %v1851 = vadd.f32 %v1811, %v1838
    %v1852 = vadd.f32 %v1812, %v1838
    %v1853 = vadd.f32 %v1813, %v1838
    %v1854 = vadd.f32 %v1814, %v1838
    %v1855 = vadd.f32 %v1815, %v1838
    %v1856 = vadd.f32 %v1816, %v1838
    %v1857 = vadd.f32 %v1817, %v1838
    %v1858 = vadd.f32 %v1818, %v1838
    %v1859 = vadd.f32 %v1819, %v1842
    %v1860 = vadd.f32 %v1820, %v1842
    %v1861 = vadd.f32 %v1821, %v1842
    %v1862 = vadd.f32 %v1822, %v1842
    %v1863 = vadd.f32 %v1823, %v1842
    %v1864 = vadd.f32 %v1824, %v1842
    %v1865 = vadd.f32 %v1825, %v1842
    %v1866 = vadd.f32 %v1826, %v1842
    %v1867 = vadd.f32 %v1827, %v1842
    %v1868 = vadd.f32 %v1828, %v1842
    %v1869 = vadd.f32 %v1829, %v1842
    %v1870 = vadd.f32 %v1830, %v1842
    %v1871 = vadd.f32 %v1831, %v1842
    %v1872 = vadd.f32 %v1832, %v1842
    %v1873 = vadd.f32 %v1833, %v1842
    %v1874 = vadd.f32 %v1834, %v1842
    %v1875 = vmax.f32 %v1843, %v1845
    %v1876 = vmax.f32 %v1844, %v1846
    %v1877 = vmax.f32 %v1875, %v1847
    %v1878 = vmax.f32 %v1876, %v1848
    %v1879 = vmax.f32 %v1877, %v1849
    %v1880 = vmax.f32 %v1878, %v1850
    %v1881 = vmax.f32 %v1879, %v1851
    %v1882 = vmax.f32 %v1880, %v1852
    %v1883 = vmax.f32 %v1881, %v1853
    %v1884 = vmax.f32 %v1882, %v1854
    %v1885 = vmax.f32 %v1883, %v1855
    %v1886 = vmax.f32 %v1884, %v1856
    %v1887 = vmax.f32 %v1885, %v1857
    %v1888 = vmax.f32 %v1886, %v1858
    %v1889 = vmax.f32 %v1887, %v1888
    %v1890 = vrot.slane %v1889, 4
    %v1891 = vmax.f32 %v1889, %v1890
    %v1892 = vrot.slane %v1891, 2
    %v1893 = vmax.f32 %v1891, %v1892
    %v1894 = vrot.slane %v1893, 1
    %v1895 = vmax.f32 %v1893, %v1894
    %v1896 = vmax.f32 %v1859, %v1861
    %v1897 = vmax.f32 %v1860, %v1862
    %v1898 = vmax.f32 %v1896, %v1863
    %v1899 = vmax.f32 %v1897, %v1864
    %v1900 = vmax.f32 %v1898, %v1865
    %v1901 = vmax.f32 %v1899, %v1866
    %v1902 = vmax.f32 %v1900, %v1867
    %v1903 = vmax.f32 %v1901, %v1868
    %v1904 = vmax.f32 %v1902, %v1869
    %v1905 = vmax.f32 %v1903, %v1870
    %v1906 = vmax.f32 %v1904, %v1871
    %v1907 = vmax.f32 %v1905, %v1872
    %v1908 = vmax.f32 %v1906, %v1873
    %v1909 = vmax.f32 %v1907, %v1874
    %v1910 = vmax.f32 %v1908, %v1909
    %v1911 = vrot.slane %v1910, 4
    %v1912 = vmax.f32 %v1910, %v1911
    %v1913 = vrot.slane %v1912, 2
    %v1914 = vmax.f32 %v1912, %v1913
    %v1915 = vrot.slane %v1914, 1
    %v1916 = vmax.f32 %v1914, %v1915
    %vm1917 = vcmp.eq.f32.partialorder %v1843, %v1895
    %vm1918 = vcmp.eq.f32.partialorder %v1844, %v1895
    %vm1919 = vcmp.eq.f32.partialorder %v1845, %v1895
    %vm1920 = vcmp.eq.f32.partialorder %v1846, %v1895
    %vm1921 = vcmp.eq.f32.partialorder %v1847, %v1895
    %vm1922 = vcmp.eq.f32.partialorder %v1848, %v1895
    %vm1923 = vcmp.eq.f32.partialorder %v1849, %v1895
    %vm1924 = vcmp.eq.f32.partialorder %v1850, %v1895
    %vm1925 = vcmp.eq.f32.partialorder %v1851, %v1895
    %vm1926 = vcmp.eq.f32.partialorder %v1852, %v1895
    %vm1927 = vcmp.eq.f32.partialorder %v1853, %v1895
    %vm1928 = vcmp.eq.f32.partialorder %v1854, %v1895
    %vm1929 = vcmp.eq.f32.partialorder %v1855, %v1895
    %vm1930 = vcmp.eq.f32.partialorder %v1856, %v1895
    %vm1931 = vcmp.eq.f32.partialorder %v1857, %v1895
    %vm1932 = vcmp.eq.f32.partialorder %v1858, %v1895
    %vm1933 = vcmp.eq.f32.partialorder %v1859, %v1916
    %vm1934 = vcmp.eq.f32.partialorder %v1860, %v1916
    %vm1935 = vcmp.eq.f32.partialorder %v1861, %v1916
    %vm1936 = vcmp.eq.f32.partialorder %v1862, %v1916
    %vm1937 = vcmp.eq.f32.partialorder %v1863, %v1916
    %vm1938 = vcmp.eq.f32.partialorder %v1864, %v1916
    %vm1939 = vcmp.eq.f32.partialorder %v1865, %v1916
    %vm1940 = vcmp.eq.f32.partialorder %v1866, %v1916
    %vm1941 = vcmp.eq.f32.partialorder %v1867, %v1916
    %vm1942 = vcmp.eq.f32.partialorder %v1868, %v1916
    %vm1943 = vcmp.eq.f32.partialorder %v1869, %v1916
    %vm1944 = vcmp.eq.f32.partialorder %v1870, %v1916
    %vm1945 = vcmp.eq.f32.partialorder %v1871, %v1916
    %vm1946 = vcmp.eq.f32.partialorder %v1872, %v1916
    %vm1947 = vcmp.eq.f32.partialorder %v1873, %v1916
    %vm1948 = vcmp.eq.f32.partialorder %v1874, %v1916
    %v1949 = vsel %vm1917, %v303, 128
    %v1950 = vsel %vm1918, %v304, 128
    %v1951 = vsel %vm1919, %v305, 128
    %v1952 = vsel %vm1920, %v306, 128
    %v1953 = vsel %vm1921, %v307, 128
    %v1954 = vsel %vm1922, %v308, 128
    %v1955 = vsel %vm1923, %v309, 128
    %v1956 = vsel %vm1924, %v310, 128
    %v1957 = vsel %vm1925, %v311, 128
    %v1958 = vsel %vm1926, %v312, 128
    %v1959 = vsel %vm1927, %v313, 128
    %v1960 = vsel %vm1928, %v314, 128
    %v1961 = vsel %vm1929, %v315, 128
    %v1962 = vsel %vm1930, %v316, 128
    %v1963 = vsel %vm1931, %v317, 128
    %v1964 = vsel %vm1932, %v318, 128
    %v1965 = vsel %vm1933, %v303, 128
    %v1966 = vsel %vm1934, %v304, 128
    %v1967 = vsel %vm1935, %v305, 128
    %v1968 = vsel %vm1936, %v306, 128
    %v1969 = vsel %vm1937, %v307, 128
    %v1970 = vsel %vm1938, %v308, 128
    %v1971 = vsel %vm1939, %v309, 128
    %v1972 = vsel %vm1940, %v310, 128
    %v1973 = vsel %vm1941, %v311, 128
    %v1974 = vsel %vm1942, %v312, 128
    %v1975 = vsel %vm1943, %v313, 128
    %v1976 = vsel %vm1944, %v314, 128
    %v1977 = vsel %vm1945, %v315, 128
    %v1978 = vsel %vm1946, %v316, 128
    %v1979 = vsel %vm1947, %v317, 128
    %v1980 = vsel %vm1948, %v318, 128
    %vm1981 = vcmp.lt.s32.totalorder %v1949, %v1951
    %v1982 = vsel %vm1981, %v1949, %v1951
    %vm1983 = vcmp.lt.s32.totalorder %v1950, %v1952
    %v1984 = vsel %vm1983, %v1950, %v1952
    %vm1985 = vcmp.lt.s32.totalorder %v1982, %v1953
    %v1986 = vsel %vm1985, %v1982, %v1953
    %vm1987 = vcmp.lt.s32.totalorder %v1984, %v1954
    %v1988 = vsel %vm1987, %v1984, %v1954
    %vm1989 = vcmp.lt.s32.totalorder %v1986, %v1955
    %v1990 = vsel %vm1989, %v1986, %v1955
    %vm1991 = vcmp.lt.s32.totalorder %v1988, %v1956
    %v1992 = vsel %vm1991, %v1988, %v1956
    %vm1993 = vcmp.lt.s32.totalorder %v1990, %v1957
    %v1994 = vsel %vm1993, %v1990, %v1957
    %vm1995 = vcmp.lt.s32.totalorder %v1992, %v1958
    %v1996 = vsel %vm1995, %v1992, %v1958
    %vm1997 = vcmp.lt.s32.totalorder %v1994, %v1959
    %v1998 = vsel %vm1997, %v1994, %v1959
    %vm1999 = vcmp.lt.s32.totalorder %v1996, %v1960
    %v2000 = vsel %vm1999, %v1996, %v1960
    %vm2001 = vcmp.lt.s32.totalorder %v1998, %v1961
    %v2002 = vsel %vm2001, %v1998, %v1961
    %vm2003 = vcmp.lt.s32.totalorder %v2000, %v1962
    %v2004 = vsel %vm2003, %v2000, %v1962
    %vm2005 = vcmp.lt.s32.totalorder %v2002, %v1963
    %v2006 = vsel %vm2005, %v2002, %v1963
    %vm2007 = vcmp.lt.s32.totalorder %v2004, %v1964
    %v2008 = vsel %vm2007, %v2004, %v1964
    %vm2009 = vcmp.lt.s32.totalorder %v2006, %v2008
    %v2010 = vsel %vm2009, %v2006, %v2008
    %v2011 = vrot.slane %v2010, 4
    %vm2012 = vcmp.lt.s32.totalorder %v2010, %v2011
    %v2013 = vsel %vm2012, %v2010, %v2011
    %v2014 = vrot.slane %v2013, 2
    %vm2015 = vcmp.lt.s32.totalorder %v2013, %v2014
    %v2016 = vsel %vm2015, %v2013, %v2014
    %v2017 = vrot.slane %v2016, 1
    %vm2018 = vcmp.lt.s32.totalorder %v2016, %v2017
    %v2019 = vsel %vm2018, %v2016, %v2017
    %vm2020 = vcmp.lt.s32.totalorder %v1965, %v1967
    %v2021 = vsel %vm2020, %v1965, %v1967
    %vm2022 = vcmp.lt.s32.totalorder %v1966, %v1968
    %v2023 = vsel %vm2022, %v1966, %v1968
    %vm2024 = vcmp.lt.s32.totalorder %v2021, %v1969
    %v2025 = vsel %vm2024, %v2021, %v1969
    %vm2026 = vcmp.lt.s32.totalorder %v2023, %v1970
    %v2027 = vsel %vm2026, %v2023, %v1970
    %vm2028 = vcmp.lt.s32.totalorder %v2025, %v1971
    %v2029 = vsel %vm2028, %v2025, %v1971
    %vm2030 = vcmp.lt.s32.totalorder %v2027, %v1972
    %v2031 = vsel %vm2030, %v2027, %v1972
    %vm2032 = vcmp.lt.s32.totalorder %v2029, %v1973
    %v2033 = vsel %vm2032, %v2029, %v1973
    %vm2034 = vcmp.lt.s32.totalorder %v2031, %v1974
    %v2035 = vsel %vm2034, %v2031, %v1974
    %vm2036 = vcmp.lt.s32.totalorder %v2033, %v1975
    %v2037 = vsel %vm2036, %v2033, %v1975
    %vm2038 = vcmp.lt.s32.totalorder %v2035, %v1976
    %v2039 = vsel %vm2038, %v2035, %v1976
    %vm2040 = vcmp.lt.s32.totalorder %v2037, %v1977
    %v2041 = vsel %vm2040, %v2037, %v1977
    %vm2042 = vcmp.lt.s32.totalorder %v2039, %v1978
    %v2043 = vsel %vm2042, %v2039, %v1978
    %vm2044 = vcmp.lt.s32.totalorder %v2041, %v1979
    %v2045 = vsel %vm2044, %v2041, %v1979
    %vm2046 = vcmp.lt.s32.totalorder %v2043, %v1980
    %v2047 = vsel %vm2046, %v2043, %v1980
    %vm2048 = vcmp.lt.s32.totalorder %v2045, %v2047
    %v2049 = vsel %vm2048, %v2045, %v2047
    %v2050 = vrot.slane %v2049, 4
    %vm2051 = vcmp.lt.s32.totalorder %v2049, %v2050
    %v2052 = vsel %vm2051, %v2049, %v2050
    %v2053 = vrot.slane %v2052, 2
    %vm2054 = vcmp.lt.s32.totalorder %v2052, %v2053
    %v2055 = vsel %vm2054, %v2052, %v2053
    %v2056 = vrot.slane %v2055, 1
    %vm2057 = vcmp.lt.s32.totalorder %v2055, %v2056
    %v2058 = vsel %vm2057, %v2055, %v2056
    %2059 = vset.pattern.permute.xlu0 5
    %2060 = vperm.xlu0 %2059, %v462
    %v2061 = vpop.permute.xlu0 %2060
    %vm2062 = vcmp.eq.s32.totalorder %v2061, 1
    %v2065 = vsel %vm50, %v1916, %v1895
    %v2067 = vsel %vm2062, %v2065, %v1668
    %v2068 = vlaneseq
    %v2069 = vshrl.u32 %v2068, 7
    %v2070 = vsub.s32 0, %v2069
    %v2071 = vrot.slane %v2067, %v2070
    %2073 = vbcast.lane.b32.xlu0 %v2071, 256
    %v2074 = vpop.permute.xlu0 %2073
    %s2076 = sor.u32 256, 8
    %2077 = vbcast.lane.b32.xlu0 %v2071, %s2076
    %v2078 = vpop.permute.xlu0 %2077
    %s2080 = sor.u32 256, 16
    %2081 = vbcast.lane.b32.xlu0 %v2071, %s2080
    %v2082 = vpop.permute.xlu0 %2081
    %s2084 = sor.u32 256, 24
    %2085 = vbcast.lane.b32.xlu0 %v2071, %s2084
    %v2086 = vpop.permute.xlu0 %2085
    %s2088 = sor.u32 256, 32
    %2089 = vbcast.lane.b32.xlu0 %v2071, %s2088
    %v2090 = vpop.permute.xlu0 %2089
    %s2092 = sor.u32 256, 40
    %2093 = vbcast.lane.b32.xlu0 %v2071, %s2092
    %v2094 = vpop.permute.xlu0 %2093
    %s2096 = sor.u32 256, 48
    %2097 = vbcast.lane.b32.xlu0 %v2071, %s2096
    %v2098 = vpop.permute.xlu0 %2097
    %s2100 = sor.u32 256, 56
    %2101 = vbcast.lane.b32.xlu0 %v2071, %s2100
    %v2102 = vpop.permute.xlu0 %2101
    %s2104 = sor.u32 256, 64
    %2105 = vbcast.lane.b32.xlu0 %v2071, %s2104
    %v2106 = vpop.permute.xlu0 %2105
    %s2108 = sor.u32 256, 72
    %2109 = vbcast.lane.b32.xlu0 %v2071, %s2108
    %v2110 = vpop.permute.xlu0 %2109
    %s2112 = sor.u32 256, 80
    %2113 = vbcast.lane.b32.xlu0 %v2071, %s2112
    %v2114 = vpop.permute.xlu0 %2113
    %s2116 = sor.u32 256, 88
    %2117 = vbcast.lane.b32.xlu0 %v2071, %s2116
    %v2118 = vpop.permute.xlu0 %2117
    %s2120 = sor.u32 256, 96
    %2121 = vbcast.lane.b32.xlu0 %v2071, %s2120
    %v2122 = vpop.permute.xlu0 %2121
    %s2124 = sor.u32 256, 104
    %2125 = vbcast.lane.b32.xlu0 %v2071, %s2124
    %v2126 = vpop.permute.xlu0 %2125
    %s2128 = sor.u32 256, 112
    %2129 = vbcast.lane.b32.xlu0 %v2071, %s2128
    %v2130 = vpop.permute.xlu0 %2129
    %s2132 = sor.u32 256, 120
    %2133 = vbcast.lane.b32.xlu0 %v2071, %s2132
    %v2134 = vpop.permute.xlu0 %2133
    %v2135 = vlaneseq
    %v2136 = vshrl.u32 %v2135, 7
    %v2137 = vsub.s32 1, %v2136
    %v2138 = vrot.slane %v2067, %v2137
    %2140 = vbcast.lane.b32.xlu0 %v2138, 256
    %v2141 = vpop.permute.xlu0 %2140
    %s2143 = sor.u32 256, 8
    %2144 = vbcast.lane.b32.xlu0 %v2138, %s2143
    %v2145 = vpop.permute.xlu0 %2144
    %s2147 = sor.u32 256, 16
    %2148 = vbcast.lane.b32.xlu0 %v2138, %s2147
    %v2149 = vpop.permute.xlu0 %2148
    %s2151 = sor.u32 256, 24
    %2152 = vbcast.lane.b32.xlu0 %v2138, %s2151
    %v2153 = vpop.permute.xlu0 %2152
    %s2155 = sor.u32 256, 32
    %2156 = vbcast.lane.b32.xlu0 %v2138, %s2155
    %v2157 = vpop.permute.xlu0 %2156
    %s2159 = sor.u32 256, 40
    %2160 = vbcast.lane.b32.xlu0 %v2138, %s2159
    %v2161 = vpop.permute.xlu0 %2160
    %s2163 = sor.u32 256, 48
    %2164 = vbcast.lane.b32.xlu0 %v2138, %s2163
    %v2165 = vpop.permute.xlu0 %2164
    %s2167 = sor.u32 256, 56
    %2168 = vbcast.lane.b32.xlu0 %v2138, %s2167
    %v2169 = vpop.permute.xlu0 %2168
    %s2171 = sor.u32 256, 64
    %2172 = vbcast.lane.b32.xlu0 %v2138, %s2171
    %v2173 = vpop.permute.xlu0 %2172
    %s2175 = sor.u32 256, 72
    %2176 = vbcast.lane.b32.xlu0 %v2138, %s2175
    %v2177 = vpop.permute.xlu0 %2176
    %s2179 = sor.u32 256, 80
    %2180 = vbcast.lane.b32.xlu0 %v2138, %s2179
    %v2181 = vpop.permute.xlu0 %2180
    %s2183 = sor.u32 256, 88
    %2184 = vbcast.lane.b32.xlu0 %v2138, %s2183
    %v2185 = vpop.permute.xlu0 %2184
    %s2187 = sor.u32 256, 96
    %2188 = vbcast.lane.b32.xlu0 %v2138, %s2187
    %v2189 = vpop.permute.xlu0 %2188
    %s2191 = sor.u32 256, 104
    %2192 = vbcast.lane.b32.xlu0 %v2138, %s2191
    %v2193 = vpop.permute.xlu0 %2192
    %s2195 = sor.u32 256, 112
    %2196 = vbcast.lane.b32.xlu0 %v2138, %s2195
    %v2197 = vpop.permute.xlu0 %2196
    %s2199 = sor.u32 256, 120
    %2200 = vbcast.lane.b32.xlu0 %v2138, %s2199
    %v2201 = vpop.permute.xlu0 %2200
    %v2202 = vadd.f32 %v2074, %v24
    %v2203 = vadd.f32 %v2078, %v25
    %v2204 = vadd.f32 %v2082, %v26
    %v2205 = vadd.f32 %v2086, %v27
    %v2206 = vadd.f32 %v2090, %v28
    %v2207 = vadd.f32 %v2094, %v29
    %v2208 = vadd.f32 %v2098, %v30
    %v2209 = vadd.f32 %v2102, %v31
    %v2210 = vadd.f32 %v2106, %v32
    %v2211 = vadd.f32 %v2110, %v33
    %v2212 = vadd.f32 %v2114, %v34
    %v2213 = vadd.f32 %v2118, %v35
    %v2214 = vadd.f32 %v2122, %v36
    %v2215 = vadd.f32 %v2126, %v37
    %v2216 = vadd.f32 %v2130, %v38
    %v2217 = vadd.f32 %v2134, %v39
    %v2218 = vadd.f32 %v2141, %v24
    %v2219 = vadd.f32 %v2145, %v25
    %v2220 = vadd.f32 %v2149, %v26
    %v2221 = vadd.f32 %v2153, %v27
    %v2222 = vadd.f32 %v2157, %v28
    %v2223 = vadd.f32 %v2161, %v29
    %v2224 = vadd.f32 %v2165, %v30
    %v2225 = vadd.f32 %v2169, %v31
    %v2226 = vadd.f32 %v2173, %v32
    %v2227 = vadd.f32 %v2177, %v33
    %v2228 = vadd.f32 %v2181, %v34
    %v2229 = vadd.f32 %v2185, %v35
    %v2230 = vadd.f32 %v2189, %v36
    %v2231 = vadd.f32 %v2193, %v37
    %v2232 = vadd.f32 %v2197, %v38
    %v2233 = vadd.f32 %v2201, %v39
    %v2234 = vlaneseq
    %v2235 = vshrl.u32 %v2234, 7
    %v2236 = vsub.s32 6, %v2235
    %v2237 = vrot.slane %v21, %v2236
    %v2238 = vlaneseq
    %v2239 = vshrl.u32 %v2238, 7
    %v2240 = vsub.s32 6, %v2239
    %v2241 = vrot.slane %v22, %v2240
    %v2242 = vadd.f32 %v2202, %v2237
    %v2243 = vadd.f32 %v2203, %v2237
    %v2244 = vadd.f32 %v2204, %v2237
    %v2245 = vadd.f32 %v2205, %v2237
    %v2246 = vadd.f32 %v2206, %v2237
    %v2247 = vadd.f32 %v2207, %v2237
    %v2248 = vadd.f32 %v2208, %v2237
    %v2249 = vadd.f32 %v2209, %v2237
    %v2250 = vadd.f32 %v2210, %v2237
    %v2251 = vadd.f32 %v2211, %v2237
    %v2252 = vadd.f32 %v2212, %v2237
    %v2253 = vadd.f32 %v2213, %v2237
    %v2254 = vadd.f32 %v2214, %v2237
    %v2255 = vadd.f32 %v2215, %v2237
    %v2256 = vadd.f32 %v2216, %v2237
    %v2257 = vadd.f32 %v2217, %v2237
    %v2258 = vadd.f32 %v2218, %v2241
    %v2259 = vadd.f32 %v2219, %v2241
    %v2260 = vadd.f32 %v2220, %v2241
    %v2261 = vadd.f32 %v2221, %v2241
    %v2262 = vadd.f32 %v2222, %v2241
    %v2263 = vadd.f32 %v2223, %v2241
    %v2264 = vadd.f32 %v2224, %v2241
    %v2265 = vadd.f32 %v2225, %v2241
    %v2266 = vadd.f32 %v2226, %v2241
    %v2267 = vadd.f32 %v2227, %v2241
    %v2268 = vadd.f32 %v2228, %v2241
    %v2269 = vadd.f32 %v2229, %v2241
    %v2270 = vadd.f32 %v2230, %v2241
    %v2271 = vadd.f32 %v2231, %v2241
    %v2272 = vadd.f32 %v2232, %v2241
    %v2273 = vadd.f32 %v2233, %v2241
    %v2274 = vmax.f32 %v2242, %v2244
    %v2275 = vmax.f32 %v2243, %v2245
    %v2276 = vmax.f32 %v2274, %v2246
    %v2277 = vmax.f32 %v2275, %v2247
    %v2278 = vmax.f32 %v2276, %v2248
    %v2279 = vmax.f32 %v2277, %v2249
    %v2280 = vmax.f32 %v2278, %v2250
    %v2281 = vmax.f32 %v2279, %v2251
    %v2282 = vmax.f32 %v2280, %v2252
    %v2283 = vmax.f32 %v2281, %v2253
    %v2284 = vmax.f32 %v2282, %v2254
    %v2285 = vmax.f32 %v2283, %v2255
    %v2286 = vmax.f32 %v2284, %v2256
    %v2287 = vmax.f32 %v2285, %v2257
    %v2288 = vmax.f32 %v2286, %v2287
    %v2289 = vrot.slane %v2288, 4
    %v2290 = vmax.f32 %v2288, %v2289
    %v2291 = vrot.slane %v2290, 2
    %v2292 = vmax.f32 %v2290, %v2291
    %v2293 = vrot.slane %v2292, 1
    %v2294 = vmax.f32 %v2292, %v2293
    %v2295 = vmax.f32 %v2258, %v2260
    %v2296 = vmax.f32 %v2259, %v2261
    %v2297 = vmax.f32 %v2295, %v2262
    %v2298 = vmax.f32 %v2296, %v2263
    %v2299 = vmax.f32 %v2297, %v2264
    %v2300 = vmax.f32 %v2298, %v2265
    %v2301 = vmax.f32 %v2299, %v2266
    %v2302 = vmax.f32 %v2300, %v2267
    %v2303 = vmax.f32 %v2301, %v2268
    %v2304 = vmax.f32 %v2302, %v2269
    %v2305 = vmax.f32 %v2303, %v2270
    %v2306 = vmax.f32 %v2304, %v2271
    %v2307 = vmax.f32 %v2305, %v2272
    %v2308 = vmax.f32 %v2306, %v2273
    %v2309 = vmax.f32 %v2307, %v2308
    %v2310 = vrot.slane %v2309, 4
    %v2311 = vmax.f32 %v2309, %v2310
    %v2312 = vrot.slane %v2311, 2
    %v2313 = vmax.f32 %v2311, %v2312
    %v2314 = vrot.slane %v2313, 1
    %v2315 = vmax.f32 %v2313, %v2314
    %vm2316 = vcmp.eq.f32.partialorder %v2242, %v2294
    %vm2317 = vcmp.eq.f32.partialorder %v2243, %v2294
    %vm2318 = vcmp.eq.f32.partialorder %v2244, %v2294
    %vm2319 = vcmp.eq.f32.partialorder %v2245, %v2294
    %vm2320 = vcmp.eq.f32.partialorder %v2246, %v2294
    %vm2321 = vcmp.eq.f32.partialorder %v2247, %v2294
    %vm2322 = vcmp.eq.f32.partialorder %v2248, %v2294
    %vm2323 = vcmp.eq.f32.partialorder %v2249, %v2294
    %vm2324 = vcmp.eq.f32.partialorder %v2250, %v2294
    %vm2325 = vcmp.eq.f32.partialorder %v2251, %v2294
    %vm2326 = vcmp.eq.f32.partialorder %v2252, %v2294
    %vm2327 = vcmp.eq.f32.partialorder %v2253, %v2294
    %vm2328 = vcmp.eq.f32.partialorder %v2254, %v2294
    %vm2329 = vcmp.eq.f32.partialorder %v2255, %v2294
    %vm2330 = vcmp.eq.f32.partialorder %v2256, %v2294
    %vm2331 = vcmp.eq.f32.partialorder %v2257, %v2294
    %vm2332 = vcmp.eq.f32.partialorder %v2258, %v2315
    %vm2333 = vcmp.eq.f32.partialorder %v2259, %v2315
    %vm2334 = vcmp.eq.f32.partialorder %v2260, %v2315
    %vm2335 = vcmp.eq.f32.partialorder %v2261, %v2315
    %vm2336 = vcmp.eq.f32.partialorder %v2262, %v2315
    %vm2337 = vcmp.eq.f32.partialorder %v2263, %v2315
    %vm2338 = vcmp.eq.f32.partialorder %v2264, %v2315
    %vm2339 = vcmp.eq.f32.partialorder %v2265, %v2315
    %vm2340 = vcmp.eq.f32.partialorder %v2266, %v2315
    %vm2341 = vcmp.eq.f32.partialorder %v2267, %v2315
    %vm2342 = vcmp.eq.f32.partialorder %v2268, %v2315
    %vm2343 = vcmp.eq.f32.partialorder %v2269, %v2315
    %vm2344 = vcmp.eq.f32.partialorder %v2270, %v2315
    %vm2345 = vcmp.eq.f32.partialorder %v2271, %v2315
    %vm2346 = vcmp.eq.f32.partialorder %v2272, %v2315
    %vm2347 = vcmp.eq.f32.partialorder %v2273, %v2315
    %v2348 = vsel %vm2316, %v303, 128
    %v2349 = vsel %vm2317, %v304, 128
    %v2350 = vsel %vm2318, %v305, 128
    %v2351 = vsel %vm2319, %v306, 128
    %v2352 = vsel %vm2320, %v307, 128
    %v2353 = vsel %vm2321, %v308, 128
    %v2354 = vsel %vm2322, %v309, 128
    %v2355 = vsel %vm2323, %v310, 128
    %v2356 = vsel %vm2324, %v311, 128
    %v2357 = vsel %vm2325, %v312, 128
    %v2358 = vsel %vm2326, %v313, 128
    %v2359 = vsel %vm2327, %v314, 128
    %v2360 = vsel %vm2328, %v315, 128
    %v2361 = vsel %vm2329, %v316, 128
    %v2362 = vsel %vm2330, %v317, 128
    %v2363 = vsel %vm2331, %v318, 128
    %v2364 = vsel %vm2332, %v303, 128
    %v2365 = vsel %vm2333, %v304, 128
    %v2366 = vsel %vm2334, %v305, 128
    %v2367 = vsel %vm2335, %v306, 128
    %v2368 = vsel %vm2336, %v307, 128
    %v2369 = vsel %vm2337, %v308, 128
    %v2370 = vsel %vm2338, %v309, 128
    %v2371 = vsel %vm2339, %v310, 128
    %v2372 = vsel %vm2340, %v311, 128
    %v2373 = vsel %vm2341, %v312, 128
    %v2374 = vsel %vm2342, %v313, 128
    %v2375 = vsel %vm2343, %v314, 128
    %v2376 = vsel %vm2344, %v315, 128
    %v2377 = vsel %vm2345, %v316, 128
    %v2378 = vsel %vm2346, %v317, 128
    %v2379 = vsel %vm2347, %v318, 128
    %vm2380 = vcmp.lt.s32.totalorder %v2348, %v2350
    %v2381 = vsel %vm2380, %v2348, %v2350
    %vm2382 = vcmp.lt.s32.totalorder %v2349, %v2351
    %v2383 = vsel %vm2382, %v2349, %v2351
    %vm2384 = vcmp.lt.s32.totalorder %v2381, %v2352
    %v2385 = vsel %vm2384, %v2381, %v2352
    %vm2386 = vcmp.lt.s32.totalorder %v2383, %v2353
    %v2387 = vsel %vm2386, %v2383, %v2353
    %vm2388 = vcmp.lt.s32.totalorder %v2385, %v2354
    %v2389 = vsel %vm2388, %v2385, %v2354
    %vm2390 = vcmp.lt.s32.totalorder %v2387, %v2355
    %v2391 = vsel %vm2390, %v2387, %v2355
    %vm2392 = vcmp.lt.s32.totalorder %v2389, %v2356
    %v2393 = vsel %vm2392, %v2389, %v2356
    %vm2394 = vcmp.lt.s32.totalorder %v2391, %v2357
    %v2395 = vsel %vm2394, %v2391, %v2357
    %vm2396 = vcmp.lt.s32.totalorder %v2393, %v2358
    %v2397 = vsel %vm2396, %v2393, %v2358
    %vm2398 = vcmp.lt.s32.totalorder %v2395, %v2359
    %v2399 = vsel %vm2398, %v2395, %v2359
    %vm2400 = vcmp.lt.s32.totalorder %v2397, %v2360
    %v2401 = vsel %vm2400, %v2397, %v2360
    %vm2402 = vcmp.lt.s32.totalorder %v2399, %v2361
    %v2403 = vsel %vm2402, %v2399, %v2361
    %vm2404 = vcmp.lt.s32.totalorder %v2401, %v2362
    %v2405 = vsel %vm2404, %v2401, %v2362
    %vm2406 = vcmp.lt.s32.totalorder %v2403, %v2363
    %v2407 = vsel %vm2406, %v2403, %v2363
    %vm2408 = vcmp.lt.s32.totalorder %v2405, %v2407
    %v2409 = vsel %vm2408, %v2405, %v2407
    %v2410 = vrot.slane %v2409, 4
    %vm2411 = vcmp.lt.s32.totalorder %v2409, %v2410
    %v2412 = vsel %vm2411, %v2409, %v2410
    %v2413 = vrot.slane %v2412, 2
    %vm2414 = vcmp.lt.s32.totalorder %v2412, %v2413
    %v2415 = vsel %vm2414, %v2412, %v2413
    %v2416 = vrot.slane %v2415, 1
    %vm2417 = vcmp.lt.s32.totalorder %v2415, %v2416
    %v2418 = vsel %vm2417, %v2415, %v2416
    %vm2419 = vcmp.lt.s32.totalorder %v2364, %v2366
    %v2420 = vsel %vm2419, %v2364, %v2366
    %vm2421 = vcmp.lt.s32.totalorder %v2365, %v2367
    %v2422 = vsel %vm2421, %v2365, %v2367
    %vm2423 = vcmp.lt.s32.totalorder %v2420, %v2368
    %v2424 = vsel %vm2423, %v2420, %v2368
    %vm2425 = vcmp.lt.s32.totalorder %v2422, %v2369
    %v2426 = vsel %vm2425, %v2422, %v2369
    %vm2427 = vcmp.lt.s32.totalorder %v2424, %v2370
    %v2428 = vsel %vm2427, %v2424, %v2370
    %vm2429 = vcmp.lt.s32.totalorder %v2426, %v2371
    %v2430 = vsel %vm2429, %v2426, %v2371
    %vm2431 = vcmp.lt.s32.totalorder %v2428, %v2372
    %v2432 = vsel %vm2431, %v2428, %v2372
    %vm2433 = vcmp.lt.s32.totalorder %v2430, %v2373
    %v2434 = vsel %vm2433, %v2430, %v2373
    %vm2435 = vcmp.lt.s32.totalorder %v2432, %v2374
    %v2436 = vsel %vm2435, %v2432, %v2374
    %vm2437 = vcmp.lt.s32.totalorder %v2434, %v2375
    %v2438 = vsel %vm2437, %v2434, %v2375
    %vm2439 = vcmp.lt.s32.totalorder %v2436, %v2376
    %v2440 = vsel %vm2439, %v2436, %v2376
    %vm2441 = vcmp.lt.s32.totalorder %v2438, %v2377
    %v2442 = vsel %vm2441, %v2438, %v2377
    %vm2443 = vcmp.lt.s32.totalorder %v2440, %v2378
    %v2444 = vsel %vm2443, %v2440, %v2378
    %vm2445 = vcmp.lt.s32.totalorder %v2442, %v2379
    %v2446 = vsel %vm2445, %v2442, %v2379
    %vm2447 = vcmp.lt.s32.totalorder %v2444, %v2446
    %v2448 = vsel %vm2447, %v2444, %v2446
    %v2449 = vrot.slane %v2448, 4
    %vm2450 = vcmp.lt.s32.totalorder %v2448, %v2449
    %v2451 = vsel %vm2450, %v2448, %v2449
    %v2452 = vrot.slane %v2451, 2
    %vm2453 = vcmp.lt.s32.totalorder %v2451, %v2452
    %v2454 = vsel %vm2453, %v2451, %v2452
    %v2455 = vrot.slane %v2454, 1
    %vm2456 = vcmp.lt.s32.totalorder %v2454, %v2455
    %v2457 = vsel %vm2456, %v2454, %v2455
    %2458 = vset.pattern.permute.xlu0 6
    %2459 = vperm.xlu0 %2458, %v462
    %v2460 = vpop.permute.xlu0 %2459
    %vm2461 = vcmp.eq.s32.totalorder %v2460, 1
    %v2464 = vsel %vm50, %v2315, %v2294
    %v2466 = vsel %vm2461, %v2464, %v2067
    %v2467 = vlaneseq
    %v2468 = vshrl.u32 %v2467, 7
    %v2469 = vsub.s32 0, %v2468
    %v2470 = vrot.slane %v2466, %v2469
    %2472 = vbcast.lane.b32.xlu0 %v2470, 256
    %v2473 = vpop.permute.xlu0 %2472
    %s2475 = sor.u32 256, 8
    %2476 = vbcast.lane.b32.xlu0 %v2470, %s2475
    %v2477 = vpop.permute.xlu0 %2476
    %s2479 = sor.u32 256, 16
    %2480 = vbcast.lane.b32.xlu0 %v2470, %s2479
    %v2481 = vpop.permute.xlu0 %2480
    %s2483 = sor.u32 256, 24
    %2484 = vbcast.lane.b32.xlu0 %v2470, %s2483
    %v2485 = vpop.permute.xlu0 %2484
    %s2487 = sor.u32 256, 32
    %2488 = vbcast.lane.b32.xlu0 %v2470, %s2487
    %v2489 = vpop.permute.xlu0 %2488
    %s2491 = sor.u32 256, 40
    %2492 = vbcast.lane.b32.xlu0 %v2470, %s2491
    %v2493 = vpop.permute.xlu0 %2492
    %s2495 = sor.u32 256, 48
    %2496 = vbcast.lane.b32.xlu0 %v2470, %s2495
    %v2497 = vpop.permute.xlu0 %2496
    %s2499 = sor.u32 256, 56
    %2500 = vbcast.lane.b32.xlu0 %v2470, %s2499
    %v2501 = vpop.permute.xlu0 %2500
    %s2503 = sor.u32 256, 64
    %2504 = vbcast.lane.b32.xlu0 %v2470, %s2503
    %v2505 = vpop.permute.xlu0 %2504
    %s2507 = sor.u32 256, 72
    %2508 = vbcast.lane.b32.xlu0 %v2470, %s2507
    %v2509 = vpop.permute.xlu0 %2508
    %s2511 = sor.u32 256, 80
    %2512 = vbcast.lane.b32.xlu0 %v2470, %s2511
    %v2513 = vpop.permute.xlu0 %2512
    %s2515 = sor.u32 256, 88
    %2516 = vbcast.lane.b32.xlu0 %v2470, %s2515
    %v2517 = vpop.permute.xlu0 %2516
    %s2519 = sor.u32 256, 96
    %2520 = vbcast.lane.b32.xlu0 %v2470, %s2519
    %v2521 = vpop.permute.xlu0 %2520
    %s2523 = sor.u32 256, 104
    %2524 = vbcast.lane.b32.xlu0 %v2470, %s2523
    %v2525 = vpop.permute.xlu0 %2524
    %s2527 = sor.u32 256, 112
    %2528 = vbcast.lane.b32.xlu0 %v2470, %s2527
    %v2529 = vpop.permute.xlu0 %2528
    %s2531 = sor.u32 256, 120
    %2532 = vbcast.lane.b32.xlu0 %v2470, %s2531
    %v2533 = vpop.permute.xlu0 %2532
    %v2534 = vlaneseq
    %v2535 = vshrl.u32 %v2534, 7
    %v2536 = vsub.s32 1, %v2535
    %v2537 = vrot.slane %v2466, %v2536
    %2539 = vbcast.lane.b32.xlu0 %v2537, 256
    %v2540 = vpop.permute.xlu0 %2539
    %s2542 = sor.u32 256, 8
    %2543 = vbcast.lane.b32.xlu0 %v2537, %s2542
    %v2544 = vpop.permute.xlu0 %2543
    %s2546 = sor.u32 256, 16
    %2547 = vbcast.lane.b32.xlu0 %v2537, %s2546
    %v2548 = vpop.permute.xlu0 %2547
    %s2550 = sor.u32 256, 24
    %2551 = vbcast.lane.b32.xlu0 %v2537, %s2550
    %v2552 = vpop.permute.xlu0 %2551
    %s2554 = sor.u32 256, 32
    %2555 = vbcast.lane.b32.xlu0 %v2537, %s2554
    %v2556 = vpop.permute.xlu0 %2555
    %s2558 = sor.u32 256, 40
    %2559 = vbcast.lane.b32.xlu0 %v2537, %s2558
    %v2560 = vpop.permute.xlu0 %2559
    %s2562 = sor.u32 256, 48
    %2563 = vbcast.lane.b32.xlu0 %v2537, %s2562
    %v2564 = vpop.permute.xlu0 %2563
    %s2566 = sor.u32 256, 56
    %2567 = vbcast.lane.b32.xlu0 %v2537, %s2566
    %v2568 = vpop.permute.xlu0 %2567
    %s2570 = sor.u32 256, 64
    %2571 = vbcast.lane.b32.xlu0 %v2537, %s2570
    %v2572 = vpop.permute.xlu0 %2571
    %s2574 = sor.u32 256, 72
    %2575 = vbcast.lane.b32.xlu0 %v2537, %s2574
    %v2576 = vpop.permute.xlu0 %2575
    %s2578 = sor.u32 256, 80
    %2579 = vbcast.lane.b32.xlu0 %v2537, %s2578
    %v2580 = vpop.permute.xlu0 %2579
    %s2582 = sor.u32 256, 88
    %2583 = vbcast.lane.b32.xlu0 %v2537, %s2582
    %v2584 = vpop.permute.xlu0 %2583
    %s2586 = sor.u32 256, 96
    %2587 = vbcast.lane.b32.xlu0 %v2537, %s2586
    %v2588 = vpop.permute.xlu0 %2587
    %s2590 = sor.u32 256, 104
    %2591 = vbcast.lane.b32.xlu0 %v2537, %s2590
    %v2592 = vpop.permute.xlu0 %2591
    %s2594 = sor.u32 256, 112
    %2595 = vbcast.lane.b32.xlu0 %v2537, %s2594
    %v2596 = vpop.permute.xlu0 %2595
    %s2598 = sor.u32 256, 120
    %2599 = vbcast.lane.b32.xlu0 %v2537, %s2598
    %v2600 = vpop.permute.xlu0 %2599
    %v2601 = vadd.f32 %v2473, %v24
    %v2602 = vadd.f32 %v2477, %v25
    %v2603 = vadd.f32 %v2481, %v26
    %v2604 = vadd.f32 %v2485, %v27
    %v2605 = vadd.f32 %v2489, %v28
    %v2606 = vadd.f32 %v2493, %v29
    %v2607 = vadd.f32 %v2497, %v30
    %v2608 = vadd.f32 %v2501, %v31
    %v2609 = vadd.f32 %v2505, %v32
    %v2610 = vadd.f32 %v2509, %v33
    %v2611 = vadd.f32 %v2513, %v34
    %v2612 = vadd.f32 %v2517, %v35
    %v2613 = vadd.f32 %v2521, %v36
    %v2614 = vadd.f32 %v2525, %v37
    %v2615 = vadd.f32 %v2529, %v38
    %v2616 = vadd.f32 %v2533, %v39
    %v2617 = vadd.f32 %v2540, %v24
    %v2618 = vadd.f32 %v2544, %v25
    %v2619 = vadd.f32 %v2548, %v26
    %v2620 = vadd.f32 %v2552, %v27
    %v2621 = vadd.f32 %v2556, %v28
    %v2622 = vadd.f32 %v2560, %v29
    %v2623 = vadd.f32 %v2564, %v30
    %v2624 = vadd.f32 %v2568, %v31
    %v2625 = vadd.f32 %v2572, %v32
    %v2626 = vadd.f32 %v2576, %v33
    %v2627 = vadd.f32 %v2580, %v34
    %v2628 = vadd.f32 %v2584, %v35
    %v2629 = vadd.f32 %v2588, %v36
    %v2630 = vadd.f32 %v2592, %v37
    %v2631 = vadd.f32 %v2596, %v38
    %v2632 = vadd.f32 %v2600, %v39
    %v2633 = vlaneseq
    %v2634 = vshrl.u32 %v2633, 7
    %v2635 = vsub.s32 7, %v2634
    %v2636 = vrot.slane %v21, %v2635
    %v2637 = vlaneseq
    %v2638 = vshrl.u32 %v2637, 7
    %v2639 = vsub.s32 7, %v2638
    %v2640 = vrot.slane %v22, %v2639
    %v2641 = vadd.f32 %v2601, %v2636
    %v2642 = vadd.f32 %v2602, %v2636
    %v2643 = vadd.f32 %v2603, %v2636
    %v2644 = vadd.f32 %v2604, %v2636
    %v2645 = vadd.f32 %v2605, %v2636
    %v2646 = vadd.f32 %v2606, %v2636
    %v2647 = vadd.f32 %v2607, %v2636
    %v2648 = vadd.f32 %v2608, %v2636
    %v2649 = vadd.f32 %v2609, %v2636
    %v2650 = vadd.f32 %v2610, %v2636
    %v2651 = vadd.f32 %v2611, %v2636
    %v2652 = vadd.f32 %v2612, %v2636
    %v2653 = vadd.f32 %v2613, %v2636
    %v2654 = vadd.f32 %v2614, %v2636
    %v2655 = vadd.f32 %v2615, %v2636
    %v2656 = vadd.f32 %v2616, %v2636
    %v2657 = vadd.f32 %v2617, %v2640
    %v2658 = vadd.f32 %v2618, %v2640
    %v2659 = vadd.f32 %v2619, %v2640
    %v2660 = vadd.f32 %v2620, %v2640
    %v2661 = vadd.f32 %v2621, %v2640
    %v2662 = vadd.f32 %v2622, %v2640
    %v2663 = vadd.f32 %v2623, %v2640
    %v2664 = vadd.f32 %v2624, %v2640
    %v2665 = vadd.f32 %v2625, %v2640
    %v2666 = vadd.f32 %v2626, %v2640
    %v2667 = vadd.f32 %v2627, %v2640
    %v2668 = vadd.f32 %v2628, %v2640
    %v2669 = vadd.f32 %v2629, %v2640
    %v2670 = vadd.f32 %v2630, %v2640
    %v2671 = vadd.f32 %v2631, %v2640
    %v2672 = vadd.f32 %v2632, %v2640
    %v2673 = vmax.f32 %v2641, %v2643
    %v2674 = vmax.f32 %v2642, %v2644
    %v2675 = vmax.f32 %v2673, %v2645
    %v2676 = vmax.f32 %v2674, %v2646
    %v2677 = vmax.f32 %v2675, %v2647
    %v2678 = vmax.f32 %v2676, %v2648
    %v2679 = vmax.f32 %v2677, %v2649
    %v2680 = vmax.f32 %v2678, %v2650
    %v2681 = vmax.f32 %v2679, %v2651
    %v2682 = vmax.f32 %v2680, %v2652
    %v2683 = vmax.f32 %v2681, %v2653
    %v2684 = vmax.f32 %v2682, %v2654
    %v2685 = vmax.f32 %v2683, %v2655
    %v2686 = vmax.f32 %v2684, %v2656
    %v2687 = vmax.f32 %v2685, %v2686
    %v2688 = vrot.slane %v2687, 4
    %v2689 = vmax.f32 %v2687, %v2688
    %v2690 = vrot.slane %v2689, 2
    %v2691 = vmax.f32 %v2689, %v2690
    %v2692 = vrot.slane %v2691, 1
    %v2693 = vmax.f32 %v2691, %v2692
    %v2694 = vmax.f32 %v2657, %v2659
    %v2695 = vmax.f32 %v2658, %v2660
    %v2696 = vmax.f32 %v2694, %v2661
    %v2697 = vmax.f32 %v2695, %v2662
    %v2698 = vmax.f32 %v2696, %v2663
    %v2699 = vmax.f32 %v2697, %v2664
    %v2700 = vmax.f32 %v2698, %v2665
    %v2701 = vmax.f32 %v2699, %v2666
    %v2702 = vmax.f32 %v2700, %v2667
    %v2703 = vmax.f32 %v2701, %v2668
    %v2704 = vmax.f32 %v2702, %v2669
    %v2705 = vmax.f32 %v2703, %v2670
    %v2706 = vmax.f32 %v2704, %v2671
    %v2707 = vmax.f32 %v2705, %v2672
    %v2708 = vmax.f32 %v2706, %v2707
    %v2709 = vrot.slane %v2708, 4
    %v2710 = vmax.f32 %v2708, %v2709
    %v2711 = vrot.slane %v2710, 2
    %v2712 = vmax.f32 %v2710, %v2711
    %v2713 = vrot.slane %v2712, 1
    %v2714 = vmax.f32 %v2712, %v2713
    %vm2715 = vcmp.eq.f32.partialorder %v2641, %v2693
    %vm2716 = vcmp.eq.f32.partialorder %v2642, %v2693
    %vm2717 = vcmp.eq.f32.partialorder %v2643, %v2693
    %vm2718 = vcmp.eq.f32.partialorder %v2644, %v2693
    %vm2719 = vcmp.eq.f32.partialorder %v2645, %v2693
    %vm2720 = vcmp.eq.f32.partialorder %v2646, %v2693
    %vm2721 = vcmp.eq.f32.partialorder %v2647, %v2693
    %vm2722 = vcmp.eq.f32.partialorder %v2648, %v2693
    %vm2723 = vcmp.eq.f32.partialorder %v2649, %v2693
    %vm2724 = vcmp.eq.f32.partialorder %v2650, %v2693
    %vm2725 = vcmp.eq.f32.partialorder %v2651, %v2693
    %vm2726 = vcmp.eq.f32.partialorder %v2652, %v2693
    %vm2727 = vcmp.eq.f32.partialorder %v2653, %v2693
    %vm2728 = vcmp.eq.f32.partialorder %v2654, %v2693
    %vm2729 = vcmp.eq.f32.partialorder %v2655, %v2693
    %vm2730 = vcmp.eq.f32.partialorder %v2656, %v2693
    %vm2731 = vcmp.eq.f32.partialorder %v2657, %v2714
    %vm2732 = vcmp.eq.f32.partialorder %v2658, %v2714
    %vm2733 = vcmp.eq.f32.partialorder %v2659, %v2714
    %vm2734 = vcmp.eq.f32.partialorder %v2660, %v2714
    %vm2735 = vcmp.eq.f32.partialorder %v2661, %v2714
    %vm2736 = vcmp.eq.f32.partialorder %v2662, %v2714
    %vm2737 = vcmp.eq.f32.partialorder %v2663, %v2714
    %vm2738 = vcmp.eq.f32.partialorder %v2664, %v2714
    %vm2739 = vcmp.eq.f32.partialorder %v2665, %v2714
    %vm2740 = vcmp.eq.f32.partialorder %v2666, %v2714
    %vm2741 = vcmp.eq.f32.partialorder %v2667, %v2714
    %vm2742 = vcmp.eq.f32.partialorder %v2668, %v2714
    %vm2743 = vcmp.eq.f32.partialorder %v2669, %v2714
    %vm2744 = vcmp.eq.f32.partialorder %v2670, %v2714
    %vm2745 = vcmp.eq.f32.partialorder %v2671, %v2714
    %vm2746 = vcmp.eq.f32.partialorder %v2672, %v2714
    %v2747 = vsel %vm2715, %v303, 128
    %v2748 = vsel %vm2716, %v304, 128
    %v2749 = vsel %vm2717, %v305, 128
    %v2750 = vsel %vm2718, %v306, 128
    %v2751 = vsel %vm2719, %v307, 128
    %v2752 = vsel %vm2720, %v308, 128
    %v2753 = vsel %vm2721, %v309, 128
    %v2754 = vsel %vm2722, %v310, 128
    %v2755 = vsel %vm2723, %v311, 128
    %v2756 = vsel %vm2724, %v312, 128
    %v2757 = vsel %vm2725, %v313, 128
    %v2758 = vsel %vm2726, %v314, 128
    %v2759 = vsel %vm2727, %v315, 128
    %v2760 = vsel %vm2728, %v316, 128
    %v2761 = vsel %vm2729, %v317, 128
    %v2762 = vsel %vm2730, %v318, 128
    %v2763 = vsel %vm2731, %v303, 128
    %v2764 = vsel %vm2732, %v304, 128
    %v2765 = vsel %vm2733, %v305, 128
    %v2766 = vsel %vm2734, %v306, 128
    %v2767 = vsel %vm2735, %v307, 128
    %v2768 = vsel %vm2736, %v308, 128
    %v2769 = vsel %vm2737, %v309, 128
    %v2770 = vsel %vm2738, %v310, 128
    %v2771 = vsel %vm2739, %v311, 128
    %v2772 = vsel %vm2740, %v312, 128
    %v2773 = vsel %vm2741, %v313, 128
    %v2774 = vsel %vm2742, %v314, 128
    %v2775 = vsel %vm2743, %v315, 128
    %v2776 = vsel %vm2744, %v316, 128
    %v2777 = vsel %vm2745, %v317, 128
    %v2778 = vsel %vm2746, %v318, 128
    %vm2779 = vcmp.lt.s32.totalorder %v2747, %v2749
    %v2780 = vsel %vm2779, %v2747, %v2749
    %vm2781 = vcmp.lt.s32.totalorder %v2748, %v2750
    %v2782 = vsel %vm2781, %v2748, %v2750
    %vm2783 = vcmp.lt.s32.totalorder %v2780, %v2751
    %v2784 = vsel %vm2783, %v2780, %v2751
    %vm2785 = vcmp.lt.s32.totalorder %v2782, %v2752
    %v2786 = vsel %vm2785, %v2782, %v2752
    %vm2787 = vcmp.lt.s32.totalorder %v2784, %v2753
    %v2788 = vsel %vm2787, %v2784, %v2753
    %vm2789 = vcmp.lt.s32.totalorder %v2786, %v2754
    %v2790 = vsel %vm2789, %v2786, %v2754
    %vm2791 = vcmp.lt.s32.totalorder %v2788, %v2755
    %v2792 = vsel %vm2791, %v2788, %v2755
    %vm2793 = vcmp.lt.s32.totalorder %v2790, %v2756
    %v2794 = vsel %vm2793, %v2790, %v2756
    %vm2795 = vcmp.lt.s32.totalorder %v2792, %v2757
    %v2796 = vsel %vm2795, %v2792, %v2757
    %vm2797 = vcmp.lt.s32.totalorder %v2794, %v2758
    %v2798 = vsel %vm2797, %v2794, %v2758
    %vm2799 = vcmp.lt.s32.totalorder %v2796, %v2759
    %v2800 = vsel %vm2799, %v2796, %v2759
    %vm2801 = vcmp.lt.s32.totalorder %v2798, %v2760
    %v2802 = vsel %vm2801, %v2798, %v2760
    %vm2803 = vcmp.lt.s32.totalorder %v2800, %v2761
    %v2804 = vsel %vm2803, %v2800, %v2761
    %vm2805 = vcmp.lt.s32.totalorder %v2802, %v2762
    %v2806 = vsel %vm2805, %v2802, %v2762
    %vm2807 = vcmp.lt.s32.totalorder %v2804, %v2806
    %v2808 = vsel %vm2807, %v2804, %v2806
    %v2809 = vrot.slane %v2808, 4
    %vm2810 = vcmp.lt.s32.totalorder %v2808, %v2809
    %v2811 = vsel %vm2810, %v2808, %v2809
    %v2812 = vrot.slane %v2811, 2
    %vm2813 = vcmp.lt.s32.totalorder %v2811, %v2812
    %v2814 = vsel %vm2813, %v2811, %v2812
    %v2815 = vrot.slane %v2814, 1
    %vm2816 = vcmp.lt.s32.totalorder %v2814, %v2815
    %v2817 = vsel %vm2816, %v2814, %v2815
    %vm2818 = vcmp.lt.s32.totalorder %v2763, %v2765
    %v2819 = vsel %vm2818, %v2763, %v2765
    %vm2820 = vcmp.lt.s32.totalorder %v2764, %v2766
    %v2821 = vsel %vm2820, %v2764, %v2766
    %vm2822 = vcmp.lt.s32.totalorder %v2819, %v2767
    %v2823 = vsel %vm2822, %v2819, %v2767
    %vm2824 = vcmp.lt.s32.totalorder %v2821, %v2768
    %v2825 = vsel %vm2824, %v2821, %v2768
    %vm2826 = vcmp.lt.s32.totalorder %v2823, %v2769
    %v2827 = vsel %vm2826, %v2823, %v2769
    %vm2828 = vcmp.lt.s32.totalorder %v2825, %v2770
    %v2829 = vsel %vm2828, %v2825, %v2770
    %vm2830 = vcmp.lt.s32.totalorder %v2827, %v2771
    %v2831 = vsel %vm2830, %v2827, %v2771
    %vm2832 = vcmp.lt.s32.totalorder %v2829, %v2772
    %v2833 = vsel %vm2832, %v2829, %v2772
    %vm2834 = vcmp.lt.s32.totalorder %v2831, %v2773
    %v2835 = vsel %vm2834, %v2831, %v2773
    %vm2836 = vcmp.lt.s32.totalorder %v2833, %v2774
    %v2837 = vsel %vm2836, %v2833, %v2774
    %vm2838 = vcmp.lt.s32.totalorder %v2835, %v2775
    %v2839 = vsel %vm2838, %v2835, %v2775
    %vm2840 = vcmp.lt.s32.totalorder %v2837, %v2776
    %v2841 = vsel %vm2840, %v2837, %v2776
    %vm2842 = vcmp.lt.s32.totalorder %v2839, %v2777
    %v2843 = vsel %vm2842, %v2839, %v2777
    %vm2844 = vcmp.lt.s32.totalorder %v2841, %v2778
    %v2845 = vsel %vm2844, %v2841, %v2778
    %vm2846 = vcmp.lt.s32.totalorder %v2843, %v2845
    %v2847 = vsel %vm2846, %v2843, %v2845
    %v2848 = vrot.slane %v2847, 4
    %vm2849 = vcmp.lt.s32.totalorder %v2847, %v2848
    %v2850 = vsel %vm2849, %v2847, %v2848
    %v2851 = vrot.slane %v2850, 2
    %vm2852 = vcmp.lt.s32.totalorder %v2850, %v2851
    %v2853 = vsel %vm2852, %v2850, %v2851
    %v2854 = vrot.slane %v2853, 1
    %vm2855 = vcmp.lt.s32.totalorder %v2853, %v2854
    %v2856 = vsel %vm2855, %v2853, %v2854
    %2857 = vset.pattern.permute.xlu0 7
    %2858 = vperm.xlu0 %2857, %v462
    %v2859 = vpop.permute.xlu0 %2858
    %vm2860 = vcmp.eq.s32.totalorder %v2859, 1
    %v2863 = vsel %vm50, %v2714, %v2693
    %v2865 = vsel %vm2860, %v2863, %v2466
    %v2866 = vld [vmem:[%s4] sm:$0x1]
    %v2868 = vlaneseq
    %v2869 = vshrl.u32 %v2868, 7
    %v2870 = vsub.s32 0, %v2869
    %v2871 = vrot.slane %v2866, %v2870
    %v2873 = vadd.f32 %v2865, %v2871
    %vm2874 = vcmask 1041408
    %v2875 = vsel %vm2874, %v2873, -inf
    %2876 = vmax.xlane.f32.xlu0 %v2875
    %v2877 = vpop.xlane.xlu0 %2876
    %v2878 = vlaneseq
    %v2879 = vand.u32 %v2878, 127
    %vm2880 = vcmp.eq.f32.partialorder %v2873, %v2877
    %v2881 = vsel %vm2880, %v2879, 128
    %v2882 = vsel %vm2874, %v2881, 2147483647
    %v2883 = vand.u32 %v2882, 65535
    %v2884 = vshra.s32 %v2882, 16
    %v2885 = vcvt.s32.f32 %v2883
    %v2886 = vcvt.s32.f32 %v2884
    %2887 = vmin.xlane.f32.xlu0 %v2886
    %v2888 = vpop.xlane.xlu0 %2887
    %vm2889 = vcmp.eq.f32.partialorder %v2886, %v2888
    %v2890 = vsel %vm2889, %v2885, inf
    %2891 = vmin.xlane.f32.xlu0 %v2890
    %v2892 = vpop.xlane.xlu0 %2891
    %v2893 = vcvt.f32.s32 %v2892
    %v2894 = vcvt.f32.s32 %v2888
    %v2895 = vshll.u32 %v2894, 16
    %v2896 = vadd.s32 %v2895, %v2893
    %vm2897 = vcmask 58368
    %v2898 = vsel %vm2897, %v23, 0
    %v2899 = vand.u32 %v2898, 65535
    %v2900 = vshrl.u32 %v2898, 16
    %v2901 = vcvt.s32.f32 %v2899
    %v2902 = vcvt.s32.f32 %v2900
    %2903 = vadd.xlane.f32.xlu0 %v2901
    %v2904 = vpop.xlane.xlu0 %2903
    %2905 = vadd.xlane.f32.xlu0 %v2902
    %v2906 = vpop.xlane.xlu0 %2905
    %v2907 = vcvt.f32.s32 %v2904
    %v2908 = vcvt.f32.s32 %v2906
    %v2909 = vshll.u32 %v2908, 16
    %v2910 = vadd.s32 %v2909, %v2907
    %v2911 = vsub.s32 %v2910, 1
    %vm2912 = vcmp.eq.s32.totalorder %v2911, 7
    %v2913 = vsel %vm2912, %v2896, 0
    %vm2914 = vcmp.eq.s32.totalorder %v2879, %v2896
    %v2915 = vsel %vm50, %v2856, %v2817
    %v2916 = vsel %vm2914, %v2915, 0
    %v2917 = vsel %vm2874, %v2916, 0
    %v2918 = vand.u32 %v2917, 65535
    %v2919 = vshrl.u32 %v2917, 16
    %v2920 = vcvt.s32.f32 %v2918
    %v2921 = vcvt.s32.f32 %v2919
    %2922 = vadd.xlane.f32.xlu0 %v2920
    %v2923 = vpop.xlane.xlu0 %2922
    %2924 = vadd.xlane.f32.xlu0 %v2921
    %v2925 = vpop.xlane.xlu0 %2924
    %v2926 = vcvt.f32.s32 %v2923
    %v2927 = vcvt.f32.s32 %v2925
    %v2928 = vshll.u32 %v2927, 16
    %v2929 = vadd.s32 %v2928, %v2926
    %vm2930 = vcmp.eq.s32.totalorder %v2911, 6
    %v2931 = vsel %vm2930, %v2896, 0
    %v2932 = vsel %vm461, %v2929, %v2931
    %v2933 = vsel %vm461, %v2929, %v2896
    %2934 = vset.pattern.permute.xlu0 7
    %2935 = vperm.xlu0 %2934, %v2933
    %v2936 = vpop.permute.xlu0 %2935
    %vm2937 = vcmp.eq.s32.totalorder %v2879, %v2936
    %v2938 = vsel %vm50, %v2457, %v2418
    %v2939 = vsel %vm2937, %v2938, 0
    %v2940 = vsel %vm2874, %v2939, 0
    %v2941 = vand.u32 %v2940, 65535
    %v2942 = vshrl.u32 %v2940, 16
    %v2943 = vcvt.s32.f32 %v2941
    %v2944 = vcvt.s32.f32 %v2942
    %2945 = vadd.xlane.f32.xlu0 %v2943
    %v2946 = vpop.xlane.xlu0 %2945
    %2947 = vadd.xlane.f32.xlu0 %v2944
    %v2948 = vpop.xlane.xlu0 %2947
    %v2949 = vcvt.f32.s32 %v2946
    %v2950 = vcvt.f32.s32 %v2948
    %v2951 = vshll.u32 %v2950, 16
    %v2952 = vadd.s32 %v2951, %v2949
    %vm2953 = vcmp.eq.s32.totalorder %v2911, 5
    %v2954 = vsel %vm2953, %v2896, 0
    %v2955 = vsel %vm461, %v2952, %v2954
    %v2956 = vsel %vm461, %v2952, %v2896
    %2957 = vset.pattern.permute.xlu0 6
    %2958 = vperm.xlu0 %2957, %v2956
    %v2959 = vpop.permute.xlu0 %2958
    %vm2960 = vcmp.eq.s32.totalorder %v2879, %v2959
    %v2961 = vsel %vm50, %v2058, %v2019
    %v2962 = vsel %vm2960, %v2961, 0
    %v2963 = vsel %vm2874, %v2962, 0
    %v2964 = vand.u32 %v2963, 65535
    %v2965 = vshrl.u32 %v2963, 16
    %v2966 = vcvt.s32.f32 %v2964
    %v2967 = vcvt.s32.f32 %v2965
    %2968 = vadd.xlane.f32.xlu0 %v2966
    %v2969 = vpop.xlane.xlu0 %2968
    %2970 = vadd.xlane.f32.xlu0 %v2967
    %v2971 = vpop.xlane.xlu0 %2970
    %v2972 = vcvt.f32.s32 %v2969
    %v2973 = vcvt.f32.s32 %v2971
    %v2974 = vshll.u32 %v2973, 16
    %v2975 = vadd.s32 %v2974, %v2972
    %vm2976 = vcmp.eq.s32.totalorder %v2911, 4
    %v2977 = vsel %vm2976, %v2896, 0
    %v2978 = vsel %vm461, %v2975, %v2977
    %v2979 = vsel %vm461, %v2975, %v2896
    %2980 = vset.pattern.permute.xlu0 5
    %2981 = vperm.xlu0 %2980, %v2979
    %v2982 = vpop.permute.xlu0 %2981
    %vm2983 = vcmp.eq.s32.totalorder %v2879, %v2982
    %v2984 = vsel %vm50, %v1659, %v1620
    %v2985 = vsel %vm2983, %v2984, 0
    %v2986 = vsel %vm2874, %v2985, 0
    %v2987 = vand.u32 %v2986, 65535
    %v2988 = vshrl.u32 %v2986, 16
    %v2989 = vcvt.s32.f32 %v2987
    %v2990 = vcvt.s32.f32 %v2988
    %2991 = vadd.xlane.f32.xlu0 %v2989
    %v2992 = vpop.xlane.xlu0 %2991
    %2993 = vadd.xlane.f32.xlu0 %v2990
    %v2994 = vpop.xlane.xlu0 %2993
    %v2995 = vcvt.f32.s32 %v2992
    %v2996 = vcvt.f32.s32 %v2994
    %v2997 = vshll.u32 %v2996, 16
    %v2998 = vadd.s32 %v2997, %v2995
    %vm2999 = vcmp.eq.s32.totalorder %v2911, 3
    %v3000 = vsel %vm2999, %v2896, 0
    %v3001 = vsel %vm461, %v2998, %v3000
    %v3002 = vsel %vm461, %v2998, %v2896
    %3003 = vset.pattern.permute.xlu0 4
    %3004 = vperm.xlu0 %3003, %v3002
    %v3005 = vpop.permute.xlu0 %3004
    %vm3006 = vcmp.eq.s32.totalorder %v2879, %v3005
    %v3007 = vsel %vm50, %v1260, %v1221
    %v3008 = vsel %vm3006, %v3007, 0
    %v3009 = vsel %vm2874, %v3008, 0
    %v3010 = vand.u32 %v3009, 65535
    %v3011 = vshrl.u32 %v3009, 16
    %v3012 = vcvt.s32.f32 %v3010
    %v3013 = vcvt.s32.f32 %v3011
    %3014 = vadd.xlane.f32.xlu0 %v3012
    %v3015 = vpop.xlane.xlu0 %3014
    %3016 = vadd.xlane.f32.xlu0 %v3013
    %v3017 = vpop.xlane.xlu0 %3016
    %v3018 = vcvt.f32.s32 %v3015
    %v3019 = vcvt.f32.s32 %v3017
    %v3020 = vshll.u32 %v3019, 16
    %v3021 = vadd.s32 %v3020, %v3018
    %vm3022 = vcmp.eq.s32.totalorder %v2911, 2
    %v3023 = vsel %vm3022, %v2896, 0
    %v3024 = vsel %vm461, %v3021, %v3023
    %v3025 = vsel %vm461, %v3021, %v2896
    %3026 = vset.pattern.permute.xlu0 3
    %3027 = vperm.xlu0 %3026, %v3025
    %v3028 = vpop.permute.xlu0 %3027
    %vm3029 = vcmp.eq.s32.totalorder %v2879, %v3028
    %v3030 = vsel %vm50, %v861, %v822
    %v3031 = vsel %vm3029, %v3030, 0
    %v3032 = vsel %vm2874, %v3031, 0
    %v3033 = vand.u32 %v3032, 65535
    %v3034 = vshrl.u32 %v3032, 16
    %v3035 = vcvt.s32.f32 %v3033
    %v3036 = vcvt.s32.f32 %v3034
    %3037 = vadd.xlane.f32.xlu0 %v3035
    %v3038 = vpop.xlane.xlu0 %3037
    %3039 = vadd.xlane.f32.xlu0 %v3036
    %v3040 = vpop.xlane.xlu0 %3039
    %v3041 = vcvt.f32.s32 %v3038
    %v3042 = vcvt.f32.s32 %v3040
    %v3043 = vshll.u32 %v3042, 16
    %v3044 = vadd.s32 %v3043, %v3041
    %vm3045 = vcmp.eq.s32.totalorder %v2911, 1
    %v3046 = vsel %vm3045, %v2896, 0
    %v3047 = vsel %vm461, %v3044, %v3046
    %v3048 = vsel %vm461, %v3044, %v2896
    %3049 = vset.pattern.permute.xlu0 2
    %3050 = vperm.xlu0 %3049, %v3048
    %v3051 = vpop.permute.xlu0 %3050
    %vm3052 = vcmp.eq.s32.totalorder %v2879, %v3051
    %v3053 = vsel %vm50, %v460, %v421
    %v3054 = vsel %vm3052, %v3053, 0
    %v3055 = vsel %vm2874, %v3054, 0
    %v3056 = vand.u32 %v3055, 65535
    %v3057 = vshrl.u32 %v3055, 16
    %v3058 = vcvt.s32.f32 %v3056
    %v3059 = vcvt.s32.f32 %v3057
    %3060 = vadd.xlane.f32.xlu0 %v3058
    %v3061 = vpop.xlane.xlu0 %3060
    %3062 = vadd.xlane.f32.xlu0 %v3059
    %v3063 = vpop.xlane.xlu0 %3062
    %v3064 = vcvt.f32.s32 %v3061
    %v3065 = vcvt.f32.s32 %v3063
    %v3066 = vshll.u32 %v3065, 16
    %v3067 = vadd.s32 %v3066, %v3064
    %vm3068 = vcmp.eq.s32.totalorder %v2911, 0
    %v3069 = vsel %vm3068, %v2896, 0
    %v3070 = vsel %vm461, %v3067, %v3069
    %3071 = vrot.lane.b32.xlu0 %v3070, 127
    %v3072 = vpop.permute.xlu0 %3071
    %3073 = vrot.lane.b32.xlu0 %v3047, 127
    %v3074 = vpop.permute.xlu0 %3073
    %3075 = vrot.lane.b32.xlu0 %v3024, 127
    %v3076 = vpop.permute.xlu0 %3075
    %3077 = vrot.lane.b32.xlu0 %v3001, 127
    %v3078 = vpop.permute.xlu0 %3077
    %3079 = vrot.lane.b32.xlu0 %v2978, 127
    %v3080 = vpop.permute.xlu0 %3079
    %3081 = vrot.lane.b32.xlu0 %v2955, 127
    %v3082 = vpop.permute.xlu0 %3081
    %3083 = vrot.lane.b32.xlu0 %v2932, 127
    %v3084 = vpop.permute.xlu0 %3083
    %vm3085 = vcmask 7168
    %v3086 = vsel %vm3085, %v3072, %v3074
    %vm3087 = vcmask 15360
    %v3088 = vsel %vm3087, %v3086, %v3076
    %vm3089 = vcmask 23552
    %v3090 = vsel %vm3089, %v3088, %v3078
    %vm3091 = vcmask 31744
    %v3092 = vsel %vm3091, %v3090, %v3080
    %vm3093 = vcmask 39936
    %v3094 = vsel %vm3093, %v3092, %v3082
    %vm3095 = vcmask 48128
    %v3096 = vsel %vm3095, %v3094, %v3084
    %vm3097 = vcmask 56320
    %v3098 = vsel %vm3097, %v3096, %v2913
    %3099 = vst.msk [vmem:[#allocation2] sm:$0x3] %vm2897, %v3098
    // Predicated region
    $region22: #{bert_bilstm_crf_forward.7} parent=1 // pred_check
      _
    $region23: #{bert_bilstm_crf_forward.7} parent=1 // pred_check_branch
      %3101 = sbr.rel (0) target = $region25
    $region24: #{bert_bilstm_crf_forward.7} parent=1 // pred_region
      %s3103 = ssub.s32 32, 32
      %3104 = vsyncadd [#allocation3], %s3103
      %s3106 = sshll.u32 [#allocation2], 4
      %s3107 = int_to_ptr.vmem [resolvable:$true] %s3106
      %3109 = dma.vmem_to_hbm [thread:$0]  %s3107, 32, %s5, [#allocation3]
    $region25: #{bert_bilstm_crf_forward.7} parent=1 // pred_fallthru
      _
    // Predicated region
    $region26: #{bert_bilstm_crf_forward.7} parent=1 // pred_check
      _
    $region27: #{bert_bilstm_crf_forward.7} parent=1 // pred_check_branch
      %3111 = sbr.rel (0) target = $region29
    $region28: #{bert_bilstm_crf_forward.7} parent=1 // pred_region
      %3112 = dma.done [#allocation3], 32
    $region29: #{bert_bilstm_crf_forward.7} parent=1 // pred_fallthru
      _
    %3113 = vsyncpa [#allocation3], 1

</llo_original>
